<compile_context>
chip_gen: v7x
topology: tpu7x:2x2x1
jax: 0.10.0
libtpu: 0.0.40
codegen_flags: <defaults>
</compile_context>

<pallas_src>
import functools
import math

import jax
import jax.numpy as jnp
from jax.experimental import pallas as pl
from jax.experimental.pallas import tpu as pltpu

_LANES = 128


def _fused_inception_kernel(x_ref, *refs, patch_list, win_size, tw, n_time, sub, n_sub):
    """Fused multi-scale patch attention on a [win_size, TG, 128] slab of sequences.

    x_ref   : (win_size, TG, 128) VMEM  -- TG*128 independent (batch*channel) sequences
                                           on the (sublane, lane) axes, time on dim 0.
    refs    : (w_0, b_0, w_1, b_1, ..., o_ref, acc_ref)
                w_i : (p_i, win_size // p_i) SMEM -- linear weight of branch i,
                                                     pre-scaled by 1/len(patch_list)
                b_i : (p_i,)                 SMEM -- linear bias, pre-scaled likewise
    o_ref   : (tw, TG, 128) VMEM        -- output rows of this time block (branch mean)
    acc_ref : (tw, TG, 128) VMEM f32    -- scratch accumulator for the branch mean
    """
    o_ref = refs[-2]
    acc_ref = refs[-1]
    wb_refs = refs[:-2]

    def compute_time_block(t0):
        # Computes output rows [t0, t0 + tw) for every branch into acc_ref (local rows).
        for bi, p in enumerate(patch_list):
            w_num = win_size // p
            w_ref = wb_refs[2 * bi]
            b_ref = wb_refs[2 * bi + 1]
            scale = 1.0 / math.sqrt(float(p))
            first = bi == 0

            # Hoist the SMEM scalar reads out of the query loop (they are i-invariant);
            # re-uses of the same SSA scalar keep the splats CSE-able.
            w_s = [[w_ref[k, j] for j in range(w_num)] for k in range(p)]
            b_s = [b_ref[k] for k in range(p)]

            q0 = t0 // p   # first attention-query index owned by this time block
            nq = tw // p   # number of queries owned by this time block

            for c in range(n_sub):               # iterate [8,128]-dense sublane chunks
                sl = pl.ds(c * sub, sub)
                for qi in range(nq):
                    i = q0 + qi
                    # p query rows, loaded dense and pre-scaled ONCE by 1/sqrt(p).
                    q_rows = [
                        x_ref[pl.ds(i * p + k, 1), sl, :].astype(jnp.float32) * scale
                        for k in range(p)
                    ]
                    # Scores s_j = scale * <z_i, z_j>.  Key rows are re-loaded from VMEM
                    # per use (vld slots have slack) so the live set stays ~p+w_num vregs.
                    # NOTE: for very large w_num (small p with win_size >~ 300) a chunked
                    # online softmax would be needed to keep this register-resident.
                    s = []
                    for j in range(w_num):
                        d = q_rows[0] * x_ref[pl.ds(j * p, 1), sl, :].astype(jnp.float32)
                        for k in range(1, p):
                            d = d + q_rows[k] * x_ref[
                                pl.ds(j * p + k, 1), sl, :].astype(jnp.float32)
                        s.append(d)

                    # Numerically stable softmax over j; exact reciprocal on the EUP
                    # (approx=True would be slightly cheaper but loosens parity).
                    m = s[0]
                    for j in range(1, w_num):
                        m = jnp.maximum(m, s[j])
                    e = [jnp.exp(sj - m) for sj in s]
                    denom = e[0]
                    for j in range(1, w_num):
                        denom = denom + e[j]
                    r = pl.reciprocal(denom, approx=False)

                    # Linear projection w_num -> p (scalar weights from SMEM); softmax
                    # normalization folded into the projected sum.  Accumulate the
                    # branch mean directly in the f32 VMEM scratch (dense row stores).
                    for k in range(p):
                        t_acc = e[0] * w_s[k][0]
                        for j in range(1, w_num):
                            t_acc = t_acc + e[j] * w_s[k][j]
                        val = t_acc * r + b_s[k]
                        row = qi * p + k          # local output row in this time block
                        if first:
                            acc_ref[pl.ds(row, 1), sl, :] = val
                        else:
                            acc_ref[pl.ds(row, 1), sl, :] = (
                                acc_ref[pl.ds(row, 1), sl, :] + val)

    if n_time == 1:
        compute_time_block(0)
    else:
        # Small-N path: split the window across a parallel grid axis so both v7x
        # TensorCores get work.  Query/output rows are partitioned; keys span full W.
        for tb in range(n_time):
            @pl.when(pl.program_id(0) == tb)
            def _time_block(t0=tb * tw):
                compute_time_block(t0)

    # One whole-block, sublane/lane-dense store of the branch mean.
    o_ref[...] = acc_ref[...].astype(o_ref.dtype)


def inception_attention_forward(x, params, patch_list):
    """Full InceptionAttentionLayer forward. x: [B, win_size, C] -> [B, win_size, C]."""
    B, W, C = x.shape
    N = B * C
    n_branches = len(patch_list)
    for p in patch_list:
        if W % p != 0:
            raise ValueError(f"win_size={W} must be divisible by patch size {p}")

    itemsize = jnp.dtype(x.dtype).itemsize
    G = -(-N // _LANES)                        # number of 128-lane sequence groups

    # ---- lane/sublane tiling of the sequence axis --------------------------------
    if G <= 8:
        TG = G                                 # tiny-N fallback: whole axis, one block
    else:
        half = -(-G // 2)                      # target >= 2 lane-grid steps (v7x: 2 TCs)
        TG = max(8, min(64, (half // 8) * 8))  # dense tiles, 1024..8192 lanes per block
        # Generation-safe VMEM cap (v7x has 64 MiB/TC): keep ~5 blocks under ~40 MiB.
        per_tg = 5 * W * _LANES * 4
        TG = min(TG, max(8, ((40 << 20) // per_tg) // 8 * 8))
    G_pad = -(-G // TG) * TG
    n_lane = G_pad // TG
    sub = 8 if TG % 8 == 0 else TG
    n_sub = TG // sub

    # ---- time split only when the lane grid cannot feed two TensorCores ----------
    n_time = 1
    if n_lane == 1 and W % 2 == 0 and all((W // 2) % p == 0 for p in patch_list):
        n_time = 2
    TW = W // n_time

    # ---- one fused transpose(+pad) copy: [B, W, C] -> [W, G_pad, 128] -------------
    # Time-major so the independent (b, c) sequences fill dense (sublane, lane) tiles;
    # under jit the transpose/pad/reshape fuse into a single HBM copy.
    N_pad = G_pad * _LANES
    xt = jnp.transpose(x, (1, 0, 2)).reshape(W, N)
    if N_pad != N:
        xt = jnp.pad(xt, ((0, 0), (0, N_pad - N)))
    x3 = xt.reshape(W, G_pad, _LANES)

    # ---- tiny per-branch linear weights/biases: whole in SMEM, pre-scaled by
    # 1/n_branches so the kernel accumulates the branch mean directly ---------------
    inv_nb = 1.0 / float(n_branches)
    wb_args = []
    in_specs = [pl.BlockSpec((W, TG, _LANES), lambda t, g: (0, g, 0))]
    for i, p in enumerate(patch_list):
        w_num = W // p
        wb_args.append(
            (jnp.asarray(params[i]["weight"], jnp.float32) * inv_nb).reshape(p, w_num))
        wb_args.append(
            (jnp.asarray(params[i]["bias"], jnp.float32) * inv_nb).reshape(p))
        in_specs.append(pl.BlockSpec(memory_space=pltpu.MemorySpace.SMEM))
        in_specs.append(pl.BlockSpec(memory_space=pltpu.MemorySpace.SMEM))

    kernel = functools.partial(
        _fused_inception_kernel, patch_list=tuple(patch_list), win_size=W,
        tw=TW, n_time=n_time, sub=sub, n_sub=n_sub)

    # VMEM budget: double-buffered input + output blocks, plus the f32 accumulator.
    in_blk = W * TG * _LANES * itemsize
    out_blk = TW * TG * _LANES * itemsize
    acc_blk = TW * TG * _LANES * 4
    vmem_need = 2 * (in_blk + out_blk) + acc_blk + (4 << 20)
    vmem_limit = int(min(56 << 20, max(vmem_need, 32 << 20)))

    yt = pl.pallas_call(
        kernel,
        out_shape=jax.ShapeDtypeStruct((W, G_pad, _LANES), x.dtype),
        grid=(n_time, n_lane),
        in_specs=in_specs,
        out_specs=pl.BlockSpec((TW, TG, _LANES), lambda t, g: (t, g, 0)),
        scratch_shapes=[pltpu.VMEM((TW, TG, _LANES), jnp.float32)],
        compiler_params=pltpu.CompilerParams(
            dimension_semantics=("parallel", "parallel"),
            vmem_limit_bytes=vmem_limit),
    )(x3, *wb_args)

    # '(b c) w p -> b (w p) c'  ==  [W, N] -> [B, W, C]   (one transpose copy back)
    return yt.reshape(W, N_pad)[:, :N].reshape(W, B, C).transpose(1, 0, 2)


def init_params(key, win_size, patch_list):
    """Kaiming-normal (fan_out, relu) weights, zero biases; deterministic."""
    params = []
    for p in patch_list:
        w_num = win_size // p
        key, sub = jax.random.split(key)
        std = math.sqrt(2.0 / p)  # fan_out = out_features = p
        weight = std * jax.random.normal(sub, (p, w_num), dtype=jnp.float32)
        bias = jnp.zeros((p,), dtype=jnp.float32)
        params.append({"weight": weight, "bias": bias})
    return params


def _reference(x, params, patch_list):
    """Plain-JAX reference of the same forward pass (for sanity checking)."""
    B, W, C = x.shape
    res = []
    for i, p in enumerate(patch_list):
        w_num = W // p
        z = (x.reshape(B, w_num, p, C).transpose(0, 3, 1, 2)
              .reshape(B * C, w_num, p))
        s = (1.0 / math.sqrt(p)) * jnp.einsum("nld,nsd->nls", z, z)
        a = jax.nn.softmax(s, axis=-1)
        o = jnp.einsum("nls,os->nlo", a, params[i]["weight"]) + params[i]["bias"]
        res.append(o.reshape(B, C, w_num, p).transpose(0, 2, 3, 1).reshape(B, W, C))
    return jnp.mean(jnp.stack(res, axis=-1), axis=-1)


if __name__ == "__main__":
    key = jax.random.PRNGKey(0)
    batch, win_size, channels = 2, 16, 4
    patch_list = [2, 4, 8]

    k_x, k_p, k_x2, k_x3 = jax.random.split(key, 4)
    params = init_params(k_p, win_size, patch_list)
    fwd = jax.jit(functools.partial(inception_attention_forward, patch_list=patch_list))

    # 1) tiny-N path: single lane block, time axis split across 2 parallel grid steps.
    x = jax.random.normal(k_x, (batch, win_size, channels), dtype=jnp.float32)
    out = jax.block_until_ready(fwd(x, params))
    ref = _reference(x, params, patch_list)
    assert out.shape == (batch, win_size, channels)
    assert jnp.max(jnp.abs(out - ref)) < 1e-4, "mismatch vs plain-JAX reference"

    # 2) ragged lane groups below a dense tile: N = 16*40 = 640 -> 5 sublane groups.
    x2 = jax.random.normal(k_x2, (16, win_size, 40), dtype=jnp.float32)
    out2 = jax.block_until_ready(fwd(x2, params))
    ref2 = _reference(x2, params, patch_list)
    assert out2.shape == x2.shape
    assert jnp.max(jnp.abs(out2 - ref2)) < 1e-4, "mismatch vs reference (small-G path)"

    # 3) dense-tile path with a >=2-step lane grid: N = 8*144 = 1152 -> 9 groups,
    #    padded to 16 and tiled as 2 blocks of 8 dense sublane groups.
    x3 = jax.random.normal(k_x3, (8, win_size, 144), dtype=jnp.float32)
    out3 = jax.block_until_ready(fwd(x3, params))
    ref3 = _reference(x3, params, patch_list)
    assert out3.shape == x3.shape
    assert jnp.max(jnp.abs(out3 - ref3)) < 1e-4, "mismatch vs reference (tiled path)"

    print("KERNEL_OK")
</pallas_src>

<mosaic_0001>
module attributes {stable_mosaic.version = 11 : i64} {
  func.func @_fused_inception_kernel(%arg0: i32, %arg1: i32, %arg2: memref<16x1x128xf32, #tpu.memory_space<vmem>>, %arg3: memref<2x8xf32, #tpu.memory_space<smem>>, %arg4: memref<2xf32, #tpu.memory_space<smem>>, %arg5: memref<4x4xf32, #tpu.memory_space<smem>>, %arg6: memref<4xf32, #tpu.memory_space<smem>>, %arg7: memref<8x2xf32, #tpu.memory_space<smem>>, %arg8: memref<8xf32, #tpu.memory_space<smem>>, %arg9: memref<8x1x128xf32, #tpu.memory_space<vmem>>, %arg10: memref<8x1x128xf32, #tpu.memory_space<vmem>>) attributes {dimension_semantics = [#tpu.dimension_semantics<parallel>, #tpu.dimension_semantics<parallel>], iteration_bounds = array<i64: 2, 1>, scalar_prefetch = 0 : i64, scratch_operands = 1 : i64, tpu.core_type = #tpu.core_type<tc>, window_params = [{transform_indices = @transform_0, window_bounds = array<i64: 16, 1, 128>}, {transform_indices = @transform_1, window_bounds = array<i64: 2, 8>}, {transform_indices = @transform_2, window_bounds = array<i64: 2>}, {transform_indices = @transform_3, window_bounds = array<i64: 4, 4>}, {transform_indices = @transform_4, window_bounds = array<i64: 4>}, {transform_indices = @transform_5, window_bounds = array<i64: 8, 2>}, {transform_indices = @transform_6, window_bounds = array<i64: 8>}, {transform_indices = @transform_7, window_bounds = array<i64: 8, 1, 128>}]} {
    %c0_i32 = arith.constant 0 : i32
    %0 = arith.cmpi eq, %arg0, %c0_i32 : i32
    %1 = arith.extui %0 : i1 to i32
    %c0_i32_0 = arith.constant 0 : i32
    %2 = arith.cmpi ne, %1, %c0_i32_0 : i32
    scf.if %2 {
      %c0_7 = arith.constant 0 : index
      %c0_8 = arith.constant 0 : index
      %8 = memref.load %arg3[%c0_7, %c0_8] : memref<2x8xf32, #tpu.memory_space<smem>>
      %c0_9 = arith.constant 0 : index
      %c1 = arith.constant 1 : index
      %9 = memref.load %arg3[%c0_9, %c1] : memref<2x8xf32, #tpu.memory_space<smem>>
      %c0_10 = arith.constant 0 : index
      %c2 = arith.constant 2 : index
      %10 = memref.load %arg3[%c0_10, %c2] : memref<2x8xf32, #tpu.memory_space<smem>>
      %c0_11 = arith.constant 0 : index
      %c3 = arith.constant 3 : index
      %11 = memref.load %arg3[%c0_11, %c3] : memref<2x8xf32, #tpu.memory_space<smem>>
      %c0_12 = arith.constant 0 : index
      %c4 = arith.constant 4 : index
      %12 = memref.load %arg3[%c0_12, %c4] : memref<2x8xf32, #tpu.memory_space<smem>>
      %c0_13 = arith.constant 0 : index
      %c5 = arith.constant 5 : index
      %13 = memref.load %arg3[%c0_13, %c5] : memref<2x8xf32, #tpu.memory_space<smem>>
      %c0_14 = arith.constant 0 : index
      %c6 = arith.constant 6 : index
      %14 = memref.load %arg3[%c0_14, %c6] : memref<2x8xf32, #tpu.memory_space<smem>>
      %c0_15 = arith.constant 0 : index
      %c7 = arith.constant 7 : index
      %15 = memref.load %arg3[%c0_15, %c7] : memref<2x8xf32, #tpu.memory_space<smem>>
      %c1_16 = arith.constant 1 : index
      %c0_17 = arith.constant 0 : index
      %16 = memref.load %arg3[%c1_16, %c0_17] : memref<2x8xf32, #tpu.memory_space<smem>>
      %c1_18 = arith.constant 1 : index
      %c1_19 = arith.constant 1 : index
      %17 = memref.load %arg3[%c1_18, %c1_19] : memref<2x8xf32, #tpu.memory_space<smem>>
      %c1_20 = arith.constant 1 : index
      %c2_21 = arith.constant 2 : index
      %18 = memref.load %arg3[%c1_20, %c2_21] : memref<2x8xf32, #tpu.memory_space<smem>>
      %c1_22 = arith.constant 1 : index
      %c3_23 = arith.constant 3 : index
      %19 = memref.load %arg3[%c1_22, %c3_23] : memref<2x8xf32, #tpu.memory_space<smem>>
      %c1_24 = arith.constant 1 : index
      %c4_25 = arith.constant 4 : index
      %20 = memref.load %arg3[%c1_24, %c4_25] : memref<2x8xf32, #tpu.memory_space<smem>>
      %c1_26 = arith.constant 1 : index
      %c5_27 = arith.constant 5 : index
      %21 = memref.load %arg3[%c1_26, %c5_27] : memref<2x8xf32, #tpu.memory_space<smem>>
      %c1_28 = arith.constant 1 : index
      %c6_29 = arith.constant 6 : index
      %22 = memref.load %arg3[%c1_28, %c6_29] : memref<2x8xf32, #tpu.memory_space<smem>>
      %c1_30 = arith.constant 1 : index
      %c7_31 = arith.constant 7 : index
      %23 = memref.load %arg3[%c1_30, %c7_31] : memref<2x8xf32, #tpu.memory_space<smem>>
      %c0_32 = arith.constant 0 : index
      %24 = memref.load %arg4[%c0_32] : memref<2xf32, #tpu.memory_space<smem>>
      %c1_33 = arith.constant 1 : index
      %25 = memref.load %arg4[%c1_33] : memref<2xf32, #tpu.memory_space<smem>>
      %c0_34 = arith.constant 0 : index
      %c0_35 = arith.constant 0 : index
      %c0_36 = arith.constant 0 : index
      %26 = vector.load %arg2[%c0_34, %c0_35, %c0_36] : memref<16x1x128xf32, #tpu.memory_space<vmem>>, vector<1x1x128xf32>
      %cst = arith.constant 0.707106769 : f32
      %27 = vector.broadcast %cst : f32 to vector<1x1x128xf32>
      %28 = arith.mulf %26, %27 : vector<1x1x128xf32>
      %c1_37 = arith.constant 1 : index
      %c0_38 = arith.constant 0 : index
      %c0_39 = arith.constant 0 : index
      %29 = vector.load %arg2[%c1_37, %c0_38, %c0_39] : memref<16x1x128xf32, #tpu.memory_space<vmem>>, vector<1x1x128xf32>
      %cst_40 = arith.constant 0.707106769 : f32
      %30 = vector.broadcast %cst_40 : f32 to vector<1x1x128xf32>
      %31 = arith.mulf %29, %30 : vector<1x1x128xf32>
      %c0_41 = arith.constant 0 : index
      %c0_42 = arith.constant 0 : index
      %c0_43 = arith.constant 0 : index
      %32 = vector.load %arg2[%c0_41, %c0_42, %c0_43] : memref<16x1x128xf32, #tpu.memory_space<vmem>>, vector<1x1x128xf32>
      %33 = arith.mulf %28, %32 : vector<1x1x128xf32>
      %c1_44 = arith.constant 1 : index
      %c0_45 = arith.constant 0 : index
      %c0_46 = arith.constant 0 : index
      %34 = vector.load %arg2[%c1_44, %c0_45, %c0_46] : memref<16x1x128xf32, #tpu.memory_space<vmem>>, vector<1x1x128xf32>
      %35 = arith.mulf %31, %34 : vector<1x1x128xf32>
      %36 = arith.addf %33, %35 : vector<1x1x128xf32>
      %c2_47 = arith.constant 2 : index
      %c0_48 = arith.constant 0 : index
      %c0_49 = arith.constant 0 : index
      %37 = vector.load %arg2[%c2_47, %c0_48, %c0_49] : memref<16x1x128xf32, #tpu.memory_space<vmem>>, vector<1x1x128xf32>
      %38 = arith.mulf %28, %37 : vector<1x1x128xf32>
      %c3_50 = arith.constant 3 : index
      %c0_51 = arith.constant 0 : index
      %c0_52 = arith.constant 0 : index
      %39 = vector.load %arg2[%c3_50, %c0_51, %c0_52] : memref<16x1x128xf32, #tpu.memory_space<vmem>>, vector<1x1x128xf32>
      %40 = arith.mulf %31, %39 : vector<1x1x128xf32>
      %41 = arith.addf %38, %40 : vector<1x1x128xf32>
      %c4_53 = arith.constant 4 : index
      %c0_54 = arith.constant 0 : index
      %c0_55 = arith.constant 0 : index
      %42 = vector.load %arg2[%c4_53, %c0_54, %c0_55] : memref<16x1x128xf32, #tpu.memory_space<vmem>>, vector<1x1x128xf32>
      %43 = arith.mulf %28, %42 : vector<1x1x128xf32>
      %c5_56 = arith.constant 5 : index
      %c0_57 = arith.constant 0 : index
      %c0_58 = arith.constant 0 : index
      %44 = vector.load %arg2[%c5_56, %c0_57, %c0_58] : memref<16x1x128xf32, #tpu.memory_space<vmem>>, vector<1x1x128xf32>
      %45 = arith.mulf %31, %44 : vector<1x1x128xf32>
      %46 = arith.addf %43, %45 : vector<1x1x128xf32>
      %c6_59 = arith.constant 6 : index
      %c0_60 = arith.constant 0 : index
      %c0_61 = arith.constant 0 : index
      %47 = vector.load %arg2[%c6_59, %c0_60, %c0_61] : memref<16x1x128xf32, #tpu.memory_space<vmem>>, vector<1x1x128xf32>
      %48 = arith.mulf %28, %47 : vector<1x1x128xf32>
      %c7_62 = arith.constant 7 : index
      %c0_63 = arith.constant 0 : index
      %c0_64 = arith.constant 0 : index
      %49 = vector.load %arg2[%c7_62, %c0_63, %c0_64] : memref<16x1x128xf32, #tpu.memory_space<vmem>>, vector<1x1x128xf32>
      %50 = arith.mulf %31, %49 : vector<1x1x128xf32>
      %51 = arith.addf %48, %50 : vector<1x1x128xf32>
      %c8 = arith.constant 8 : index
      %c0_65 = arith.constant 0 : index
      %c0_66 = arith.constant 0 : index
      %52 = vector.load %arg2[%c8, %c0_65, %c0_66] : memref<16x1x128xf32, #tpu.memory_space<vmem>>, vector<1x1x128xf32>
      %53 = arith.mulf %28, %52 : vector<1x1x128xf32>
      %c9 = arith.constant 9 : index
      %c0_67 = arith.constant 0 : index
      %c0_68 = arith.constant 0 : index
      %54 = vector.load %arg2[%c9, %c0_67, %c0_68] : memref<16x1x128xf32, #tpu.memory_space<vmem>>, vector<1x1x128xf32>
      %55 = arith.mulf %31, %54 : vector<1x1x128xf32>
      %56 = arith.addf %53, %55 : vector<1x1x128xf32>
      %c10 = arith.constant 10 : index
      %c0_69 = arith.constant 0 : index
      %c0_70 = arith.constant 0 : index
      %57 = vector.load %arg2[%c10, %c0_69, %c0_70] : memref<16x1x128xf32, #tpu.memory_space<vmem>>, vector<1x1x128xf32>
      %58 = arith.mulf %28, %57 : vector<1x1x128xf32>
      %c11 = arith.constant 11 : index
      %c0_71 = arith.constant 0 : index
      %c0_72 = arith.constant 0 : index
      %59 = vector.load %arg2[%c11, %c0_71, %c0_72] : memref<16x1x128xf32, #tpu.memory_space<vmem>>, vector<1x1x128xf32>
      %60 = arith.mulf %31, %59 : vector<1x1x128xf32>
      %61 = arith.addf %58, %60 : vector<1x1x128xf32>
      %c12 = arith.constant 12 : index
      %c0_73 = arith.constant 0 : index
      %c0_74 = arith.constant 0 : index
      %62 = vector.load %arg2[%c12, %c0_73, %c0_74] : memref<16x1x128xf32, #tpu.memory_space<vmem>>, vector<1x1x128xf32>
      %63 = arith.mulf %28, %62 : vector<1x1x128xf32>
      %c13 = arith.constant 13 : index
      %c0_75 = arith.constant 0 : index
      %c0_76 = arith.constant 0 : index
      %64 = vector.load %arg2[%c13, %c0_75, %c0_76] : memref<16x1x128xf32, #tpu.memory_space<vmem>>, vector<1x1x128xf32>
      %65 = arith.mulf %31, %64 : vector<1x1x128xf32>
      %66 = arith.addf %63, %65 : vector<1x1x128xf32>
      %c14 = arith.constant 14 : index
      %c0_77 = arith.constant 0 : index
      %c0_78 = arith.constant 0 : index
      %67 = vector.load %arg2[%c14, %c0_77, %c0_78] : memref<16x1x128xf32, #tpu.memory_space<vmem>>, vector<1x1x128xf32>
      %68 = arith.mulf %28, %67 : vector<1x1x128xf32>
      %c15 = arith.constant 15 : index
      %c0_79 = arith.constant 0 : index
      %c0_80 = arith.constant 0 : index
      %69 = vector.load %arg2[%c15, %c0_79, %c0_80] : memref<16x1x128xf32, #tpu.memory_space<vmem>>, vector<1x1x128xf32>
      %70 = arith.mulf %31, %69 : vector<1x1x128xf32>
      %71 = arith.addf %68, %70 : vector<1x1x128xf32>
      %72 = arith.maximumf %36, %41 : vector<1x1x128xf32>
      %73 = arith.maximumf %72, %46 : vector<1x1x128xf32>
      %74 = arith.maximumf %73, %51 : vector<1x1x128xf32>
      %75 = arith.maximumf %74, %56 : vector<1x1x128xf32>
      %76 = arith.maximumf %75, %61 : vector<1x1x128xf32>
      %77 = arith.maximumf %76, %66 : vector<1x1x128xf32>
      %78 = arith.maximumf %77, %71 : vector<1x1x128xf32>
      %79 = arith.subf %36, %78 : vector<1x1x128xf32>
      %80 = math.exp %79 : vector<1x1x128xf32>
      %81 = arith.subf %41, %78 : vector<1x1x128xf32>
      %82 = math.exp %81 : vector<1x1x128xf32>
      %83 = arith.subf %46, %78 : vector<1x1x128xf32>
      %84 = math.exp %83 : vector<1x1x128xf32>
      %85 = arith.subf %51, %78 : vector<1x1x128xf32>
      %86 = math.exp %85 : vector<1x1x128xf32>
      %87 = arith.subf %56, %78 : vector<1x1x128xf32>
      %88 = math.exp %87 : vector<1x1x128xf32>
      %89 = arith.subf %61, %78 : vector<1x1x128xf32>
      %90 = math.exp %89 : vector<1x1x128xf32>
      %91 = arith.subf %66, %78 : vector<1x1x128xf32>
      %92 = math.exp %91 : vector<1x1x128xf32>
      %93 = arith.subf %71, %78 : vector<1x1x128xf32>
      %94 = math.exp %93 : vector<1x1x128xf32>
      %95 = arith.addf %80, %82 : vector<1x1x128xf32>
      %96 = arith.addf %95, %84 : vector<1x1x128xf32>
      %97 = arith.addf %96, %86 : vector<1x1x128xf32>
      %98 = arith.addf %97, %88 : vector<1x1x128xf32>
      %99 = arith.addf %98, %90 : vector<1x1x128xf32>
      %100 = arith.addf %99, %92 : vector<1x1x128xf32>
      %101 = arith.addf %100, %94 : vector<1x1x128xf32>
      %102 = tpu.reciprocal %101 : vector<1x1x128xf32> -> vector<1x1x128xf32>
      %103 = vector.broadcast %8 : f32 to vector<1x1x128xf32>
      %104 = arith.mulf %80, %103 : vector<1x1x128xf32>
      %105 = vector.broadcast %9 : f32 to vector<1x1x128xf32>
      %106 = arith.mulf %82, %105 : vector<1x1x128xf32>
      %107 = arith.addf %104, %106 : vector<1x1x128xf32>
      %108 = vector.broadcast %10 : f32 to vector<1x1x128xf32>
      %109 = arith.mulf %84, %108 : vector<1x1x128xf32>
      %110 = arith.addf %107, %109 : vector<1x1x128xf32>
      %111 = vector.broadcast %11 : f32 to vector<1x1x128xf32>
      %112 = arith.mulf %86, %111 : vector<1x1x128xf32>
      %113 = arith.addf %110, %112 : vector<1x1x128xf32>
      %114 = vector.broadcast %12 : f32 to vector<1x1x128xf32>
      %115 = arith.mulf %88, %114 : vector<1x1x128xf32>
      %116 = arith.addf %113, %115 : vector<1x1x128xf32>
      %117 = vector.broadcast %13 : f32 to vector<1x1x128xf32>
      %118 = arith.mulf %90, %117 : vector<1x1x128xf32>
      %119 = arith.addf %116, %118 : vector<1x1x128xf32>
      %120 = vector.broadcast %14 : f32 to vector<1x1x128xf32>
      %121 = arith.mulf %92, %120 : vector<1x1x128xf32>
      %122 = arith.addf %119, %121 : vector<1x1x128xf32>
      %123 = vector.broadcast %15 : f32 to vector<1x1x128xf32>
      %124 = arith.mulf %94, %123 : vector<1x1x128xf32>
      %125 = arith.addf %122, %124 : vector<1x1x128xf32>
      %126 = arith.mulf %125, %102 : vector<1x1x128xf32>
      %127 = vector.broadcast %24 : f32 to vector<1x1x128xf32>
      %128 = arith.addf %126, %127 : vector<1x1x128xf32>
      %c0_81 = arith.constant 0 : index
      %c0_82 = arith.constant 0 : index
      %c0_83 = arith.constant 0 : index
      %129 = vector.load %arg10[%c0_81, %c0_82, %c0_83] : memref<8x1x128xf32, #tpu.memory_space<vmem>>, vector<1x1x128xf32>
      tpu.vector_store %arg10[%c0_81, %c0_82, %c0_83], %128 {strides = array<i32>} : memref<8x1x128xf32, #tpu.memory_space<vmem>>, vector<1x1x128xf32>,
      %130 = vector.broadcast %16 : f32 to vector<1x1x128xf32>
      %131 = arith.mulf %80, %130 : vector<1x1x128xf32>
      %132 = vector.broadcast %17 : f32 to vector<1x1x128xf32>
      %133 = arith.mulf %82, %132 : vector<1x1x128xf32>
      %134 = arith.addf %131, %133 : vector<1x1x128xf32>
      %135 = vector.broadcast %18 : f32 to vector<1x1x128xf32>
      %136 = arith.mulf %84, %135 : vector<1x1x128xf32>
      %137 = arith.addf %134, %136 : vector<1x1x128xf32>
      %138 = vector.broadcast %19 : f32 to vector<1x1x128xf32>
      %139 = arith.mulf %86, %138 : vector<1x1x128xf32>
      %140 = arith.addf %137, %139 : vector<1x1x128xf32>
      %141 = vector.broadcast %20 : f32 to vector<1x1x128xf32>
      %142 = arith.mulf %88, %141 : vector<1x1x128xf32>
      %143 = arith.addf %140, %142 : vector<1x1x128xf32>
      %144 = vector.broadcast %21 : f32 to vector<1x1x128xf32>
      %145 = arith.mulf %90, %144 : vector<1x1x128xf32>
      %146 = arith.addf %143, %145 : vector<1x1x128xf32>
      %147 = vector.broadcast %22 : f32 to vector<1x1x128xf32>
      %148 = arith.mulf %92, %147 : vector<1x1x128xf32>
      %149 = arith.addf %146, %148 : vector<1x1x128xf32>
      %150 = vector.broadcast %23 : f32 to vector<1x1x128xf32>
      %151 = arith.mulf %94, %150 : vector<1x1x128xf32>
      %152 = arith.addf %149, %151 : vector<1x1x128xf32>
      %153 = arith.mulf %152, %102 : vector<1x1x128xf32>
      %154 = vector.broadcast %25 : f32 to vector<1x1x128xf32>
      %155 = arith.addf %153, %154 : vector<1x1x128xf32>
      %c1_84 = arith.constant 1 : index
      %c0_85 = arith.constant 0 : index
      %c0_86 = arith.constant 0 : index
      %156 = vector.load %arg10[%c1_84, %c0_85, %c0_86] : memref<8x1x128xf32, #tpu.memory_space<vmem>>, vector<1x1x128xf32>
      tpu.vector_store %arg10[%c1_84, %c0_85, %c0_86], %155 {strides = array<i32>} : memref<8x1x128xf32, #tpu.memory_space<vmem>>, vector<1x1x128xf32>,
      %c2_87 = arith.constant 2 : index
      %c0_88 = arith.constant 0 : index
      %c0_89 = arith.constant 0 : index
      %157 = vector.load %arg2[%c2_87, %c0_88, %c0_89] : memref<16x1x128xf32, #tpu.memory_space<vmem>>, vector<1x1x128xf32>
      %cst_90 = arith.constant 0.707106769 : f32
      %158 = vector.broadcast %cst_90 : f32 to vector<1x1x128xf32>
      %159 = arith.mulf %157, %158 : vector<1x1x128xf32>
      %c3_91 = arith.constant 3 : index
      %c0_92 = arith.constant 0 : index
      %c0_93 = arith.constant 0 : index
      %160 = vector.load %arg2[%c3_91, %c0_92, %c0_93] : memref<16x1x128xf32, #tpu.memory_space<vmem>>, vector<1x1x128xf32>
      %cst_94 = arith.constant 0.707106769 : f32
      %161 = vector.broadcast %cst_94 : f32 to vector<1x1x128xf32>
      %162 = arith.mulf %160, %161 : vector<1x1x128xf32>
      %c0_95 = arith.constant 0 : index
      %c0_96 = arith.constant 0 : index
      %c0_97 = arith.constant 0 : index
      %163 = vector.load %arg2[%c0_95, %c0_96, %c0_97] : memref<16x1x128xf32, #tpu.memory_space<vmem>>, vector<1x1x128xf32>
      %164 = arith.mulf %159, %163 : vector<1x1x128xf32>
      %c1_98 = arith.constant 1 : index
      %c0_99 = arith.constant 0 : index
      %c0_100 = arith.constant 0 : index
      %165 = vector.load %arg2[%c1_98, %c0_99, %c0_100] : memref<16x1x128xf32, #tpu.memory_space<vmem>>, vector<1x1x128xf32>
      %166 = arith.mulf %162, %165 : vector<1x1x128xf32>
      %167 = arith.addf %164, %166 : vector<1x1x128xf32>
      %c2_101 = arith.constant 2 : index
      %c0_102 = arith.constant 0 : index
      %c0_103 = arith.constant 0 : index
      %168 = vector.load %arg2[%c2_101, %c0_102, %c0_103] : memref<16x1x128xf32, #tpu.memory_space<vmem>>, vector<1x1x128xf32>
      %169 = arith.mulf %159, %168 : vector<1x1x128xf32>
      %c3_104 = arith.constant 3 : index
      %c0_105 = arith.constant 0 : index
      %c0_106 = arith.constant 0 : index
      %170 = vector.load %arg2[%c3_104, %c0_105, %c0_106] : memref<16x1x128xf32, #tpu.memory_space<vmem>>, vector<1x1x128xf32>
      %171 = arith.mulf %162, %170 : vector<1x1x128xf32>
      %172 = arith.addf %169, %171 : vector<1x1x128xf32>
      %c4_107 = arith.constant 4 : index
      %c0_108 = arith.constant 0 : index
      %c0_109 = arith.constant 0 : index
      %173 = vector.load %arg2[%c4_107, %c0_108, %c0_109] : memref<16x1x128xf32, #tpu.memory_space<vmem>>, vector<1x1x128xf32>
      %174 = arith.mulf %159, %173 : vector<1x1x128xf32>
      %c5_110 = arith.constant 5 : index
      %c0_111 = arith.constant 0 : index
      %c0_112 = arith.constant 0 : index
      %175 = vector.load %arg2[%c5_110, %c0_111, %c0_112] : memref<16x1x128xf32, #tpu.memory_space<vmem>>, vector<1x1x128xf32>
      %176 = arith.mulf %162, %175 : vector<1x1x128xf32>
      %177 = arith.addf %174, %176 : vector<1x1x128xf32>
      %c6_113 = arith.constant 6 : index
      %c0_114 = arith.constant 0 : index
      %c0_115 = arith.constant 0 : index
      %178 = vector.load %arg2[%c6_113, %c0_114, %c0_115] : memref<16x1x128xf32, #tpu.memory_space<vmem>>, vector<1x1x128xf32>
      %179 = arith.mulf %159, %178 : vector<1x1x128xf32>
      %c7_116 = arith.constant 7 : index
      %c0_117 = arith.constant 0 : index
      %c0_118 = arith.constant 0 : index
      %180 = vector.load %arg2[%c7_116, %c0_117, %c0_118] : memref<16x1x128xf32, #tpu.memory_space<vmem>>, vector<1x1x128xf32>
      %181 = arith.mulf %162, %180 : vector<1x1x128xf32>
      %182 = arith.addf %179, %181 : vector<1x1x128xf32>
      %c8_119 = arith.constant 8 : index
      %c0_120 = arith.constant 0 : index
      %c0_121 = arith.constant 0 : index
      %183 = vector.load %arg2[%c8_119, %c0_120, %c0_121] : memref<16x1x128xf32, #tpu.memory_space<vmem>>, vector<1x1x128xf32>
      %184 = arith.mulf %159, %183 : vector<1x1x128xf32>
      %c9_122 = arith.constant 9 : index
      %c0_123 = arith.constant 0 : index
      %c0_124 = arith.constant 0 : index
      %185 = vector.load %arg2[%c9_122, %c0_123, %c0_124] : memref<16x1x128xf32, #tpu.memory_space<vmem>>, vector<1x1x128xf32>
      %186 = arith.mulf %162, %185 : vector<1x1x128xf32>
      %187 = arith.addf %184, %186 : vector<1x1x128xf32>
      %c10_125 = arith.constant 10 : index
      %c0_126 = arith.constant 0 : index
      %c0_127 = arith.constant 0 : index
      %188 = vector.load %arg2[%c10_125, %c0_126, %c0_127] : memref<16x1x128xf32, #tpu.memory_space<vmem>>, vector<1x1x128xf32>
      %189 = arith.mulf %159, %188 : vector<1x1x128xf32>
      %c11_128 = arith.constant 11 : index
      %c0_129 = arith.constant 0 : index
      %c0_130 = arith.constant 0 : index
      %190 = vector.load %arg2[%c11_128, %c0_129, %c0_130] : memref<16x1x128xf32, #tpu.memory_space<vmem>>, vector<1x1x128xf32>
      %191 = arith.mulf %162, %190 : vector<1x1x128xf32>
      %192 = arith.addf %189, %191 : vector<1x1x128xf32>
      %c12_131 = arith.constant 12 : index
      %c0_132 = arith.constant 0 : index
      %c0_133 = arith.constant 0 : index
      %193 = vector.load %arg2[%c12_131, %c0_132, %c0_133] : memref<16x1x128xf32, #tpu.memory_space<vmem>>, vector<1x1x128xf32>
      %194 = arith.mulf %159, %193 : vector<1x1x128xf32>
      %c13_134 = arith.constant 13 : index
      %c0_135 = arith.constant 0 : index
      %c0_136 = arith.constant 0 : index
      %195 = vector.load %arg2[%c13_134, %c0_135, %c0_136] : memref<16x1x128xf32, #tpu.memory_space<vmem>>, vector<1x1x128xf32>
      %196 = arith.mulf %162, %195 : vector<1x1x128xf32>
      %197 = arith.addf %194, %196 : vector<1x1x128xf32>
      %c14_137 = arith.constant 14 : index
      %c0_138 = arith.constant 0 : index
      %c0_139 = arith.constant 0 : index
      %198 = vector.load %arg2[%c14_137, %c0_138, %c0_139] : memref<16x1x128xf32, #tpu.memory_space<vmem>>, vector<1x1x128xf32>
      %199 = arith.mulf %159, %198 : vector<1x1x128xf32>
      %c15_140 = arith.constant 15 : index
      %c0_141 = arith.constant 0 : index
      %c0_142 = arith.constant 0 : index
      %200 = vector.load %arg2[%c15_140, %c0_141, %c0_142] : memref<16x1x128xf32, #tpu.memory_space<vmem>>, vector<1x1x128xf32>
      %201 = arith.mulf %162, %200 : vector<1x1x128xf32>
      %202 = arith.addf %199, %201 : vector<1x1x128xf32>
      %203 = arith.maximumf %167, %172 : vector<1x1x128xf32>
      %204 = arith.maximumf %203, %177 : vector<1x1x128xf32>
      %205 = arith.maximumf %204, %182 : vector<1x1x128xf32>
      %206 = arith.maximumf %205, %187 : vector<1x1x128xf32>
      %207 = arith.maximumf %206, %192 : vector<1x1x128xf32>
      %208 = arith.maximumf %207, %197 : vector<1x1x128xf32>
      %209 = arith.maximumf %208, %202 : vector<1x1x128xf32>
      %210 = arith.subf %167, %209 : vector<1x1x128xf32>
      %211 = math.exp %210 : vector<1x1x128xf32>
      %212 = arith.subf %172, %209 : vector<1x1x128xf32>
      %213 = math.exp %212 : vector<1x1x128xf32>
      %214 = arith.subf %177, %209 : vector<1x1x128xf32>
      %215 = math.exp %214 : vector<1x1x128xf32>
      %216 = arith.subf %182, %209 : vector<1x1x128xf32>
      %217 = math.exp %216 : vector<1x1x128xf32>
      %218 = arith.subf %187, %209 : vector<1x1x128xf32>
      %219 = math.exp %218 : vector<1x1x128xf32>
      %220 = arith.subf %192, %209 : vector<1x1x128xf32>
      %221 = math.exp %220 : vector<1x1x128xf32>
      %222 = arith.subf %197, %209 : vector<1x1x128xf32>
      %223 = math.exp %222 : vector<1x1x128xf32>
      %224 = arith.subf %202, %209 : vector<1x1x128xf32>
      %225 = math.exp %224 : vector<1x1x128xf32>
      %226 = arith.addf %211, %213 : vector<1x1x128xf32>
      %227 = arith.addf %226, %215 : vector<1x1x128xf32>
      %228 = arith.addf %227, %217 : vector<1x1x128xf32>
      %229 = arith.addf %228, %219 : vector<1x1x128xf32>
      %230 = arith.addf %229, %221 : vector<1x1x128xf32>
      %231 = arith.addf %230, %223 : vector<1x1x128xf32>
      %232 = arith.addf %231, %225 : vector<1x1x128xf32>
      %233 = tpu.reciprocal %232 : vector<1x1x128xf32> -> vector<1x1x128xf32>
      %234 = vector.broadcast %8 : f32 to vector<1x1x128xf32>
      %235 = arith.mulf %211, %234 : vector<1x1x128xf32>
      %236 = vector.broadcast %9 : f32 to vector<1x1x128xf32>
      %237 = arith.mulf %213, %236 : vector<1x1x128xf32>
      %238 = arith.addf %235, %237 : vector<1x1x128xf32>
      %239 = vector.broadcast %10 : f32 to vector<1x1x128xf32>
      %240 = arith.mulf %215, %239 : vector<1x1x128xf32>
      %241 = arith.addf %238, %240 : vector<1x1x128xf32>
      %242 = vector.broadcast %11 : f32 to vector<1x1x128xf32>
      %243 = arith.mulf %217, %242 : vector<1x1x128xf32>
      %244 = arith.addf %241, %243 : vector<1x1x128xf32>
      %245 = vector.broadcast %12 : f32 to vector<1x1x128xf32>
      %246 = arith.mulf %219, %245 : vector<1x1x128xf32>
      %247 = arith.addf %244, %246 : vector<1x1x128xf32>
      %248 = vector.broadcast %13 : f32 to vector<1x1x128xf32>
      %249 = arith.mulf %221, %248 : vector<1x1x128xf32>
      %250 = arith.addf %247, %249 : vector<1x1x128xf32>
      %251 = vector.broadcast %14 : f32 to vector<1x1x128xf32>
      %252 = arith.mulf %223, %251 : vector<1x1x128xf32>
      %253 = arith.addf %250, %252 : vector<1x1x128xf32>
      %254 = vector.broadcast %15 : f32 to vector<1x1x128xf32>
      %255 = arith.mulf %225, %254 : vector<1x1x128xf32>
      %256 = arith.addf %253, %255 : vector<1x1x128xf32>
      %257 = arith.mulf %256, %233 : vector<1x1x128xf32>
      %258 = vector.broadcast %24 : f32 to vector<1x1x128xf32>
      %259 = arith.addf %257, %258 : vector<1x1x128xf32>
      %c2_143 = arith.constant 2 : index
      %c0_144 = arith.constant 0 : index
      %c0_145 = arith.constant 0 : index
      %260 = vector.load %arg10[%c2_143, %c0_144, %c0_145] : memref<8x1x128xf32, #tpu.memory_space<vmem>>, vector<1x1x128xf32>
      tpu.vector_store %arg10[%c2_143, %c0_144, %c0_145], %259 {strides = array<i32>} : memref<8x1x128xf32, #tpu.memory_space<vmem>>, vector<1x1x128xf32>,
      %261 = vector.broadcast %16 : f32 to vector<1x1x128xf32>
      %262 = arith.mulf %211, %261 : vector<1x1x128xf32>
      %263 = vector.broadcast %17 : f32 to vector<1x1x128xf32>
      %264 = arith.mulf %213, %263 : vector<1x1x128xf32>
      %265 = arith.addf %262, %264 : vector<1x1x128xf32>
      %266 = vector.broadcast %18 : f32 to vector<1x1x128xf32>
      %267 = arith.mulf %215, %266 : vector<1x1x128xf32>
      %268 = arith.addf %265, %267 : vector<1x1x128xf32>
      %269 = vector.broadcast %19 : f32 to vector<1x1x128xf32>
      %270 = arith.mulf %217, %269 : vector<1x1x128xf32>
      %271 = arith.addf %268, %270 : vector<1x1x128xf32>
      %272 = vector.broadcast %20 : f32 to vector<1x1x128xf32>
      %273 = arith.mulf %219, %272 : vector<1x1x128xf32>
      %274 = arith.addf %271, %273 : vector<1x1x128xf32>
      %275 = vector.broadcast %21 : f32 to vector<1x1x128xf32>
      %276 = arith.mulf %221, %275 : vector<1x1x128xf32>
      %277 = arith.addf %274, %276 : vector<1x1x128xf32>
      %278 = vector.broadcast %22 : f32 to vector<1x1x128xf32>
      %279 = arith.mulf %223, %278 : vector<1x1x128xf32>
      %280 = arith.addf %277, %279 : vector<1x1x128xf32>
      %281 = vector.broadcast %23 : f32 to vector<1x1x128xf32>
      %282 = arith.mulf %225, %281 : vector<1x1x128xf32>
      %283 = arith.addf %280, %282 : vector<1x1x128xf32>
      %284 = arith.mulf %283, %233 : vector<1x1x128xf32>
      %285 = vector.broadcast %25 : f32 to vector<1x1x128xf32>
      %286 = arith.addf %284, %285 : vector<1x1x128xf32>
      %c3_146 = arith.constant 3 : index
      %c0_147 = arith.constant 0 : index
      %c0_148 = arith.constant 0 : index
      %287 = vector.load %arg10[%c3_146, %c0_147, %c0_148] : memref<8x1x128xf32, #tpu.memory_space<vmem>>, vector<1x1x128xf32>
      tpu.vector_store %arg10[%c3_146, %c0_147, %c0_148], %286 {strides = array<i32>} : memref<8x1x128xf32, #tpu.memory_space<vmem>>, vector<1x1x128xf32>,
      %c4_149 = arith.constant 4 : index
      %c0_150 = arith.constant 0 : index
      %c0_151 = arith.constant 0 : index
      %288 = vector.load %arg2[%c4_149, %c0_150, %c0_151] : memref<16x1x128xf32, #tpu.memory_space<vmem>>, vector<1x1x128xf32>
      %cst_152 = arith.constant 0.707106769 : f32
      %289 = vector.broadcast %cst_152 : f32 to vector<1x1x128xf32>
      %290 = arith.mulf %288, %289 : vector<1x1x128xf32>
      %c5_153 = arith.constant 5 : index
      %c0_154 = arith.constant 0 : index
      %c0_155 = arith.constant 0 : index
      %291 = vector.load %arg2[%c5_153, %c0_154, %c0_155] : memref<16x1x128xf32, #tpu.memory_space<vmem>>, vector<1x1x128xf32>
      %cst_156 = arith.constant 0.707106769 : f32
      %292 = vector.broadcast %cst_156 : f32 to vector<1x1x128xf32>
      %293 = arith.mulf %291, %292 : vector<1x1x128xf32>
      %c0_157 = arith.constant 0 : index
      %c0_158 = arith.constant 0 : index
      %c0_159 = arith.constant 0 : index
      %294 = vector.load %arg2[%c0_157, %c0_158, %c0_159] : memref<16x1x128xf32, #tpu.memory_space<vmem>>, vector<1x1x128xf32>
      %295 = arith.mulf %290, %294 : vector<1x1x128xf32>
      %c1_160 = arith.constant 1 : index
      %c0_161 = arith.constant 0 : index
      %c0_162 = arith.constant 0 : index
      %296 = vector.load %arg2[%c1_160, %c0_161, %c0_162] : memref<16x1x128xf32, #tpu.memory_space<vmem>>, vector<1x1x128xf32>
      %297 = arith.mulf %293, %296 : vector<1x1x128xf32>
      %298 = arith.addf %295, %297 : vector<1x1x128xf32>
      %c2_163 = arith.constant 2 : index
      %c0_164 = arith.constant 0 : index
      %c0_165 = arith.constant 0 : index
      %299 = vector.load %arg2[%c2_163, %c0_164, %c0_165] : memref<16x1x128xf32, #tpu.memory_space<vmem>>, vector<1x1x128xf32>
      %300 = arith.mulf %290, %299 : vector<1x1x128xf32>
      %c3_166 = arith.constant 3 : index
      %c0_167 = arith.constant 0 : index
      %c0_168 = arith.constant 0 : index
      %301 = vector.load %arg2[%c3_166, %c0_167, %c0_168] : memref<16x1x128xf32, #tpu.memory_space<vmem>>, vector<1x1x128xf32>
      %302 = arith.mulf %293, %301 : vector<1x1x128xf32>
      %303 = arith.addf %300, %302 : vector<1x1x128xf32>
      %c4_169 = arith.constant 4 : index
      %c0_170 = arith.constant 0 : index
      %c0_171 = arith.constant 0 : index
      %304 = vector.load %arg2[%c4_169, %c0_170, %c0_171] : memref<16x1x128xf32, #tpu.memory_space<vmem>>, vector<1x1x128xf32>
      %305 = arith.mulf %290, %304 : vector<1x1x128xf32>
      %c5_172 = arith.constant 5 : index
      %c0_173 = arith.constant 0 : index
      %c0_174 = arith.constant 0 : index
      %306 = vector.load %arg2[%c5_172, %c0_173, %c0_174] : memref<16x1x128xf32, #tpu.memory_space<vmem>>, vector<1x1x128xf32>
      %307 = arith.mulf %293, %306 : vector<1x1x128xf32>
      %308 = arith.addf %305, %307 : vector<1x1x128xf32>
      %c6_175 = arith.constant 6 : index
      %c0_176 = arith.constant 0 : index
      %c0_177 = arith.constant 0 : index
      %309 = vector.load %arg2[%c6_175, %c0_176, %c0_177] : memref<16x1x128xf32, #tpu.memory_space<vmem>>, vector<1x1x128xf32>
      %310 = arith.mulf %290, %309 : vector<1x1x128xf32>
      %c7_178 = arith.constant 7 : index
      %c0_179 = arith.constant 0 : index
      %c0_180 = arith.constant 0 : index
      %311 = vector.load %arg2[%c7_178, %c0_179, %c0_180] : memref<16x1x128xf32, #tpu.memory_space<vmem>>, vector<1x1x128xf32>
      %312 = arith.mulf %293, %311 : vector<1x1x128xf32>
      %313 = arith.addf %310, %312 : vector<1x1x128xf32>
      %c8_181 = arith.constant 8 : index
      %c0_182 = arith.constant 0 : index
      %c0_183 = arith.constant 0 : index
      %314 = vector.load %arg2[%c8_181, %c0_182, %c0_183] : memref<16x1x128xf32, #tpu.memory_space<vmem>>, vector<1x1x128xf32>
      %315 = arith.mulf %290, %314 : vector<1x1x128xf32>
      %c9_184 = arith.constant 9 : index
      %c0_185 = arith.constant 0 : index
      %c0_186 = arith.constant 0 : index
      %316 = vector.load %arg2[%c9_184, %c0_185, %c0_186] : memref<16x1x128xf32, #tpu.memory_space<vmem>>, vector<1x1x128xf32>
      %317 = arith.mulf %293, %316 : vector<1x1x128xf32>
      %318 = arith.addf %315, %317 : vector<1x1x128xf32>
      %c10_187 = arith.constant 10 : index
      %c0_188 = arith.constant 0 : index
      %c0_189 = arith.constant 0 : index
      %319 = vector.load %arg2[%c10_187, %c0_188, %c0_189] : memref<16x1x128xf32, #tpu.memory_space<vmem>>, vector<1x1x128xf32>
      %320 = arith.mulf %290, %319 : vector<1x1x128xf32>
      %c11_190 = arith.constant 11 : index
      %c0_191 = arith.constant 0 : index
      %c0_192 = arith.constant 0 : index
      %321 = vector.load %arg2[%c11_190, %c0_191, %c0_192] : memref<16x1x128xf32, #tpu.memory_space<vmem>>, vector<1x1x128xf32>
      %322 = arith.mulf %293, %321 : vector<1x1x128xf32>
      %323 = arith.addf %320, %322 : vector<1x1x128xf32>
      %c12_193 = arith.constant 12 : index
      %c0_194 = arith.constant 0 : index
      %c0_195 = arith.constant 0 : index
      %324 = vector.load %arg2[%c12_193, %c0_194, %c0_195] : memref<16x1x128xf32, #tpu.memory_space<vmem>>, vector<1x1x128xf32>
      %325 = arith.mulf %290, %324 : vector<1x1x128xf32>
      %c13_196 = arith.constant 13 : index
      %c0_197 = arith.constant 0 : index
      %c0_198 = arith.constant 0 : index
      %326 = vector.load %arg2[%c13_196, %c0_197, %c0_198] : memref<16x1x128xf32, #tpu.memory_space<vmem>>, vector<1x1x128xf32>
      %327 = arith.mulf %293, %326 : vector<1x1x128xf32>
      %328 = arith.addf %325, %327 : vector<1x1x128xf32>
      %c14_199 = arith.constant 14 : index
      %c0_200 = arith.constant 0 : index
      %c0_201 = arith.constant 0 : index
      %329 = vector.load %arg2[%c14_199, %c0_200, %c0_201] : memref<16x1x128xf32, #tpu.memory_space<vmem>>, vector<1x1x128xf32>
      %330 = arith.mulf %290, %329 : vector<1x1x128xf32>
      %c15_202 = arith.constant 15 : index
      %c0_203 = arith.constant 0 : index
      %c0_204 = arith.constant 0 : index
      %331 = vector.load %arg2[%c15_202, %c0_203, %c0_204] : memref<16x1x128xf32, #tpu.memory_space<vmem>>, vector<1x1x128xf32>
      %332 = arith.mulf %293, %331 : vector<1x1x128xf32>
      %333 = arith.addf %330, %332 : vector<1x1x128xf32>
      %334 = arith.maximumf %298, %303 : vector<1x1x128xf32>
      %335 = arith.maximumf %334, %308 : vector<1x1x128xf32>
      %336 = arith.maximumf %335, %313 : vector<1x1x128xf32>
      %337 = arith.maximumf %336, %318 : vector<1x1x128xf32>
      %338 = arith.maximumf %337, %323 : vector<1x1x128xf32>
      %339 = arith.maximumf %338, %328 : vector<1x1x128xf32>
      %340 = arith.maximumf %339, %333 : vector<1x1x128xf32>
      %341 = arith.subf %298, %340 : vector<1x1x128xf32>
      %342 = math.exp %341 : vector<1x1x128xf32>
      %343 = arith.subf %303, %340 : vector<1x1x128xf32>
      %344 = math.exp %343 : vector<1x1x128xf32>
      %345 = arith.subf %308, %340 : vector<1x1x128xf32>
      %346 = math.exp %345 : vector<1x1x128xf32>
      %347 = arith.subf %313, %340 : vector<1x1x128xf32>
      %348 = math.exp %347 : vector<1x1x128xf32>
      %349 = arith.subf %318, %340 : vector<1x1x128xf32>
      %350 = math.exp %349 : vector<1x1x128xf32>
      %351 = arith.subf %323, %340 : vector<1x1x128xf32>
      %352 = math.exp %351 : vector<1x1x128xf32>
      %353 = arith.subf %328, %340 : vector<1x1x128xf32>
      %354 = math.exp %353 : vector<1x1x128xf32>
      %355 = arith.subf %333, %340 : vector<1x1x128xf32>
      %356 = math.exp %355 : vector<1x1x128xf32>
      %357 = arith.addf %342, %344 : vector<1x1x128xf32>
      %358 = arith.addf %357, %346 : vector<1x1x128xf32>
      %359 = arith.addf %358, %348 : vector<1x1x128xf32>
      %360 = arith.addf %359, %350 : vector<1x1x128xf32>
      %361 = arith.addf %360, %352 : vector<1x1x128xf32>
      %362 = arith.addf %361, %354 : vector<1x1x128xf32>
      %363 = arith.addf %362, %356 : vector<1x1x128xf32>
      %364 = tpu.reciprocal %363 : vector<1x1x128xf32> -> vector<1x1x128xf32>
      %365 = vector.broadcast %8 : f32 to vector<1x1x128xf32>
      %366 = arith.mulf %342, %365 : vector<1x1x128xf32>
      %367 = vector.broadcast %9 : f32 to vector<1x1x128xf32>
      %368 = arith.mulf %344, %367 : vector<1x1x128xf32>
      %369 = arith.addf %366, %368 : vector<1x1x128xf32>
      %370 = vector.broadcast %10 : f32 to vector<1x1x128xf32>
      %371 = arith.mulf %346, %370 : vector<1x1x128xf32>
      %372 = arith.addf %369, %371 : vector<1x1x128xf32>
      %373 = vector.broadcast %11 : f32 to vector<1x1x128xf32>
      %374 = arith.mulf %348, %373 : vector<1x1x128xf32>
      %375 = arith.addf %372, %374 : vector<1x1x128xf32>
      %376 = vector.broadcast %12 : f32 to vector<1x1x128xf32>
      %377 = arith.mulf %350, %376 : vector<1x1x128xf32>
      %378 = arith.addf %375, %377 : vector<1x1x128xf32>
      %379 = vector.broadcast %13 : f32 to vector<1x1x128xf32>
      %380 = arith.mulf %352, %379 : vector<1x1x128xf32>
      %381 = arith.addf %378, %380 : vector<1x1x128xf32>
      %382 = vector.broadcast %14 : f32 to vector<1x1x128xf32>
      %383 = arith.mulf %354, %382 : vector<1x1x128xf32>
      %384 = arith.addf %381, %383 : vector<1x1x128xf32>
      %385 = vector.broadcast %15 : f32 to vector<1x1x128xf32>
      %386 = arith.mulf %356, %385 : vector<1x1x128xf32>
      %387 = arith.addf %384, %386 : vector<1x1x128xf32>
      %388 = arith.mulf %387, %364 : vector<1x1x128xf32>
      %389 = vector.broadcast %24 : f32 to vector<1x1x128xf32>
      %390 = arith.addf %388, %389 : vector<1x1x128xf32>
      %c4_205 = arith.constant 4 : index
      %c0_206 = arith.constant 0 : index
      %c0_207 = arith.constant 0 : index
      %391 = vector.load %arg10[%c4_205, %c0_206, %c0_207] : memref<8x1x128xf32, #tpu.memory_space<vmem>>, vector<1x1x128xf32>
      tpu.vector_store %arg10[%c4_205, %c0_206, %c0_207], %390 {strides = array<i32>} : memref<8x1x128xf32, #tpu.memory_space<vmem>>, vector<1x1x128xf32>,
      %392 = vector.broadcast %16 : f32 to vector<1x1x128xf32>
      %393 = arith.mulf %342, %392 : vector<1x1x128xf32>
      %394 = vector.broadcast %17 : f32 to vector<1x1x128xf32>
      %395 = arith.mulf %344, %394 : vector<1x1x128xf32>
      %396 = arith.addf %393, %395 : vector<1x1x128xf32>
      %397 = vector.broadcast %18 : f32 to vector<1x1x128xf32>
      %398 = arith.mulf %346, %397 : vector<1x1x128xf32>
      %399 = arith.addf %396, %398 : vector<1x1x128xf32>
      %400 = vector.broadcast %19 : f32 to vector<1x1x128xf32>
      %401 = arith.mulf %348, %400 : vector<1x1x128xf32>
      %402 = arith.addf %399, %401 : vector<1x1x128xf32>
      %403 = vector.broadcast %20 : f32 to vector<1x1x128xf32>
      %404 = arith.mulf %350, %403 : vector<1x1x128xf32>
      %405 = arith.addf %402, %404 : vector<1x1x128xf32>
      %406 = vector.broadcast %21 : f32 to vector<1x1x128xf32>
      %407 = arith.mulf %352, %406 : vector<1x1x128xf32>
      %408 = arith.addf %405, %407 : vector<1x1x128xf32>
      %409 = vector.broadcast %22 : f32 to vector<1x1x128xf32>
      %410 = arith.mulf %354, %409 : vector<1x1x128xf32>
      %411 = arith.addf %408, %410 : vector<1x1x128xf32>
      %412 = vector.broadcast %23 : f32 to vector<1x1x128xf32>
      %413 = arith.mulf %356, %412 : vector<1x1x128xf32>
      %414 = arith.addf %411, %413 : vector<1x1x128xf32>
      %415 = arith.mulf %414, %364 : vector<1x1x128xf32>
      %416 = vector.broadcast %25 : f32 to vector<1x1x128xf32>
      %417 = arith.addf %415, %416 : vector<1x1x128xf32>
      %c5_208 = arith.constant 5 : index
      %c0_209 = arith.constant 0 : index
      %c0_210 = arith.constant 0 : index
      %418 = vector.load %arg10[%c5_208, %c0_209, %c0_210] : memref<8x1x128xf32, #tpu.memory_space<vmem>>, vector<1x1x128xf32>
      tpu.vector_store %arg10[%c5_208, %c0_209, %c0_210], %417 {strides = array<i32>} : memref<8x1x128xf32, #tpu.memory_space<vmem>>, vector<1x1x128xf32>,
      %c6_211 = arith.constant 6 : index
      %c0_212 = arith.constant 0 : index
      %c0_213 = arith.constant 0 : index
      %419 = vector.load %arg2[%c6_211, %c0_212, %c0_213] : memref<16x1x128xf32, #tpu.memory_space<vmem>>, vector<1x1x128xf32>
      %cst_214 = arith.constant 0.707106769 : f32
      %420 = vector.broadcast %cst_214 : f32 to vector<1x1x128xf32>
      %421 = arith.mulf %419, %420 : vector<1x1x128xf32>
      %c7_215 = arith.constant 7 : index
      %c0_216 = arith.constant 0 : index
      %c0_217 = arith.constant 0 : index
      %422 = vector.load %arg2[%c7_215, %c0_216, %c0_217] : memref<16x1x128xf32, #tpu.memory_space<vmem>>, vector<1x1x128xf32>
      %cst_218 = arith.constant 0.707106769 : f32
      %423 = vector.broadcast %cst_218 : f32 to vector<1x1x128xf32>
      %424 = arith.mulf %422, %423 : vector<1x1x128xf32>
      %c0_219 = arith.constant 0 : index
      %c0_220 = arith.constant 0 : index
      %c0_221 = arith.constant 0 : index
      %425 = vector.load %arg2[%c0_219, %c0_220, %c0_221] : memref<16x1x128xf32, #tpu.memory_space<vmem>>, vector<1x1x128xf32>
      %426 = arith.mulf %421, %425 : vector<1x1x128xf32>
      %c1_222 = arith.constant 1 : index
      %c0_223 = arith.constant 0 : index
      %c0_224 = arith.constant 0 : index
      %427 = vector.load %arg2[%c1_222, %c0_223, %c0_224] : memref<16x1x128xf32, #tpu.memory_space<vmem>>, vector<1x1x128xf32>
      %428 = arith.mulf %424, %427 : vector<1x1x128xf32>
      %429 = arith.addf %426, %428 : vector<1x1x128xf32>
      %c2_225 = arith.constant 2 : index
      %c0_226 = arith.constant 0 : index
      %c0_227 = arith.constant 0 : index
      %430 = vector.load %arg2[%c2_225, %c0_226, %c0_227] : memref<16x1x128xf32, #tpu.memory_space<vmem>>, vector<1x1x128xf32>
      %431 = arith.mulf %421, %430 : vector<1x1x128xf32>
      %c3_228 = arith.constant 3 : index
      %c0_229 = arith.constant 0 : index
      %c0_230 = arith.constant 0 : index
      %432 = vector.load %arg2[%c3_228, %c0_229, %c0_230] : memref<16x1x128xf32, #tpu.memory_space<vmem>>, vector<1x1x128xf32>
      %433 = arith.mulf %424, %432 : vector<1x1x128xf32>
      %434 = arith.addf %431, %433 : vector<1x1x128xf32>
      %c4_231 = arith.constant 4 : index
      %c0_232 = arith.constant 0 : index
      %c0_233 = arith.constant 0 : index
      %435 = vector.load %arg2[%c4_231, %c0_232, %c0_233] : memref<16x1x128xf32, #tpu.memory_space<vmem>>, vector<1x1x128xf32>
      %436 = arith.mulf %421, %435 : vector<1x1x128xf32>
      %c5_234 = arith.constant 5 : index
      %c0_235 = arith.constant 0 : index
      %c0_236 = arith.constant 0 : index
      %437 = vector.load %arg2[%c5_234, %c0_235, %c0_236] : memref<16x1x128xf32, #tpu.memory_space<vmem>>, vector<1x1x128xf32>
      %438 = arith.mulf %424, %437 : vector<1x1x128xf32>
      %439 = arith.addf %436, %438 : vector<1x1x128xf32>
      %c6_237 = arith.constant 6 : index
      %c0_238 = arith.constant 0 : index
      %c0_239 = arith.constant 0 : index
      %440 = vector.load %arg2[%c6_237, %c0_238, %c0_239] : memref<16x1x128xf32, #tpu.memory_space<vmem>>, vector<1x1x128xf32>
      %441 = arith.mulf %421, %440 : vector<1x1x128xf32>
      %c7_240 = arith.constant 7 : index
      %c0_241 = arith.constant 0 : index
      %c0_242 = arith.constant 0 : index
      %442 = vector.load %arg2[%c7_240, %c0_241, %c0_242] : memref<16x1x128xf32, #tpu.memory_space<vmem>>, vector<1x1x128xf32>
      %443 = arith.mulf %424, %442 : vector<1x1x128xf32>
      %444 = arith.addf %441, %443 : vector<1x1x128xf32>
      %c8_243 = arith.constant 8 : index
      %c0_244 = arith.constant 0 : index
      %c0_245 = arith.constant 0 : index
      %445 = vector.load %arg2[%c8_243, %c0_244, %c0_245] : memref<16x1x128xf32, #tpu.memory_space<vmem>>, vector<1x1x128xf32>
      %446 = arith.mulf %421, %445 : vector<1x1x128xf32>
      %c9_246 = arith.constant 9 : index
      %c0_247 = arith.constant 0 : index
      %c0_248 = arith.constant 0 : index
      %447 = vector.load %arg2[%c9_246, %c0_247, %c0_248] : memref<16x1x128xf32, #tpu.memory_space<vmem>>, vector<1x1x128xf32>
      %448 = arith.mulf %424, %447 : vector<1x1x128xf32>
      %449 = arith.addf %446, %448 : vector<1x1x128xf32>
      %c10_249 = arith.constant 10 : index
      %c0_250 = arith.constant 0 : index
      %c0_251 = arith.constant 0 : index
      %450 = vector.load %arg2[%c10_249, %c0_250, %c0_251] : memref<16x1x128xf32, #tpu.memory_space<vmem>>, vector<1x1x128xf32>
      %451 = arith.mulf %421, %450 : vector<1x1x128xf32>
      %c11_252 = arith.constant 11 : index
      %c0_253 = arith.constant 0 : index
      %c0_254 = arith.constant 0 : index
      %452 = vector.load %arg2[%c11_252, %c0_253, %c0_254] : memref<16x1x128xf32, #tpu.memory_space<vmem>>, vector<1x1x128xf32>
      %453 = arith.mulf %424, %452 : vector<1x1x128xf32>
      %454 = arith.addf %451, %453 : vector<1x1x128xf32>
      %c12_255 = arith.constant 12 : index
      %c0_256 = arith.constant 0 : index
      %c0_257 = arith.constant 0 : index
      %455 = vector.load %arg2[%c12_255, %c0_256, %c0_257] : memref<16x1x128xf32, #tpu.memory_space<vmem>>, vector<1x1x128xf32>
      %456 = arith.mulf %421, %455 : vector<1x1x128xf32>
      %c13_258 = arith.constant 13 : index
      %c0_259 = arith.constant 0 : index
      %c0_260 = arith.constant 0 : index
      %457 = vector.load %arg2[%c13_258, %c0_259, %c0_260] : memref<16x1x128xf32, #tpu.memory_space<vmem>>, vector<1x1x128xf32>
      %458 = arith.mulf %424, %457 : vector<1x1x128xf32>
      %459 = arith.addf %456, %458 : vector<1x1x128xf32>
      %c14_261 = arith.constant 14 : index
      %c0_262 = arith.constant 0 : index
      %c0_263 = arith.constant 0 : index
      %460 = vector.load %arg2[%c14_261, %c0_262, %c0_263] : memref<16x1x128xf32, #tpu.memory_space<vmem>>, vector<1x1x128xf32>
      %461 = arith.mulf %421, %460 : vector<1x1x128xf32>
      %c15_264 = arith.constant 15 : index
      %c0_265 = arith.constant 0 : index
      %c0_266 = arith.constant 0 : index
      %462 = vector.load %arg2[%c15_264, %c0_265, %c0_266] : memref<16x1x128xf32, #tpu.memory_space<vmem>>, vector<1x1x128xf32>
      %463 = arith.mulf %424, %462 : vector<1x1x128xf32>
      %464 = arith.addf %461, %463 : vector<1x1x128xf32>
      %465 = arith.maximumf %429, %434 : vector<1x1x128xf32>
      %466 = arith.maximumf %465, %439 : vector<1x1x128xf32>
      %467 = arith.maximumf %466, %444 : vector<1x1x128xf32>
      %468 = arith.maximumf %467, %449 : vector<1x1x128xf32>
      %469 = arith.maximumf %468, %454 : vector<1x1x128xf32>
      %470 = arith.maximumf %469, %459 : vector<1x1x128xf32>
      %471 = arith.maximumf %470, %464 : vector<1x1x128xf32>
      %472 = arith.subf %429, %471 : vector<1x1x128xf32>
      %473 = math.exp %472 : vector<1x1x128xf32>
      %474 = arith.subf %434, %471 : vector<1x1x128xf32>
      %475 = math.exp %474 : vector<1x1x128xf32>
      %476 = arith.subf %439, %471 : vector<1x1x128xf32>
      %477 = math.exp %476 : vector<1x1x128xf32>
      %478 = arith.subf %444, %471 : vector<1x1x128xf32>
      %479 = math.exp %478 : vector<1x1x128xf32>
      %480 = arith.subf %449, %471 : vector<1x1x128xf32>
      %481 = math.exp %480 : vector<1x1x128xf32>
      %482 = arith.subf %454, %471 : vector<1x1x128xf32>
      %483 = math.exp %482 : vector<1x1x128xf32>
      %484 = arith.subf %459, %471 : vector<1x1x128xf32>
      %485 = math.exp %484 : vector<1x1x128xf32>
      %486 = arith.subf %464, %471 : vector<1x1x128xf32>
      %487 = math.exp %486 : vector<1x1x128xf32>
      %488 = arith.addf %473, %475 : vector<1x1x128xf32>
      %489 = arith.addf %488, %477 : vector<1x1x128xf32>
      %490 = arith.addf %489, %479 : vector<1x1x128xf32>
      %491 = arith.addf %490, %481 : vector<1x1x128xf32>
      %492 = arith.addf %491, %483 : vector<1x1x128xf32>
      %493 = arith.addf %492, %485 : vector<1x1x128xf32>
      %494 = arith.addf %493, %487 : vector<1x1x128xf32>
      %495 = tpu.reciprocal %494 : vector<1x1x128xf32> -> vector<1x1x128xf32>
      %496 = vector.broadcast %8 : f32 to vector<1x1x128xf32>
      %497 = arith.mulf %473, %496 : vector<1x1x128xf32>
      %498 = vector.broadcast %9 : f32 to vector<1x1x128xf32>
      %499 = arith.mulf %475, %498 : vector<1x1x128xf32>
      %500 = arith.addf %497, %499 : vector<1x1x128xf32>
      %501 = vector.broadcast %10 : f32 to vector<1x1x128xf32>
      %502 = arith.mulf %477, %501 : vector<1x1x128xf32>
      %503 = arith.addf %500, %502 : vector<1x1x128xf32>
      %504 = vector.broadcast %11 : f32 to vector<1x1x128xf32>
      %505 = arith.mulf %479, %504 : vector<1x1x128xf32>
      %506 = arith.addf %503, %505 : vector<1x1x128xf32>
      %507 = vector.broadcast %12 : f32 to vector<1x1x128xf32>
      %508 = arith.mulf %481, %507 : vector<1x1x128xf32>
      %509 = arith.addf %506, %508 : vector<1x1x128xf32>
      %510 = vector.broadcast %13 : f32 to vector<1x1x128xf32>
      %511 = arith.mulf %483, %510 : vector<1x1x128xf32>
      %512 = arith.addf %509, %511 : vector<1x1x128xf32>
      %513 = vector.broadcast %14 : f32 to vector<1x1x128xf32>
      %514 = arith.mulf %485, %513 : vector<1x1x128xf32>
      %515 = arith.addf %512, %514 : vector<1x1x128xf32>
      %516 = vector.broadcast %15 : f32 to vector<1x1x128xf32>
      %517 = arith.mulf %487, %516 : vector<1x1x128xf32>
      %518 = arith.addf %515, %517 : vector<1x1x128xf32>
      %519 = arith.mulf %518, %495 : vector<1x1x128xf32>
      %520 = vector.broadcast %24 : f32 to vector<1x1x128xf32>
      %521 = arith.addf %519, %520 : vector<1x1x128xf32>
      %c6_267 = arith.constant 6 : index
      %c0_268 = arith.constant 0 : index
      %c0_269 = arith.constant 0 : index
      %522 = vector.load %arg10[%c6_267, %c0_268, %c0_269] : memref<8x1x128xf32, #tpu.memory_space<vmem>>, vector<1x1x128xf32>
      tpu.vector_store %arg10[%c6_267, %c0_268, %c0_269], %521 {strides = array<i32>} : memref<8x1x128xf32, #tpu.memory_space<vmem>>, vector<1x1x128xf32>,
      %523 = vector.broadcast %16 : f32 to vector<1x1x128xf32>
      %524 = arith.mulf %473, %523 : vector<1x1x128xf32>
      %525 = vector.broadcast %17 : f32 to vector<1x1x128xf32>
      %526 = arith.mulf %475, %525 : vector<1x1x128xf32>
      %527 = arith.addf %524, %526 : vector<1x1x128xf32>
      %528 = vector.broadcast %18 : f32 to vector<1x1x128xf32>
      %529 = arith.mulf %477, %528 : vector<1x1x128xf32>
      %530 = arith.addf %527, %529 : vector<1x1x128xf32>
      %531 = vector.broadcast %19 : f32 to vector<1x1x128xf32>
      %532 = arith.mulf %479, %531 : vector<1x1x128xf32>
      %533 = arith.addf %530, %532 : vector<1x1x128xf32>
      %534 = vector.broadcast %20 : f32 to vector<1x1x128xf32>
      %535 = arith.mulf %481, %534 : vector<1x1x128xf32>
      %536 = arith.addf %533, %535 : vector<1x1x128xf32>
      %537 = vector.broadcast %21 : f32 to vector<1x1x128xf32>
      %538 = arith.mulf %483, %537 : vector<1x1x128xf32>
      %539 = arith.addf %536, %538 : vector<1x1x128xf32>
      %540 = vector.broadcast %22 : f32 to vector<1x1x128xf32>
      %541 = arith.mulf %485, %540 : vector<1x1x128xf32>
      %542 = arith.addf %539, %541 : vector<1x1x128xf32>
      %543 = vector.broadcast %23 : f32 to vector<1x1x128xf32>
      %544 = arith.mulf %487, %543 : vector<1x1x128xf32>
      %545 = arith.addf %542, %544 : vector<1x1x128xf32>
      %546 = arith.mulf %545, %495 : vector<1x1x128xf32>
      %547 = vector.broadcast %25 : f32 to vector<1x1x128xf32>
      %548 = arith.addf %546, %547 : vector<1x1x128xf32>
      %c7_270 = arith.constant 7 : index
      %c0_271 = arith.constant 0 : index
      %c0_272 = arith.constant 0 : index
      %549 = vector.load %arg10[%c7_270, %c0_271, %c0_272] : memref<8x1x128xf32, #tpu.memory_space<vmem>>, vector<1x1x128xf32>
      tpu.vector_store %arg10[%c7_270, %c0_271, %c0_272], %548 {strides = array<i32>} : memref<8x1x128xf32, #tpu.memory_space<vmem>>, vector<1x1x128xf32>,
      %c0_273 = arith.constant 0 : index
      %c0_274 = arith.constant 0 : index
      %550 = memref.load %arg5[%c0_273, %c0_274] : memref<4x4xf32, #tpu.memory_space<smem>>
      %c0_275 = arith.constant 0 : index
      %c1_276 = arith.constant 1 : index
      %551 = memref.load %arg5[%c0_275, %c1_276] : memref<4x4xf32, #tpu.memory_space<smem>>
      %c0_277 = arith.constant 0 : index
      %c2_278 = arith.constant 2 : index
      %552 = memref.load %arg5[%c0_277, %c2_278] : memref<4x4xf32, #tpu.memory_space<smem>>
      %c0_279 = arith.constant 0 : index
      %c3_280 = arith.constant 3 : index
      %553 = memref.load %arg5[%c0_279, %c3_280] : memref<4x4xf32, #tpu.memory_space<smem>>
      %c1_281 = arith.constant 1 : index
      %c0_282 = arith.constant 0 : index
      %554 = memref.load %arg5[%c1_281, %c0_282] : memref<4x4xf32, #tpu.memory_space<smem>>
      %c1_283 = arith.constant 1 : index
      %c1_284 = arith.constant 1 : index
      %555 = memref.load %arg5[%c1_283, %c1_284] : memref<4x4xf32, #tpu.memory_space<smem>>
      %c1_285 = arith.constant 1 : index
      %c2_286 = arith.constant 2 : index
      %556 = memref.load %arg5[%c1_285, %c2_286] : memref<4x4xf32, #tpu.memory_space<smem>>
      %c1_287 = arith.constant 1 : index
      %c3_288 = arith.constant 3 : index
      %557 = memref.load %arg5[%c1_287, %c3_288] : memref<4x4xf32, #tpu.memory_space<smem>>
      %c2_289 = arith.constant 2 : index
      %c0_290 = arith.constant 0 : index
      %558 = memref.load %arg5[%c2_289, %c0_290] : memref<4x4xf32, #tpu.memory_space<smem>>
      %c2_291 = arith.constant 2 : index
      %c1_292 = arith.constant 1 : index
      %559 = memref.load %arg5[%c2_291, %c1_292] : memref<4x4xf32, #tpu.memory_space<smem>>
      %c2_293 = arith.constant 2 : index
      %c2_294 = arith.constant 2 : index
      %560 = memref.load %arg5[%c2_293, %c2_294] : memref<4x4xf32, #tpu.memory_space<smem>>
      %c2_295 = arith.constant 2 : index
      %c3_296 = arith.constant 3 : index
      %561 = memref.load %arg5[%c2_295, %c3_296] : memref<4x4xf32, #tpu.memory_space<smem>>
      %c3_297 = arith.constant 3 : index
      %c0_298 = arith.constant 0 : index
      %562 = memref.load %arg5[%c3_297, %c0_298] : memref<4x4xf32, #tpu.memory_space<smem>>
      %c3_299 = arith.constant 3 : index
      %c1_300 = arith.constant 1 : index
      %563 = memref.load %arg5[%c3_299, %c1_300] : memref<4x4xf32, #tpu.memory_space<smem>>
      %c3_301 = arith.constant 3 : index
      %c2_302 = arith.constant 2 : index
      %564 = memref.load %arg5[%c3_301, %c2_302] : memref<4x4xf32, #tpu.memory_space<smem>>
      %c3_303 = arith.constant 3 : index
      %c3_304 = arith.constant 3 : index
      %565 = memref.load %arg5[%c3_303, %c3_304] : memref<4x4xf32, #tpu.memory_space<smem>>
      %c0_305 = arith.constant 0 : index
      %566 = memref.load %arg6[%c0_305] : memref<4xf32, #tpu.memory_space<smem>>
      %c1_306 = arith.constant 1 : index
      %567 = memref.load %arg6[%c1_306] : memref<4xf32, #tpu.memory_space<smem>>
      %c2_307 = arith.constant 2 : index
      %568 = memref.load %arg6[%c2_307] : memref<4xf32, #tpu.memory_space<smem>>
      %c3_308 = arith.constant 3 : index
      %569 = memref.load %arg6[%c3_308] : memref<4xf32, #tpu.memory_space<smem>>
      %c0_309 = arith.constant 0 : index
      %c0_310 = arith.constant 0 : index
      %c0_311 = arith.constant 0 : index
      %570 = vector.load %arg2[%c0_309, %c0_310, %c0_311] : memref<16x1x128xf32, #tpu.memory_space<vmem>>, vector<1x1x128xf32>
      %cst_312 = arith.constant 5.000000e-01 : f32
      %571 = vector.broadcast %cst_312 : f32 to vector<1x1x128xf32>
      %572 = arith.mulf %570, %571 : vector<1x1x128xf32>
      %c1_313 = arith.constant 1 : index
      %c0_314 = arith.constant 0 : index
      %c0_315 = arith.constant 0 : index
      %573 = vector.load %arg2[%c1_313, %c0_314, %c0_315] : memref<16x1x128xf32, #tpu.memory_space<vmem>>, vector<1x1x128xf32>
      %cst_316 = arith.constant 5.000000e-01 : f32
      %574 = vector.broadcast %cst_316 : f32 to vector<1x1x128xf32>
      %575 = arith.mulf %573, %574 : vector<1x1x128xf32>
      %c2_317 = arith.constant 2 : index
      %c0_318 = arith.constant 0 : index
      %c0_319 = arith.constant 0 : index
      %576 = vector.load %arg2[%c2_317, %c0_318, %c0_319] : memref<16x1x128xf32, #tpu.memory_space<vmem>>, vector<1x1x128xf32>
      %cst_320 = arith.constant 5.000000e-01 : f32
      %577 = vector.broadcast %cst_320 : f32 to vector<1x1x128xf32>
      %578 = arith.mulf %576, %577 : vector<1x1x128xf32>
      %c3_321 = arith.constant 3 : index
      %c0_322 = arith.constant 0 : index
      %c0_323 = arith.constant 0 : index
      %579 = vector.load %arg2[%c3_321, %c0_322, %c0_323] : memref<16x1x128xf32, #tpu.memory_space<vmem>>, vector<1x1x128xf32>
      %cst_324 = arith.constant 5.000000e-01 : f32
      %580 = vector.broadcast %cst_324 : f32 to vector<1x1x128xf32>
      %581 = arith.mulf %579, %580 : vector<1x1x128xf32>
      %c0_325 = arith.constant 0 : index
      %c0_326 = arith.constant 0 : index
      %c0_327 = arith.constant 0 : index
      %582 = vector.load %arg2[%c0_325, %c0_326, %c0_327] : memref<16x1x128xf32, #tpu.memory_space<vmem>>, vector<1x1x128xf32>
      %583 = arith.mulf %572, %582 : vector<1x1x128xf32>
      %c1_328 = arith.constant 1 : index
      %c0_329 = arith.constant 0 : index
      %c0_330 = arith.constant 0 : index
      %584 = vector.load %arg2[%c1_328, %c0_329, %c0_330] : memref<16x1x128xf32, #tpu.memory_space<vmem>>, vector<1x1x128xf32>
      %585 = arith.mulf %575, %584 : vector<1x1x128xf32>
      %586 = arith.addf %583, %585 : vector<1x1x128xf32>
      %c2_331 = arith.constant 2 : index
      %c0_332 = arith.constant 0 : index
      %c0_333 = arith.constant 0 : index
      %587 = vector.load %arg2[%c2_331, %c0_332, %c0_333] : memref<16x1x128xf32, #tpu.memory_space<vmem>>, vector<1x1x128xf32>
      %588 = arith.mulf %578, %587 : vector<1x1x128xf32>
      %589 = arith.addf %586, %588 : vector<1x1x128xf32>
      %c3_334 = arith.constant 3 : index
      %c0_335 = arith.constant 0 : index
      %c0_336 = arith.constant 0 : index
      %590 = vector.load %arg2[%c3_334, %c0_335, %c0_336] : memref<16x1x128xf32, #tpu.memory_space<vmem>>, vector<1x1x128xf32>
      %591 = arith.mulf %581, %590 : vector<1x1x128xf32>
      %592 = arith.addf %589, %591 : vector<1x1x128xf32>
      %c4_337 = arith.constant 4 : index
      %c0_338 = arith.constant 0 : index
      %c0_339 = arith.constant 0 : index
      %593 = vector.load %arg2[%c4_337, %c0_338, %c0_339] : memref<16x1x128xf32, #tpu.memory_space<vmem>>, vector<1x1x128xf32>
      %594 = arith.mulf %572, %593 : vector<1x1x128xf32>
      %c5_340 = arith.constant 5 : index
      %c0_341 = arith.constant 0 : index
      %c0_342 = arith.constant 0 : index
      %595 = vector.load %arg2[%c5_340, %c0_341, %c0_342] : memref<16x1x128xf32, #tpu.memory_space<vmem>>, vector<1x1x128xf32>
      %596 = arith.mulf %575, %595 : vector<1x1x128xf32>
      %597 = arith.addf %594, %596 : vector<1x1x128xf32>
      %c6_343 = arith.constant 6 : index
      %c0_344 = arith.constant 0 : index
      %c0_345 = arith.constant 0 : index
      %598 = vector.load %arg2[%c6_343, %c0_344, %c0_345] : memref<16x1x128xf32, #tpu.memory_space<vmem>>, vector<1x1x128xf32>
      %599 = arith.mulf %578, %598 : vector<1x1x128xf32>
      %600 = arith.addf %597, %599 : vector<1x1x128xf32>
      %c7_346 = arith.constant 7 : index
      %c0_347 = arith.constant 0 : index
      %c0_348 = arith.constant 0 : index
      %601 = vector.load %arg2[%c7_346, %c0_347, %c0_348] : memref<16x1x128xf32, #tpu.memory_space<vmem>>, vector<1x1x128xf32>
      %602 = arith.mulf %581, %601 : vector<1x1x128xf32>
      %603 = arith.addf %600, %602 : vector<1x1x128xf32>
      %c8_349 = arith.constant 8 : index
      %c0_350 = arith.constant 0 : index
      %c0_351 = arith.constant 0 : index
      %604 = vector.load %arg2[%c8_349, %c0_350, %c0_351] : memref<16x1x128xf32, #tpu.memory_space<vmem>>, vector<1x1x128xf32>
      %605 = arith.mulf %572, %604 : vector<1x1x128xf32>
      %c9_352 = arith.constant 9 : index
      %c0_353 = arith.constant 0 : index
      %c0_354 = arith.constant 0 : index
      %606 = vector.load %arg2[%c9_352, %c0_353, %c0_354] : memref<16x1x128xf32, #tpu.memory_space<vmem>>, vector<1x1x128xf32>
      %607 = arith.mulf %575, %606 : vector<1x1x128xf32>
      %608 = arith.addf %605, %607 : vector<1x1x128xf32>
      %c10_355 = arith.constant 10 : index
      %c0_356 = arith.constant 0 : index
      %c0_357 = arith.constant 0 : index
      %609 = vector.load %arg2[%c10_355, %c0_356, %c0_357] : memref<16x1x128xf32, #tpu.memory_space<vmem>>, vector<1x1x128xf32>
      %610 = arith.mulf %578, %609 : vector<1x1x128xf32>
      %611 = arith.addf %608, %610 : vector<1x1x128xf32>
      %c11_358 = arith.constant 11 : index
      %c0_359 = arith.constant 0 : index
      %c0_360 = arith.constant 0 : index
      %612 = vector.load %arg2[%c11_358, %c0_359, %c0_360] : memref<16x1x128xf32, #tpu.memory_space<vmem>>, vector<1x1x128xf32>
      %613 = arith.mulf %581, %612 : vector<1x1x128xf32>
      %614 = arith.addf %611, %613 : vector<1x1x128xf32>
      %c12_361 = arith.constant 12 : index
      %c0_362 = arith.constant 0 : index
      %c0_363 = arith.constant 0 : index
      %615 = vector.load %arg2[%c12_361, %c0_362, %c0_363] : memref<16x1x128xf32, #tpu.memory_space<vmem>>, vector<1x1x128xf32>
      %616 = arith.mulf %572, %615 : vector<1x1x128xf32>
      %c13_364 = arith.constant 13 : index
      %c0_365 = arith.constant 0 : index
      %c0_366 = arith.constant 0 : index
      %617 = vector.load %arg2[%c13_364, %c0_365, %c0_366] : memref<16x1x128xf32, #tpu.memory_space<vmem>>, vector<1x1x128xf32>
      %618 = arith.mulf %575, %617 : vector<1x1x128xf32>
      %619 = arith.addf %616, %618 : vector<1x1x128xf32>
      %c14_367 = arith.constant 14 : index
      %c0_368 = arith.constant 0 : index
      %c0_369 = arith.constant 0 : index
      %620 = vector.load %arg2[%c14_367, %c0_368, %c0_369] : memref<16x1x128xf32, #tpu.memory_space<vmem>>, vector<1x1x128xf32>
      %621 = arith.mulf %578, %620 : vector<1x1x128xf32>
      %622 = arith.addf %619, %621 : vector<1x1x128xf32>
      %c15_370 = arith.constant 15 : index
      %c0_371 = arith.constant 0 : index
      %c0_372 = arith.constant 0 : index
      %623 = vector.load %arg2[%c15_370, %c0_371, %c0_372] : memref<16x1x128xf32, #tpu.memory_space<vmem>>, vector<1x1x128xf32>
      %624 = arith.mulf %581, %623 : vector<1x1x128xf32>
      %625 = arith.addf %622, %624 : vector<1x1x128xf32>
      %626 = arith.maximumf %592, %603 : vector<1x1x128xf32>
      %627 = arith.maximumf %626, %614 : vector<1x1x128xf32>
      %628 = arith.maximumf %627, %625 : vector<1x1x128xf32>
      %629 = arith.subf %592, %628 : vector<1x1x128xf32>
      %630 = math.exp %629 : vector<1x1x128xf32>
      %631 = arith.subf %603, %628 : vector<1x1x128xf32>
      %632 = math.exp %631 : vector<1x1x128xf32>
      %633 = arith.subf %614, %628 : vector<1x1x128xf32>
      %634 = math.exp %633 : vector<1x1x128xf32>
      %635 = arith.subf %625, %628 : vector<1x1x128xf32>
      %636 = math.exp %635 : vector<1x1x128xf32>
      %637 = arith.addf %630, %632 : vector<1x1x128xf32>
      %638 = arith.addf %637, %634 : vector<1x1x128xf32>
      %639 = arith.addf %638, %636 : vector<1x1x128xf32>
      %640 = tpu.reciprocal %639 : vector<1x1x128xf32> -> vector<1x1x128xf32>
      %641 = vector.broadcast %550 : f32 to vector<1x1x128xf32>
      %642 = arith.mulf %630, %641 : vector<1x1x128xf32>
      %643 = vector.broadcast %551 : f32 to vector<1x1x128xf32>
      %644 = arith.mulf %632, %643 : vector<1x1x128xf32>
      %645 = arith.addf %642, %644 : vector<1x1x128xf32>
      %646 = vector.broadcast %552 : f32 to vector<1x1x128xf32>
      %647 = arith.mulf %634, %646 : vector<1x1x128xf32>
      %648 = arith.addf %645, %647 : vector<1x1x128xf32>
      %649 = vector.broadcast %553 : f32 to vector<1x1x128xf32>
      %650 = arith.mulf %636, %649 : vector<1x1x128xf32>
      %651 = arith.addf %648, %650 : vector<1x1x128xf32>
      %652 = arith.mulf %651, %640 : vector<1x1x128xf32>
      %653 = vector.broadcast %566 : f32 to vector<1x1x128xf32>
      %654 = arith.addf %652, %653 : vector<1x1x128xf32>
      %c0_373 = arith.constant 0 : index
      %c0_374 = arith.constant 0 : index
      %c0_375 = arith.constant 0 : index
      %655 = vector.load %arg10[%c0_373, %c0_374, %c0_375] : memref<8x1x128xf32, #tpu.memory_space<vmem>>, vector<1x1x128xf32>
      %656 = arith.addf %655, %654 : vector<1x1x128xf32>
      %c0_376 = arith.constant 0 : index
      %c0_377 = arith.constant 0 : index
      %c0_378 = arith.constant 0 : index
      %657 = vector.load %arg10[%c0_376, %c0_377, %c0_378] : memref<8x1x128xf32, #tpu.memory_space<vmem>>, vector<1x1x128xf32>
      tpu.vector_store %arg10[%c0_376, %c0_377, %c0_378], %656 {strides = array<i32>} : memref<8x1x128xf32, #tpu.memory_space<vmem>>, vector<1x1x128xf32>,
      %658 = vector.broadcast %554 : f32 to vector<1x1x128xf32>
      %659 = arith.mulf %630, %658 : vector<1x1x128xf32>
      %660 = vector.broadcast %555 : f32 to vector<1x1x128xf32>
      %661 = arith.mulf %632, %660 : vector<1x1x128xf32>
      %662 = arith.addf %659, %661 : vector<1x1x128xf32>
      %663 = vector.broadcast %556 : f32 to vector<1x1x128xf32>
      %664 = arith.mulf %634, %663 : vector<1x1x128xf32>
      %665 = arith.addf %662, %664 : vector<1x1x128xf32>
      %666 = vector.broadcast %557 : f32 to vector<1x1x128xf32>
      %667 = arith.mulf %636, %666 : vector<1x1x128xf32>
      %668 = arith.addf %665, %667 : vector<1x1x128xf32>
      %669 = arith.mulf %668, %640 : vector<1x1x128xf32>
      %670 = vector.broadcast %567 : f32 to vector<1x1x128xf32>
      %671 = arith.addf %669, %670 : vector<1x1x128xf32>
      %c1_379 = arith.constant 1 : index
      %c0_380 = arith.constant 0 : index
      %c0_381 = arith.constant 0 : index
      %672 = vector.load %arg10[%c1_379, %c0_380, %c0_381] : memref<8x1x128xf32, #tpu.memory_space<vmem>>, vector<1x1x128xf32>
      %673 = arith.addf %672, %671 : vector<1x1x128xf32>
      %c1_382 = arith.constant 1 : index
      %c0_383 = arith.constant 0 : index
      %c0_384 = arith.constant 0 : index
      %674 = vector.load %arg10[%c1_382, %c0_383, %c0_384] : memref<8x1x128xf32, #tpu.memory_space<vmem>>, vector<1x1x128xf32>
      tpu.vector_store %arg10[%c1_382, %c0_383, %c0_384], %673 {strides = array<i32>} : memref<8x1x128xf32, #tpu.memory_space<vmem>>, vector<1x1x128xf32>,
      %675 = vector.broadcast %558 : f32 to vector<1x1x128xf32>
      %676 = arith.mulf %630, %675 : vector<1x1x128xf32>
      %677 = vector.broadcast %559 : f32 to vector<1x1x128xf32>
      %678 = arith.mulf %632, %677 : vector<1x1x128xf32>
      %679 = arith.addf %676, %678 : vector<1x1x128xf32>
      %680 = vector.broadcast %560 : f32 to vector<1x1x128xf32>
      %681 = arith.mulf %634, %680 : vector<1x1x128xf32>
      %682 = arith.addf %679, %681 : vector<1x1x128xf32>
      %683 = vector.broadcast %561 : f32 to vector<1x1x128xf32>
      %684 = arith.mulf %636, %683 : vector<1x1x128xf32>
      %685 = arith.addf %682, %684 : vector<1x1x128xf32>
      %686 = arith.mulf %685, %640 : vector<1x1x128xf32>
      %687 = vector.broadcast %568 : f32 to vector<1x1x128xf32>
      %688 = arith.addf %686, %687 : vector<1x1x128xf32>
      %c2_385 = arith.constant 2 : index
      %c0_386 = arith.constant 0 : index
      %c0_387 = arith.constant 0 : index
      %689 = vector.load %arg10[%c2_385, %c0_386, %c0_387] : memref<8x1x128xf32, #tpu.memory_space<vmem>>, vector<1x1x128xf32>
      %690 = arith.addf %689, %688 : vector<1x1x128xf32>
      %c2_388 = arith.constant 2 : index
      %c0_389 = arith.constant 0 : index
      %c0_390 = arith.constant 0 : index
      %691 = vector.load %arg10[%c2_388, %c0_389, %c0_390] : memref<8x1x128xf32, #tpu.memory_space<vmem>>, vector<1x1x128xf32>
      tpu.vector_store %arg10[%c2_388, %c0_389, %c0_390], %690 {strides = array<i32>} : memref<8x1x128xf32, #tpu.memory_space<vmem>>, vector<1x1x128xf32>,
      %692 = vector.broadcast %562 : f32 to vector<1x1x128xf32>
      %693 = arith.mulf %630, %692 : vector<1x1x128xf32>
      %694 = vector.broadcast %563 : f32 to vector<1x1x128xf32>
      %695 = arith.mulf %632, %694 : vector<1x1x128xf32>
      %696 = arith.addf %693, %695 : vector<1x1x128xf32>
      %697 = vector.broadcast %564 : f32 to vector<1x1x128xf32>
      %698 = arith.mulf %634, %697 : vector<1x1x128xf32>
      %699 = arith.addf %696, %698 : vector<1x1x128xf32>
      %700 = vector.broadcast %565 : f32 to vector<1x1x128xf32>
      %701 = arith.mulf %636, %700 : vector<1x1x128xf32>
      %702 = arith.addf %699, %701 : vector<1x1x128xf32>
      %703 = arith.mulf %702, %640 : vector<1x1x128xf32>
      %704 = vector.broadcast %569 : f32 to vector<1x1x128xf32>
      %705 = arith.addf %703, %704 : vector<1x1x128xf32>
      %c3_391 = arith.constant 3 : index
      %c0_392 = arith.constant 0 : index
      %c0_393 = arith.constant 0 : index
      %706 = vector.load %arg10[%c3_391, %c0_392, %c0_393] : memref<8x1x128xf32, #tpu.memory_space<vmem>>, vector<1x1x128xf32>
      %707 = arith.addf %706, %705 : vector<1x1x128xf32>
      %c3_394 = arith.constant 3 : index
      %c0_395 = arith.constant 0 : index
      %c0_396 = arith.constant 0 : index
      %708 = vector.load %arg10[%c3_394, %c0_395, %c0_396] : memref<8x1x128xf32, #tpu.memory_space<vmem>>, vector<1x1x128xf32>
      tpu.vector_store %arg10[%c3_394, %c0_395, %c0_396], %707 {strides = array<i32>} : memref<8x1x128xf32, #tpu.memory_space<vmem>>, vector<1x1x128xf32>,
      %c4_397 = arith.constant 4 : index
      %c0_398 = arith.constant 0 : index
      %c0_399 = arith.constant 0 : index
      %709 = vector.load %arg2[%c4_397, %c0_398, %c0_399] : memref<16x1x128xf32, #tpu.memory_space<vmem>>, vector<1x1x128xf32>
      %cst_400 = arith.constant 5.000000e-01 : f32
      %710 = vector.broadcast %cst_400 : f32 to vector<1x1x128xf32>
      %711 = arith.mulf %709, %710 : vector<1x1x128xf32>
      %c5_401 = arith.constant 5 : index
      %c0_402 = arith.constant 0 : index
      %c0_403 = arith.constant 0 : index
      %712 = vector.load %arg2[%c5_401, %c0_402, %c0_403] : memref<16x1x128xf32, #tpu.memory_space<vmem>>, vector<1x1x128xf32>
      %cst_404 = arith.constant 5.000000e-01 : f32
      %713 = vector.broadcast %cst_404 : f32 to vector<1x1x128xf32>
      %714 = arith.mulf %712, %713 : vector<1x1x128xf32>
      %c6_405 = arith.constant 6 : index
      %c0_406 = arith.constant 0 : index
      %c0_407 = arith.constant 0 : index
      %715 = vector.load %arg2[%c6_405, %c0_406, %c0_407] : memref<16x1x128xf32, #tpu.memory_space<vmem>>, vector<1x1x128xf32>
      %cst_408 = arith.constant 5.000000e-01 : f32
      %716 = vector.broadcast %cst_408 : f32 to vector<1x1x128xf32>
      %717 = arith.mulf %715, %716 : vector<1x1x128xf32>
      %c7_409 = arith.constant 7 : index
      %c0_410 = arith.constant 0 : index
      %c0_411 = arith.constant 0 : index
      %718 = vector.load %arg2[%c7_409, %c0_410, %c0_411] : memref<16x1x128xf32, #tpu.memory_space<vmem>>, vector<1x1x128xf32>
      %cst_412 = arith.constant 5.000000e-01 : f32
      %719 = vector.broadcast %cst_412 : f32 to vector<1x1x128xf32>
      %720 = arith.mulf %718, %719 : vector<1x1x128xf32>
      %c0_413 = arith.constant 0 : index
      %c0_414 = arith.constant 0 : index
      %c0_415 = arith.constant 0 : index
      %721 = vector.load %arg2[%c0_413, %c0_414, %c0_415] : memref<16x1x128xf32, #tpu.memory_space<vmem>>, vector<1x1x128xf32>
      %722 = arith.mulf %711, %721 : vector<1x1x128xf32>
      %c1_416 = arith.constant 1 : index
      %c0_417 = arith.constant 0 : index
      %c0_418 = arith.constant 0 : index
      %723 = vector.load %arg2[%c1_416, %c0_417, %c0_418] : memref<16x1x128xf32, #tpu.memory_space<vmem>>, vector<1x1x128xf32>
      %724 = arith.mulf %714, %723 : vector<1x1x128xf32>
      %725 = arith.addf %722, %724 : vector<1x1x128xf32>
      %c2_419 = arith.constant 2 : index
      %c0_420 = arith.constant 0 : index
      %c0_421 = arith.constant 0 : index
      %726 = vector.load %arg2[%c2_419, %c0_420, %c0_421] : memref<16x1x128xf32, #tpu.memory_space<vmem>>, vector<1x1x128xf32>
      %727 = arith.mulf %717, %726 : vector<1x1x128xf32>
      %728 = arith.addf %725, %727 : vector<1x1x128xf32>
      %c3_422 = arith.constant 3 : index
      %c0_423 = arith.constant 0 : index
      %c0_424 = arith.constant 0 : index
      %729 = vector.load %arg2[%c3_422, %c0_423, %c0_424] : memref<16x1x128xf32, #tpu.memory_space<vmem>>, vector<1x1x128xf32>
      %730 = arith.mulf %720, %729 : vector<1x1x128xf32>
      %731 = arith.addf %728, %730 : vector<1x1x128xf32>
      %c4_425 = arith.constant 4 : index
      %c0_426 = arith.constant 0 : index
      %c0_427 = arith.constant 0 : index
      %732 = vector.load %arg2[%c4_425, %c0_426, %c0_427] : memref<16x1x128xf32, #tpu.memory_space<vmem>>, vector<1x1x128xf32>
      %733 = arith.mulf %711, %732 : vector<1x1x128xf32>
      %c5_428 = arith.constant 5 : index
      %c0_429 = arith.constant 0 : index
      %c0_430 = arith.constant 0 : index
      %734 = vector.load %arg2[%c5_428, %c0_429, %c0_430] : memref<16x1x128xf32, #tpu.memory_space<vmem>>, vector<1x1x128xf32>
      %735 = arith.mulf %714, %734 : vector<1x1x128xf32>
      %736 = arith.addf %733, %735 : vector<1x1x128xf32>
      %c6_431 = arith.constant 6 : index
      %c0_432 = arith.constant 0 : index
      %c0_433 = arith.constant 0 : index
      %737 = vector.load %arg2[%c6_431, %c0_432, %c0_433] : memref<16x1x128xf32, #tpu.memory_space<vmem>>, vector<1x1x128xf32>
      %738 = arith.mulf %717, %737 : vector<1x1x128xf32>
      %739 = arith.addf %736, %738 : vector<1x1x128xf32>
      %c7_434 = arith.constant 7 : index
      %c0_435 = arith.constant 0 : index
      %c0_436 = arith.constant 0 : index
      %740 = vector.load %arg2[%c7_434, %c0_435, %c0_436] : memref<16x1x128xf32, #tpu.memory_space<vmem>>, vector<1x1x128xf32>
      %741 = arith.mulf %720, %740 : vector<1x1x128xf32>
      %742 = arith.addf %739, %741 : vector<1x1x128xf32>
      %c8_437 = arith.constant 8 : index
      %c0_438 = arith.constant 0 : index
      %c0_439 = arith.constant 0 : index
      %743 = vector.load %arg2[%c8_437, %c0_438, %c0_439] : memref<16x1x128xf32, #tpu.memory_space<vmem>>, vector<1x1x128xf32>
      %744 = arith.mulf %711, %743 : vector<1x1x128xf32>
      %c9_440 = arith.constant 9 : index
      %c0_441 = arith.constant 0 : index
      %c0_442 = arith.constant 0 : index
      %745 = vector.load %arg2[%c9_440, %c0_441, %c0_442] : memref<16x1x128xf32, #tpu.memory_space<vmem>>, vector<1x1x128xf32>
      %746 = arith.mulf %714, %745 : vector<1x1x128xf32>
      %747 = arith.addf %744, %746 : vector<1x1x128xf32>
      %c10_443 = arith.constant 10 : index
      %c0_444 = arith.constant 0 : index
      %c0_445 = arith.constant 0 : index
      %748 = vector.load %arg2[%c10_443, %c0_444, %c0_445] : memref<16x1x128xf32, #tpu.memory_space<vmem>>, vector<1x1x128xf32>
      %749 = arith.mulf %717, %748 : vector<1x1x128xf32>
      %750 = arith.addf %747, %749 : vector<1x1x128xf32>
      %c11_446 = arith.constant 11 : index
      %c0_447 = arith.constant 0 : index
      %c0_448 = arith.constant 0 : index
      %751 = vector.load %arg2[%c11_446, %c0_447, %c0_448] : memref<16x1x128xf32, #tpu.memory_space<vmem>>, vector<1x1x128xf32>
      %752 = arith.mulf %720, %751 : vector<1x1x128xf32>
      %753 = arith.addf %750, %752 : vector<1x1x128xf32>
      %c12_449 = arith.constant 12 : index
      %c0_450 = arith.constant 0 : index
      %c0_451 = arith.constant 0 : index
      %754 = vector.load %arg2[%c12_449, %c0_450, %c0_451] : memref<16x1x128xf32, #tpu.memory_space<vmem>>, vector<1x1x128xf32>
      %755 = arith.mulf %711, %754 : vector<1x1x128xf32>
      %c13_452 = arith.constant 13 : index
      %c0_453 = arith.constant 0 : index
      %c0_454 = arith.constant 0 : index
      %756 = vector.load %arg2[%c13_452, %c0_453, %c0_454] : memref<16x1x128xf32, #tpu.memory_space<vmem>>, vector<1x1x128xf32>
      %757 = arith.mulf %714, %756 : vector<1x1x128xf32>
      %758 = arith.addf %755, %757 : vector<1x1x128xf32>
      %c14_455 = arith.constant 14 : index
      %c0_456 = arith.constant 0 : index
      %c0_457 = arith.constant 0 : index
      %759 = vector.load %arg2[%c14_455, %c0_456, %c0_457] : memref<16x1x128xf32, #tpu.memory_space<vmem>>, vector<1x1x128xf32>
      %760 = arith.mulf %717, %759 : vector<1x1x128xf32>
      %761 = arith.addf %758, %760 : vector<1x1x128xf32>
      %c15_458 = arith.constant 15 : index
      %c0_459 = arith.constant 0 : index
      %c0_460 = arith.constant 0 : index
      %762 = vector.load %arg2[%c15_458, %c0_459, %c0_460] : memref<16x1x128xf32, #tpu.memory_space<vmem>>, vector<1x1x128xf32>
      %763 = arith.mulf %720, %762 : vector<1x1x128xf32>
      %764 = arith.addf %761, %763 : vector<1x1x128xf32>
      %765 = arith.maximumf %731, %742 : vector<1x1x128xf32>
      %766 = arith.maximumf %765, %753 : vector<1x1x128xf32>
      %767 = arith.maximumf %766, %764 : vector<1x1x128xf32>
      %768 = arith.subf %731, %767 : vector<1x1x128xf32>
      %769 = math.exp %768 : vector<1x1x128xf32>
      %770 = arith.subf %742, %767 : vector<1x1x128xf32>
      %771 = math.exp %770 : vector<1x1x128xf32>
      %772 = arith.subf %753, %767 : vector<1x1x128xf32>
      %773 = math.exp %772 : vector<1x1x128xf32>
      %774 = arith.subf %764, %767 : vector<1x1x128xf32>
      %775 = math.exp %774 : vector<1x1x128xf32>
      %776 = arith.addf %769, %771 : vector<1x1x128xf32>
      %777 = arith.addf %776, %773 : vector<1x1x128xf32>
      %778 = arith.addf %777, %775 : vector<1x1x128xf32>
      %779 = tpu.reciprocal %778 : vector<1x1x128xf32> -> vector<1x1x128xf32>
      %780 = vector.broadcast %550 : f32 to vector<1x1x128xf32>
      %781 = arith.mulf %769, %780 : vector<1x1x128xf32>
      %782 = vector.broadcast %551 : f32 to vector<1x1x128xf32>
      %783 = arith.mulf %771, %782 : vector<1x1x128xf32>
      %784 = arith.addf %781, %783 : vector<1x1x128xf32>
      %785 = vector.broadcast %552 : f32 to vector<1x1x128xf32>
      %786 = arith.mulf %773, %785 : vector<1x1x128xf32>
      %787 = arith.addf %784, %786 : vector<1x1x128xf32>
      %788 = vector.broadcast %553 : f32 to vector<1x1x128xf32>
      %789 = arith.mulf %775, %788 : vector<1x1x128xf32>
      %790 = arith.addf %787, %789 : vector<1x1x128xf32>
      %791 = arith.mulf %790, %779 : vector<1x1x128xf32>
      %792 = vector.broadcast %566 : f32 to vector<1x1x128xf32>
      %793 = arith.addf %791, %792 : vector<1x1x128xf32>
      %c4_461 = arith.constant 4 : index
      %c0_462 = arith.constant 0 : index
      %c0_463 = arith.constant 0 : index
      %794 = vector.load %arg10[%c4_461, %c0_462, %c0_463] : memref<8x1x128xf32, #tpu.memory_space<vmem>>, vector<1x1x128xf32>
      %795 = arith.addf %794, %793 : vector<1x1x128xf32>
      %c4_464 = arith.constant 4 : index
      %c0_465 = arith.constant 0 : index
      %c0_466 = arith.constant 0 : index
      %796 = vector.load %arg10[%c4_464, %c0_465, %c0_466] : memref<8x1x128xf32, #tpu.memory_space<vmem>>, vector<1x1x128xf32>
      tpu.vector_store %arg10[%c4_464, %c0_465, %c0_466], %795 {strides = array<i32>} : memref<8x1x128xf32, #tpu.memory_space<vmem>>, vector<1x1x128xf32>,
      %797 = vector.broadcast %554 : f32 to vector<1x1x128xf32>
      %798 = arith.mulf %769, %797 : vector<1x1x128xf32>
      %799 = vector.broadcast %555 : f32 to vector<1x1x128xf32>
      %800 = arith.mulf %771, %799 : vector<1x1x128xf32>
      %801 = arith.addf %798, %800 : vector<1x1x128xf32>
      %802 = vector.broadcast %556 : f32 to vector<1x1x128xf32>
      %803 = arith.mulf %773, %802 : vector<1x1x128xf32>
      %804 = arith.addf %801, %803 : vector<1x1x128xf32>
      %805 = vector.broadcast %557 : f32 to vector<1x1x128xf32>
      %806 = arith.mulf %775, %805 : vector<1x1x128xf32>
      %807 = arith.addf %804, %806 : vector<1x1x128xf32>
      %808 = arith.mulf %807, %779 : vector<1x1x128xf32>
      %809 = vector.broadcast %567 : f32 to vector<1x1x128xf32>
      %810 = arith.addf %808, %809 : vector<1x1x128xf32>
      %c5_467 = arith.constant 5 : index
      %c0_468 = arith.constant 0 : index
      %c0_469 = arith.constant 0 : index
      %811 = vector.load %arg10[%c5_467, %c0_468, %c0_469] : memref<8x1x128xf32, #tpu.memory_space<vmem>>, vector<1x1x128xf32>
      %812 = arith.addf %811, %810 : vector<1x1x128xf32>
      %c5_470 = arith.constant 5 : index
      %c0_471 = arith.constant 0 : index
      %c0_472 = arith.constant 0 : index
      %813 = vector.load %arg10[%c5_470, %c0_471, %c0_472] : memref<8x1x128xf32, #tpu.memory_space<vmem>>, vector<1x1x128xf32>
      tpu.vector_store %arg10[%c5_470, %c0_471, %c0_472], %812 {strides = array<i32>} : memref<8x1x128xf32, #tpu.memory_space<vmem>>, vector<1x1x128xf32>,
      %814 = vector.broadcast %558 : f32 to vector<1x1x128xf32>
      %815 = arith.mulf %769, %814 : vector<1x1x128xf32>
      %816 = vector.broadcast %559 : f32 to vector<1x1x128xf32>
      %817 = arith.mulf %771, %816 : vector<1x1x128xf32>
      %818 = arith.addf %815, %817 : vector<1x1x128xf32>
      %819 = vector.broadcast %560 : f32 to vector<1x1x128xf32>
      %820 = arith.mulf %773, %819 : vector<1x1x128xf32>
      %821 = arith.addf %818, %820 : vector<1x1x128xf32>
      %822 = vector.broadcast %561 : f32 to vector<1x1x128xf32>
      %823 = arith.mulf %775, %822 : vector<1x1x128xf32>
      %824 = arith.addf %821, %823 : vector<1x1x128xf32>
      %825 = arith.mulf %824, %779 : vector<1x1x128xf32>
      %826 = vector.broadcast %568 : f32 to vector<1x1x128xf32>
      %827 = arith.addf %825, %826 : vector<1x1x128xf32>
      %c6_473 = arith.constant 6 : index
      %c0_474 = arith.constant 0 : index
      %c0_475 = arith.constant 0 : index
      %828 = vector.load %arg10[%c6_473, %c0_474, %c0_475] : memref<8x1x128xf32, #tpu.memory_space<vmem>>, vector<1x1x128xf32>
      %829 = arith.addf %828, %827 : vector<1x1x128xf32>
      %c6_476 = arith.constant 6 : index
      %c0_477 = arith.constant 0 : index
      %c0_478 = arith.constant 0 : index
      %830 = vector.load %arg10[%c6_476, %c0_477, %c0_478] : memref<8x1x128xf32, #tpu.memory_space<vmem>>, vector<1x1x128xf32>
      tpu.vector_store %arg10[%c6_476, %c0_477, %c0_478], %829 {strides = array<i32>} : memref<8x1x128xf32, #tpu.memory_space<vmem>>, vector<1x1x128xf32>,
      %831 = vector.broadcast %562 : f32 to vector<1x1x128xf32>
      %832 = arith.mulf %769, %831 : vector<1x1x128xf32>
      %833 = vector.broadcast %563 : f32 to vector<1x1x128xf32>
      %834 = arith.mulf %771, %833 : vector<1x1x128xf32>
      %835 = arith.addf %832, %834 : vector<1x1x128xf32>
      %836 = vector.broadcast %564 : f32 to vector<1x1x128xf32>
      %837 = arith.mulf %773, %836 : vector<1x1x128xf32>
      %838 = arith.addf %835, %837 : vector<1x1x128xf32>
      %839 = vector.broadcast %565 : f32 to vector<1x1x128xf32>
      %840 = arith.mulf %775, %839 : vector<1x1x128xf32>
      %841 = arith.addf %838, %840 : vector<1x1x128xf32>
      %842 = arith.mulf %841, %779 : vector<1x1x128xf32>
      %843 = vector.broadcast %569 : f32 to vector<1x1x128xf32>
      %844 = arith.addf %842, %843 : vector<1x1x128xf32>
      %c7_479 = arith.constant 7 : index
      %c0_480 = arith.constant 0 : index
      %c0_481 = arith.constant 0 : index
      %845 = vector.load %arg10[%c7_479, %c0_480, %c0_481] : memref<8x1x128xf32, #tpu.memory_space<vmem>>, vector<1x1x128xf32>
      %846 = arith.addf %845, %844 : vector<1x1x128xf32>
      %c7_482 = arith.constant 7 : index
      %c0_483 = arith.constant 0 : index
      %c0_484 = arith.constant 0 : index
      %847 = vector.load %arg10[%c7_482, %c0_483, %c0_484] : memref<8x1x128xf32, #tpu.memory_space<vmem>>, vector<1x1x128xf32>
      tpu.vector_store %arg10[%c7_482, %c0_483, %c0_484], %846 {strides = array<i32>} : memref<8x1x128xf32, #tpu.memory_space<vmem>>, vector<1x1x128xf32>,
      %c0_485 = arith.constant 0 : index
      %c0_486 = arith.constant 0 : index
      %848 = memref.load %arg7[%c0_485, %c0_486] : memref<8x2xf32, #tpu.memory_space<smem>>
      %c0_487 = arith.constant 0 : index
      %c1_488 = arith.constant 1 : index
      %849 = memref.load %arg7[%c0_487, %c1_488] : memref<8x2xf32, #tpu.memory_space<smem>>
      %c1_489 = arith.constant 1 : index
      %c0_490 = arith.constant 0 : index
      %850 = memref.load %arg7[%c1_489, %c0_490] : memref<8x2xf32, #tpu.memory_space<smem>>
      %c1_491 = arith.constant 1 : index
      %c1_492 = arith.constant 1 : index
      %851 = memref.load %arg7[%c1_491, %c1_492] : memref<8x2xf32, #tpu.memory_space<smem>>
      %c2_493 = arith.constant 2 : index
      %c0_494 = arith.constant 0 : index
      %852 = memref.load %arg7[%c2_493, %c0_494] : memref<8x2xf32, #tpu.memory_space<smem>>
      %c2_495 = arith.constant 2 : index
      %c1_496 = arith.constant 1 : index
      %853 = memref.load %arg7[%c2_495, %c1_496] : memref<8x2xf32, #tpu.memory_space<smem>>
      %c3_497 = arith.constant 3 : index
      %c0_498 = arith.constant 0 : index
      %854 = memref.load %arg7[%c3_497, %c0_498] : memref<8x2xf32, #tpu.memory_space<smem>>
      %c3_499 = arith.constant 3 : index
      %c1_500 = arith.constant 1 : index
      %855 = memref.load %arg7[%c3_499, %c1_500] : memref<8x2xf32, #tpu.memory_space<smem>>
      %c4_501 = arith.constant 4 : index
      %c0_502 = arith.constant 0 : index
      %856 = memref.load %arg7[%c4_501, %c0_502] : memref<8x2xf32, #tpu.memory_space<smem>>
      %c4_503 = arith.constant 4 : index
      %c1_504 = arith.constant 1 : index
      %857 = memref.load %arg7[%c4_503, %c1_504] : memref<8x2xf32, #tpu.memory_space<smem>>
      %c5_505 = arith.constant 5 : index
      %c0_506 = arith.constant 0 : index
      %858 = memref.load %arg7[%c5_505, %c0_506] : memref<8x2xf32, #tpu.memory_space<smem>>
      %c5_507 = arith.constant 5 : index
      %c1_508 = arith.constant 1 : index
      %859 = memref.load %arg7[%c5_507, %c1_508] : memref<8x2xf32, #tpu.memory_space<smem>>
      %c6_509 = arith.constant 6 : index
      %c0_510 = arith.constant 0 : index
      %860 = memref.load %arg7[%c6_509, %c0_510] : memref<8x2xf32, #tpu.memory_space<smem>>
      %c6_511 = arith.constant 6 : index
      %c1_512 = arith.constant 1 : index
      %861 = memref.load %arg7[%c6_511, %c1_512] : memref<8x2xf32, #tpu.memory_space<smem>>
      %c7_513 = arith.constant 7 : index
      %c0_514 = arith.constant 0 : index
      %862 = memref.load %arg7[%c7_513, %c0_514] : memref<8x2xf32, #tpu.memory_space<smem>>
      %c7_515 = arith.constant 7 : index
      %c1_516 = arith.constant 1 : index
      %863 = memref.load %arg7[%c7_515, %c1_516] : memref<8x2xf32, #tpu.memory_space<smem>>
      %c0_517 = arith.constant 0 : index
      %864 = memref.load %arg8[%c0_517] : memref<8xf32, #tpu.memory_space<smem>>
      %c1_518 = arith.constant 1 : index
      %865 = memref.load %arg8[%c1_518] : memref<8xf32, #tpu.memory_space<smem>>
      %c2_519 = arith.constant 2 : index
      %866 = memref.load %arg8[%c2_519] : memref<8xf32, #tpu.memory_space<smem>>
      %c3_520 = arith.constant 3 : index
      %867 = memref.load %arg8[%c3_520] : memref<8xf32, #tpu.memory_space<smem>>
      %c4_521 = arith.constant 4 : index
      %868 = memref.load %arg8[%c4_521] : memref<8xf32, #tpu.memory_space<smem>>
      %c5_522 = arith.constant 5 : index
      %869 = memref.load %arg8[%c5_522] : memref<8xf32, #tpu.memory_space<smem>>
      %c6_523 = arith.constant 6 : index
      %870 = memref.load %arg8[%c6_523] : memref<8xf32, #tpu.memory_space<smem>>
      %c7_524 = arith.constant 7 : index
      %871 = memref.load %arg8[%c7_524] : memref<8xf32, #tpu.memory_space<smem>>
      %c0_525 = arith.constant 0 : index
      %c0_526 = arith.constant 0 : index
      %c0_527 = arith.constant 0 : index
      %872 = vector.load %arg2[%c0_525, %c0_526, %c0_527] : memref<16x1x128xf32, #tpu.memory_space<vmem>>, vector<1x1x128xf32>
      %cst_528 = arith.constant 0.353553385 : f32
      %873 = vector.broadcast %cst_528 : f32 to vector<1x1x128xf32>
      %874 = arith.mulf %872, %873 : vector<1x1x128xf32>
      %c1_529 = arith.constant 1 : index
      %c0_530 = arith.constant 0 : index
      %c0_531 = arith.constant 0 : index
      %875 = vector.load %arg2[%c1_529, %c0_530, %c0_531] : memref<16x1x128xf32, #tpu.memory_space<vmem>>, vector<1x1x128xf32>
      %cst_532 = arith.constant 0.353553385 : f32
      %876 = vector.broadcast %cst_532 : f32 to vector<1x1x128xf32>
      %877 = arith.mulf %875, %876 : vector<1x1x128xf32>
      %c2_533 = arith.constant 2 : index
      %c0_534 = arith.constant 0 : index
      %c0_535 = arith.constant 0 : index
      %878 = vector.load %arg2[%c2_533, %c0_534, %c0_535] : memref<16x1x128xf32, #tpu.memory_space<vmem>>, vector<1x1x128xf32>
      %cst_536 = arith.constant 0.353553385 : f32
      %879 = vector.broadcast %cst_536 : f32 to vector<1x1x128xf32>
      %880 = arith.mulf %878, %879 : vector<1x1x128xf32>
      %c3_537 = arith.constant 3 : index
      %c0_538 = arith.constant 0 : index
      %c0_539 = arith.constant 0 : index
      %881 = vector.load %arg2[%c3_537, %c0_538, %c0_539] : memref<16x1x128xf32, #tpu.memory_space<vmem>>, vector<1x1x128xf32>
      %cst_540 = arith.constant 0.353553385 : f32
      %882 = vector.broadcast %cst_540 : f32 to vector<1x1x128xf32>
      %883 = arith.mulf %881, %882 : vector<1x1x128xf32>
      %c4_541 = arith.constant 4 : index
      %c0_542 = arith.constant 0 : index
      %c0_543 = arith.constant 0 : index
      %884 = vector.load %arg2[%c4_541, %c0_542, %c0_543] : memref<16x1x128xf32, #tpu.memory_space<vmem>>, vector<1x1x128xf32>
      %cst_544 = arith.constant 0.353553385 : f32
      %885 = vector.broadcast %cst_544 : f32 to vector<1x1x128xf32>
      %886 = arith.mulf %884, %885 : vector<1x1x128xf32>
      %c5_545 = arith.constant 5 : index
      %c0_546 = arith.constant 0 : index
      %c0_547 = arith.constant 0 : index
      %887 = vector.load %arg2[%c5_545, %c0_546, %c0_547] : memref<16x1x128xf32, #tpu.memory_space<vmem>>, vector<1x1x128xf32>
      %cst_548 = arith.constant 0.353553385 : f32
      %888 = vector.broadcast %cst_548 : f32 to vector<1x1x128xf32>
      %889 = arith.mulf %887, %888 : vector<1x1x128xf32>
      %c6_549 = arith.constant 6 : index
      %c0_550 = arith.constant 0 : index
      %c0_551 = arith.constant 0 : index
      %890 = vector.load %arg2[%c6_549, %c0_550, %c0_551] : memref<16x1x128xf32, #tpu.memory_space<vmem>>, vector<1x1x128xf32>
      %cst_552 = arith.constant 0.353553385 : f32
      %891 = vector.broadcast %cst_552 : f32 to vector<1x1x128xf32>
      %892 = arith.mulf %890, %891 : vector<1x1x128xf32>
      %c7_553 = arith.constant 7 : index
      %c0_554 = arith.constant 0 : index
      %c0_555 = arith.constant 0 : index
      %893 = vector.load %arg2[%c7_553, %c0_554, %c0_555] : memref<16x1x128xf32, #tpu.memory_space<vmem>>, vector<1x1x128xf32>
      %cst_556 = arith.constant 0.353553385 : f32
      %894 = vector.broadcast %cst_556 : f32 to vector<1x1x128xf32>
      %895 = arith.mulf %893, %894 : vector<1x1x128xf32>
      %c0_557 = arith.constant 0 : index
      %c0_558 = arith.constant 0 : index
      %c0_559 = arith.constant 0 : index
      %896 = vector.load %arg2[%c0_557, %c0_558, %c0_559] : memref<16x1x128xf32, #tpu.memory_space<vmem>>, vector<1x1x128xf32>
      %897 = arith.mulf %874, %896 : vector<1x1x128xf32>
      %c1_560 = arith.constant 1 : index
      %c0_561 = arith.constant 0 : index
      %c0_562 = arith.constant 0 : index
      %898 = vector.load %arg2[%c1_560, %c0_561, %c0_562] : memref<16x1x128xf32, #tpu.memory_space<vmem>>, vector<1x1x128xf32>
      %899 = arith.mulf %877, %898 : vector<1x1x128xf32>
      %900 = arith.addf %897, %899 : vector<1x1x128xf32>
      %c2_563 = arith.constant 2 : index
      %c0_564 = arith.constant 0 : index
      %c0_565 = arith.constant 0 : index
      %901 = vector.load %arg2[%c2_563, %c0_564, %c0_565] : memref<16x1x128xf32, #tpu.memory_space<vmem>>, vector<1x1x128xf32>
      %902 = arith.mulf %880, %901 : vector<1x1x128xf32>
      %903 = arith.addf %900, %902 : vector<1x1x128xf32>
      %c3_566 = arith.constant 3 : index
      %c0_567 = arith.constant 0 : index
      %c0_568 = arith.constant 0 : index
      %904 = vector.load %arg2[%c3_566, %c0_567, %c0_568] : memref<16x1x128xf32, #tpu.memory_space<vmem>>, vector<1x1x128xf32>
      %905 = arith.mulf %883, %904 : vector<1x1x128xf32>
      %906 = arith.addf %903, %905 : vector<1x1x128xf32>
      %c4_569 = arith.constant 4 : index
      %c0_570 = arith.constant 0 : index
      %c0_571 = arith.constant 0 : index
      %907 = vector.load %arg2[%c4_569, %c0_570, %c0_571] : memref<16x1x128xf32, #tpu.memory_space<vmem>>, vector<1x1x128xf32>
      %908 = arith.mulf %886, %907 : vector<1x1x128xf32>
      %909 = arith.addf %906, %908 : vector<1x1x128xf32>
      %c5_572 = arith.constant 5 : index
      %c0_573 = arith.constant 0 : index
      %c0_574 = arith.constant 0 : index
      %910 = vector.load %arg2[%c5_572, %c0_573, %c0_574] : memref<16x1x128xf32, #tpu.memory_space<vmem>>, vector<1x1x128xf32>
      %911 = arith.mulf %889, %910 : vector<1x1x128xf32>
      %912 = arith.addf %909, %911 : vector<1x1x128xf32>
      %c6_575 = arith.constant 6 : index
      %c0_576 = arith.constant 0 : index
      %c0_577 = arith.constant 0 : index
      %913 = vector.load %arg2[%c6_575, %c0_576, %c0_577] : memref<16x1x128xf32, #tpu.memory_space<vmem>>, vector<1x1x128xf32>
      %914 = arith.mulf %892, %913 : vector<1x1x128xf32>
      %915 = arith.addf %912, %914 : vector<1x1x128xf32>
      %c7_578 = arith.constant 7 : index
      %c0_579 = arith.constant 0 : index
      %c0_580 = arith.constant 0 : index
      %916 = vector.load %arg2[%c7_578, %c0_579, %c0_580] : memref<16x1x128xf32, #tpu.memory_space<vmem>>, vector<1x1x128xf32>
      %917 = arith.mulf %895, %916 : vector<1x1x128xf32>
      %918 = arith.addf %915, %917 : vector<1x1x128xf32>
      %c8_581 = arith.constant 8 : index
      %c0_582 = arith.constant 0 : index
      %c0_583 = arith.constant 0 : index
      %919 = vector.load %arg2[%c8_581, %c0_582, %c0_583] : memref<16x1x128xf32, #tpu.memory_space<vmem>>, vector<1x1x128xf32>
      %920 = arith.mulf %874, %919 : vector<1x1x128xf32>
      %c9_584 = arith.constant 9 : index
      %c0_585 = arith.constant 0 : index
      %c0_586 = arith.constant 0 : index
      %921 = vector.load %arg2[%c9_584, %c0_585, %c0_586] : memref<16x1x128xf32, #tpu.memory_space<vmem>>, vector<1x1x128xf32>
      %922 = arith.mulf %877, %921 : vector<1x1x128xf32>
      %923 = arith.addf %920, %922 : vector<1x1x128xf32>
      %c10_587 = arith.constant 10 : index
      %c0_588 = arith.constant 0 : index
      %c0_589 = arith.constant 0 : index
      %924 = vector.load %arg2[%c10_587, %c0_588, %c0_589] : memref<16x1x128xf32, #tpu.memory_space<vmem>>, vector<1x1x128xf32>
      %925 = arith.mulf %880, %924 : vector<1x1x128xf32>
      %926 = arith.addf %923, %925 : vector<1x1x128xf32>
      %c11_590 = arith.constant 11 : index
      %c0_591 = arith.constant 0 : index
      %c0_592 = arith.constant 0 : index
      %927 = vector.load %arg2[%c11_590, %c0_591, %c0_592] : memref<16x1x128xf32, #tpu.memory_space<vmem>>, vector<1x1x128xf32>
      %928 = arith.mulf %883, %927 : vector<1x1x128xf32>
      %929 = arith.addf %926, %928 : vector<1x1x128xf32>
      %c12_593 = arith.constant 12 : index
      %c0_594 = arith.constant 0 : index
      %c0_595 = arith.constant 0 : index
      %930 = vector.load %arg2[%c12_593, %c0_594, %c0_595] : memref<16x1x128xf32, #tpu.memory_space<vmem>>, vector<1x1x128xf32>
      %931 = arith.mulf %886, %930 : vector<1x1x128xf32>
      %932 = arith.addf %929, %931 : vector<1x1x128xf32>
      %c13_596 = arith.constant 13 : index
      %c0_597 = arith.constant 0 : index
      %c0_598 = arith.constant 0 : index
      %933 = vector.load %arg2[%c13_596, %c0_597, %c0_598] : memref<16x1x128xf32, #tpu.memory_space<vmem>>, vector<1x1x128xf32>
      %934 = arith.mulf %889, %933 : vector<1x1x128xf32>
      %935 = arith.addf %932, %934 : vector<1x1x128xf32>
      %c14_599 = arith.constant 14 : index
      %c0_600 = arith.constant 0 : index
      %c0_601 = arith.constant 0 : index
      %936 = vector.load %arg2[%c14_599, %c0_600, %c0_601] : memref<16x1x128xf32, #tpu.memory_space<vmem>>, vector<1x1x128xf32>
      %937 = arith.mulf %892, %936 : vector<1x1x128xf32>
      %938 = arith.addf %935, %937 : vector<1x1x128xf32>
      %c15_602 = arith.constant 15 : index
      %c0_603 = arith.constant 0 : index
      %c0_604 = arith.constant 0 : index
      %939 = vector.load %arg2[%c15_602, %c0_603, %c0_604] : memref<16x1x128xf32, #tpu.memory_space<vmem>>, vector<1x1x128xf32>
      %940 = arith.mulf %895, %939 : vector<1x1x128xf32>
      %941 = arith.addf %938, %940 : vector<1x1x128xf32>
      %942 = arith.maximumf %918, %941 : vector<1x1x128xf32>
      %943 = arith.subf %918, %942 : vector<1x1x128xf32>
      %944 = math.exp %943 : vector<1x1x128xf32>
      %945 = arith.subf %941, %942 : vector<1x1x128xf32>
      %946 = math.exp %945 : vector<1x1x128xf32>
      %947 = arith.addf %944, %946 : vector<1x1x128xf32>
      %948 = tpu.reciprocal %947 : vector<1x1x128xf32> -> vector<1x1x128xf32>
      %949 = vector.broadcast %848 : f32 to vector<1x1x128xf32>
      %950 = arith.mulf %944, %949 : vector<1x1x128xf32>
      %951 = vector.broadcast %849 : f32 to vector<1x1x128xf32>
      %952 = arith.mulf %946, %951 : vector<1x1x128xf32>
      %953 = arith.addf %950, %952 : vector<1x1x128xf32>
      %954 = arith.mulf %953, %948 : vector<1x1x128xf32>
      %955 = vector.broadcast %864 : f32 to vector<1x1x128xf32>
      %956 = arith.addf %954, %955 : vector<1x1x128xf32>
      %c0_605 = arith.constant 0 : index
      %c0_606 = arith.constant 0 : index
      %c0_607 = arith.constant 0 : index
      %957 = vector.load %arg10[%c0_605, %c0_606, %c0_607] : memref<8x1x128xf32, #tpu.memory_space<vmem>>, vector<1x1x128xf32>
      %958 = arith.addf %957, %956 : vector<1x1x128xf32>
      %c0_608 = arith.constant 0 : index
      %c0_609 = arith.constant 0 : index
      %c0_610 = arith.constant 0 : index
      %959 = vector.load %arg10[%c0_608, %c0_609, %c0_610] : memref<8x1x128xf32, #tpu.memory_space<vmem>>, vector<1x1x128xf32>
      tpu.vector_store %arg10[%c0_608, %c0_609, %c0_610], %958 {strides = array<i32>} : memref<8x1x128xf32, #tpu.memory_space<vmem>>, vector<1x1x128xf32>,
      %960 = vector.broadcast %850 : f32 to vector<1x1x128xf32>
      %961 = arith.mulf %944, %960 : vector<1x1x128xf32>
      %962 = vector.broadcast %851 : f32 to vector<1x1x128xf32>
      %963 = arith.mulf %946, %962 : vector<1x1x128xf32>
      %964 = arith.addf %961, %963 : vector<1x1x128xf32>
      %965 = arith.mulf %964, %948 : vector<1x1x128xf32>
      %966 = vector.broadcast %865 : f32 to vector<1x1x128xf32>
      %967 = arith.addf %965, %966 : vector<1x1x128xf32>
      %c1_611 = arith.constant 1 : index
      %c0_612 = arith.constant 0 : index
      %c0_613 = arith.constant 0 : index
      %968 = vector.load %arg10[%c1_611, %c0_612, %c0_613] : memref<8x1x128xf32, #tpu.memory_space<vmem>>, vector<1x1x128xf32>
      %969 = arith.addf %968, %967 : vector<1x1x128xf32>
      %c1_614 = arith.constant 1 : index
      %c0_615 = arith.constant 0 : index
      %c0_616 = arith.constant 0 : index
      %970 = vector.load %arg10[%c1_614, %c0_615, %c0_616] : memref<8x1x128xf32, #tpu.memory_space<vmem>>, vector<1x1x128xf32>
      tpu.vector_store %arg10[%c1_614, %c0_615, %c0_616], %969 {strides = array<i32>} : memref<8x1x128xf32, #tpu.memory_space<vmem>>, vector<1x1x128xf32>,
      %971 = vector.broadcast %852 : f32 to vector<1x1x128xf32>
      %972 = arith.mulf %944, %971 : vector<1x1x128xf32>
      %973 = vector.broadcast %853 : f32 to vector<1x1x128xf32>
      %974 = arith.mulf %946, %973 : vector<1x1x128xf32>
      %975 = arith.addf %972, %974 : vector<1x1x128xf32>
      %976 = arith.mulf %975, %948 : vector<1x1x128xf32>
      %977 = vector.broadcast %866 : f32 to vector<1x1x128xf32>
      %978 = arith.addf %976, %977 : vector<1x1x128xf32>
      %c2_617 = arith.constant 2 : index
      %c0_618 = arith.constant 0 : index
      %c0_619 = arith.constant 0 : index
      %979 = vector.load %arg10[%c2_617, %c0_618, %c0_619] : memref<8x1x128xf32, #tpu.memory_space<vmem>>, vector<1x1x128xf32>
      %980 = arith.addf %979, %978 : vector<1x1x128xf32>
      %c2_620 = arith.constant 2 : index
      %c0_621 = arith.constant 0 : index
      %c0_622 = arith.constant 0 : index
      %981 = vector.load %arg10[%c2_620, %c0_621, %c0_622] : memref<8x1x128xf32, #tpu.memory_space<vmem>>, vector<1x1x128xf32>
      tpu.vector_store %arg10[%c2_620, %c0_621, %c0_622], %980 {strides = array<i32>} : memref<8x1x128xf32, #tpu.memory_space<vmem>>, vector<1x1x128xf32>,
      %982 = vector.broadcast %854 : f32 to vector<1x1x128xf32>
      %983 = arith.mulf %944, %982 : vector<1x1x128xf32>
      %984 = vector.broadcast %855 : f32 to vector<1x1x128xf32>
      %985 = arith.mulf %946, %984 : vector<1x1x128xf32>
      %986 = arith.addf %983, %985 : vector<1x1x128xf32>
      %987 = arith.mulf %986, %948 : vector<1x1x128xf32>
      %988 = vector.broadcast %867 : f32 to vector<1x1x128xf32>
      %989 = arith.addf %987, %988 : vector<1x1x128xf32>
      %c3_623 = arith.constant 3 : index
      %c0_624 = arith.constant 0 : index
      %c0_625 = arith.constant 0 : index
      %990 = vector.load %arg10[%c3_623, %c0_624, %c0_625] : memref<8x1x128xf32, #tpu.memory_space<vmem>>, vector<1x1x128xf32>
      %991 = arith.addf %990, %989 : vector<1x1x128xf32>
      %c3_626 = arith.constant 3 : index
      %c0_627 = arith.constant 0 : index
      %c0_628 = arith.constant 0 : index
      %992 = vector.load %arg10[%c3_626, %c0_627, %c0_628] : memref<8x1x128xf32, #tpu.memory_space<vmem>>, vector<1x1x128xf32>
      tpu.vector_store %arg10[%c3_626, %c0_627, %c0_628], %991 {strides = array<i32>} : memref<8x1x128xf32, #tpu.memory_space<vmem>>, vector<1x1x128xf32>,
      %993 = vector.broadcast %856 : f32 to vector<1x1x128xf32>
      %994 = arith.mulf %944, %993 : vector<1x1x128xf32>
      %995 = vector.broadcast %857 : f32 to vector<1x1x128xf32>
      %996 = arith.mulf %946, %995 : vector<1x1x128xf32>
      %997 = arith.addf %994, %996 : vector<1x1x128xf32>
      %998 = arith.mulf %997, %948 : vector<1x1x128xf32>
      %999 = vector.broadcast %868 : f32 to vector<1x1x128xf32>
      %1000 = arith.addf %998, %999 : vector<1x1x128xf32>
      %c4_629 = arith.constant 4 : index
      %c0_630 = arith.constant 0 : index
      %c0_631 = arith.constant 0 : index
      %1001 = vector.load %arg10[%c4_629, %c0_630, %c0_631] : memref<8x1x128xf32, #tpu.memory_space<vmem>>, vector<1x1x128xf32>
      %1002 = arith.addf %1001, %1000 : vector<1x1x128xf32>
      %c4_632 = arith.constant 4 : index
      %c0_633 = arith.constant 0 : index
      %c0_634 = arith.constant 0 : index
      %1003 = vector.load %arg10[%c4_632, %c0_633, %c0_634] : memref<8x1x128xf32, #tpu.memory_space<vmem>>, vector<1x1x128xf32>
      tpu.vector_store %arg10[%c4_632, %c0_633, %c0_634], %1002 {strides = array<i32>} : memref<8x1x128xf32, #tpu.memory_space<vmem>>, vector<1x1x128xf32>,
      %1004 = vector.broadcast %858 : f32 to vector<1x1x128xf32>
      %1005 = arith.mulf %944, %1004 : vector<1x1x128xf32>
      %1006 = vector.broadcast %859 : f32 to vector<1x1x128xf32>
      %1007 = arith.mulf %946, %1006 : vector<1x1x128xf32>
      %1008 = arith.addf %1005, %1007 : vector<1x1x128xf32>
      %1009 = arith.mulf %1008, %948 : vector<1x1x128xf32>
      %1010 = vector.broadcast %869 : f32 to vector<1x1x128xf32>
      %1011 = arith.addf %1009, %1010 : vector<1x1x128xf32>
      %c5_635 = arith.constant 5 : index
      %c0_636 = arith.constant 0 : index
      %c0_637 = arith.constant 0 : index
      %1012 = vector.load %arg10[%c5_635, %c0_636, %c0_637] : memref<8x1x128xf32, #tpu.memory_space<vmem>>, vector<1x1x128xf32>
      %1013 = arith.addf %1012, %1011 : vector<1x1x128xf32>
      %c5_638 = arith.constant 5 : index
      %c0_639 = arith.constant 0 : index
      %c0_640 = arith.constant 0 : index
      %1014 = vector.load %arg10[%c5_638, %c0_639, %c0_640] : memref<8x1x128xf32, #tpu.memory_space<vmem>>, vector<1x1x128xf32>
      tpu.vector_store %arg10[%c5_638, %c0_639, %c0_640], %1013 {strides = array<i32>} : memref<8x1x128xf32, #tpu.memory_space<vmem>>, vector<1x1x128xf32>,
      %1015 = vector.broadcast %860 : f32 to vector<1x1x128xf32>
      %1016 = arith.mulf %944, %1015 : vector<1x1x128xf32>
      %1017 = vector.broadcast %861 : f32 to vector<1x1x128xf32>
      %1018 = arith.mulf %946, %1017 : vector<1x1x128xf32>
      %1019 = arith.addf %1016, %1018 : vector<1x1x128xf32>
      %1020 = arith.mulf %1019, %948 : vector<1x1x128xf32>
      %1021 = vector.broadcast %870 : f32 to vector<1x1x128xf32>
      %1022 = arith.addf %1020, %1021 : vector<1x1x128xf32>
      %c6_641 = arith.constant 6 : index
      %c0_642 = arith.constant 0 : index
      %c0_643 = arith.constant 0 : index
      %1023 = vector.load %arg10[%c6_641, %c0_642, %c0_643] : memref<8x1x128xf32, #tpu.memory_space<vmem>>, vector<1x1x128xf32>
      %1024 = arith.addf %1023, %1022 : vector<1x1x128xf32>
      %c6_644 = arith.constant 6 : index
      %c0_645 = arith.constant 0 : index
      %c0_646 = arith.constant 0 : index
      %1025 = vector.load %arg10[%c6_644, %c0_645, %c0_646] : memref<8x1x128xf32, #tpu.memory_space<vmem>>, vector<1x1x128xf32>
      tpu.vector_store %arg10[%c6_644, %c0_645, %c0_646], %1024 {strides = array<i32>} : memref<8x1x128xf32, #tpu.memory_space<vmem>>, vector<1x1x128xf32>,
      %1026 = vector.broadcast %862 : f32 to vector<1x1x128xf32>
      %1027 = arith.mulf %944, %1026 : vector<1x1x128xf32>
      %1028 = vector.broadcast %863 : f32 to vector<1x1x128xf32>
      %1029 = arith.mulf %946, %1028 : vector<1x1x128xf32>
      %1030 = arith.addf %1027, %1029 : vector<1x1x128xf32>
      %1031 = arith.mulf %1030, %948 : vector<1x1x128xf32>
      %1032 = vector.broadcast %871 : f32 to vector<1x1x128xf32>
      %1033 = arith.addf %1031, %1032 : vector<1x1x128xf32>
      %c7_647 = arith.constant 7 : index
      %c0_648 = arith.constant 0 : index
      %c0_649 = arith.constant 0 : index
      %1034 = vector.load %arg10[%c7_647, %c0_648, %c0_649] : memref<8x1x128xf32, #tpu.memory_space<vmem>>, vector<1x1x128xf32>
      %1035 = arith.addf %1034, %1033 : vector<1x1x128xf32>
      %c7_650 = arith.constant 7 : index
      %c0_651 = arith.constant 0 : index
      %c0_652 = arith.constant 0 : index
      %1036 = vector.load %arg10[%c7_650, %c0_651, %c0_652] : memref<8x1x128xf32, #tpu.memory_space<vmem>>, vector<1x1x128xf32>
      tpu.vector_store %arg10[%c7_650, %c0_651, %c0_652], %1035 {strides = array<i32>} : memref<8x1x128xf32, #tpu.memory_space<vmem>>, vector<1x1x128xf32>,
    } else {
    }
    %c1_i32 = arith.constant 1 : i32
    %3 = arith.cmpi eq, %arg0, %c1_i32 : i32
    %4 = arith.extui %3 : i1 to i32
    %c0_i32_1 = arith.constant 0 : i32
    %5 = arith.cmpi ne, %4, %c0_i32_1 : i32
    scf.if %5 {
      %c0_7 = arith.constant 0 : index
      %c0_8 = arith.constant 0 : index
      %8 = memref.load %arg3[%c0_7, %c0_8] : memref<2x8xf32, #tpu.memory_space<smem>>
      %c0_9 = arith.constant 0 : index
      %c1 = arith.constant 1 : index
      %9 = memref.load %arg3[%c0_9, %c1] : memref<2x8xf32, #tpu.memory_space<smem>>
      %c0_10 = arith.constant 0 : index
      %c2 = arith.constant 2 : index
      %10 = memref.load %arg3[%c0_10, %c2] : memref<2x8xf32, #tpu.memory_space<smem>>
      %c0_11 = arith.constant 0 : index
      %c3 = arith.constant 3 : index
      %11 = memref.load %arg3[%c0_11, %c3] : memref<2x8xf32, #tpu.memory_space<smem>>
      %c0_12 = arith.constant 0 : index
      %c4 = arith.constant 4 : index
      %12 = memref.load %arg3[%c0_12, %c4] : memref<2x8xf32, #tpu.memory_space<smem>>
      %c0_13 = arith.constant 0 : index
      %c5 = arith.constant 5 : index
      %13 = memref.load %arg3[%c0_13, %c5] : memref<2x8xf32, #tpu.memory_space<smem>>
      %c0_14 = arith.constant 0 : index
      %c6 = arith.constant 6 : index
      %14 = memref.load %arg3[%c0_14, %c6] : memref<2x8xf32, #tpu.memory_space<smem>>
      %c0_15 = arith.constant 0 : index
      %c7 = arith.constant 7 : index
      %15 = memref.load %arg3[%c0_15, %c7] : memref<2x8xf32, #tpu.memory_space<smem>>
      %c1_16 = arith.constant 1 : index
      %c0_17 = arith.constant 0 : index
      %16 = memref.load %arg3[%c1_16, %c0_17] : memref<2x8xf32, #tpu.memory_space<smem>>
      %c1_18 = arith.constant 1 : index
      %c1_19 = arith.constant 1 : index
      %17 = memref.load %arg3[%c1_18, %c1_19] : memref<2x8xf32, #tpu.memory_space<smem>>
      %c1_20 = arith.constant 1 : index
      %c2_21 = arith.constant 2 : index
      %18 = memref.load %arg3[%c1_20, %c2_21] : memref<2x8xf32, #tpu.memory_space<smem>>
      %c1_22 = arith.constant 1 : index
      %c3_23 = arith.constant 3 : index
      %19 = memref.load %arg3[%c1_22, %c3_23] : memref<2x8xf32, #tpu.memory_space<smem>>
      %c1_24 = arith.constant 1 : index
      %c4_25 = arith.constant 4 : index
      %20 = memref.load %arg3[%c1_24, %c4_25] : memref<2x8xf32, #tpu.memory_space<smem>>
      %c1_26 = arith.constant 1 : index
      %c5_27 = arith.constant 5 : index
      %21 = memref.load %arg3[%c1_26, %c5_27] : memref<2x8xf32, #tpu.memory_space<smem>>
      %c1_28 = arith.constant 1 : index
      %c6_29 = arith.constant 6 : index
      %22 = memref.load %arg3[%c1_28, %c6_29] : memref<2x8xf32, #tpu.memory_space<smem>>
      %c1_30 = arith.constant 1 : index
      %c7_31 = arith.constant 7 : index
      %23 = memref.load %arg3[%c1_30, %c7_31] : memref<2x8xf32, #tpu.memory_space<smem>>
      %c0_32 = arith.constant 0 : index
      %24 = memref.load %arg4[%c0_32] : memref<2xf32, #tpu.memory_space<smem>>
      %c1_33 = arith.constant 1 : index
      %25 = memref.load %arg4[%c1_33] : memref<2xf32, #tpu.memory_space<smem>>
      %c8 = arith.constant 8 : index
      %c0_34 = arith.constant 0 : index
      %c0_35 = arith.constant 0 : index
      %26 = vector.load %arg2[%c8, %c0_34, %c0_35] : memref<16x1x128xf32, #tpu.memory_space<vmem>>, vector<1x1x128xf32>
      %cst = arith.constant 0.707106769 : f32
      %27 = vector.broadcast %cst : f32 to vector<1x1x128xf32>
      %28 = arith.mulf %26, %27 : vector<1x1x128xf32>
      %c9 = arith.constant 9 : index
      %c0_36 = arith.constant 0 : index
      %c0_37 = arith.constant 0 : index
      %29 = vector.load %arg2[%c9, %c0_36, %c0_37] : memref<16x1x128xf32, #tpu.memory_space<vmem>>, vector<1x1x128xf32>
      %cst_38 = arith.constant 0.707106769 : f32
      %30 = vector.broadcast %cst_38 : f32 to vector<1x1x128xf32>
      %31 = arith.mulf %29, %30 : vector<1x1x128xf32>
      %c0_39 = arith.constant 0 : index
      %c0_40 = arith.constant 0 : index
      %c0_41 = arith.constant 0 : index
      %32 = vector.load %arg2[%c0_39, %c0_40, %c0_41] : memref<16x1x128xf32, #tpu.memory_space<vmem>>, vector<1x1x128xf32>
      %33 = arith.mulf %28, %32 : vector<1x1x128xf32>
      %c1_42 = arith.constant 1 : index
      %c0_43 = arith.constant 0 : index
      %c0_44 = arith.constant 0 : index
      %34 = vector.load %arg2[%c1_42, %c0_43, %c0_44] : memref<16x1x128xf32, #tpu.memory_space<vmem>>, vector<1x1x128xf32>
      %35 = arith.mulf %31, %34 : vector<1x1x128xf32>
      %36 = arith.addf %33, %35 : vector<1x1x128xf32>
      %c2_45 = arith.constant 2 : index
      %c0_46 = arith.constant 0 : index
      %c0_47 = arith.constant 0 : index
      %37 = vector.load %arg2[%c2_45, %c0_46, %c0_47] : memref<16x1x128xf32, #tpu.memory_space<vmem>>, vector<1x1x128xf32>
      %38 = arith.mulf %28, %37 : vector<1x1x128xf32>
      %c3_48 = arith.constant 3 : index
      %c0_49 = arith.constant 0 : index
      %c0_50 = arith.constant 0 : index
      %39 = vector.load %arg2[%c3_48, %c0_49, %c0_50] : memref<16x1x128xf32, #tpu.memory_space<vmem>>, vector<1x1x128xf32>
      %40 = arith.mulf %31, %39 : vector<1x1x128xf32>
      %41 = arith.addf %38, %40 : vector<1x1x128xf32>
      %c4_51 = arith.constant 4 : index
      %c0_52 = arith.constant 0 : index
      %c0_53 = arith.constant 0 : index
      %42 = vector.load %arg2[%c4_51, %c0_52, %c0_53] : memref<16x1x128xf32, #tpu.memory_space<vmem>>, vector<1x1x128xf32>
      %43 = arith.mulf %28, %42 : vector<1x1x128xf32>
      %c5_54 = arith.constant 5 : index
      %c0_55 = arith.constant 0 : index
      %c0_56 = arith.constant 0 : index
      %44 = vector.load %arg2[%c5_54, %c0_55, %c0_56] : memref<16x1x128xf32, #tpu.memory_space<vmem>>, vector<1x1x128xf32>
      %45 = arith.mulf %31, %44 : vector<1x1x128xf32>
      %46 = arith.addf %43, %45 : vector<1x1x128xf32>
      %c6_57 = arith.constant 6 : index
      %c0_58 = arith.constant 0 : index
      %c0_59 = arith.constant 0 : index
      %47 = vector.load %arg2[%c6_57, %c0_58, %c0_59] : memref<16x1x128xf32, #tpu.memory_space<vmem>>, vector<1x1x128xf32>
      %48 = arith.mulf %28, %47 : vector<1x1x128xf32>
      %c7_60 = arith.constant 7 : index
      %c0_61 = arith.constant 0 : index
      %c0_62 = arith.constant 0 : index
      %49 = vector.load %arg2[%c7_60, %c0_61, %c0_62] : memref<16x1x128xf32, #tpu.memory_space<vmem>>, vector<1x1x128xf32>
      %50 = arith.mulf %31, %49 : vector<1x1x128xf32>
      %51 = arith.addf %48, %50 : vector<1x1x128xf32>
      %c8_63 = arith.constant 8 : index
      %c0_64 = arith.constant 0 : index
      %c0_65 = arith.constant 0 : index
      %52 = vector.load %arg2[%c8_63, %c0_64, %c0_65] : memref<16x1x128xf32, #tpu.memory_space<vmem>>, vector<1x1x128xf32>
      %53 = arith.mulf %28, %52 : vector<1x1x128xf32>
      %c9_66 = arith.constant 9 : index
      %c0_67 = arith.constant 0 : index
      %c0_68 = arith.constant 0 : index
      %54 = vector.load %arg2[%c9_66, %c0_67, %c0_68] : memref<16x1x128xf32, #tpu.memory_space<vmem>>, vector<1x1x128xf32>
      %55 = arith.mulf %31, %54 : vector<1x1x128xf32>
      %56 = arith.addf %53, %55 : vector<1x1x128xf32>
      %c10 = arith.constant 10 : index
      %c0_69 = arith.constant 0 : index
      %c0_70 = arith.constant 0 : index
      %57 = vector.load %arg2[%c10, %c0_69, %c0_70] : memref<16x1x128xf32, #tpu.memory_space<vmem>>, vector<1x1x128xf32>
      %58 = arith.mulf %28, %57 : vector<1x1x128xf32>
      %c11 = arith.constant 11 : index
      %c0_71 = arith.constant 0 : index
      %c0_72 = arith.constant 0 : index
      %59 = vector.load %arg2[%c11, %c0_71, %c0_72] : memref<16x1x128xf32, #tpu.memory_space<vmem>>, vector<1x1x128xf32>
      %60 = arith.mulf %31, %59 : vector<1x1x128xf32>
      %61 = arith.addf %58, %60 : vector<1x1x128xf32>
      %c12 = arith.constant 12 : index
      %c0_73 = arith.constant 0 : index
      %c0_74 = arith.constant 0 : index
      %62 = vector.load %arg2[%c12, %c0_73, %c0_74] : memref<16x1x128xf32, #tpu.memory_space<vmem>>, vector<1x1x128xf32>
      %63 = arith.mulf %28, %62 : vector<1x1x128xf32>
      %c13 = arith.constant 13 : index
      %c0_75 = arith.constant 0 : index
      %c0_76 = arith.constant 0 : index
      %64 = vector.load %arg2[%c13, %c0_75, %c0_76] : memref<16x1x128xf32, #tpu.memory_space<vmem>>, vector<1x1x128xf32>
      %65 = arith.mulf %31, %64 : vector<1x1x128xf32>
      %66 = arith.addf %63, %65 : vector<1x1x128xf32>
      %c14 = arith.constant 14 : index
      %c0_77 = arith.constant 0 : index
      %c0_78 = arith.constant 0 : index
      %67 = vector.load %arg2[%c14, %c0_77, %c0_78] : memref<16x1x128xf32, #tpu.memory_space<vmem>>, vector<1x1x128xf32>
      %68 = arith.mulf %28, %67 : vector<1x1x128xf32>
      %c15 = arith.constant 15 : index
      %c0_79 = arith.constant 0 : index
      %c0_80 = arith.constant 0 : index
      %69 = vector.load %arg2[%c15, %c0_79, %c0_80] : memref<16x1x128xf32, #tpu.memory_space<vmem>>, vector<1x1x128xf32>
      %70 = arith.mulf %31, %69 : vector<1x1x128xf32>
      %71 = arith.addf %68, %70 : vector<1x1x128xf32>
      %72 = arith.maximumf %36, %41 : vector<1x1x128xf32>
      %73 = arith.maximumf %72, %46 : vector<1x1x128xf32>
      %74 = arith.maximumf %73, %51 : vector<1x1x128xf32>
      %75 = arith.maximumf %74, %56 : vector<1x1x128xf32>
      %76 = arith.maximumf %75, %61 : vector<1x1x128xf32>
      %77 = arith.maximumf %76, %66 : vector<1x1x128xf32>
      %78 = arith.maximumf %77, %71 : vector<1x1x128xf32>
      %79 = arith.subf %36, %78 : vector<1x1x128xf32>
      %80 = math.exp %79 : vector<1x1x128xf32>
      %81 = arith.subf %41, %78 : vector<1x1x128xf32>
      %82 = math.exp %81 : vector<1x1x128xf32>
      %83 = arith.subf %46, %78 : vector<1x1x128xf32>
      %84 = math.exp %83 : vector<1x1x128xf32>
      %85 = arith.subf %51, %78 : vector<1x1x128xf32>
      %86 = math.exp %85 : vector<1x1x128xf32>
      %87 = arith.subf %56, %78 : vector<1x1x128xf32>
      %88 = math.exp %87 : vector<1x1x128xf32>
      %89 = arith.subf %61, %78 : vector<1x1x128xf32>
      %90 = math.exp %89 : vector<1x1x128xf32>
      %91 = arith.subf %66, %78 : vector<1x1x128xf32>
      %92 = math.exp %91 : vector<1x1x128xf32>
      %93 = arith.subf %71, %78 : vector<1x1x128xf32>
      %94 = math.exp %93 : vector<1x1x128xf32>
      %95 = arith.addf %80, %82 : vector<1x1x128xf32>
      %96 = arith.addf %95, %84 : vector<1x1x128xf32>
      %97 = arith.addf %96, %86 : vector<1x1x128xf32>
      %98 = arith.addf %97, %88 : vector<1x1x128xf32>
      %99 = arith.addf %98, %90 : vector<1x1x128xf32>
      %100 = arith.addf %99, %92 : vector<1x1x128xf32>
      %101 = arith.addf %100, %94 : vector<1x1x128xf32>
      %102 = tpu.reciprocal %101 : vector<1x1x128xf32> -> vector<1x1x128xf32>
      %103 = vector.broadcast %8 : f32 to vector<1x1x128xf32>
      %104 = arith.mulf %80, %103 : vector<1x1x128xf32>
      %105 = vector.broadcast %9 : f32 to vector<1x1x128xf32>
      %106 = arith.mulf %82, %105 : vector<1x1x128xf32>
      %107 = arith.addf %104, %106 : vector<1x1x128xf32>
      %108 = vector.broadcast %10 : f32 to vector<1x1x128xf32>
      %109 = arith.mulf %84, %108 : vector<1x1x128xf32>
      %110 = arith.addf %107, %109 : vector<1x1x128xf32>
      %111 = vector.broadcast %11 : f32 to vector<1x1x128xf32>
      %112 = arith.mulf %86, %111 : vector<1x1x128xf32>
      %113 = arith.addf %110, %112 : vector<1x1x128xf32>
      %114 = vector.broadcast %12 : f32 to vector<1x1x128xf32>
      %115 = arith.mulf %88, %114 : vector<1x1x128xf32>
      %116 = arith.addf %113, %115 : vector<1x1x128xf32>
      %117 = vector.broadcast %13 : f32 to vector<1x1x128xf32>
      %118 = arith.mulf %90, %117 : vector<1x1x128xf32>
      %119 = arith.addf %116, %118 : vector<1x1x128xf32>
      %120 = vector.broadcast %14 : f32 to vector<1x1x128xf32>
      %121 = arith.mulf %92, %120 : vector<1x1x128xf32>
      %122 = arith.addf %119, %121 : vector<1x1x128xf32>
      %123 = vector.broadcast %15 : f32 to vector<1x1x128xf32>
      %124 = arith.mulf %94, %123 : vector<1x1x128xf32>
      %125 = arith.addf %122, %124 : vector<1x1x128xf32>
      %126 = arith.mulf %125, %102 : vector<1x1x128xf32>
      %127 = vector.broadcast %24 : f32 to vector<1x1x128xf32>
      %128 = arith.addf %126, %127 : vector<1x1x128xf32>
      %c0_81 = arith.constant 0 : index
      %c0_82 = arith.constant 0 : index
      %c0_83 = arith.constant 0 : index
      %129 = vector.load %arg10[%c0_81, %c0_82, %c0_83] : memref<8x1x128xf32, #tpu.memory_space<vmem>>, vector<1x1x128xf32>
      tpu.vector_store %arg10[%c0_81, %c0_82, %c0_83], %128 {strides = array<i32>} : memref<8x1x128xf32, #tpu.memory_space<vmem>>, vector<1x1x128xf32>,
      %130 = vector.broadcast %16 : f32 to vector<1x1x128xf32>
      %131 = arith.mulf %80, %130 : vector<1x1x128xf32>
      %132 = vector.broadcast %17 : f32 to vector<1x1x128xf32>
      %133 = arith.mulf %82, %132 : vector<1x1x128xf32>
      %134 = arith.addf %131, %133 : vector<1x1x128xf32>
      %135 = vector.broadcast %18 : f32 to vector<1x1x128xf32>
      %136 = arith.mulf %84, %135 : vector<1x1x128xf32>
      %137 = arith.addf %134, %136 : vector<1x1x128xf32>
      %138 = vector.broadcast %19 : f32 to vector<1x1x128xf32>
      %139 = arith.mulf %86, %138 : vector<1x1x128xf32>
      %140 = arith.addf %137, %139 : vector<1x1x128xf32>
      %141 = vector.broadcast %20 : f32 to vector<1x1x128xf32>
      %142 = arith.mulf %88, %141 : vector<1x1x128xf32>
      %143 = arith.addf %140, %142 : vector<1x1x128xf32>
      %144 = vector.broadcast %21 : f32 to vector<1x1x128xf32>
      %145 = arith.mulf %90, %144 : vector<1x1x128xf32>
      %146 = arith.addf %143, %145 : vector<1x1x128xf32>
      %147 = vector.broadcast %22 : f32 to vector<1x1x128xf32>
      %148 = arith.mulf %92, %147 : vector<1x1x128xf32>
      %149 = arith.addf %146, %148 : vector<1x1x128xf32>
      %150 = vector.broadcast %23 : f32 to vector<1x1x128xf32>
      %151 = arith.mulf %94, %150 : vector<1x1x128xf32>
      %152 = arith.addf %149, %151 : vector<1x1x128xf32>
      %153 = arith.mulf %152, %102 : vector<1x1x128xf32>
      %154 = vector.broadcast %25 : f32 to vector<1x1x128xf32>
      %155 = arith.addf %153, %154 : vector<1x1x128xf32>
      %c1_84 = arith.constant 1 : index
      %c0_85 = arith.constant 0 : index
      %c0_86 = arith.constant 0 : index
      %156 = vector.load %arg10[%c1_84, %c0_85, %c0_86] : memref<8x1x128xf32, #tpu.memory_space<vmem>>, vector<1x1x128xf32>
      tpu.vector_store %arg10[%c1_84, %c0_85, %c0_86], %155 {strides = array<i32>} : memref<8x1x128xf32, #tpu.memory_space<vmem>>, vector<1x1x128xf32>,
      %c10_87 = arith.constant 10 : index
      %c0_88 = arith.constant 0 : index
      %c0_89 = arith.constant 0 : index
      %157 = vector.load %arg2[%c10_87, %c0_88, %c0_89] : memref<16x1x128xf32, #tpu.memory_space<vmem>>, vector<1x1x128xf32>
      %cst_90 = arith.constant 0.707106769 : f32
      %158 = vector.broadcast %cst_90 : f32 to vector<1x1x128xf32>
      %159 = arith.mulf %157, %158 : vector<1x1x128xf32>
      %c11_91 = arith.constant 11 : index
      %c0_92 = arith.constant 0 : index
      %c0_93 = arith.constant 0 : index
      %160 = vector.load %arg2[%c11_91, %c0_92, %c0_93] : memref<16x1x128xf32, #tpu.memory_space<vmem>>, vector<1x1x128xf32>
      %cst_94 = arith.constant 0.707106769 : f32
      %161 = vector.broadcast %cst_94 : f32 to vector<1x1x128xf32>
      %162 = arith.mulf %160, %161 : vector<1x1x128xf32>
      %c0_95 = arith.constant 0 : index
      %c0_96 = arith.constant 0 : index
      %c0_97 = arith.constant 0 : index
      %163 = vector.load %arg2[%c0_95, %c0_96, %c0_97] : memref<16x1x128xf32, #tpu.memory_space<vmem>>, vector<1x1x128xf32>
      %164 = arith.mulf %159, %163 : vector<1x1x128xf32>
      %c1_98 = arith.constant 1 : index
      %c0_99 = arith.constant 0 : index
      %c0_100 = arith.constant 0 : index
      %165 = vector.load %arg2[%c1_98, %c0_99, %c0_100] : memref<16x1x128xf32, #tpu.memory_space<vmem>>, vector<1x1x128xf32>
      %166 = arith.mulf %162, %165 : vector<1x1x128xf32>
      %167 = arith.addf %164, %166 : vector<1x1x128xf32>
      %c2_101 = arith.constant 2 : index
      %c0_102 = arith.constant 0 : index
      %c0_103 = arith.constant 0 : index
      %168 = vector.load %arg2[%c2_101, %c0_102, %c0_103] : memref<16x1x128xf32, #tpu.memory_space<vmem>>, vector<1x1x128xf32>
      %169 = arith.mulf %159, %168 : vector<1x1x128xf32>
      %c3_104 = arith.constant 3 : index
      %c0_105 = arith.constant 0 : index
      %c0_106 = arith.constant 0 : index
      %170 = vector.load %arg2[%c3_104, %c0_105, %c0_106] : memref<16x1x128xf32, #tpu.memory_space<vmem>>, vector<1x1x128xf32>
      %171 = arith.mulf %162, %170 : vector<1x1x128xf32>
      %172 = arith.addf %169, %171 : vector<1x1x128xf32>
      %c4_107 = arith.constant 4 : index
      %c0_108 = arith.constant 0 : index
      %c0_109 = arith.constant 0 : index
      %173 = vector.load %arg2[%c4_107, %c0_108, %c0_109] : memref<16x1x128xf32, #tpu.memory_space<vmem>>, vector<1x1x128xf32>
      %174 = arith.mulf %159, %173 : vector<1x1x128xf32>
      %c5_110 = arith.constant 5 : index
      %c0_111 = arith.constant 0 : index
      %c0_112 = arith.constant 0 : index
      %175 = vector.load %arg2[%c5_110, %c0_111, %c0_112] : memref<16x1x128xf32, #tpu.memory_space<vmem>>, vector<1x1x128xf32>
      %176 = arith.mulf %162, %175 : vector<1x1x128xf32>
      %177 = arith.addf %174, %176 : vector<1x1x128xf32>
      %c6_113 = arith.constant 6 : index
      %c0_114 = arith.constant 0 : index
      %c0_115 = arith.constant 0 : index
      %178 = vector.load %arg2[%c6_113, %c0_114, %c0_115] : memref<16x1x128xf32, #tpu.memory_space<vmem>>, vector<1x1x128xf32>
      %179 = arith.mulf %159, %178 : vector<1x1x128xf32>
      %c7_116 = arith.constant 7 : index
      %c0_117 = arith.constant 0 : index
      %c0_118 = arith.constant 0 : index
      %180 = vector.load %arg2[%c7_116, %c0_117, %c0_118] : memref<16x1x128xf32, #tpu.memory_space<vmem>>, vector<1x1x128xf32>
      %181 = arith.mulf %162, %180 : vector<1x1x128xf32>
      %182 = arith.addf %179, %181 : vector<1x1x128xf32>
      %c8_119 = arith.constant 8 : index
      %c0_120 = arith.constant 0 : index
      %c0_121 = arith.constant 0 : index
      %183 = vector.load %arg2[%c8_119, %c0_120, %c0_121] : memref<16x1x128xf32, #tpu.memory_space<vmem>>, vector<1x1x128xf32>
      %184 = arith.mulf %159, %183 : vector<1x1x128xf32>
      %c9_122 = arith.constant 9 : index
      %c0_123 = arith.constant 0 : index
      %c0_124 = arith.constant 0 : index
      %185 = vector.load %arg2[%c9_122, %c0_123, %c0_124] : memref<16x1x128xf32, #tpu.memory_space<vmem>>, vector<1x1x128xf32>
      %186 = arith.mulf %162, %185 : vector<1x1x128xf32>
      %187 = arith.addf %184, %186 : vector<1x1x128xf32>
      %c10_125 = arith.constant 10 : index
      %c0_126 = arith.constant 0 : index
      %c0_127 = arith.constant 0 : index
      %188 = vector.load %arg2[%c10_125, %c0_126, %c0_127] : memref<16x1x128xf32, #tpu.memory_space<vmem>>, vector<1x1x128xf32>
      %189 = arith.mulf %159, %188 : vector<1x1x128xf32>
      %c11_128 = arith.constant 11 : index
      %c0_129 = arith.constant 0 : index
      %c0_130 = arith.constant 0 : index
      %190 = vector.load %arg2[%c11_128, %c0_129, %c0_130] : memref<16x1x128xf32, #tpu.memory_space<vmem>>, vector<1x1x128xf32>
      %191 = arith.mulf %162, %190 : vector<1x1x128xf32>
      %192 = arith.addf %189, %191 : vector<1x1x128xf32>
      %c12_131 = arith.constant 12 : index
      %c0_132 = arith.constant 0 : index
      %c0_133 = arith.constant 0 : index
      %193 = vector.load %arg2[%c12_131, %c0_132, %c0_133] : memref<16x1x128xf32, #tpu.memory_space<vmem>>, vector<1x1x128xf32>
      %194 = arith.mulf %159, %193 : vector<1x1x128xf32>
      %c13_134 = arith.constant 13 : index
      %c0_135 = arith.constant 0 : index
      %c0_136 = arith.constant 0 : index
      %195 = vector.load %arg2[%c13_134, %c0_135, %c0_136] : memref<16x1x128xf32, #tpu.memory_space<vmem>>, vector<1x1x128xf32>
      %196 = arith.mulf %162, %195 : vector<1x1x128xf32>
      %197 = arith.addf %194, %196 : vector<1x1x128xf32>
      %c14_137 = arith.constant 14 : index
      %c0_138 = arith.constant 0 : index
      %c0_139 = arith.constant 0 : index
      %198 = vector.load %arg2[%c14_137, %c0_138, %c0_139] : memref<16x1x128xf32, #tpu.memory_space<vmem>>, vector<1x1x128xf32>
      %199 = arith.mulf %159, %198 : vector<1x1x128xf32>
      %c15_140 = arith.constant 15 : index
      %c0_141 = arith.constant 0 : index
      %c0_142 = arith.constant 0 : index
      %200 = vector.load %arg2[%c15_140, %c0_141, %c0_142] : memref<16x1x128xf32, #tpu.memory_space<vmem>>, vector<1x1x128xf32>
      %201 = arith.mulf %162, %200 : vector<1x1x128xf32>
      %202 = arith.addf %199, %201 : vector<1x1x128xf32>
      %203 = arith.maximumf %167, %172 : vector<1x1x128xf32>
      %204 = arith.maximumf %203, %177 : vector<1x1x128xf32>
      %205 = arith.maximumf %204, %182 : vector<1x1x128xf32>
      %206 = arith.maximumf %205, %187 : vector<1x1x128xf32>
      %207 = arith.maximumf %206, %192 : vector<1x1x128xf32>
      %208 = arith.maximumf %207, %197 : vector<1x1x128xf32>
      %209 = arith.maximumf %208, %202 : vector<1x1x128xf32>
      %210 = arith.subf %167, %209 : vector<1x1x128xf32>
      %211 = math.exp %210 : vector<1x1x128xf32>
      %212 = arith.subf %172, %209 : vector<1x1x128xf32>
      %213 = math.exp %212 : vector<1x1x128xf32>
      %214 = arith.subf %177, %209 : vector<1x1x128xf32>
      %215 = math.exp %214 : vector<1x1x128xf32>
      %216 = arith.subf %182, %209 : vector<1x1x128xf32>
      %217 = math.exp %216 : vector<1x1x128xf32>
      %218 = arith.subf %187, %209 : vector<1x1x128xf32>
      %219 = math.exp %218 : vector<1x1x128xf32>
      %220 = arith.subf %192, %209 : vector<1x1x128xf32>
      %221 = math.exp %220 : vector<1x1x128xf32>
      %222 = arith.subf %197, %209 : vector<1x1x128xf32>
      %223 = math.exp %222 : vector<1x1x128xf32>
      %224 = arith.subf %202, %209 : vector<1x1x128xf32>
      %225 = math.exp %224 : vector<1x1x128xf32>
      %226 = arith.addf %211, %213 : vector<1x1x128xf32>
      %227 = arith.addf %226, %215 : vector<1x1x128xf32>
      %228 = arith.addf %227, %217 : vector<1x1x128xf32>
      %229 = arith.addf %228, %219 : vector<1x1x128xf32>
      %230 = arith.addf %229, %221 : vector<1x1x128xf32>
      %231 = arith.addf %230, %223 : vector<1x1x128xf32>
      %232 = arith.addf %231, %225 : vector<1x1x128xf32>
      %233 = tpu.reciprocal %232 : vector<1x1x128xf32> -> vector<1x1x128xf32>
      %234 = vector.broadcast %8 : f32 to vector<1x1x128xf32>
      %235 = arith.mulf %211, %234 : vector<1x1x128xf32>
      %236 = vector.broadcast %9 : f32 to vector<1x1x128xf32>
      %237 = arith.mulf %213, %236 : vector<1x1x128xf32>
      %238 = arith.addf %235, %237 : vector<1x1x128xf32>
      %239 = vector.broadcast %10 : f32 to vector<1x1x128xf32>
      %240 = arith.mulf %215, %239 : vector<1x1x128xf32>
      %241 = arith.addf %238, %240 : vector<1x1x128xf32>
      %242 = vector.broadcast %11 : f32 to vector<1x1x128xf32>
      %243 = arith.mulf %217, %242 : vector<1x1x128xf32>
      %244 = arith.addf %241, %243 : vector<1x1x128xf32>
      %245 = vector.broadcast %12 : f32 to vector<1x1x128xf32>
      %246 = arith.mulf %219, %245 : vector<1x1x128xf32>
      %247 = arith.addf %244, %246 : vector<1x1x128xf32>
      %248 = vector.broadcast %13 : f32 to vector<1x1x128xf32>
      %249 = arith.mulf %221, %248 : vector<1x1x128xf32>
      %250 = arith.addf %247, %249 : vector<1x1x128xf32>
      %251 = vector.broadcast %14 : f32 to vector<1x1x128xf32>
      %252 = arith.mulf %223, %251 : vector<1x1x128xf32>
      %253 = arith.addf %250, %252 : vector<1x1x128xf32>
      %254 = vector.broadcast %15 : f32 to vector<1x1x128xf32>
      %255 = arith.mulf %225, %254 : vector<1x1x128xf32>
      %256 = arith.addf %253, %255 : vector<1x1x128xf32>
      %257 = arith.mulf %256, %233 : vector<1x1x128xf32>
      %258 = vector.broadcast %24 : f32 to vector<1x1x128xf32>
      %259 = arith.addf %257, %258 : vector<1x1x128xf32>
      %c2_143 = arith.constant 2 : index
      %c0_144 = arith.constant 0 : index
      %c0_145 = arith.constant 0 : index
      %260 = vector.load %arg10[%c2_143, %c0_144, %c0_145] : memref<8x1x128xf32, #tpu.memory_space<vmem>>, vector<1x1x128xf32>
      tpu.vector_store %arg10[%c2_143, %c0_144, %c0_145], %259 {strides = array<i32>} : memref<8x1x128xf32, #tpu.memory_space<vmem>>, vector<1x1x128xf32>,
      %261 = vector.broadcast %16 : f32 to vector<1x1x128xf32>
      %262 = arith.mulf %211, %261 : vector<1x1x128xf32>
      %263 = vector.broadcast %17 : f32 to vector<1x1x128xf32>
      %264 = arith.mulf %213, %263 : vector<1x1x128xf32>
      %265 = arith.addf %262, %264 : vector<1x1x128xf32>
      %266 = vector.broadcast %18 : f32 to vector<1x1x128xf32>
      %267 = arith.mulf %215, %266 : vector<1x1x128xf32>
      %268 = arith.addf %265, %267 : vector<1x1x128xf32>
      %269 = vector.broadcast %19 : f32 to vector<1x1x128xf32>
      %270 = arith.mulf %217, %269 : vector<1x1x128xf32>
      %271 = arith.addf %268, %270 : vector<1x1x128xf32>
      %272 = vector.broadcast %20 : f32 to vector<1x1x128xf32>
      %273 = arith.mulf %219, %272 : vector<1x1x128xf32>
      %274 = arith.addf %271, %273 : vector<1x1x128xf32>
      %275 = vector.broadcast %21 : f32 to vector<1x1x128xf32>
      %276 = arith.mulf %221, %275 : vector<1x1x128xf32>
      %277 = arith.addf %274, %276 : vector<1x1x128xf32>
      %278 = vector.broadcast %22 : f32 to vector<1x1x128xf32>
      %279 = arith.mulf %223, %278 : vector<1x1x128xf32>
      %280 = arith.addf %277, %279 : vector<1x1x128xf32>
      %281 = vector.broadcast %23 : f32 to vector<1x1x128xf32>
      %282 = arith.mulf %225, %281 : vector<1x1x128xf32>
      %283 = arith.addf %280, %282 : vector<1x1x128xf32>
      %284 = arith.mulf %283, %233 : vector<1x1x128xf32>
      %285 = vector.broadcast %25 : f32 to vector<1x1x128xf32>
      %286 = arith.addf %284, %285 : vector<1x1x128xf32>
      %c3_146 = arith.constant 3 : index
      %c0_147 = arith.constant 0 : index
      %c0_148 = arith.constant 0 : index
      %287 = vector.load %arg10[%c3_146, %c0_147, %c0_148] : memref<8x1x128xf32, #tpu.memory_space<vmem>>, vector<1x1x128xf32>
      tpu.vector_store %arg10[%c3_146, %c0_147, %c0_148], %286 {strides = array<i32>} : memref<8x1x128xf32, #tpu.memory_space<vmem>>, vector<1x1x128xf32>,
      %c12_149 = arith.constant 12 : index
      %c0_150 = arith.constant 0 : index
      %c0_151 = arith.constant 0 : index
      %288 = vector.load %arg2[%c12_149, %c0_150, %c0_151] : memref<16x1x128xf32, #tpu.memory_space<vmem>>, vector<1x1x128xf32>
      %cst_152 = arith.constant 0.707106769 : f32
      %289 = vector.broadcast %cst_152 : f32 to vector<1x1x128xf32>
      %290 = arith.mulf %288, %289 : vector<1x1x128xf32>
      %c13_153 = arith.constant 13 : index
      %c0_154 = arith.constant 0 : index
      %c0_155 = arith.constant 0 : index
      %291 = vector.load %arg2[%c13_153, %c0_154, %c0_155] : memref<16x1x128xf32, #tpu.memory_space<vmem>>, vector<1x1x128xf32>
      %cst_156 = arith.constant 0.707106769 : f32
      %292 = vector.broadcast %cst_156 : f32 to vector<1x1x128xf32>
      %293 = arith.mulf %291, %292 : vector<1x1x128xf32>
      %c0_157 = arith.constant 0 : index
      %c0_158 = arith.constant 0 : index
      %c0_159 = arith.constant 0 : index
      %294 = vector.load %arg2[%c0_157, %c0_158, %c0_159] : memref<16x1x128xf32, #tpu.memory_space<vmem>>, vector<1x1x128xf32>
      %295 = arith.mulf %290, %294 : vector<1x1x128xf32>
      %c1_160 = arith.constant 1 : index
      %c0_161 = arith.constant 0 : index
      %c0_162 = arith.constant 0 : index
      %296 = vector.load %arg2[%c1_160, %c0_161, %c0_162] : memref<16x1x128xf32, #tpu.memory_space<vmem>>, vector<1x1x128xf32>
      %297 = arith.mulf %293, %296 : vector<1x1x128xf32>
      %298 = arith.addf %295, %297 : vector<1x1x128xf32>
      %c2_163 = arith.constant 2 : index
      %c0_164 = arith.constant 0 : index
      %c0_165 = arith.constant 0 : index
      %299 = vector.load %arg2[%c2_163, %c0_164, %c0_165] : memref<16x1x128xf32, #tpu.memory_space<vmem>>, vector<1x1x128xf32>
      %300 = arith.mulf %290, %299 : vector<1x1x128xf32>
      %c3_166 = arith.constant 3 : index
      %c0_167 = arith.constant 0 : index
      %c0_168 = arith.constant 0 : index
      %301 = vector.load %arg2[%c3_166, %c0_167, %c0_168] : memref<16x1x128xf32, #tpu.memory_space<vmem>>, vector<1x1x128xf32>
      %302 = arith.mulf %293, %301 : vector<1x1x128xf32>
      %303 = arith.addf %300, %302 : vector<1x1x128xf32>
      %c4_169 = arith.constant 4 : index
      %c0_170 = arith.constant 0 : index
      %c0_171 = arith.constant 0 : index
      %304 = vector.load %arg2[%c4_169, %c0_170, %c0_171] : memref<16x1x128xf32, #tpu.memory_space<vmem>>, vector<1x1x128xf32>
      %305 = arith.mulf %290, %304 : vector<1x1x128xf32>
      %c5_172 = arith.constant 5 : index
      %c0_173 = arith.constant 0 : index
      %c0_174 = arith.constant 0 : index
      %306 = vector.load %arg2[%c5_172, %c0_173, %c0_174] : memref<16x1x128xf32, #tpu.memory_space<vmem>>, vector<1x1x128xf32>
      %307 = arith.mulf %293, %306 : vector<1x1x128xf32>
      %308 = arith.addf %305, %307 : vector<1x1x128xf32>
      %c6_175 = arith.constant 6 : index
      %c0_176 = arith.constant 0 : index
      %c0_177 = arith.constant 0 : index
      %309 = vector.load %arg2[%c6_175, %c0_176, %c0_177] : memref<16x1x128xf32, #tpu.memory_space<vmem>>, vector<1x1x128xf32>
      %310 = arith.mulf %290, %309 : vector<1x1x128xf32>
      %c7_178 = arith.constant 7 : index
      %c0_179 = arith.constant 0 : index
      %c0_180 = arith.constant 0 : index
      %311 = vector.load %arg2[%c7_178, %c0_179, %c0_180] : memref<16x1x128xf32, #tpu.memory_space<vmem>>, vector<1x1x128xf32>
      %312 = arith.mulf %293, %311 : vector<1x1x128xf32>
      %313 = arith.addf %310, %312 : vector<1x1x128xf32>
      %c8_181 = arith.constant 8 : index
      %c0_182 = arith.constant 0 : index
      %c0_183 = arith.constant 0 : index
      %314 = vector.load %arg2[%c8_181, %c0_182, %c0_183] : memref<16x1x128xf32, #tpu.memory_space<vmem>>, vector<1x1x128xf32>
      %315 = arith.mulf %290, %314 : vector<1x1x128xf32>
      %c9_184 = arith.constant 9 : index
      %c0_185 = arith.constant 0 : index
      %c0_186 = arith.constant 0 : index
      %316 = vector.load %arg2[%c9_184, %c0_185, %c0_186] : memref<16x1x128xf32, #tpu.memory_space<vmem>>, vector<1x1x128xf32>
      %317 = arith.mulf %293, %316 : vector<1x1x128xf32>
      %318 = arith.addf %315, %317 : vector<1x1x128xf32>
      %c10_187 = arith.constant 10 : index
      %c0_188 = arith.constant 0 : index
      %c0_189 = arith.constant 0 : index
      %319 = vector.load %arg2[%c10_187, %c0_188, %c0_189] : memref<16x1x128xf32, #tpu.memory_space<vmem>>, vector<1x1x128xf32>
      %320 = arith.mulf %290, %319 : vector<1x1x128xf32>
      %c11_190 = arith.constant 11 : index
      %c0_191 = arith.constant 0 : index
      %c0_192 = arith.constant 0 : index
      %321 = vector.load %arg2[%c11_190, %c0_191, %c0_192] : memref<16x1x128xf32, #tpu.memory_space<vmem>>, vector<1x1x128xf32>
      %322 = arith.mulf %293, %321 : vector<1x1x128xf32>
      %323 = arith.addf %320, %322 : vector<1x1x128xf32>
      %c12_193 = arith.constant 12 : index
      %c0_194 = arith.constant 0 : index
      %c0_195 = arith.constant 0 : index
      %324 = vector.load %arg2[%c12_193, %c0_194, %c0_195] : memref<16x1x128xf32, #tpu.memory_space<vmem>>, vector<1x1x128xf32>
      %325 = arith.mulf %290, %324 : vector<1x1x128xf32>
      %c13_196 = arith.constant 13 : index
      %c0_197 = arith.constant 0 : index
      %c0_198 = arith.constant 0 : index
      %326 = vector.load %arg2[%c13_196, %c0_197, %c0_198] : memref<16x1x128xf32, #tpu.memory_space<vmem>>, vector<1x1x128xf32>
      %327 = arith.mulf %293, %326 : vector<1x1x128xf32>
      %328 = arith.addf %325, %327 : vector<1x1x128xf32>
      %c14_199 = arith.constant 14 : index
      %c0_200 = arith.constant 0 : index
      %c0_201 = arith.constant 0 : index
      %329 = vector.load %arg2[%c14_199, %c0_200, %c0_201] : memref<16x1x128xf32, #tpu.memory_space<vmem>>, vector<1x1x128xf32>
      %330 = arith.mulf %290, %329 : vector<1x1x128xf32>
      %c15_202 = arith.constant 15 : index
      %c0_203 = arith.constant 0 : index
      %c0_204 = arith.constant 0 : index
      %331 = vector.load %arg2[%c15_202, %c0_203, %c0_204] : memref<16x1x128xf32, #tpu.memory_space<vmem>>, vector<1x1x128xf32>
      %332 = arith.mulf %293, %331 : vector<1x1x128xf32>
      %333 = arith.addf %330, %332 : vector<1x1x128xf32>
      %334 = arith.maximumf %298, %303 : vector<1x1x128xf32>
      %335 = arith.maximumf %334, %308 : vector<1x1x128xf32>
      %336 = arith.maximumf %335, %313 : vector<1x1x128xf32>
      %337 = arith.maximumf %336, %318 : vector<1x1x128xf32>
      %338 = arith.maximumf %337, %323 : vector<1x1x128xf32>
      %339 = arith.maximumf %338, %328 : vector<1x1x128xf32>
      %340 = arith.maximumf %339, %333 : vector<1x1x128xf32>
      %341 = arith.subf %298, %340 : vector<1x1x128xf32>
      %342 = math.exp %341 : vector<1x1x128xf32>
      %343 = arith.subf %303, %340 : vector<1x1x128xf32>
      %344 = math.exp %343 : vector<1x1x128xf32>
      %345 = arith.subf %308, %340 : vector<1x1x128xf32>
      %346 = math.exp %345 : vector<1x1x128xf32>
      %347 = arith.subf %313, %340 : vector<1x1x128xf32>
      %348 = math.exp %347 : vector<1x1x128xf32>
      %349 = arith.subf %318, %340 : vector<1x1x128xf32>
      %350 = math.exp %349 : vector<1x1x128xf32>
      %351 = arith.subf %323, %340 : vector<1x1x128xf32>
      %352 = math.exp %351 : vector<1x1x128xf32>
      %353 = arith.subf %328, %340 : vector<1x1x128xf32>
      %354 = math.exp %353 : vector<1x1x128xf32>
      %355 = arith.subf %333, %340 : vector<1x1x128xf32>
      %356 = math.exp %355 : vector<1x1x128xf32>
      %357 = arith.addf %342, %344 : vector<1x1x128xf32>
      %358 = arith.addf %357, %346 : vector<1x1x128xf32>
      %359 = arith.addf %358, %348 : vector<1x1x128xf32>
      %360 = arith.addf %359, %350 : vector<1x1x128xf32>
      %361 = arith.addf %360, %352 : vector<1x1x128xf32>
      %362 = arith.addf %361, %354 : vector<1x1x128xf32>
      %363 = arith.addf %362, %356 : vector<1x1x128xf32>
      %364 = tpu.reciprocal %363 : vector<1x1x128xf32> -> vector<1x1x128xf32>
      %365 = vector.broadcast %8 : f32 to vector<1x1x128xf32>
      %366 = arith.mulf %342, %365 : vector<1x1x128xf32>
      %367 = vector.broadcast %9 : f32 to vector<1x1x128xf32>
      %368 = arith.mulf %344, %367 : vector<1x1x128xf32>
      %369 = arith.addf %366, %368 : vector<1x1x128xf32>
      %370 = vector.broadcast %10 : f32 to vector<1x1x128xf32>
      %371 = arith.mulf %346, %370 : vector<1x1x128xf32>
      %372 = arith.addf %369, %371 : vector<1x1x128xf32>
      %373 = vector.broadcast %11 : f32 to vector<1x1x128xf32>
      %374 = arith.mulf %348, %373 : vector<1x1x128xf32>
      %375 = arith.addf %372, %374 : vector<1x1x128xf32>
      %376 = vector.broadcast %12 : f32 to vector<1x1x128xf32>
      %377 = arith.mulf %350, %376 : vector<1x1x128xf32>
      %378 = arith.addf %375, %377 : vector<1x1x128xf32>
      %379 = vector.broadcast %13 : f32 to vector<1x1x128xf32>
      %380 = arith.mulf %352, %379 : vector<1x1x128xf32>
      %381 = arith.addf %378, %380 : vector<1x1x128xf32>
      %382 = vector.broadcast %14 : f32 to vector<1x1x128xf32>
      %383 = arith.mulf %354, %382 : vector<1x1x128xf32>
      %384 = arith.addf %381, %383 : vector<1x1x128xf32>
      %385 = vector.broadcast %15 : f32 to vector<1x1x128xf32>
      %386 = arith.mulf %356, %385 : vector<1x1x128xf32>
      %387 = arith.addf %384, %386 : vector<1x1x128xf32>
      %388 = arith.mulf %387, %364 : vector<1x1x128xf32>
      %389 = vector.broadcast %24 : f32 to vector<1x1x128xf32>
      %390 = arith.addf %388, %389 : vector<1x1x128xf32>
      %c4_205 = arith.constant 4 : index
      %c0_206 = arith.constant 0 : index
      %c0_207 = arith.constant 0 : index
      %391 = vector.load %arg10[%c4_205, %c0_206, %c0_207] : memref<8x1x128xf32, #tpu.memory_space<vmem>>, vector<1x1x128xf32>
      tpu.vector_store %arg10[%c4_205, %c0_206, %c0_207], %390 {strides = array<i32>} : memref<8x1x128xf32, #tpu.memory_space<vmem>>, vector<1x1x128xf32>,
      %392 = vector.broadcast %16 : f32 to vector<1x1x128xf32>
      %393 = arith.mulf %342, %392 : vector<1x1x128xf32>
      %394 = vector.broadcast %17 : f32 to vector<1x1x128xf32>
      %395 = arith.mulf %344, %394 : vector<1x1x128xf32>
      %396 = arith.addf %393, %395 : vector<1x1x128xf32>
      %397 = vector.broadcast %18 : f32 to vector<1x1x128xf32>
      %398 = arith.mulf %346, %397 : vector<1x1x128xf32>
      %399 = arith.addf %396, %398 : vector<1x1x128xf32>
      %400 = vector.broadcast %19 : f32 to vector<1x1x128xf32>
      %401 = arith.mulf %348, %400 : vector<1x1x128xf32>
      %402 = arith.addf %399, %401 : vector<1x1x128xf32>
      %403 = vector.broadcast %20 : f32 to vector<1x1x128xf32>
      %404 = arith.mulf %350, %403 : vector<1x1x128xf32>
      %405 = arith.addf %402, %404 : vector<1x1x128xf32>
      %406 = vector.broadcast %21 : f32 to vector<1x1x128xf32>
      %407 = arith.mulf %352, %406 : vector<1x1x128xf32>
      %408 = arith.addf %405, %407 : vector<1x1x128xf32>
      %409 = vector.broadcast %22 : f32 to vector<1x1x128xf32>
      %410 = arith.mulf %354, %409 : vector<1x1x128xf32>
      %411 = arith.addf %408, %410 : vector<1x1x128xf32>
      %412 = vector.broadcast %23 : f32 to vector<1x1x128xf32>
      %413 = arith.mulf %356, %412 : vector<1x1x128xf32>
      %414 = arith.addf %411, %413 : vector<1x1x128xf32>
      %415 = arith.mulf %414, %364 : vector<1x1x128xf32>
      %416 = vector.broadcast %25 : f32 to vector<1x1x128xf32>
      %417 = arith.addf %415, %416 : vector<1x1x128xf32>
      %c5_208 = arith.constant 5 : index
      %c0_209 = arith.constant 0 : index
      %c0_210 = arith.constant 0 : index
      %418 = vector.load %arg10[%c5_208, %c0_209, %c0_210] : memref<8x1x128xf32, #tpu.memory_space<vmem>>, vector<1x1x128xf32>
      tpu.vector_store %arg10[%c5_208, %c0_209, %c0_210], %417 {strides = array<i32>} : memref<8x1x128xf32, #tpu.memory_space<vmem>>, vector<1x1x128xf32>,
      %c14_211 = arith.constant 14 : index
      %c0_212 = arith.constant 0 : index
      %c0_213 = arith.constant 0 : index
      %419 = vector.load %arg2[%c14_211, %c0_212, %c0_213] : memref<16x1x128xf32, #tpu.memory_space<vmem>>, vector<1x1x128xf32>
      %cst_214 = arith.constant 0.707106769 : f32
      %420 = vector.broadcast %cst_214 : f32 to vector<1x1x128xf32>
      %421 = arith.mulf %419, %420 : vector<1x1x128xf32>
      %c15_215 = arith.constant 15 : index
      %c0_216 = arith.constant 0 : index
      %c0_217 = arith.constant 0 : index
      %422 = vector.load %arg2[%c15_215, %c0_216, %c0_217] : memref<16x1x128xf32, #tpu.memory_space<vmem>>, vector<1x1x128xf32>
      %cst_218 = arith.constant 0.707106769 : f32
      %423 = vector.broadcast %cst_218 : f32 to vector<1x1x128xf32>
      %424 = arith.mulf %422, %423 : vector<1x1x128xf32>
      %c0_219 = arith.constant 0 : index
      %c0_220 = arith.constant 0 : index
      %c0_221 = arith.constant 0 : index
      %425 = vector.load %arg2[%c0_219, %c0_220, %c0_221] : memref<16x1x128xf32, #tpu.memory_space<vmem>>, vector<1x1x128xf32>
      %426 = arith.mulf %421, %425 : vector<1x1x128xf32>
      %c1_222 = arith.constant 1 : index
      %c0_223 = arith.constant 0 : index
      %c0_224 = arith.constant 0 : index
      %427 = vector.load %arg2[%c1_222, %c0_223, %c0_224] : memref<16x1x128xf32, #tpu.memory_space<vmem>>, vector<1x1x128xf32>
      %428 = arith.mulf %424, %427 : vector<1x1x128xf32>
      %429 = arith.addf %426, %428 : vector<1x1x128xf32>
      %c2_225 = arith.constant 2 : index
      %c0_226 = arith.constant 0 : index
      %c0_227 = arith.constant 0 : index
      %430 = vector.load %arg2[%c2_225, %c0_226, %c0_227] : memref<16x1x128xf32, #tpu.memory_space<vmem>>, vector<1x1x128xf32>
      %431 = arith.mulf %421, %430 : vector<1x1x128xf32>
      %c3_228 = arith.constant 3 : index
      %c0_229 = arith.constant 0 : index
      %c0_230 = arith.constant 0 : index
      %432 = vector.load %arg2[%c3_228, %c0_229, %c0_230] : memref<16x1x128xf32, #tpu.memory_space<vmem>>, vector<1x1x128xf32>
      %433 = arith.mulf %424, %432 : vector<1x1x128xf32>
      %434 = arith.addf %431, %433 : vector<1x1x128xf32>
      %c4_231 = arith.constant 4 : index
      %c0_232 = arith.constant 0 : index
      %c0_233 = arith.constant 0 : index
      %435 = vector.load %arg2[%c4_231, %c0_232, %c0_233] : memref<16x1x128xf32, #tpu.memory_space<vmem>>, vector<1x1x128xf32>
      %436 = arith.mulf %421, %435 : vector<1x1x128xf32>
      %c5_234 = arith.constant 5 : index
      %c0_235 = arith.constant 0 : index
      %c0_236 = arith.constant 0 : index
      %437 = vector.load %arg2[%c5_234, %c0_235, %c0_236] : memref<16x1x128xf32, #tpu.memory_space<vmem>>, vector<1x1x128xf32>
      %438 = arith.mulf %424, %437 : vector<1x1x128xf32>
      %439 = arith.addf %436, %438 : vector<1x1x128xf32>
      %c6_237 = arith.constant 6 : index
      %c0_238 = arith.constant 0 : index
      %c0_239 = arith.constant 0 : index
      %440 = vector.load %arg2[%c6_237, %c0_238, %c0_239] : memref<16x1x128xf32, #tpu.memory_space<vmem>>, vector<1x1x128xf32>
      %441 = arith.mulf %421, %440 : vector<1x1x128xf32>
      %c7_240 = arith.constant 7 : index
      %c0_241 = arith.constant 0 : index
      %c0_242 = arith.constant 0 : index
      %442 = vector.load %arg2[%c7_240, %c0_241, %c0_242] : memref<16x1x128xf32, #tpu.memory_space<vmem>>, vector<1x1x128xf32>
      %443 = arith.mulf %424, %442 : vector<1x1x128xf32>
      %444 = arith.addf %441, %443 : vector<1x1x128xf32>
      %c8_243 = arith.constant 8 : index
      %c0_244 = arith.constant 0 : index
      %c0_245 = arith.constant 0 : index
      %445 = vector.load %arg2[%c8_243, %c0_244, %c0_245] : memref<16x1x128xf32, #tpu.memory_space<vmem>>, vector<1x1x128xf32>
      %446 = arith.mulf %421, %445 : vector<1x1x128xf32>
      %c9_246 = arith.constant 9 : index
      %c0_247 = arith.constant 0 : index
      %c0_248 = arith.constant 0 : index
      %447 = vector.load %arg2[%c9_246, %c0_247, %c0_248] : memref<16x1x128xf32, #tpu.memory_space<vmem>>, vector<1x1x128xf32>
      %448 = arith.mulf %424, %447 : vector<1x1x128xf32>
      %449 = arith.addf %446, %448 : vector<1x1x128xf32>
      %c10_249 = arith.constant 10 : index
      %c0_250 = arith.constant 0 : index
      %c0_251 = arith.constant 0 : index
      %450 = vector.load %arg2[%c10_249, %c0_250, %c0_251] : memref<16x1x128xf32, #tpu.memory_space<vmem>>, vector<1x1x128xf32>
      %451 = arith.mulf %421, %450 : vector<1x1x128xf32>
      %c11_252 = arith.constant 11 : index
      %c0_253 = arith.constant 0 : index
      %c0_254 = arith.constant 0 : index
      %452 = vector.load %arg2[%c11_252, %c0_253, %c0_254] : memref<16x1x128xf32, #tpu.memory_space<vmem>>, vector<1x1x128xf32>
      %453 = arith.mulf %424, %452 : vector<1x1x128xf32>
      %454 = arith.addf %451, %453 : vector<1x1x128xf32>
      %c12_255 = arith.constant 12 : index
      %c0_256 = arith.constant 0 : index
      %c0_257 = arith.constant 0 : index
      %455 = vector.load %arg2[%c12_255, %c0_256, %c0_257] : memref<16x1x128xf32, #tpu.memory_space<vmem>>, vector<1x1x128xf32>
      %456 = arith.mulf %421, %455 : vector<1x1x128xf32>
      %c13_258 = arith.constant 13 : index
      %c0_259 = arith.constant 0 : index
      %c0_260 = arith.constant 0 : index
      %457 = vector.load %arg2[%c13_258, %c0_259, %c0_260] : memref<16x1x128xf32, #tpu.memory_space<vmem>>, vector<1x1x128xf32>
      %458 = arith.mulf %424, %457 : vector<1x1x128xf32>
      %459 = arith.addf %456, %458 : vector<1x1x128xf32>
      %c14_261 = arith.constant 14 : index
      %c0_262 = arith.constant 0 : index
      %c0_263 = arith.constant 0 : index
      %460 = vector.load %arg2[%c14_261, %c0_262, %c0_263] : memref<16x1x128xf32, #tpu.memory_space<vmem>>, vector<1x1x128xf32>
      %461 = arith.mulf %421, %460 : vector<1x1x128xf32>
      %c15_264 = arith.constant 15 : index
      %c0_265 = arith.constant 0 : index
      %c0_266 = arith.constant 0 : index
      %462 = vector.load %arg2[%c15_264, %c0_265, %c0_266] : memref<16x1x128xf32, #tpu.memory_space<vmem>>, vector<1x1x128xf32>
      %463 = arith.mulf %424, %462 : vector<1x1x128xf32>
      %464 = arith.addf %461, %463 : vector<1x1x128xf32>
      %465 = arith.maximumf %429, %434 : vector<1x1x128xf32>
      %466 = arith.maximumf %465, %439 : vector<1x1x128xf32>
      %467 = arith.maximumf %466, %444 : vector<1x1x128xf32>
      %468 = arith.maximumf %467, %449 : vector<1x1x128xf32>
      %469 = arith.maximumf %468, %454 : vector<1x1x128xf32>
      %470 = arith.maximumf %469, %459 : vector<1x1x128xf32>
      %471 = arith.maximumf %470, %464 : vector<1x1x128xf32>
      %472 = arith.subf %429, %471 : vector<1x1x128xf32>
      %473 = math.exp %472 : vector<1x1x128xf32>
      %474 = arith.subf %434, %471 : vector<1x1x128xf32>
      %475 = math.exp %474 : vector<1x1x128xf32>
      %476 = arith.subf %439, %471 : vector<1x1x128xf32>
      %477 = math.exp %476 : vector<1x1x128xf32>
      %478 = arith.subf %444, %471 : vector<1x1x128xf32>
      %479 = math.exp %478 : vector<1x1x128xf32>
      %480 = arith.subf %449, %471 : vector<1x1x128xf32>
      %481 = math.exp %480 : vector<1x1x128xf32>
      %482 = arith.subf %454, %471 : vector<1x1x128xf32>
      %483 = math.exp %482 : vector<1x1x128xf32>
      %484 = arith.subf %459, %471 : vector<1x1x128xf32>
      %485 = math.exp %484 : vector<1x1x128xf32>
      %486 = arith.subf %464, %471 : vector<1x1x128xf32>
      %487 = math.exp %486 : vector<1x1x128xf32>
      %488 = arith.addf %473, %475 : vector<1x1x128xf32>
      %489 = arith.addf %488, %477 : vector<1x1x128xf32>
      %490 = arith.addf %489, %479 : vector<1x1x128xf32>
      %491 = arith.addf %490, %481 : vector<1x1x128xf32>
      %492 = arith.addf %491, %483 : vector<1x1x128xf32>
      %493 = arith.addf %492, %485 : vector<1x1x128xf32>
      %494 = arith.addf %493, %487 : vector<1x1x128xf32>
      %495 = tpu.reciprocal %494 : vector<1x1x128xf32> -> vector<1x1x128xf32>
      %496 = vector.broadcast %8 : f32 to vector<1x1x128xf32>
      %497 = arith.mulf %473, %496 : vector<1x1x128xf32>
      %498 = vector.broadcast %9 : f32 to vector<1x1x128xf32>
      %499 = arith.mulf %475, %498 : vector<1x1x128xf32>
      %500 = arith.addf %497, %499 : vector<1x1x128xf32>
      %501 = vector.broadcast %10 : f32 to vector<1x1x128xf32>
      %502 = arith.mulf %477, %501 : vector<1x1x128xf32>
      %503 = arith.addf %500, %502 : vector<1x1x128xf32>
      %504 = vector.broadcast %11 : f32 to vector<1x1x128xf32>
      %505 = arith.mulf %479, %504 : vector<1x1x128xf32>
      %506 = arith.addf %503, %505 : vector<1x1x128xf32>
      %507 = vector.broadcast %12 : f32 to vector<1x1x128xf32>
      %508 = arith.mulf %481, %507 : vector<1x1x128xf32>
      %509 = arith.addf %506, %508 : vector<1x1x128xf32>
      %510 = vector.broadcast %13 : f32 to vector<1x1x128xf32>
      %511 = arith.mulf %483, %510 : vector<1x1x128xf32>
      %512 = arith.addf %509, %511 : vector<1x1x128xf32>
      %513 = vector.broadcast %14 : f32 to vector<1x1x128xf32>
      %514 = arith.mulf %485, %513 : vector<1x1x128xf32>
      %515 = arith.addf %512, %514 : vector<1x1x128xf32>
      %516 = vector.broadcast %15 : f32 to vector<1x1x128xf32>
      %517 = arith.mulf %487, %516 : vector<1x1x128xf32>
      %518 = arith.addf %515, %517 : vector<1x1x128xf32>
      %519 = arith.mulf %518, %495 : vector<1x1x128xf32>
      %520 = vector.broadcast %24 : f32 to vector<1x1x128xf32>
      %521 = arith.addf %519, %520 : vector<1x1x128xf32>
      %c6_267 = arith.constant 6 : index
      %c0_268 = arith.constant 0 : index
      %c0_269 = arith.constant 0 : index
      %522 = vector.load %arg10[%c6_267, %c0_268, %c0_269] : memref<8x1x128xf32, #tpu.memory_space<vmem>>, vector<1x1x128xf32>
      tpu.vector_store %arg10[%c6_267, %c0_268, %c0_269], %521 {strides = array<i32>} : memref<8x1x128xf32, #tpu.memory_space<vmem>>, vector<1x1x128xf32>,
      %523 = vector.broadcast %16 : f32 to vector<1x1x128xf32>
      %524 = arith.mulf %473, %523 : vector<1x1x128xf32>
      %525 = vector.broadcast %17 : f32 to vector<1x1x128xf32>
      %526 = arith.mulf %475, %525 : vector<1x1x128xf32>
      %527 = arith.addf %524, %526 : vector<1x1x128xf32>
      %528 = vector.broadcast %18 : f32 to vector<1x1x128xf32>
      %529 = arith.mulf %477, %528 : vector<1x1x128xf32>
      %530 = arith.addf %527, %529 : vector<1x1x128xf32>
      %531 = vector.broadcast %19 : f32 to vector<1x1x128xf32>
      %532 = arith.mulf %479, %531 : vector<1x1x128xf32>
      %533 = arith.addf %530, %532 : vector<1x1x128xf32>
      %534 = vector.broadcast %20 : f32 to vector<1x1x128xf32>
      %535 = arith.mulf %481, %534 : vector<1x1x128xf32>
      %536 = arith.addf %533, %535 : vector<1x1x128xf32>
      %537 = vector.broadcast %21 : f32 to vector<1x1x128xf32>
      %538 = arith.mulf %483, %537 : vector<1x1x128xf32>
      %539 = arith.addf %536, %538 : vector<1x1x128xf32>
      %540 = vector.broadcast %22 : f32 to vector<1x1x128xf32>
      %541 = arith.mulf %485, %540 : vector<1x1x128xf32>
      %542 = arith.addf %539, %541 : vector<1x1x128xf32>
      %543 = vector.broadcast %23 : f32 to vector<1x1x128xf32>
      %544 = arith.mulf %487, %543 : vector<1x1x128xf32>
      %545 = arith.addf %542, %544 : vector<1x1x128xf32>
      %546 = arith.mulf %545, %495 : vector<1x1x128xf32>
      %547 = vector.broadcast %25 : f32 to vector<1x1x128xf32>
      %548 = arith.addf %546, %547 : vector<1x1x128xf32>
      %c7_270 = arith.constant 7 : index
      %c0_271 = arith.constant 0 : index
      %c0_272 = arith.constant 0 : index
      %549 = vector.load %arg10[%c7_270, %c0_271, %c0_272] : memref<8x1x128xf32, #tpu.memory_space<vmem>>, vector<1x1x128xf32>
      tpu.vector_store %arg10[%c7_270, %c0_271, %c0_272], %548 {strides = array<i32>} : memref<8x1x128xf32, #tpu.memory_space<vmem>>, vector<1x1x128xf32>,
      %c0_273 = arith.constant 0 : index
      %c0_274 = arith.constant 0 : index
      %550 = memref.load %arg5[%c0_273, %c0_274] : memref<4x4xf32, #tpu.memory_space<smem>>
      %c0_275 = arith.constant 0 : index
      %c1_276 = arith.constant 1 : index
      %551 = memref.load %arg5[%c0_275, %c1_276] : memref<4x4xf32, #tpu.memory_space<smem>>
      %c0_277 = arith.constant 0 : index
      %c2_278 = arith.constant 2 : index
      %552 = memref.load %arg5[%c0_277, %c2_278] : memref<4x4xf32, #tpu.memory_space<smem>>
      %c0_279 = arith.constant 0 : index
      %c3_280 = arith.constant 3 : index
      %553 = memref.load %arg5[%c0_279, %c3_280] : memref<4x4xf32, #tpu.memory_space<smem>>
      %c1_281 = arith.constant 1 : index
      %c0_282 = arith.constant 0 : index
      %554 = memref.load %arg5[%c1_281, %c0_282] : memref<4x4xf32, #tpu.memory_space<smem>>
      %c1_283 = arith.constant 1 : index
      %c1_284 = arith.constant 1 : index
      %555 = memref.load %arg5[%c1_283, %c1_284] : memref<4x4xf32, #tpu.memory_space<smem>>
      %c1_285 = arith.constant 1 : index
      %c2_286 = arith.constant 2 : index
      %556 = memref.load %arg5[%c1_285, %c2_286] : memref<4x4xf32, #tpu.memory_space<smem>>
      %c1_287 = arith.constant 1 : index
      %c3_288 = arith.constant 3 : index
      %557 = memref.load %arg5[%c1_287, %c3_288] : memref<4x4xf32, #tpu.memory_space<smem>>
      %c2_289 = arith.constant 2 : index
      %c0_290 = arith.constant 0 : index
      %558 = memref.load %arg5[%c2_289, %c0_290] : memref<4x4xf32, #tpu.memory_space<smem>>
      %c2_291 = arith.constant 2 : index
      %c1_292 = arith.constant 1 : index
      %559 = memref.load %arg5[%c2_291, %c1_292] : memref<4x4xf32, #tpu.memory_space<smem>>
      %c2_293 = arith.constant 2 : index
      %c2_294 = arith.constant 2 : index
      %560 = memref.load %arg5[%c2_293, %c2_294] : memref<4x4xf32, #tpu.memory_space<smem>>
      %c2_295 = arith.constant 2 : index
      %c3_296 = arith.constant 3 : index
      %561 = memref.load %arg5[%c2_295, %c3_296] : memref<4x4xf32, #tpu.memory_space<smem>>
      %c3_297 = arith.constant 3 : index
      %c0_298 = arith.constant 0 : index
      %562 = memref.load %arg5[%c3_297, %c0_298] : memref<4x4xf32, #tpu.memory_space<smem>>
      %c3_299 = arith.constant 3 : index
      %c1_300 = arith.constant 1 : index
      %563 = memref.load %arg5[%c3_299, %c1_300] : memref<4x4xf32, #tpu.memory_space<smem>>
      %c3_301 = arith.constant 3 : index
      %c2_302 = arith.constant 2 : index
      %564 = memref.load %arg5[%c3_301, %c2_302] : memref<4x4xf32, #tpu.memory_space<smem>>
      %c3_303 = arith.constant 3 : index
      %c3_304 = arith.constant 3 : index
      %565 = memref.load %arg5[%c3_303, %c3_304] : memref<4x4xf32, #tpu.memory_space<smem>>
      %c0_305 = arith.constant 0 : index
      %566 = memref.load %arg6[%c0_305] : memref<4xf32, #tpu.memory_space<smem>>
      %c1_306 = arith.constant 1 : index
      %567 = memref.load %arg6[%c1_306] : memref<4xf32, #tpu.memory_space<smem>>
      %c2_307 = arith.constant 2 : index
      %568 = memref.load %arg6[%c2_307] : memref<4xf32, #tpu.memory_space<smem>>
      %c3_308 = arith.constant 3 : index
      %569 = memref.load %arg6[%c3_308] : memref<4xf32, #tpu.memory_space<smem>>
      %c8_309 = arith.constant 8 : index
      %c0_310 = arith.constant 0 : index
      %c0_311 = arith.constant 0 : index
      %570 = vector.load %arg2[%c8_309, %c0_310, %c0_311] : memref<16x1x128xf32, #tpu.memory_space<vmem>>, vector<1x1x128xf32>
      %cst_312 = arith.constant 5.000000e-01 : f32
      %571 = vector.broadcast %cst_312 : f32 to vector<1x1x128xf32>
      %572 = arith.mulf %570, %571 : vector<1x1x128xf32>
      %c9_313 = arith.constant 9 : index
      %c0_314 = arith.constant 0 : index
      %c0_315 = arith.constant 0 : index
      %573 = vector.load %arg2[%c9_313, %c0_314, %c0_315] : memref<16x1x128xf32, #tpu.memory_space<vmem>>, vector<1x1x128xf32>
      %cst_316 = arith.constant 5.000000e-01 : f32
      %574 = vector.broadcast %cst_316 : f32 to vector<1x1x128xf32>
      %575 = arith.mulf %573, %574 : vector<1x1x128xf32>
      %c10_317 = arith.constant 10 : index
      %c0_318 = arith.constant 0 : index
      %c0_319 = arith.constant 0 : index
      %576 = vector.load %arg2[%c10_317, %c0_318, %c0_319] : memref<16x1x128xf32, #tpu.memory_space<vmem>>, vector<1x1x128xf32>
      %cst_320 = arith.constant 5.000000e-01 : f32
      %577 = vector.broadcast %cst_320 : f32 to vector<1x1x128xf32>
      %578 = arith.mulf %576, %577 : vector<1x1x128xf32>
      %c11_321 = arith.constant 11 : index
      %c0_322 = arith.constant 0 : index
      %c0_323 = arith.constant 0 : index
      %579 = vector.load %arg2[%c11_321, %c0_322, %c0_323] : memref<16x1x128xf32, #tpu.memory_space<vmem>>, vector<1x1x128xf32>
      %cst_324 = arith.constant 5.000000e-01 : f32
      %580 = vector.broadcast %cst_324 : f32 to vector<1x1x128xf32>
      %581 = arith.mulf %579, %580 : vector<1x1x128xf32>
      %c0_325 = arith.constant 0 : index
      %c0_326 = arith.constant 0 : index
      %c0_327 = arith.constant 0 : index
      %582 = vector.load %arg2[%c0_325, %c0_326, %c0_327] : memref<16x1x128xf32, #tpu.memory_space<vmem>>, vector<1x1x128xf32>
      %583 = arith.mulf %572, %582 : vector<1x1x128xf32>
      %c1_328 = arith.constant 1 : index
      %c0_329 = arith.constant 0 : index
      %c0_330 = arith.constant 0 : index
      %584 = vector.load %arg2[%c1_328, %c0_329, %c0_330] : memref<16x1x128xf32, #tpu.memory_space<vmem>>, vector<1x1x128xf32>
      %585 = arith.mulf %575, %584 : vector<1x1x128xf32>
      %586 = arith.addf %583, %585 : vector<1x1x128xf32>
      %c2_331 = arith.constant 2 : index
      %c0_332 = arith.constant 0 : index
      %c0_333 = arith.constant 0 : index
      %587 = vector.load %arg2[%c2_331, %c0_332, %c0_333] : memref<16x1x128xf32, #tpu.memory_space<vmem>>, vector<1x1x128xf32>
      %588 = arith.mulf %578, %587 : vector<1x1x128xf32>
      %589 = arith.addf %586, %588 : vector<1x1x128xf32>
      %c3_334 = arith.constant 3 : index
      %c0_335 = arith.constant 0 : index
      %c0_336 = arith.constant 0 : index
      %590 = vector.load %arg2[%c3_334, %c0_335, %c0_336] : memref<16x1x128xf32, #tpu.memory_space<vmem>>, vector<1x1x128xf32>
      %591 = arith.mulf %581, %590 : vector<1x1x128xf32>
      %592 = arith.addf %589, %591 : vector<1x1x128xf32>
      %c4_337 = arith.constant 4 : index
      %c0_338 = arith.constant 0 : index
      %c0_339 = arith.constant 0 : index
      %593 = vector.load %arg2[%c4_337, %c0_338, %c0_339] : memref<16x1x128xf32, #tpu.memory_space<vmem>>, vector<1x1x128xf32>
      %594 = arith.mulf %572, %593 : vector<1x1x128xf32>
      %c5_340 = arith.constant 5 : index
      %c0_341 = arith.constant 0 : index
      %c0_342 = arith.constant 0 : index
      %595 = vector.load %arg2[%c5_340, %c0_341, %c0_342] : memref<16x1x128xf32, #tpu.memory_space<vmem>>, vector<1x1x128xf32>
      %596 = arith.mulf %575, %595 : vector<1x1x128xf32>
      %597 = arith.addf %594, %596 : vector<1x1x128xf32>
      %c6_343 = arith.constant 6 : index
      %c0_344 = arith.constant 0 : index
      %c0_345 = arith.constant 0 : index
      %598 = vector.load %arg2[%c6_343, %c0_344, %c0_345] : memref<16x1x128xf32, #tpu.memory_space<vmem>>, vector<1x1x128xf32>
      %599 = arith.mulf %578, %598 : vector<1x1x128xf32>
      %600 = arith.addf %597, %599 : vector<1x1x128xf32>
      %c7_346 = arith.constant 7 : index
      %c0_347 = arith.constant 0 : index
      %c0_348 = arith.constant 0 : index
      %601 = vector.load %arg2[%c7_346, %c0_347, %c0_348] : memref<16x1x128xf32, #tpu.memory_space<vmem>>, vector<1x1x128xf32>
      %602 = arith.mulf %581, %601 : vector<1x1x128xf32>
      %603 = arith.addf %600, %602 : vector<1x1x128xf32>
      %c8_349 = arith.constant 8 : index
      %c0_350 = arith.constant 0 : index
      %c0_351 = arith.constant 0 : index
      %604 = vector.load %arg2[%c8_349, %c0_350, %c0_351] : memref<16x1x128xf32, #tpu.memory_space<vmem>>, vector<1x1x128xf32>
      %605 = arith.mulf %572, %604 : vector<1x1x128xf32>
      %c9_352 = arith.constant 9 : index
      %c0_353 = arith.constant 0 : index
      %c0_354 = arith.constant 0 : index
      %606 = vector.load %arg2[%c9_352, %c0_353, %c0_354] : memref<16x1x128xf32, #tpu.memory_space<vmem>>, vector<1x1x128xf32>
      %607 = arith.mulf %575, %606 : vector<1x1x128xf32>
      %608 = arith.addf %605, %607 : vector<1x1x128xf32>
      %c10_355 = arith.constant 10 : index
      %c0_356 = arith.constant 0 : index
      %c0_357 = arith.constant 0 : index
      %609 = vector.load %arg2[%c10_355, %c0_356, %c0_357] : memref<16x1x128xf32, #tpu.memory_space<vmem>>, vector<1x1x128xf32>
      %610 = arith.mulf %578, %609 : vector<1x1x128xf32>
      %611 = arith.addf %608, %610 : vector<1x1x128xf32>
      %c11_358 = arith.constant 11 : index
      %c0_359 = arith.constant 0 : index
      %c0_360 = arith.constant 0 : index
      %612 = vector.load %arg2[%c11_358, %c0_359, %c0_360] : memref<16x1x128xf32, #tpu.memory_space<vmem>>, vector<1x1x128xf32>
      %613 = arith.mulf %581, %612 : vector<1x1x128xf32>
      %614 = arith.addf %611, %613 : vector<1x1x128xf32>
      %c12_361 = arith.constant 12 : index
      %c0_362 = arith.constant 0 : index
      %c0_363 = arith.constant 0 : index
      %615 = vector.load %arg2[%c12_361, %c0_362, %c0_363] : memref<16x1x128xf32, #tpu.memory_space<vmem>>, vector<1x1x128xf32>
      %616 = arith.mulf %572, %615 : vector<1x1x128xf32>
      %c13_364 = arith.constant 13 : index
      %c0_365 = arith.constant 0 : index
      %c0_366 = arith.constant 0 : index
      %617 = vector.load %arg2[%c13_364, %c0_365, %c0_366] : memref<16x1x128xf32, #tpu.memory_space<vmem>>, vector<1x1x128xf32>
      %618 = arith.mulf %575, %617 : vector<1x1x128xf32>
      %619 = arith.addf %616, %618 : vector<1x1x128xf32>
      %c14_367 = arith.constant 14 : index
      %c0_368 = arith.constant 0 : index
      %c0_369 = arith.constant 0 : index
      %620 = vector.load %arg2[%c14_367, %c0_368, %c0_369] : memref<16x1x128xf32, #tpu.memory_space<vmem>>, vector<1x1x128xf32>
      %621 = arith.mulf %578, %620 : vector<1x1x128xf32>
      %622 = arith.addf %619, %621 : vector<1x1x128xf32>
      %c15_370 = arith.constant 15 : index
      %c0_371 = arith.constant 0 : index
      %c0_372 = arith.constant 0 : index
      %623 = vector.load %arg2[%c15_370, %c0_371, %c0_372] : memref<16x1x128xf32, #tpu.memory_space<vmem>>, vector<1x1x128xf32>
      %624 = arith.mulf %581, %623 : vector<1x1x128xf32>
      %625 = arith.addf %622, %624 : vector<1x1x128xf32>
      %626 = arith.maximumf %592, %603 : vector<1x1x128xf32>
      %627 = arith.maximumf %626, %614 : vector<1x1x128xf32>
      %628 = arith.maximumf %627, %625 : vector<1x1x128xf32>
      %629 = arith.subf %592, %628 : vector<1x1x128xf32>
      %630 = math.exp %629 : vector<1x1x128xf32>
      %631 = arith.subf %603, %628 : vector<1x1x128xf32>
      %632 = math.exp %631 : vector<1x1x128xf32>
      %633 = arith.subf %614, %628 : vector<1x1x128xf32>
      %634 = math.exp %633 : vector<1x1x128xf32>
      %635 = arith.subf %625, %628 : vector<1x1x128xf32>
      %636 = math.exp %635 : vector<1x1x128xf32>
      %637 = arith.addf %630, %632 : vector<1x1x128xf32>
      %638 = arith.addf %637, %634 : vector<1x1x128xf32>
      %639 = arith.addf %638, %636 : vector<1x1x128xf32>
      %640 = tpu.reciprocal %639 : vector<1x1x128xf32> -> vector<1x1x128xf32>
      %641 = vector.broadcast %550 : f32 to vector<1x1x128xf32>
      %642 = arith.mulf %630, %641 : vector<1x1x128xf32>
      %643 = vector.broadcast %551 : f32 to vector<1x1x128xf32>
      %644 = arith.mulf %632, %643 : vector<1x1x128xf32>
      %645 = arith.addf %642, %644 : vector<1x1x128xf32>
      %646 = vector.broadcast %552 : f32 to vector<1x1x128xf32>
      %647 = arith.mulf %634, %646 : vector<1x1x128xf32>
      %648 = arith.addf %645, %647 : vector<1x1x128xf32>
      %649 = vector.broadcast %553 : f32 to vector<1x1x128xf32>
      %650 = arith.mulf %636, %649 : vector<1x1x128xf32>
      %651 = arith.addf %648, %650 : vector<1x1x128xf32>
      %652 = arith.mulf %651, %640 : vector<1x1x128xf32>
      %653 = vector.broadcast %566 : f32 to vector<1x1x128xf32>
      %654 = arith.addf %652, %653 : vector<1x1x128xf32>
      %c0_373 = arith.constant 0 : index
      %c0_374 = arith.constant 0 : index
      %c0_375 = arith.constant 0 : index
      %655 = vector.load %arg10[%c0_373, %c0_374, %c0_375] : memref<8x1x128xf32, #tpu.memory_space<vmem>>, vector<1x1x128xf32>
      %656 = arith.addf %655, %654 : vector<1x1x128xf32>
      %c0_376 = arith.constant 0 : index
      %c0_377 = arith.constant 0 : index
      %c0_378 = arith.constant 0 : index
      %657 = vector.load %arg10[%c0_376, %c0_377, %c0_378] : memref<8x1x128xf32, #tpu.memory_space<vmem>>, vector<1x1x128xf32>
      tpu.vector_store %arg10[%c0_376, %c0_377, %c0_378], %656 {strides = array<i32>} : memref<8x1x128xf32, #tpu.memory_space<vmem>>, vector<1x1x128xf32>,
      %658 = vector.broadcast %554 : f32 to vector<1x1x128xf32>
      %659 = arith.mulf %630, %658 : vector<1x1x128xf32>
      %660 = vector.broadcast %555 : f32 to vector<1x1x128xf32>
      %661 = arith.mulf %632, %660 : vector<1x1x128xf32>
      %662 = arith.addf %659, %661 : vector<1x1x128xf32>
      %663 = vector.broadcast %556 : f32 to vector<1x1x128xf32>
      %664 = arith.mulf %634, %663 : vector<1x1x128xf32>
      %665 = arith.addf %662, %664 : vector<1x1x128xf32>
      %666 = vector.broadcast %557 : f32 to vector<1x1x128xf32>
      %667 = arith.mulf %636, %666 : vector<1x1x128xf32>
      %668 = arith.addf %665, %667 : vector<1x1x128xf32>
      %669 = arith.mulf %668, %640 : vector<1x1x128xf32>
      %670 = vector.broadcast %567 : f32 to vector<1x1x128xf32>
      %671 = arith.addf %669, %670 : vector<1x1x128xf32>
      %c1_379 = arith.constant 1 : index
      %c0_380 = arith.constant 0 : index
      %c0_381 = arith.constant 0 : index
      %672 = vector.load %arg10[%c1_379, %c0_380, %c0_381] : memref<8x1x128xf32, #tpu.memory_space<vmem>>, vector<1x1x128xf32>
      %673 = arith.addf %672, %671 : vector<1x1x128xf32>
      %c1_382 = arith.constant 1 : index
      %c0_383 = arith.constant 0 : index
      %c0_384 = arith.constant 0 : index
      %674 = vector.load %arg10[%c1_382, %c0_383, %c0_384] : memref<8x1x128xf32, #tpu.memory_space<vmem>>, vector<1x1x128xf32>
      tpu.vector_store %arg10[%c1_382, %c0_383, %c0_384], %673 {strides = array<i32>} : memref<8x1x128xf32, #tpu.memory_space<vmem>>, vector<1x1x128xf32>,
      %675 = vector.broadcast %558 : f32 to vector<1x1x128xf32>
      %676 = arith.mulf %630, %675 : vector<1x1x128xf32>
      %677 = vector.broadcast %559 : f32 to vector<1x1x128xf32>
      %678 = arith.mulf %632, %677 : vector<1x1x128xf32>
      %679 = arith.addf %676, %678 : vector<1x1x128xf32>
      %680 = vector.broadcast %560 : f32 to vector<1x1x128xf32>
      %681 = arith.mulf %634, %680 : vector<1x1x128xf32>
      %682 = arith.addf %679, %681 : vector<1x1x128xf32>
      %683 = vector.broadcast %561 : f32 to vector<1x1x128xf32>
      %684 = arith.mulf %636, %683 : vector<1x1x128xf32>
      %685 = arith.addf %682, %684 : vector<1x1x128xf32>
      %686 = arith.mulf %685, %640 : vector<1x1x128xf32>
      %687 = vector.broadcast %568 : f32 to vector<1x1x128xf32>
      %688 = arith.addf %686, %687 : vector<1x1x128xf32>
      %c2_385 = arith.constant 2 : index
      %c0_386 = arith.constant 0 : index
      %c0_387 = arith.constant 0 : index
      %689 = vector.load %arg10[%c2_385, %c0_386, %c0_387] : memref<8x1x128xf32, #tpu.memory_space<vmem>>, vector<1x1x128xf32>
      %690 = arith.addf %689, %688 : vector<1x1x128xf32>
      %c2_388 = arith.constant 2 : index
      %c0_389 = arith.constant 0 : index
      %c0_390 = arith.constant 0 : index
      %691 = vector.load %arg10[%c2_388, %c0_389, %c0_390] : memref<8x1x128xf32, #tpu.memory_space<vmem>>, vector<1x1x128xf32>
      tpu.vector_store %arg10[%c2_388, %c0_389, %c0_390], %690 {strides = array<i32>} : memref<8x1x128xf32, #tpu.memory_space<vmem>>, vector<1x1x128xf32>,
      %692 = vector.broadcast %562 : f32 to vector<1x1x128xf32>
      %693 = arith.mulf %630, %692 : vector<1x1x128xf32>
      %694 = vector.broadcast %563 : f32 to vector<1x1x128xf32>
      %695 = arith.mulf %632, %694 : vector<1x1x128xf32>
      %696 = arith.addf %693, %695 : vector<1x1x128xf32>
      %697 = vector.broadcast %564 : f32 to vector<1x1x128xf32>
      %698 = arith.mulf %634, %697 : vector<1x1x128xf32>
      %699 = arith.addf %696, %698 : vector<1x1x128xf32>
      %700 = vector.broadcast %565 : f32 to vector<1x1x128xf32>
      %701 = arith.mulf %636, %700 : vector<1x1x128xf32>
      %702 = arith.addf %699, %701 : vector<1x1x128xf32>
      %703 = arith.mulf %702, %640 : vector<1x1x128xf32>
      %704 = vector.broadcast %569 : f32 to vector<1x1x128xf32>
      %705 = arith.addf %703, %704 : vector<1x1x128xf32>
      %c3_391 = arith.constant 3 : index
      %c0_392 = arith.constant 0 : index
      %c0_393 = arith.constant 0 : index
      %706 = vector.load %arg10[%c3_391, %c0_392, %c0_393] : memref<8x1x128xf32, #tpu.memory_space<vmem>>, vector<1x1x128xf32>
      %707 = arith.addf %706, %705 : vector<1x1x128xf32>
      %c3_394 = arith.constant 3 : index
      %c0_395 = arith.constant 0 : index
      %c0_396 = arith.constant 0 : index
      %708 = vector.load %arg10[%c3_394, %c0_395, %c0_396] : memref<8x1x128xf32, #tpu.memory_space<vmem>>, vector<1x1x128xf32>
      tpu.vector_store %arg10[%c3_394, %c0_395, %c0_396], %707 {strides = array<i32>} : memref<8x1x128xf32, #tpu.memory_space<vmem>>, vector<1x1x128xf32>,
      %c12_397 = arith.constant 12 : index
      %c0_398 = arith.constant 0 : index
      %c0_399 = arith.constant 0 : index
      %709 = vector.load %arg2[%c12_397, %c0_398, %c0_399] : memref<16x1x128xf32, #tpu.memory_space<vmem>>, vector<1x1x128xf32>
      %cst_400 = arith.constant 5.000000e-01 : f32
      %710 = vector.broadcast %cst_400 : f32 to vector<1x1x128xf32>
      %711 = arith.mulf %709, %710 : vector<1x1x128xf32>
      %c13_401 = arith.constant 13 : index
      %c0_402 = arith.constant 0 : index
      %c0_403 = arith.constant 0 : index
      %712 = vector.load %arg2[%c13_401, %c0_402, %c0_403] : memref<16x1x128xf32, #tpu.memory_space<vmem>>, vector<1x1x128xf32>
      %cst_404 = arith.constant 5.000000e-01 : f32
      %713 = vector.broadcast %cst_404 : f32 to vector<1x1x128xf32>
      %714 = arith.mulf %712, %713 : vector<1x1x128xf32>
      %c14_405 = arith.constant 14 : index
      %c0_406 = arith.constant 0 : index
      %c0_407 = arith.constant 0 : index
      %715 = vector.load %arg2[%c14_405, %c0_406, %c0_407] : memref<16x1x128xf32, #tpu.memory_space<vmem>>, vector<1x1x128xf32>
      %cst_408 = arith.constant 5.000000e-01 : f32
      %716 = vector.broadcast %cst_408 : f32 to vector<1x1x128xf32>
      %717 = arith.mulf %715, %716 : vector<1x1x128xf32>
      %c15_409 = arith.constant 15 : index
      %c0_410 = arith.constant 0 : index
      %c0_411 = arith.constant 0 : index
      %718 = vector.load %arg2[%c15_409, %c0_410, %c0_411] : memref<16x1x128xf32, #tpu.memory_space<vmem>>, vector<1x1x128xf32>
      %cst_412 = arith.constant 5.000000e-01 : f32
      %719 = vector.broadcast %cst_412 : f32 to vector<1x1x128xf32>
      %720 = arith.mulf %718, %719 : vector<1x1x128xf32>
      %c0_413 = arith.constant 0 : index
      %c0_414 = arith.constant 0 : index
      %c0_415 = arith.constant 0 : index
      %721 = vector.load %arg2[%c0_413, %c0_414, %c0_415] : memref<16x1x128xf32, #tpu.memory_space<vmem>>, vector<1x1x128xf32>
      %722 = arith.mulf %711, %721 : vector<1x1x128xf32>
      %c1_416 = arith.constant 1 : index
      %c0_417 = arith.constant 0 : index
      %c0_418 = arith.constant 0 : index
      %723 = vector.load %arg2[%c1_416, %c0_417, %c0_418] : memref<16x1x128xf32, #tpu.memory_space<vmem>>, vector<1x1x128xf32>
      %724 = arith.mulf %714, %723 : vector<1x1x128xf32>
      %725 = arith.addf %722, %724 : vector<1x1x128xf32>
      %c2_419 = arith.constant 2 : index
      %c0_420 = arith.constant 0 : index
      %c0_421 = arith.constant 0 : index
      %726 = vector.load %arg2[%c2_419, %c0_420, %c0_421] : memref<16x1x128xf32, #tpu.memory_space<vmem>>, vector<1x1x128xf32>
      %727 = arith.mulf %717, %726 : vector<1x1x128xf32>
      %728 = arith.addf %725, %727 : vector<1x1x128xf32>
      %c3_422 = arith.constant 3 : index
      %c0_423 = arith.constant 0 : index
      %c0_424 = arith.constant 0 : index
      %729 = vector.load %arg2[%c3_422, %c0_423, %c0_424] : memref<16x1x128xf32, #tpu.memory_space<vmem>>, vector<1x1x128xf32>
      %730 = arith.mulf %720, %729 : vector<1x1x128xf32>
      %731 = arith.addf %728, %730 : vector<1x1x128xf32>
      %c4_425 = arith.constant 4 : index
      %c0_426 = arith.constant 0 : index
      %c0_427 = arith.constant 0 : index
      %732 = vector.load %arg2[%c4_425, %c0_426, %c0_427] : memref<16x1x128xf32, #tpu.memory_space<vmem>>, vector<1x1x128xf32>
      %733 = arith.mulf %711, %732 : vector<1x1x128xf32>
      %c5_428 = arith.constant 5 : index
      %c0_429 = arith.constant 0 : index
      %c0_430 = arith.constant 0 : index
      %734 = vector.load %arg2[%c5_428, %c0_429, %c0_430] : memref<16x1x128xf32, #tpu.memory_space<vmem>>, vector<1x1x128xf32>
      %735 = arith.mulf %714, %734 : vector<1x1x128xf32>
      %736 = arith.addf %733, %735 : vector<1x1x128xf32>
      %c6_431 = arith.constant 6 : index
      %c0_432 = arith.constant 0 : index
      %c0_433 = arith.constant 0 : index
      %737 = vector.load %arg2[%c6_431, %c0_432, %c0_433] : memref<16x1x128xf32, #tpu.memory_space<vmem>>, vector<1x1x128xf32>
      %738 = arith.mulf %717, %737 : vector<1x1x128xf32>
      %739 = arith.addf %736, %738 : vector<1x1x128xf32>
      %c7_434 = arith.constant 7 : index
      %c0_435 = arith.constant 0 : index
      %c0_436 = arith.constant 0 : index
      %740 = vector.load %arg2[%c7_434, %c0_435, %c0_436] : memref<16x1x128xf32, #tpu.memory_space<vmem>>, vector<1x1x128xf32>
      %741 = arith.mulf %720, %740 : vector<1x1x128xf32>
      %742 = arith.addf %739, %741 : vector<1x1x128xf32>
      %c8_437 = arith.constant 8 : index
      %c0_438 = arith.constant 0 : index
      %c0_439 = arith.constant 0 : index
      %743 = vector.load %arg2[%c8_437, %c0_438, %c0_439] : memref<16x1x128xf32, #tpu.memory_space<vmem>>, vector<1x1x128xf32>
      %744 = arith.mulf %711, %743 : vector<1x1x128xf32>
      %c9_440 = arith.constant 9 : index
      %c0_441 = arith.constant 0 : index
      %c0_442 = arith.constant 0 : index
      %745 = vector.load %arg2[%c9_440, %c0_441, %c0_442] : memref<16x1x128xf32, #tpu.memory_space<vmem>>, vector<1x1x128xf32>
      %746 = arith.mulf %714, %745 : vector<1x1x128xf32>
      %747 = arith.addf %744, %746 : vector<1x1x128xf32>
      %c10_443 = arith.constant 10 : index
      %c0_444 = arith.constant 0 : index
      %c0_445 = arith.constant 0 : index
      %748 = vector.load %arg2[%c10_443, %c0_444, %c0_445] : memref<16x1x128xf32, #tpu.memory_space<vmem>>, vector<1x1x128xf32>
      %749 = arith.mulf %717, %748 : vector<1x1x128xf32>
      %750 = arith.addf %747, %749 : vector<1x1x128xf32>
      %c11_446 = arith.constant 11 : index
      %c0_447 = arith.constant 0 : index
      %c0_448 = arith.constant 0 : index
      %751 = vector.load %arg2[%c11_446, %c0_447, %c0_448] : memref<16x1x128xf32, #tpu.memory_space<vmem>>, vector<1x1x128xf32>
      %752 = arith.mulf %720, %751 : vector<1x1x128xf32>
      %753 = arith.addf %750, %752 : vector<1x1x128xf32>
      %c12_449 = arith.constant 12 : index
      %c0_450 = arith.constant 0 : index
      %c0_451 = arith.constant 0 : index
      %754 = vector.load %arg2[%c12_449, %c0_450, %c0_451] : memref<16x1x128xf32, #tpu.memory_space<vmem>>, vector<1x1x128xf32>
      %755 = arith.mulf %711, %754 : vector<1x1x128xf32>
      %c13_452 = arith.constant 13 : index
      %c0_453 = arith.constant 0 : index
      %c0_454 = arith.constant 0 : index
      %756 = vector.load %arg2[%c13_452, %c0_453, %c0_454] : memref<16x1x128xf32, #tpu.memory_space<vmem>>, vector<1x1x128xf32>
      %757 = arith.mulf %714, %756 : vector<1x1x128xf32>
      %758 = arith.addf %755, %757 : vector<1x1x128xf32>
      %c14_455 = arith.constant 14 : index
      %c0_456 = arith.constant 0 : index
      %c0_457 = arith.constant 0 : index
      %759 = vector.load %arg2[%c14_455, %c0_456, %c0_457] : memref<16x1x128xf32, #tpu.memory_space<vmem>>, vector<1x1x128xf32>
      %760 = arith.mulf %717, %759 : vector<1x1x128xf32>
      %761 = arith.addf %758, %760 : vector<1x1x128xf32>
      %c15_458 = arith.constant 15 : index
      %c0_459 = arith.constant 0 : index
      %c0_460 = arith.constant 0 : index
      %762 = vector.load %arg2[%c15_458, %c0_459, %c0_460] : memref<16x1x128xf32, #tpu.memory_space<vmem>>, vector<1x1x128xf32>
      %763 = arith.mulf %720, %762 : vector<1x1x128xf32>
      %764 = arith.addf %761, %763 : vector<1x1x128xf32>
      %765 = arith.maximumf %731, %742 : vector<1x1x128xf32>
      %766 = arith.maximumf %765, %753 : vector<1x1x128xf32>
      %767 = arith.maximumf %766, %764 : vector<1x1x128xf32>
      %768 = arith.subf %731, %767 : vector<1x1x128xf32>
      %769 = math.exp %768 : vector<1x1x128xf32>
      %770 = arith.subf %742, %767 : vector<1x1x128xf32>
      %771 = math.exp %770 : vector<1x1x128xf32>
      %772 = arith.subf %753, %767 : vector<1x1x128xf32>
      %773 = math.exp %772 : vector<1x1x128xf32>
      %774 = arith.subf %764, %767 : vector<1x1x128xf32>
      %775 = math.exp %774 : vector<1x1x128xf32>
      %776 = arith.addf %769, %771 : vector<1x1x128xf32>
      %777 = arith.addf %776, %773 : vector<1x1x128xf32>
      %778 = arith.addf %777, %775 : vector<1x1x128xf32>
      %779 = tpu.reciprocal %778 : vector<1x1x128xf32> -> vector<1x1x128xf32>
      %780 = vector.broadcast %550 : f32 to vector<1x1x128xf32>
      %781 = arith.mulf %769, %780 : vector<1x1x128xf32>
      %782 = vector.broadcast %551 : f32 to vector<1x1x128xf32>
      %783 = arith.mulf %771, %782 : vector<1x1x128xf32>
      %784 = arith.addf %781, %783 : vector<1x1x128xf32>
      %785 = vector.broadcast %552 : f32 to vector<1x1x128xf32>
      %786 = arith.mulf %773, %785 : vector<1x1x128xf32>
      %787 = arith.addf %784, %786 : vector<1x1x128xf32>
      %788 = vector.broadcast %553 : f32 to vector<1x1x128xf32>
      %789 = arith.mulf %775, %788 : vector<1x1x128xf32>
      %790 = arith.addf %787, %789 : vector<1x1x128xf32>
      %791 = arith.mulf %790, %779 : vector<1x1x128xf32>
      %792 = vector.broadcast %566 : f32 to vector<1x1x128xf32>
      %793 = arith.addf %791, %792 : vector<1x1x128xf32>
      %c4_461 = arith.constant 4 : index
      %c0_462 = arith.constant 0 : index
      %c0_463 = arith.constant 0 : index
      %794 = vector.load %arg10[%c4_461, %c0_462, %c0_463] : memref<8x1x128xf32, #tpu.memory_space<vmem>>, vector<1x1x128xf32>
      %795 = arith.addf %794, %793 : vector<1x1x128xf32>
      %c4_464 = arith.constant 4 : index
      %c0_465 = arith.constant 0 : index
      %c0_466 = arith.constant 0 : index
      %796 = vector.load %arg10[%c4_464, %c0_465, %c0_466] : memref<8x1x128xf32, #tpu.memory_space<vmem>>, vector<1x1x128xf32>
      tpu.vector_store %arg10[%c4_464, %c0_465, %c0_466], %795 {strides = array<i32>} : memref<8x1x128xf32, #tpu.memory_space<vmem>>, vector<1x1x128xf32>,
      %797 = vector.broadcast %554 : f32 to vector<1x1x128xf32>
      %798 = arith.mulf %769, %797 : vector<1x1x128xf32>
      %799 = vector.broadcast %555 : f32 to vector<1x1x128xf32>
      %800 = arith.mulf %771, %799 : vector<1x1x128xf32>
      %801 = arith.addf %798, %800 : vector<1x1x128xf32>
      %802 = vector.broadcast %556 : f32 to vector<1x1x128xf32>
      %803 = arith.mulf %773, %802 : vector<1x1x128xf32>
      %804 = arith.addf %801, %803 : vector<1x1x128xf32>
      %805 = vector.broadcast %557 : f32 to vector<1x1x128xf32>
      %806 = arith.mulf %775, %805 : vector<1x1x128xf32>
      %807 = arith.addf %804, %806 : vector<1x1x128xf32>
      %808 = arith.mulf %807, %779 : vector<1x1x128xf32>
      %809 = vector.broadcast %567 : f32 to vector<1x1x128xf32>
      %810 = arith.addf %808, %809 : vector<1x1x128xf32>
      %c5_467 = arith.constant 5 : index
      %c0_468 = arith.constant 0 : index
      %c0_469 = arith.constant 0 : index
      %811 = vector.load %arg10[%c5_467, %c0_468, %c0_469] : memref<8x1x128xf32, #tpu.memory_space<vmem>>, vector<1x1x128xf32>
      %812 = arith.addf %811, %810 : vector<1x1x128xf32>
      %c5_470 = arith.constant 5 : index
      %c0_471 = arith.constant 0 : index
      %c0_472 = arith.constant 0 : index
      %813 = vector.load %arg10[%c5_470, %c0_471, %c0_472] : memref<8x1x128xf32, #tpu.memory_space<vmem>>, vector<1x1x128xf32>
      tpu.vector_store %arg10[%c5_470, %c0_471, %c0_472], %812 {strides = array<i32>} : memref<8x1x128xf32, #tpu.memory_space<vmem>>, vector<1x1x128xf32>,
      %814 = vector.broadcast %558 : f32 to vector<1x1x128xf32>
      %815 = arith.mulf %769, %814 : vector<1x1x128xf32>
      %816 = vector.broadcast %559 : f32 to vector<1x1x128xf32>
      %817 = arith.mulf %771, %816 : vector<1x1x128xf32>
      %818 = arith.addf %815, %817 : vector<1x1x128xf32>
      %819 = vector.broadcast %560 : f32 to vector<1x1x128xf32>
      %820 = arith.mulf %773, %819 : vector<1x1x128xf32>
      %821 = arith.addf %818, %820 : vector<1x1x128xf32>
      %822 = vector.broadcast %561 : f32 to vector<1x1x128xf32>
      %823 = arith.mulf %775, %822 : vector<1x1x128xf32>
      %824 = arith.addf %821, %823 : vector<1x1x128xf32>
      %825 = arith.mulf %824, %779 : vector<1x1x128xf32>
      %826 = vector.broadcast %568 : f32 to vector<1x1x128xf32>
      %827 = arith.addf %825, %826 : vector<1x1x128xf32>
      %c6_473 = arith.constant 6 : index
      %c0_474 = arith.constant 0 : index
      %c0_475 = arith.constant 0 : index
      %828 = vector.load %arg10[%c6_473, %c0_474, %c0_475] : memref<8x1x128xf32, #tpu.memory_space<vmem>>, vector<1x1x128xf32>
      %829 = arith.addf %828, %827 : vector<1x1x128xf32>
      %c6_476 = arith.constant 6 : index
      %c0_477 = arith.constant 0 : index
      %c0_478 = arith.constant 0 : index
      %830 = vector.load %arg10[%c6_476, %c0_477, %c0_478] : memref<8x1x128xf32, #tpu.memory_space<vmem>>, vector<1x1x128xf32>
      tpu.vector_store %arg10[%c6_476, %c0_477, %c0_478], %829 {strides = array<i32>} : memref<8x1x128xf32, #tpu.memory_space<vmem>>, vector<1x1x128xf32>,
      %831 = vector.broadcast %562 : f32 to vector<1x1x128xf32>
      %832 = arith.mulf %769, %831 : vector<1x1x128xf32>
      %833 = vector.broadcast %563 : f32 to vector<1x1x128xf32>
      %834 = arith.mulf %771, %833 : vector<1x1x128xf32>
      %835 = arith.addf %832, %834 : vector<1x1x128xf32>
      %836 = vector.broadcast %564 : f32 to vector<1x1x128xf32>
      %837 = arith.mulf %773, %836 : vector<1x1x128xf32>
      %838 = arith.addf %835, %837 : vector<1x1x128xf32>
      %839 = vector.broadcast %565 : f32 to vector<1x1x128xf32>
      %840 = arith.mulf %775, %839 : vector<1x1x128xf32>
      %841 = arith.addf %838, %840 : vector<1x1x128xf32>
      %842 = arith.mulf %841, %779 : vector<1x1x128xf32>
      %843 = vector.broadcast %569 : f32 to vector<1x1x128xf32>
      %844 = arith.addf %842, %843 : vector<1x1x128xf32>
      %c7_479 = arith.constant 7 : index
      %c0_480 = arith.constant 0 : index
      %c0_481 = arith.constant 0 : index
      %845 = vector.load %arg10[%c7_479, %c0_480, %c0_481] : memref<8x1x128xf32, #tpu.memory_space<vmem>>, vector<1x1x128xf32>
      %846 = arith.addf %845, %844 : vector<1x1x128xf32>
      %c7_482 = arith.constant 7 : index
      %c0_483 = arith.constant 0 : index
      %c0_484 = arith.constant 0 : index
      %847 = vector.load %arg10[%c7_482, %c0_483, %c0_484] : memref<8x1x128xf32, #tpu.memory_space<vmem>>, vector<1x1x128xf32>
      tpu.vector_store %arg10[%c7_482, %c0_483, %c0_484], %846 {strides = array<i32>} : memref<8x1x128xf32, #tpu.memory_space<vmem>>, vector<1x1x128xf32>,
      %c0_485 = arith.constant 0 : index
      %c0_486 = arith.constant 0 : index
      %848 = memref.load %arg7[%c0_485, %c0_486] : memref<8x2xf32, #tpu.memory_space<smem>>
      %c0_487 = arith.constant 0 : index
      %c1_488 = arith.constant 1 : index
      %849 = memref.load %arg7[%c0_487, %c1_488] : memref<8x2xf32, #tpu.memory_space<smem>>
      %c1_489 = arith.constant 1 : index
      %c0_490 = arith.constant 0 : index
      %850 = memref.load %arg7[%c1_489, %c0_490] : memref<8x2xf32, #tpu.memory_space<smem>>
      %c1_491 = arith.constant 1 : index
      %c1_492 = arith.constant 1 : index
      %851 = memref.load %arg7[%c1_491, %c1_492] : memref<8x2xf32, #tpu.memory_space<smem>>
      %c2_493 = arith.constant 2 : index
      %c0_494 = arith.constant 0 : index
      %852 = memref.load %arg7[%c2_493, %c0_494] : memref<8x2xf32, #tpu.memory_space<smem>>
      %c2_495 = arith.constant 2 : index
      %c1_496 = arith.constant 1 : index
      %853 = memref.load %arg7[%c2_495, %c1_496] : memref<8x2xf32, #tpu.memory_space<smem>>
      %c3_497 = arith.constant 3 : index
      %c0_498 = arith.constant 0 : index
      %854 = memref.load %arg7[%c3_497, %c0_498] : memref<8x2xf32, #tpu.memory_space<smem>>
      %c3_499 = arith.constant 3 : index
      %c1_500 = arith.constant 1 : index
      %855 = memref.load %arg7[%c3_499, %c1_500] : memref<8x2xf32, #tpu.memory_space<smem>>
      %c4_501 = arith.constant 4 : index
      %c0_502 = arith.constant 0 : index
      %856 = memref.load %arg7[%c4_501, %c0_502] : memref<8x2xf32, #tpu.memory_space<smem>>
      %c4_503 = arith.constant 4 : index
      %c1_504 = arith.constant 1 : index
      %857 = memref.load %arg7[%c4_503, %c1_504] : memref<8x2xf32, #tpu.memory_space<smem>>
      %c5_505 = arith.constant 5 : index
      %c0_506 = arith.constant 0 : index
      %858 = memref.load %arg7[%c5_505, %c0_506] : memref<8x2xf32, #tpu.memory_space<smem>>
      %c5_507 = arith.constant 5 : index
      %c1_508 = arith.constant 1 : index
      %859 = memref.load %arg7[%c5_507, %c1_508] : memref<8x2xf32, #tpu.memory_space<smem>>
      %c6_509 = arith.constant 6 : index
      %c0_510 = arith.constant 0 : index
      %860 = memref.load %arg7[%c6_509, %c0_510] : memref<8x2xf32, #tpu.memory_space<smem>>
      %c6_511 = arith.constant 6 : index
      %c1_512 = arith.constant 1 : index
      %861 = memref.load %arg7[%c6_511, %c1_512] : memref<8x2xf32, #tpu.memory_space<smem>>
      %c7_513 = arith.constant 7 : index
      %c0_514 = arith.constant 0 : index
      %862 = memref.load %arg7[%c7_513, %c0_514] : memref<8x2xf32, #tpu.memory_space<smem>>
      %c7_515 = arith.constant 7 : index
      %c1_516 = arith.constant 1 : index
      %863 = memref.load %arg7[%c7_515, %c1_516] : memref<8x2xf32, #tpu.memory_space<smem>>
      %c0_517 = arith.constant 0 : index
      %864 = memref.load %arg8[%c0_517] : memref<8xf32, #tpu.memory_space<smem>>
      %c1_518 = arith.constant 1 : index
      %865 = memref.load %arg8[%c1_518] : memref<8xf32, #tpu.memory_space<smem>>
      %c2_519 = arith.constant 2 : index
      %866 = memref.load %arg8[%c2_519] : memref<8xf32, #tpu.memory_space<smem>>
      %c3_520 = arith.constant 3 : index
      %867 = memref.load %arg8[%c3_520] : memref<8xf32, #tpu.memory_space<smem>>
      %c4_521 = arith.constant 4 : index
      %868 = memref.load %arg8[%c4_521] : memref<8xf32, #tpu.memory_space<smem>>
      %c5_522 = arith.constant 5 : index
      %869 = memref.load %arg8[%c5_522] : memref<8xf32, #tpu.memory_space<smem>>
      %c6_523 = arith.constant 6 : index
      %870 = memref.load %arg8[%c6_523] : memref<8xf32, #tpu.memory_space<smem>>
      %c7_524 = arith.constant 7 : index
      %871 = memref.load %arg8[%c7_524] : memref<8xf32, #tpu.memory_space<smem>>
      %c8_525 = arith.constant 8 : index
      %c0_526 = arith.constant 0 : index
      %c0_527 = arith.constant 0 : index
      %872 = vector.load %arg2[%c8_525, %c0_526, %c0_527] : memref<16x1x128xf32, #tpu.memory_space<vmem>>, vector<1x1x128xf32>
      %cst_528 = arith.constant 0.353553385 : f32
      %873 = vector.broadcast %cst_528 : f32 to vector<1x1x128xf32>
      %874 = arith.mulf %872, %873 : vector<1x1x128xf32>
      %c9_529 = arith.constant 9 : index
      %c0_530 = arith.constant 0 : index
      %c0_531 = arith.constant 0 : index
      %875 = vector.load %arg2[%c9_529, %c0_530, %c0_531] : memref<16x1x128xf32, #tpu.memory_space<vmem>>, vector<1x1x128xf32>
      %cst_532 = arith.constant 0.353553385 : f32
      %876 = vector.broadcast %cst_532 : f32 to vector<1x1x128xf32>
      %877 = arith.mulf %875, %876 : vector<1x1x128xf32>
      %c10_533 = arith.constant 10 : index
      %c0_534 = arith.constant 0 : index
      %c0_535 = arith.constant 0 : index
      %878 = vector.load %arg2[%c10_533, %c0_534, %c0_535] : memref<16x1x128xf32, #tpu.memory_space<vmem>>, vector<1x1x128xf32>
      %cst_536 = arith.constant 0.353553385 : f32
      %879 = vector.broadcast %cst_536 : f32 to vector<1x1x128xf32>
      %880 = arith.mulf %878, %879 : vector<1x1x128xf32>
      %c11_537 = arith.constant 11 : index
      %c0_538 = arith.constant 0 : index
      %c0_539 = arith.constant 0 : index
      %881 = vector.load %arg2[%c11_537, %c0_538, %c0_539] : memref<16x1x128xf32, #tpu.memory_space<vmem>>, vector<1x1x128xf32>
      %cst_540 = arith.constant 0.353553385 : f32
      %882 = vector.broadcast %cst_540 : f32 to vector<1x1x128xf32>
      %883 = arith.mulf %881, %882 : vector<1x1x128xf32>
      %c12_541 = arith.constant 12 : index
      %c0_542 = arith.constant 0 : index
      %c0_543 = arith.constant 0 : index
      %884 = vector.load %arg2[%c12_541, %c0_542, %c0_543] : memref<16x1x128xf32, #tpu.memory_space<vmem>>, vector<1x1x128xf32>
      %cst_544 = arith.constant 0.353553385 : f32
      %885 = vector.broadcast %cst_544 : f32 to vector<1x1x128xf32>
      %886 = arith.mulf %884, %885 : vector<1x1x128xf32>
      %c13_545 = arith.constant 13 : index
      %c0_546 = arith.constant 0 : index
      %c0_547 = arith.constant 0 : index
      %887 = vector.load %arg2[%c13_545, %c0_546, %c0_547] : memref<16x1x128xf32, #tpu.memory_space<vmem>>, vector<1x1x128xf32>
      %cst_548 = arith.constant 0.353553385 : f32
      %888 = vector.broadcast %cst_548 : f32 to vector<1x1x128xf32>
      %889 = arith.mulf %887, %888 : vector<1x1x128xf32>
      %c14_549 = arith.constant 14 : index
      %c0_550 = arith.constant 0 : index
      %c0_551 = arith.constant 0 : index
      %890 = vector.load %arg2[%c14_549, %c0_550, %c0_551] : memref<16x1x128xf32, #tpu.memory_space<vmem>>, vector<1x1x128xf32>
      %cst_552 = arith.constant 0.353553385 : f32
      %891 = vector.broadcast %cst_552 : f32 to vector<1x1x128xf32>
      %892 = arith.mulf %890, %891 : vector<1x1x128xf32>
      %c15_553 = arith.constant 15 : index
      %c0_554 = arith.constant 0 : index
      %c0_555 = arith.constant 0 : index
      %893 = vector.load %arg2[%c15_553, %c0_554, %c0_555] : memref<16x1x128xf32, #tpu.memory_space<vmem>>, vector<1x1x128xf32>
      %cst_556 = arith.constant 0.353553385 : f32
      %894 = vector.broadcast %cst_556 : f32 to vector<1x1x128xf32>
      %895 = arith.mulf %893, %894 : vector<1x1x128xf32>
      %c0_557 = arith.constant 0 : index
      %c0_558 = arith.constant 0 : index
      %c0_559 = arith.constant 0 : index
      %896 = vector.load %arg2[%c0_557, %c0_558, %c0_559] : memref<16x1x128xf32, #tpu.memory_space<vmem>>, vector<1x1x128xf32>
      %897 = arith.mulf %874, %896 : vector<1x1x128xf32>
      %c1_560 = arith.constant 1 : index
      %c0_561 = arith.constant 0 : index
      %c0_562 = arith.constant 0 : index
      %898 = vector.load %arg2[%c1_560, %c0_561, %c0_562] : memref<16x1x128xf32, #tpu.memory_space<vmem>>, vector<1x1x128xf32>
      %899 = arith.mulf %877, %898 : vector<1x1x128xf32>
      %900 = arith.addf %897, %899 : vector<1x1x128xf32>
      %c2_563 = arith.constant 2 : index
      %c0_564 = arith.constant 0 : index
      %c0_565 = arith.constant 0 : index
      %901 = vector.load %arg2[%c2_563, %c0_564, %c0_565] : memref<16x1x128xf32, #tpu.memory_space<vmem>>, vector<1x1x128xf32>
      %902 = arith.mulf %880, %901 : vector<1x1x128xf32>
      %903 = arith.addf %900, %902 : vector<1x1x128xf32>
      %c3_566 = arith.constant 3 : index
      %c0_567 = arith.constant 0 : index
      %c0_568 = arith.constant 0 : index
      %904 = vector.load %arg2[%c3_566, %c0_567, %c0_568] : memref<16x1x128xf32, #tpu.memory_space<vmem>>, vector<1x1x128xf32>
      %905 = arith.mulf %883, %904 : vector<1x1x128xf32>
      %906 = arith.addf %903, %905 : vector<1x1x128xf32>
      %c4_569 = arith.constant 4 : index
      %c0_570 = arith.constant 0 : index
      %c0_571 = arith.constant 0 : index
      %907 = vector.load %arg2[%c4_569, %c0_570, %c0_571] : memref<16x1x128xf32, #tpu.memory_space<vmem>>, vector<1x1x128xf32>
      %908 = arith.mulf %886, %907 : vector<1x1x128xf32>
      %909 = arith.addf %906, %908 : vector<1x1x128xf32>
      %c5_572 = arith.constant 5 : index
      %c0_573 = arith.constant 0 : index
      %c0_574 = arith.constant 0 : index
      %910 = vector.load %arg2[%c5_572, %c0_573, %c0_574] : memref<16x1x128xf32, #tpu.memory_space<vmem>>, vector<1x1x128xf32>
      %911 = arith.mulf %889, %910 : vector<1x1x128xf32>
      %912 = arith.addf %909, %911 : vector<1x1x128xf32>
      %c6_575 = arith.constant 6 : index
      %c0_576 = arith.constant 0 : index
      %c0_577 = arith.constant 0 : index
      %913 = vector.load %arg2[%c6_575, %c0_576, %c0_577] : memref<16x1x128xf32, #tpu.memory_space<vmem>>, vector<1x1x128xf32>
      %914 = arith.mulf %892, %913 : vector<1x1x128xf32>
      %915 = arith.addf %912, %914 : vector<1x1x128xf32>
      %c7_578 = arith.constant 7 : index
      %c0_579 = arith.constant 0 : index
      %c0_580 = arith.constant 0 : index
      %916 = vector.load %arg2[%c7_578, %c0_579, %c0_580] : memref<16x1x128xf32, #tpu.memory_space<vmem>>, vector<1x1x128xf32>
      %917 = arith.mulf %895, %916 : vector<1x1x128xf32>
      %918 = arith.addf %915, %917 : vector<1x1x128xf32>
      %c8_581 = arith.constant 8 : index
      %c0_582 = arith.constant 0 : index
      %c0_583 = arith.constant 0 : index
      %919 = vector.load %arg2[%c8_581, %c0_582, %c0_583] : memref<16x1x128xf32, #tpu.memory_space<vmem>>, vector<1x1x128xf32>
      %920 = arith.mulf %874, %919 : vector<1x1x128xf32>
      %c9_584 = arith.constant 9 : index
      %c0_585 = arith.constant 0 : index
      %c0_586 = arith.constant 0 : index
      %921 = vector.load %arg2[%c9_584, %c0_585, %c0_586] : memref<16x1x128xf32, #tpu.memory_space<vmem>>, vector<1x1x128xf32>
      %922 = arith.mulf %877, %921 : vector<1x1x128xf32>
      %923 = arith.addf %920, %922 : vector<1x1x128xf32>
      %c10_587 = arith.constant 10 : index
      %c0_588 = arith.constant 0 : index
      %c0_589 = arith.constant 0 : index
      %924 = vector.load %arg2[%c10_587, %c0_588, %c0_589] : memref<16x1x128xf32, #tpu.memory_space<vmem>>, vector<1x1x128xf32>
      %925 = arith.mulf %880, %924 : vector<1x1x128xf32>
      %926 = arith.addf %923, %925 : vector<1x1x128xf32>
      %c11_590 = arith.constant 11 : index
      %c0_591 = arith.constant 0 : index
      %c0_592 = arith.constant 0 : index
      %927 = vector.load %arg2[%c11_590, %c0_591, %c0_592] : memref<16x1x128xf32, #tpu.memory_space<vmem>>, vector<1x1x128xf32>
      %928 = arith.mulf %883, %927 : vector<1x1x128xf32>
      %929 = arith.addf %926, %928 : vector<1x1x128xf32>
      %c12_593 = arith.constant 12 : index
      %c0_594 = arith.constant 0 : index
      %c0_595 = arith.constant 0 : index
      %930 = vector.load %arg2[%c12_593, %c0_594, %c0_595] : memref<16x1x128xf32, #tpu.memory_space<vmem>>, vector<1x1x128xf32>
      %931 = arith.mulf %886, %930 : vector<1x1x128xf32>
      %932 = arith.addf %929, %931 : vector<1x1x128xf32>
      %c13_596 = arith.constant 13 : index
      %c0_597 = arith.constant 0 : index
      %c0_598 = arith.constant 0 : index
      %933 = vector.load %arg2[%c13_596, %c0_597, %c0_598] : memref<16x1x128xf32, #tpu.memory_space<vmem>>, vector<1x1x128xf32>
      %934 = arith.mulf %889, %933 : vector<1x1x128xf32>
      %935 = arith.addf %932, %934 : vector<1x1x128xf32>
      %c14_599 = arith.constant 14 : index
      %c0_600 = arith.constant 0 : index
      %c0_601 = arith.constant 0 : index
      %936 = vector.load %arg2[%c14_599, %c0_600, %c0_601] : memref<16x1x128xf32, #tpu.memory_space<vmem>>, vector<1x1x128xf32>
      %937 = arith.mulf %892, %936 : vector<1x1x128xf32>
      %938 = arith.addf %935, %937 : vector<1x1x128xf32>
      %c15_602 = arith.constant 15 : index
      %c0_603 = arith.constant 0 : index
      %c0_604 = arith.constant 0 : index
      %939 = vector.load %arg2[%c15_602, %c0_603, %c0_604] : memref<16x1x128xf32, #tpu.memory_space<vmem>>, vector<1x1x128xf32>
      %940 = arith.mulf %895, %939 : vector<1x1x128xf32>
      %941 = arith.addf %938, %940 : vector<1x1x128xf32>
      %942 = arith.maximumf %918, %941 : vector<1x1x128xf32>
      %943 = arith.subf %918, %942 : vector<1x1x128xf32>
      %944 = math.exp %943 : vector<1x1x128xf32>
      %945 = arith.subf %941, %942 : vector<1x1x128xf32>
      %946 = math.exp %945 : vector<1x1x128xf32>
      %947 = arith.addf %944, %946 : vector<1x1x128xf32>
      %948 = tpu.reciprocal %947 : vector<1x1x128xf32> -> vector<1x1x128xf32>
      %949 = vector.broadcast %848 : f32 to vector<1x1x128xf32>
      %950 = arith.mulf %944, %949 : vector<1x1x128xf32>
      %951 = vector.broadcast %849 : f32 to vector<1x1x128xf32>
      %952 = arith.mulf %946, %951 : vector<1x1x128xf32>
      %953 = arith.addf %950, %952 : vector<1x1x128xf32>
      %954 = arith.mulf %953, %948 : vector<1x1x128xf32>
      %955 = vector.broadcast %864 : f32 to vector<1x1x128xf32>
      %956 = arith.addf %954, %955 : vector<1x1x128xf32>
      %c0_605 = arith.constant 0 : index
      %c0_606 = arith.constant 0 : index
      %c0_607 = arith.constant 0 : index
      %957 = vector.load %arg10[%c0_605, %c0_606, %c0_607] : memref<8x1x128xf32, #tpu.memory_space<vmem>>, vector<1x1x128xf32>
      %958 = arith.addf %957, %956 : vector<1x1x128xf32>
      %c0_608 = arith.constant 0 : index
      %c0_609 = arith.constant 0 : index
      %c0_610 = arith.constant 0 : index
      %959 = vector.load %arg10[%c0_608, %c0_609, %c0_610] : memref<8x1x128xf32, #tpu.memory_space<vmem>>, vector<1x1x128xf32>
      tpu.vector_store %arg10[%c0_608, %c0_609, %c0_610], %958 {strides = array<i32>} : memref<8x1x128xf32, #tpu.memory_space<vmem>>, vector<1x1x128xf32>,
      %960 = vector.broadcast %850 : f32 to vector<1x1x128xf32>
      %961 = arith.mulf %944, %960 : vector<1x1x128xf32>
      %962 = vector.broadcast %851 : f32 to vector<1x1x128xf32>
      %963 = arith.mulf %946, %962 : vector<1x1x128xf32>
      %964 = arith.addf %961, %963 : vector<1x1x128xf32>
      %965 = arith.mulf %964, %948 : vector<1x1x128xf32>
      %966 = vector.broadcast %865 : f32 to vector<1x1x128xf32>
      %967 = arith.addf %965, %966 : vector<1x1x128xf32>
      %c1_611 = arith.constant 1 : index
      %c0_612 = arith.constant 0 : index
      %c0_613 = arith.constant 0 : index
      %968 = vector.load %arg10[%c1_611, %c0_612, %c0_613] : memref<8x1x128xf32, #tpu.memory_space<vmem>>, vector<1x1x128xf32>
      %969 = arith.addf %968, %967 : vector<1x1x128xf32>
      %c1_614 = arith.constant 1 : index
      %c0_615 = arith.constant 0 : index
      %c0_616 = arith.constant 0 : index
      %970 = vector.load %arg10[%c1_614, %c0_615, %c0_616] : memref<8x1x128xf32, #tpu.memory_space<vmem>>, vector<1x1x128xf32>
      tpu.vector_store %arg10[%c1_614, %c0_615, %c0_616], %969 {strides = array<i32>} : memref<8x1x128xf32, #tpu.memory_space<vmem>>, vector<1x1x128xf32>,
      %971 = vector.broadcast %852 : f32 to vector<1x1x128xf32>
      %972 = arith.mulf %944, %971 : vector<1x1x128xf32>
      %973 = vector.broadcast %853 : f32 to vector<1x1x128xf32>
      %974 = arith.mulf %946, %973 : vector<1x1x128xf32>
      %975 = arith.addf %972, %974 : vector<1x1x128xf32>
      %976 = arith.mulf %975, %948 : vector<1x1x128xf32>
      %977 = vector.broadcast %866 : f32 to vector<1x1x128xf32>
      %978 = arith.addf %976, %977 : vector<1x1x128xf32>
      %c2_617 = arith.constant 2 : index
      %c0_618 = arith.constant 0 : index
      %c0_619 = arith.constant 0 : index
      %979 = vector.load %arg10[%c2_617, %c0_618, %c0_619] : memref<8x1x128xf32, #tpu.memory_space<vmem>>, vector<1x1x128xf32>
      %980 = arith.addf %979, %978 : vector<1x1x128xf32>
      %c2_620 = arith.constant 2 : index
      %c0_621 = arith.constant 0 : index
      %c0_622 = arith.constant 0 : index
      %981 = vector.load %arg10[%c2_620, %c0_621, %c0_622] : memref<8x1x128xf32, #tpu.memory_space<vmem>>, vector<1x1x128xf32>
      tpu.vector_store %arg10[%c2_620, %c0_621, %c0_622], %980 {strides = array<i32>} : memref<8x1x128xf32, #tpu.memory_space<vmem>>, vector<1x1x128xf32>,
      %982 = vector.broadcast %854 : f32 to vector<1x1x128xf32>
      %983 = arith.mulf %944, %982 : vector<1x1x128xf32>
      %984 = vector.broadcast %855 : f32 to vector<1x1x128xf32>
      %985 = arith.mulf %946, %984 : vector<1x1x128xf32>
      %986 = arith.addf %983, %985 : vector<1x1x128xf32>
      %987 = arith.mulf %986, %948 : vector<1x1x128xf32>
      %988 = vector.broadcast %867 : f32 to vector<1x1x128xf32>
      %989 = arith.addf %987, %988 : vector<1x1x128xf32>
      %c3_623 = arith.constant 3 : index
      %c0_624 = arith.constant 0 : index
      %c0_625 = arith.constant 0 : index
      %990 = vector.load %arg10[%c3_623, %c0_624, %c0_625] : memref<8x1x128xf32, #tpu.memory_space<vmem>>, vector<1x1x128xf32>
      %991 = arith.addf %990, %989 : vector<1x1x128xf32>
      %c3_626 = arith.constant 3 : index
      %c0_627 = arith.constant 0 : index
      %c0_628 = arith.constant 0 : index
      %992 = vector.load %arg10[%c3_626, %c0_627, %c0_628] : memref<8x1x128xf32, #tpu.memory_space<vmem>>, vector<1x1x128xf32>
      tpu.vector_store %arg10[%c3_626, %c0_627, %c0_628], %991 {strides = array<i32>} : memref<8x1x128xf32, #tpu.memory_space<vmem>>, vector<1x1x128xf32>,
      %993 = vector.broadcast %856 : f32 to vector<1x1x128xf32>
      %994 = arith.mulf %944, %993 : vector<1x1x128xf32>
      %995 = vector.broadcast %857 : f32 to vector<1x1x128xf32>
      %996 = arith.mulf %946, %995 : vector<1x1x128xf32>
      %997 = arith.addf %994, %996 : vector<1x1x128xf32>
      %998 = arith.mulf %997, %948 : vector<1x1x128xf32>
      %999 = vector.broadcast %868 : f32 to vector<1x1x128xf32>
      %1000 = arith.addf %998, %999 : vector<1x1x128xf32>
      %c4_629 = arith.constant 4 : index
      %c0_630 = arith.constant 0 : index
      %c0_631 = arith.constant 0 : index
      %1001 = vector.load %arg10[%c4_629, %c0_630, %c0_631] : memref<8x1x128xf32, #tpu.memory_space<vmem>>, vector<1x1x128xf32>
      %1002 = arith.addf %1001, %1000 : vector<1x1x128xf32>
      %c4_632 = arith.constant 4 : index
      %c0_633 = arith.constant 0 : index
      %c0_634 = arith.constant 0 : index
      %1003 = vector.load %arg10[%c4_632, %c0_633, %c0_634] : memref<8x1x128xf32, #tpu.memory_space<vmem>>, vector<1x1x128xf32>
      tpu.vector_store %arg10[%c4_632, %c0_633, %c0_634], %1002 {strides = array<i32>} : memref<8x1x128xf32, #tpu.memory_space<vmem>>, vector<1x1x128xf32>,
      %1004 = vector.broadcast %858 : f32 to vector<1x1x128xf32>
      %1005 = arith.mulf %944, %1004 : vector<1x1x128xf32>
      %1006 = vector.broadcast %859 : f32 to vector<1x1x128xf32>
      %1007 = arith.mulf %946, %1006 : vector<1x1x128xf32>
      %1008 = arith.addf %1005, %1007 : vector<1x1x128xf32>
      %1009 = arith.mulf %1008, %948 : vector<1x1x128xf32>
      %1010 = vector.broadcast %869 : f32 to vector<1x1x128xf32>
      %1011 = arith.addf %1009, %1010 : vector<1x1x128xf32>
      %c5_635 = arith.constant 5 : index
      %c0_636 = arith.constant 0 : index
      %c0_637 = arith.constant 0 : index
      %1012 = vector.load %arg10[%c5_635, %c0_636, %c0_637] : memref<8x1x128xf32, #tpu.memory_space<vmem>>, vector<1x1x128xf32>
      %1013 = arith.addf %1012, %1011 : vector<1x1x128xf32>
      %c5_638 = arith.constant 5 : index
      %c0_639 = arith.constant 0 : index
      %c0_640 = arith.constant 0 : index
      %1014 = vector.load %arg10[%c5_638, %c0_639, %c0_640] : memref<8x1x128xf32, #tpu.memory_space<vmem>>, vector<1x1x128xf32>
      tpu.vector_store %arg10[%c5_638, %c0_639, %c0_640], %1013 {strides = array<i32>} : memref<8x1x128xf32, #tpu.memory_space<vmem>>, vector<1x1x128xf32>,
      %1015 = vector.broadcast %860 : f32 to vector<1x1x128xf32>
      %1016 = arith.mulf %944, %1015 : vector<1x1x128xf32>
      %1017 = vector.broadcast %861 : f32 to vector<1x1x128xf32>
      %1018 = arith.mulf %946, %1017 : vector<1x1x128xf32>
      %1019 = arith.addf %1016, %1018 : vector<1x1x128xf32>
      %1020 = arith.mulf %1019, %948 : vector<1x1x128xf32>
      %1021 = vector.broadcast %870 : f32 to vector<1x1x128xf32>
      %1022 = arith.addf %1020, %1021 : vector<1x1x128xf32>
      %c6_641 = arith.constant 6 : index
      %c0_642 = arith.constant 0 : index
      %c0_643 = arith.constant 0 : index
      %1023 = vector.load %arg10[%c6_641, %c0_642, %c0_643] : memref<8x1x128xf32, #tpu.memory_space<vmem>>, vector<1x1x128xf32>
      %1024 = arith.addf %1023, %1022 : vector<1x1x128xf32>
      %c6_644 = arith.constant 6 : index
      %c0_645 = arith.constant 0 : index
      %c0_646 = arith.constant 0 : index
      %1025 = vector.load %arg10[%c6_644, %c0_645, %c0_646] : memref<8x1x128xf32, #tpu.memory_space<vmem>>, vector<1x1x128xf32>
      tpu.vector_store %arg10[%c6_644, %c0_645, %c0_646], %1024 {strides = array<i32>} : memref<8x1x128xf32, #tpu.memory_space<vmem>>, vector<1x1x128xf32>,
      %1026 = vector.broadcast %862 : f32 to vector<1x1x128xf32>
      %1027 = arith.mulf %944, %1026 : vector<1x1x128xf32>
      %1028 = vector.broadcast %863 : f32 to vector<1x1x128xf32>
      %1029 = arith.mulf %946, %1028 : vector<1x1x128xf32>
      %1030 = arith.addf %1027, %1029 : vector<1x1x128xf32>
      %1031 = arith.mulf %1030, %948 : vector<1x1x128xf32>
      %1032 = vector.broadcast %871 : f32 to vector<1x1x128xf32>
      %1033 = arith.addf %1031, %1032 : vector<1x1x128xf32>
      %c7_647 = arith.constant 7 : index
      %c0_648 = arith.constant 0 : index
      %c0_649 = arith.constant 0 : index
      %1034 = vector.load %arg10[%c7_647, %c0_648, %c0_649] : memref<8x1x128xf32, #tpu.memory_space<vmem>>, vector<1x1x128xf32>
      %1035 = arith.addf %1034, %1033 : vector<1x1x128xf32>
      %c7_650 = arith.constant 7 : index
      %c0_651 = arith.constant 0 : index
      %c0_652 = arith.constant 0 : index
      %1036 = vector.load %arg10[%c7_650, %c0_651, %c0_652] : memref<8x1x128xf32, #tpu.memory_space<vmem>>, vector<1x1x128xf32>
      tpu.vector_store %arg10[%c7_650, %c0_651, %c0_652], %1035 {strides = array<i32>} : memref<8x1x128xf32, #tpu.memory_space<vmem>>, vector<1x1x128xf32>,
    } else {
    }
    %c0 = arith.constant 0 : index
    %c0_2 = arith.constant 0 : index
    %c0_3 = arith.constant 0 : index
    %6 = vector.load %arg10[%c0, %c0_2, %c0_3] : memref<8x1x128xf32, #tpu.memory_space<vmem>>, vector<8x1x128xf32>
    %c0_4 = arith.constant 0 : index
    %c0_5 = arith.constant 0 : index
    %c0_6 = arith.constant 0 : index
    %7 = vector.load %arg9[%c0_4, %c0_5, %c0_6] : memref<8x1x128xf32, #tpu.memory_space<vmem>>, vector<8x1x128xf32>
    tpu.vector_store %arg9[%c0_4, %c0_5, %c0_6], %6 {strides = array<i32>} : memref<8x1x128xf32, #tpu.memory_space<vmem>>, vector<8x1x128xf32>,
    return
  }
  func.func @transform_0(%arg0: i32, %arg1: i32) -> (i32, i32, i32) {
    %c0_i32 = arith.constant 0 : i32
    %c0_i32_0 = arith.constant 0 : i32
    %c0_i32_1 = arith.constant 0 : i32
    return %c0_i32, %arg1, %c0_i32_0 : i32, i32, i32
  }
  func.func @transform_1(%arg0: i32, %arg1: i32) -> (i32, i32) {
    %c0_i32 = arith.constant 0 : i32
    %c0_i32_0 = arith.constant 0 : i32
    %c0_i32_1 = arith.constant 0 : i32
    return %c0_i32, %c0_i32_0 : i32, i32
  }
  func.func @transform_2(%arg0: i32, %arg1: i32) -> i32 {
    %c0_i32 = arith.constant 0 : i32
    %c0_i32_0 = arith.constant 0 : i32
    return %c0_i32 : i32
  }
  func.func @transform_3(%arg0: i32, %arg1: i32) -> (i32, i32) {
    %c0_i32 = arith.constant 0 : i32
    %c0_i32_0 = arith.constant 0 : i32
    %c0_i32_1 = arith.constant 0 : i32
    return %c0_i32, %c0_i32_0 : i32, i32
  }
  func.func @transform_4(%arg0: i32, %arg1: i32) -> i32 {
    %c0_i32 = arith.constant 0 : i32
    %c0_i32_0 = arith.constant 0 : i32
    return %c0_i32 : i32
  }
  func.func @transform_5(%arg0: i32, %arg1: i32) -> (i32, i32) {
    %c0_i32 = arith.constant 0 : i32
    %c0_i32_0 = arith.constant 0 : i32
    %c0_i32_1 = arith.constant 0 : i32
    return %c0_i32, %c0_i32_0 : i32, i32
  }
  func.func @transform_6(%arg0: i32, %arg1: i32) -> i32 {
    %c0_i32 = arith.constant 0 : i32
    %c0_i32_0 = arith.constant 0 : i32
    return %c0_i32 : i32
  }
  func.func @transform_7(%arg0: i32, %arg1: i32) -> (i32, i32, i32) {
    %c0_i32 = arith.constant 0 : i32
    %c0_i32_0 = arith.constant 0 : i32
    return %arg0, %arg1, %c0_i32 : i32, i32, i32
  }
}

</mosaic_0001>

<llo_original>
// kernel: inception_attention_forward.1
$region0: #{inception_attention_forward.1}
  #allocation0 [shape = 'u32[]', space=smem, size = 0x4, offset = 0x4, fixed_abs, tag = 'smem constant byte address 0x4 - core index']
  #allocation1 [shape = 'u32[144,128]{1,0:T(1,128)}', space=vmem, size = 0x12000, scoped, tag = 'internal scratch']
  #allocation2 [shape = 'f32[8,1,128]{2,1,0:T(1,128)}', space=vmem, size = 0x1000, scoped, tag = 'scratch operand']
  %s0 = inlined_call_operand.vmem [shape: f32[16,1,128], index: 0, kind: input, shape index: {}]
  %s1 = inlined_call_operand.vmem [shape: f32[2,8], index: 1, kind: input, shape index: {}]
  %s2 = inlined_call_operand.vmem [shape: f32[2], index: 2, kind: input, shape index: {}]
  %s3 = inlined_call_operand.vmem [shape: f32[4,4], index: 3, kind: input, shape index: {}]
  %s4 = inlined_call_operand.vmem [shape: f32[4], index: 4, kind: input, shape index: {}]
  %s5 = inlined_call_operand.vmem [shape: f32[8,2], index: 5, kind: input, shape index: {}]
  %s6 = inlined_call_operand.vmem [shape: f32[8], index: 6, kind: input, shape index: {}]
  %s7 = inlined_call_operand.vmem [shape: f32[16,1,128], index: 7, kind: output, shape index: {}]
  %s8 = sld [smem:[#allocation0]]
  $region93: #{inception_attention_forward.1} parent=0
    _
  %s10 = ssub.s32 1, %s8
  %s11 = scalar_select 0, %s10, %s8
  $region1: #{inception_attention_forward.1} parent=0
    #allocation3 [shape = 'u8[1024]{0}', space=smem, size = 0x400, scoped, tag = 'input window, operand 1, single buffered']
    #allocation4 [shape = 's32[2]{0}', space=sflag, size = 0x8, scoped, tag = 'scoped memory for inception_attention_forward.1']
    #allocation5 [shape = 'u8[512]{0}', space=smem, size = 0x200, scoped, tag = 'input window, operand 2, single buffered']
    #allocation6 [shape = 's32[1]{0}', space=sflag, size = 0x4, scoped, tag = 'scoped memory for inception_attention_forward.1']
    #allocation7 [shape = 'u8[2048]{0}', space=smem, size = 0x800, scoped, tag = 'input window, operand 3, single buffered']
    #allocation8 [shape = 'u8[512]{0}', space=smem, size = 0x200, scoped, tag = 'input window, operand 4, single buffered']
    #allocation9 [shape = 's32[1]{0}', space=sflag, size = 0x4, scoped, tag = 'scoped memory for inception_attention_forward.1']
    #allocation10 [shape = 'u8[4096]{0}', space=smem, size = 0x1000, scoped, tag = 'input window, operand 5, single buffered']
    #allocation11 [shape = 'u8[512]{0}', space=smem, size = 0x200, scoped, tag = 'input window, operand 6, single buffered']
    #allocation12 [shape = 's32[1]{0}', space=sflag, size = 0x4, scoped, tag = 'scoped memory for inception_attention_forward.1']
    %12 = vsyncpa [#allocation4], 0
    %13 = vsyncpa [#allocation6], 0
    %14 = vsyncpa [#allocation9], 0
    %15 = vsyncpa [#allocation12], 0
    loop: start=0, step=1, limit=4
    $region2: #{inception_attention_forward.1} parent=1 // loop_pre_header
      _
    $region3: #{inception_attention_forward.1} parent=1 // loop_header
      %s17 = sphi 0, %s21
      %p18 = scmp.ge.s32.totalorder %s17, 4
      %s24 = sphi 0, %s36
      %s25 = sphi 0, %s32
      %s26 = sphi 0, %s24
      %s27 = sphi 0, %s25
      %s28 = sphi 0, %s26
      %s29 = sphi 0, %s27
      %s39 = sphi 0, %s41
      %s42 = sphi 0, %s39
      %s43 = sphi 0, %s42
      %s59 = sphi 0, %s43
      %s63 = sphi 0, %s63
      %s65 = sphi 0, %s63
      %s66 = sphi 0, %s65
      %s80 = sphi 0, %s66
      %s84 = sphi 0, %s84
      %s86 = sphi 0, %s84
      %s87 = sphi 0, %s86
      %s101 = sphi 0, %s87
      %s105 = sphi 0, %s105
      %s107 = sphi 0, %s105
      %s108 = sphi 0, %s107
      %s122 = sphi 0, %s108
      %s126 = sphi 0, %s126
      %s128 = sphi 0, %s126
      %s129 = sphi 0, %s128
      %s143 = sphi 0, %s129
      %s147 = sphi 0, %s147
      %s149 = sphi 0, %s147
      %s150 = sphi 0, %s149
      %s164 = sphi 0, %s150
      %s168 = sphi 0, %s168
      %s170 = sphi 0, %s168
      %s171 = sphi 0, %s170
      %s185 = sphi 0, %s171
      %s193 = sphi 0, %s195
      %s196 = sphi 0, %s193
      %s197 = sphi 0, %s196
      %s213 = sphi 0, %s197
    $region4: #{inception_attention_forward.1} parent=1 // loop_header_branch
      %20 = sbr.rel (%p18) target = $region8
    $region5: #{inception_attention_forward.1} parent=1 // loop_body
      %s22 = ssub.s32 %s17, 1
      %s23 = ssub.s32 %s17, 2
      %s30 = sadd.s32 1, %s25
      %p31 = scmp.ge.s32.totalorder %s30, 1
      %s32 = scalar_select %p31, 0, %s30
      %s33 = sadd.s32 1, %s24
      %s34 = scalar_select %p31, %s33, %s24
      %p35 = scmp.ge.s32.totalorder %s34, 2
      %s36 = scalar_select %p35, 0, %s34
      %s37 = ssub.s32 %s25, %s32
      %p38 = scmp.eq.s32.totalorder %s37, 0
      %s40 = sadd.s32 %s39, 1
      %s41 = scalar_select %p38, %s39, %s40
      %p44 = pneg %p38
      %p45 = scmp.eq.s32.totalorder %s17, 1
      %p46 = por %p44, %p45
      %p47 = scmp.ne.s32.totalorder %s39, %s42
      %p48 = scmp.eq.s32.totalorder %s17, 0
      %p49 = por %p47, %p48
      %p50 = scmp.ne.s32.totalorder %s39, %s42
      %p51 = scmp.eq.s32.totalorder %s22, 1
      %p52 = por %p50, %p51
      %p53 = scmp.ne.s32.totalorder %s42, %s43
      %p54 = scmp.eq.s32.totalorder %s22, 0
      %p55 = por %p53, %p54
      %p56 = scmp.ne.s32.totalorder %s42, %s43
      %p57 = scmp.eq.s32.totalorder %s23, 1
      %p58 = por %p56, %p57
      %p60 = scmp.ne.s32.totalorder %s43, %s59
      %p61 = scmp.eq.s32.totalorder %s23, 0
      %p62 = por %p60, %p61
      %s64 = sadd.s32 %s63, 1
      %p67 = scmp.eq.s32.totalorder %s17, 1
      %p68 = scmp.ne.s32.totalorder %s63, %s65
      %p69 = scmp.eq.s32.totalorder %s17, 0
      %p70 = por %p68, %p69
      %p71 = scmp.ne.s32.totalorder %s63, %s65
      %p72 = scmp.eq.s32.totalorder %s22, 1
      %p73 = por %p71, %p72
      %p74 = scmp.ne.s32.totalorder %s65, %s66
      %p75 = scmp.eq.s32.totalorder %s22, 0
      %p76 = por %p74, %p75
      %p77 = scmp.ne.s32.totalorder %s65, %s66
      %p78 = scmp.eq.s32.totalorder %s23, 1
      %p79 = por %p77, %p78
      %p81 = scmp.ne.s32.totalorder %s66, %s80
      %p82 = scmp.eq.s32.totalorder %s23, 0
      %p83 = por %p81, %p82
      %s85 = sadd.s32 %s84, 1
      %p88 = scmp.eq.s32.totalorder %s17, 1
      %p89 = scmp.ne.s32.totalorder %s84, %s86
      %p90 = scmp.eq.s32.totalorder %s17, 0
      %p91 = por %p89, %p90
      %p92 = scmp.ne.s32.totalorder %s84, %s86
      %p93 = scmp.eq.s32.totalorder %s22, 1
      %p94 = por %p92, %p93
      %p95 = scmp.ne.s32.totalorder %s86, %s87
      %p96 = scmp.eq.s32.totalorder %s22, 0
      %p97 = por %p95, %p96
      %p98 = scmp.ne.s32.totalorder %s86, %s87
      %p99 = scmp.eq.s32.totalorder %s23, 1
      %p100 = por %p98, %p99
      %p102 = scmp.ne.s32.totalorder %s87, %s101
      %p103 = scmp.eq.s32.totalorder %s23, 0
      %p104 = por %p102, %p103
      %s106 = sadd.s32 %s105, 1
      %p109 = scmp.eq.s32.totalorder %s17, 1
      %p110 = scmp.ne.s32.totalorder %s105, %s107
      %p111 = scmp.eq.s32.totalorder %s17, 0
      %p112 = por %p110, %p111
      %p113 = scmp.ne.s32.totalorder %s105, %s107
      %p114 = scmp.eq.s32.totalorder %s22, 1
      %p115 = por %p113, %p114
      %p116 = scmp.ne.s32.totalorder %s107, %s108
      %p117 = scmp.eq.s32.totalorder %s22, 0
      %p118 = por %p116, %p117
      %p119 = scmp.ne.s32.totalorder %s107, %s108
      %p120 = scmp.eq.s32.totalorder %s23, 1
      %p121 = por %p119, %p120
      %p123 = scmp.ne.s32.totalorder %s108, %s122
      %p124 = scmp.eq.s32.totalorder %s23, 0
      %p125 = por %p123, %p124
      %s127 = sadd.s32 %s126, 1
      %p130 = scmp.eq.s32.totalorder %s17, 1
      %p131 = scmp.ne.s32.totalorder %s126, %s128
      %p132 = scmp.eq.s32.totalorder %s17, 0
      %p133 = por %p131, %p132
      %p134 = scmp.ne.s32.totalorder %s126, %s128
      %p135 = scmp.eq.s32.totalorder %s22, 1
      %p136 = por %p134, %p135
      %p137 = scmp.ne.s32.totalorder %s128, %s129
      %p138 = scmp.eq.s32.totalorder %s22, 0
      %p139 = por %p137, %p138
      %p140 = scmp.ne.s32.totalorder %s128, %s129
      %p141 = scmp.eq.s32.totalorder %s23, 1
      %p142 = por %p140, %p141
      %p144 = scmp.ne.s32.totalorder %s129, %s143
      %p145 = scmp.eq.s32.totalorder %s23, 0
      %p146 = por %p144, %p145
      %s148 = sadd.s32 %s147, 1
      %p151 = scmp.eq.s32.totalorder %s17, 1
      %p152 = scmp.ne.s32.totalorder %s147, %s149
      %p153 = scmp.eq.s32.totalorder %s17, 0
      %p154 = por %p152, %p153
      %p155 = scmp.ne.s32.totalorder %s147, %s149
      %p156 = scmp.eq.s32.totalorder %s22, 1
      %p157 = por %p155, %p156
      %p158 = scmp.ne.s32.totalorder %s149, %s150
      %p159 = scmp.eq.s32.totalorder %s22, 0
      %p160 = por %p158, %p159
      %p161 = scmp.ne.s32.totalorder %s149, %s150
      %p162 = scmp.eq.s32.totalorder %s23, 1
      %p163 = por %p161, %p162
      %p165 = scmp.ne.s32.totalorder %s150, %s164
      %p166 = scmp.eq.s32.totalorder %s23, 0
      %p167 = por %p165, %p166
      %s169 = sadd.s32 %s168, 1
      %p172 = scmp.eq.s32.totalorder %s17, 1
      %p173 = scmp.ne.s32.totalorder %s168, %s170
      %p174 = scmp.eq.s32.totalorder %s17, 0
      %p175 = por %p173, %p174
      %p176 = scmp.ne.s32.totalorder %s168, %s170
      %p177 = scmp.eq.s32.totalorder %s22, 1
      %p178 = por %p176, %p177
      %p179 = scmp.ne.s32.totalorder %s170, %s171
      %p180 = scmp.eq.s32.totalorder %s22, 0
      %p181 = por %p179, %p180
      %p182 = scmp.ne.s32.totalorder %s170, %s171
      %p183 = scmp.eq.s32.totalorder %s23, 1
      %p184 = por %p182, %p183
      %p186 = scmp.ne.s32.totalorder %s171, %s185
      %p187 = scmp.eq.s32.totalorder %s23, 0
      %p188 = por %p186, %p187
      %s189 = ssub.s32 %s24, %s36
      %s190 = ssub.s32 %s25, %s32
      %s191 = sor.u32 %s189, %s190
      %p192 = scmp.eq.s32.totalorder %s191, 0
      %s194 = sadd.s32 %s193, 1
      %s195 = scalar_select %p192, %s193, %s194
      %p198 = pneg %p192
      %p199 = scmp.eq.s32.totalorder %s17, 1
      %p200 = por %p198, %p199
      %p201 = scmp.ne.s32.totalorder %s193, %s196
      %p202 = scmp.eq.s32.totalorder %s17, 0
      %p203 = por %p201, %p202
      %p204 = scmp.ne.s32.totalorder %s193, %s196
      %p205 = scmp.eq.s32.totalorder %s22, 1
      %p206 = por %p204, %p205
      %p207 = scmp.ne.s32.totalorder %s196, %s197
      %p208 = scmp.eq.s32.totalorder %s22, 0
      %p209 = por %p207, %p208
      %p210 = scmp.ne.s32.totalorder %s196, %s197
      %p211 = scmp.eq.s32.totalorder %s23, 1
      %p212 = por %p210, %p211
      %p214 = scmp.ne.s32.totalorder %s197, %s213
      %p215 = scmp.eq.s32.totalorder %s23, 0
      %p216 = por %p214, %p215
      %p217 = scmp.le.s32.totalorder 1, %s17
      %p218 = scmp.lt.s32.totalorder %s17, 3
      %p219 = pnand %p217, %p218
      %p220 = pneg %p219
      // Predicated region
      $region9: #{inception_attention_forward.1} parent=5 // pred_check
        _
      $region10: #{inception_attention_forward.1} parent=5 // pred_check_branch
        %222 = sbr.rel (%p219) target = $region12
      $region11: #{inception_attention_forward.1} parent=5 // pred_region
        %s223 = ssub.s32 %s17, 1
        // Predicated region
        $region13: #{inception_attention_forward.1} parent=11 // pred_check
          %p224 = pneg %p55
        $region14: #{inception_attention_forward.1} parent=11 // pred_check_branch
          %226 = sbr.rel (%p224) target = $region16
        $region15: #{inception_attention_forward.1} parent=11 // pred_region
          %p227 = scmp.lt.s32.totalorder %s27, 0
          %s228 = scalar_select %p227, %s27, 0
          %s229 = scalar_lea.vmem %s0, %s228
        $region16: #{inception_attention_forward.1} parent=11 // pred_fallthru
          _
        // Predicated region
        $region17: #{inception_attention_forward.1} parent=11 // pred_check
          %p230 = pneg %p76
        $region18: #{inception_attention_forward.1} parent=11 // pred_check_branch
          %232 = sbr.rel (%p230) target = $region20
        $region19: #{inception_attention_forward.1} parent=11 // pred_region
          %s234 = ssub.s32 32, 32
          %235 = vsyncadd [#allocation4], %s234
          %s237 = sshll.u32 %s1, 4
          %s238 = int_to_ptr.vmem [resolvable:$true] %s237
          %240 = dma.vmem_to_smem %s238, 32, [#allocation3], [#allocation4]
        $region20: #{inception_attention_forward.1} parent=11 // pred_fallthru
          _
        // Predicated region
        $region21: #{inception_attention_forward.1} parent=11 // pred_check
          %p241 = pneg %p97
        $region22: #{inception_attention_forward.1} parent=11 // pred_check_branch
          %243 = sbr.rel (%p241) target = $region24
        $region23: #{inception_attention_forward.1} parent=11 // pred_region
          %s245 = ssub.s32 16, 16
          %246 = vsyncadd [#allocation6], %s245
          %s248 = sshll.u32 %s2, 4
          %s249 = int_to_ptr.vmem [resolvable:$true] %s248
          %251 = dma.vmem_to_smem %s249, 16, [#allocation5], [#allocation6]
        $region24: #{inception_attention_forward.1} parent=11 // pred_fallthru
          _
        // Predicated region
        $region25: #{inception_attention_forward.1} parent=11 // pred_check
          %p252 = pneg %p118
        $region26: #{inception_attention_forward.1} parent=11 // pred_check_branch
          %254 = sbr.rel (%p252) target = $region28
        $region27: #{inception_attention_forward.1} parent=11 // pred_region
          %s256 = ssub.s32 64, 64
          %257 = vsyncadd [#allocation6], %s256
          %s259 = sshll.u32 %s3, 4
          %s260 = int_to_ptr.vmem [resolvable:$true] %s259
          %262 = dma.vmem_to_smem %s260, 64, [#allocation7], [#allocation6]
        $region28: #{inception_attention_forward.1} parent=11 // pred_fallthru
          _
        // Predicated region
        $region29: #{inception_attention_forward.1} parent=11 // pred_check
          %p263 = pneg %p139
        $region30: #{inception_attention_forward.1} parent=11 // pred_check_branch
          %265 = sbr.rel (%p263) target = $region32
        $region31: #{inception_attention_forward.1} parent=11 // pred_region
          %s267 = ssub.s32 16, 16
          %268 = vsyncadd [#allocation9], %s267
          %s270 = sshll.u32 %s4, 4
          %s271 = int_to_ptr.vmem [resolvable:$true] %s270
          %273 = dma.vmem_to_smem %s271, 16, [#allocation8], [#allocation9]
        $region32: #{inception_attention_forward.1} parent=11 // pred_fallthru
          _
        // Predicated region
        $region33: #{inception_attention_forward.1} parent=11 // pred_check
          %p274 = pneg %p160
        $region34: #{inception_attention_forward.1} parent=11 // pred_check_branch
          %276 = sbr.rel (%p274) target = $region36
        $region35: #{inception_attention_forward.1} parent=11 // pred_region
          %s278 = ssub.s32 128, 128
          %279 = vsyncadd [#allocation9], %s278
          %s281 = sshll.u32 %s5, 4
          %s282 = int_to_ptr.vmem [resolvable:$true] %s281
          %284 = dma.vmem_to_smem %s282, 128, [#allocation10], [#allocation9]
        $region36: #{inception_attention_forward.1} parent=11 // pred_fallthru
          _
        // Predicated region
        $region37: #{inception_attention_forward.1} parent=11 // pred_check
          %p285 = pneg %p181
        $region38: #{inception_attention_forward.1} parent=11 // pred_check_branch
          %287 = sbr.rel (%p285) target = $region40
        $region39: #{inception_attention_forward.1} parent=11 // pred_region
          %s289 = ssub.s32 16, 16
          %290 = vsyncadd [#allocation12], %s289
          %s292 = sshll.u32 %s6, 4
          %s293 = int_to_ptr.vmem [resolvable:$true] %s292
          %295 = dma.vmem_to_smem %s293, 16, [#allocation11], [#allocation12]
        $region40: #{inception_attention_forward.1} parent=11 // pred_fallthru
          _
      $region12: #{inception_attention_forward.1} parent=5 // pred_fallthru
        _
      %p296 = scmp.lt.s32.totalorder %s17, 2
      // Predicated region
      $region41: #{inception_attention_forward.1} parent=5 // pred_check
        %p297 = pneg %p296
      $region42: #{inception_attention_forward.1} parent=5 // pred_check_branch
        %299 = sbr.rel (%p297) target = $region44
      $region43: #{inception_attention_forward.1} parent=5 // pred_region
        _
      $region44: #{inception_attention_forward.1} parent=5 // pred_fallthru
        _
      %p300 = scmp.le.s32.totalorder 1, %s17
      %p301 = scmp.lt.s32.totalorder %s17, 3
      %p302 = pnand %p300, %p301
      %p303 = pneg %p302
      // Predicated region
      $region45: #{inception_attention_forward.1} parent=5 // pred_check
        _
      $region46: #{inception_attention_forward.1} parent=5 // pred_check_branch
        %305 = sbr.rel (%p302) target = $region48
      $region47: #{inception_attention_forward.1} parent=5 // pred_region
        %s306 = ssub.s32 %s17, 1
        // Predicated region
        $region49: #{inception_attention_forward.1} parent=47 // pred_check
          %p307 = pneg %p76
        $region50: #{inception_attention_forward.1} parent=47 // pred_check_branch
          %309 = sbr.rel (%p307) target = $region52
        $region51: #{inception_attention_forward.1} parent=47 // pred_region
          %310 = dma.done [#allocation4], 32
        $region52: #{inception_attention_forward.1} parent=47 // pred_fallthru
          _
        // Predicated region
        $region53: #{inception_attention_forward.1} parent=47 // pred_check
          %p311 = pneg %p97
        $region54: #{inception_attention_forward.1} parent=47 // pred_check_branch
          %313 = sbr.rel (%p311) target = $region56
        $region55: #{inception_attention_forward.1} parent=47 // pred_region
          %314 = dma.done [#allocation6], 16
        $region56: #{inception_attention_forward.1} parent=47 // pred_fallthru
          _
        // Predicated region
        $region57: #{inception_attention_forward.1} parent=47 // pred_check
          %p315 = pneg %p118
        $region58: #{inception_attention_forward.1} parent=47 // pred_check_branch
          %317 = sbr.rel (%p315) target = $region60
        $region59: #{inception_attention_forward.1} parent=47 // pred_region
          %318 = dma.done [#allocation6], 64
        $region60: #{inception_attention_forward.1} parent=47 // pred_fallthru
          _
        // Predicated region
        $region61: #{inception_attention_forward.1} parent=47 // pred_check
          %p319 = pneg %p139
        $region62: #{inception_attention_forward.1} parent=47 // pred_check_branch
          %321 = sbr.rel (%p319) target = $region64
        $region63: #{inception_attention_forward.1} parent=47 // pred_region
          %322 = dma.done [#allocation9], 16
        $region64: #{inception_attention_forward.1} parent=47 // pred_fallthru
          _
        // Predicated region
        $region65: #{inception_attention_forward.1} parent=47 // pred_check
          %p323 = pneg %p160
        $region66: #{inception_attention_forward.1} parent=47 // pred_check_branch
          %325 = sbr.rel (%p323) target = $region68
        $region67: #{inception_attention_forward.1} parent=47 // pred_region
          %326 = dma.done [#allocation9], 128
        $region68: #{inception_attention_forward.1} parent=47 // pred_fallthru
          _
        // Predicated region
        $region69: #{inception_attention_forward.1} parent=47 // pred_check
          %p327 = pneg %p181
        $region70: #{inception_attention_forward.1} parent=47 // pred_check_branch
          %329 = sbr.rel (%p327) target = $region72
        $region71: #{inception_attention_forward.1} parent=47 // pred_region
          %330 = dma.done [#allocation12], 16
        $region72: #{inception_attention_forward.1} parent=47 // pred_fallthru
          _
        %331 = sfence
        %p332 = scmp.lt.s32.totalorder %s27, 0
        %s333 = scalar_select %p332, %s27, 0
        %s334 = scalar_lea.vmem %s0, %s333
        %p335 = pneg %p55
        %p336 = pneg %p52
        %p337 = pneg %p76
        %p338 = pneg %p73
        %p339 = pneg %p97
        %p340 = pneg %p94
        %p341 = pneg %p118
        %p342 = pneg %p115
        %p343 = pneg %p139
        %p344 = pneg %p136
        %p345 = pneg %p160
        %p346 = pneg %p157
        %p347 = pneg %p181
        %p348 = pneg %p178
        %p349 = pneg %p209
        %p350 = pneg %p206
        %s351 = smul.u32 8, %s26
        %p352 = scmp.lt.s32.totalorder %s351, 15
        %s353 = scalar_select %p352, %s351, 15
        %p354 = scmp.lt.s32.totalorder %s27, 0
        %s355 = scalar_select %p354, %s27, 0
        %s356 = sadd.s32 %s355, %s353
        %s357 = scalar_lea.vmem %s7, %s356
        %p358 = scmp.lt.s32.totalorder %s27, 0
        %s359 = scalar_select %p358, %s27, 0
        %s360 = scalar_lea.vmem %s0, %s359
        %s361 = smul.u32 8, %s26
        %p362 = scmp.lt.s32.totalorder %s361, 15
        %s363 = scalar_select %p362, %s361, 15
        %p364 = scmp.lt.s32.totalorder %s27, 0
        %s365 = scalar_select %p364, %s27, 0
        %s366 = sadd.s32 %s365, %s363
        %s367 = scalar_lea.vmem %s7, %s366
        %s368 = smul.u32 8, %s26
        %p369 = scmp.eq.s32.totalorder %s26, 0
        // Predicated region
        $region73: #{inception_attention_forward.1} parent=47 // pred_check
          %p370 = pneg %p369
        $region74: #{inception_attention_forward.1} parent=47 // pred_check_branch
          %372 = sbr.rel (%p370) target = $region76
        $region75: #{inception_attention_forward.1} parent=47 // pred_region
          %s373 = sld [smem:[#allocation3]]
          %s374 = sld [smem:[#allocation3 + $0x1]]
          %s375 = sld [smem:[#allocation3 + $0x2]]
          %s376 = sld [smem:[#allocation3 + $0x3]]
          %s377 = sld [smem:[#allocation3 + $0x4]]
          %s378 = sld [smem:[#allocation3 + $0x5]]
          %s379 = sld [smem:[#allocation3 + $0x6]]
          %s380 = sld [smem:[#allocation3 + $0x7]]
          %s381 = sld [smem:[#allocation3 + $0x80]]
          %s382 = sld [smem:[#allocation3 + $0x81]]
          %s383 = sld [smem:[#allocation3 + $0x82]]
          %s384 = sld [smem:[#allocation3 + $0x83]]
          %s385 = sld [smem:[#allocation3 + $0x84]]
          %s386 = sld [smem:[#allocation3 + $0x85]]
          %s387 = sld [smem:[#allocation3 + $0x86]]
          %s388 = sld [smem:[#allocation3 + $0x87]]
          %s389 = sld [smem:[#allocation5]]
          %s390 = sld [smem:[#allocation5 + $0x1]]
          %v391 = vld [vmem:[%s360] sm:$0x1]
          %v392 = vmul.f32 %v391, 0.70710677
          %s393 = scalar_lea.vmem %s360, 1
          %v394 = vld [vmem:[%s393] sm:$0x1]
          %v395 = vmul.f32 %v394, 0.70710677
          %v396 = vmul.f32 %v392, %v391
          %v397 = vmul.f32 %v395, %v394
          %v398 = vadd.f32 %v396, %v397
          %s399 = scalar_lea.vmem %s360, 2
          %v400 = vld [vmem:[%s399] sm:$0x1]
          %v401 = vmul.f32 %v392, %v400
          %s402 = scalar_lea.vmem %s360, 3
          %v403 = vld [vmem:[%s402] sm:$0x1]
          %v404 = vmul.f32 %v395, %v403
          %v405 = vadd.f32 %v401, %v404
          %s406 = scalar_lea.vmem %s360, 4
          %v407 = vld [vmem:[%s406] sm:$0x1]
          %v408 = vmul.f32 %v392, %v407
          %s409 = scalar_lea.vmem %s360, 5
          %v410 = vld [vmem:[%s409] sm:$0x1]
          %v411 = vmul.f32 %v395, %v410
          %v412 = vadd.f32 %v408, %v411
          %s413 = scalar_lea.vmem %s360, 6
          %v414 = vld [vmem:[%s413] sm:$0x1]
          %v415 = vmul.f32 %v392, %v414
          %s416 = scalar_lea.vmem %s360, 7
          %v417 = vld [vmem:[%s416] sm:$0x1]
          %v418 = vmul.f32 %v395, %v417
          %v419 = vadd.f32 %v415, %v418
          %s420 = scalar_lea.vmem %s360, 8
          %v421 = vld [vmem:[%s420] sm:$0x1]
          %v422 = vmul.f32 %v392, %v421
          %s423 = scalar_lea.vmem %s360, 9
          %v424 = vld [vmem:[%s423] sm:$0x1]
          %v425 = vmul.f32 %v395, %v424
          %v426 = vadd.f32 %v422, %v425
          %s427 = scalar_lea.vmem %s360, 10
          %v428 = vld [vmem:[%s427] sm:$0x1]
          %v429 = vmul.f32 %v392, %v428
          %s430 = scalar_lea.vmem %s360, 11
          %v431 = vld [vmem:[%s430] sm:$0x1]
          %v432 = vmul.f32 %v395, %v431
          %v433 = vadd.f32 %v429, %v432
          %s434 = scalar_lea.vmem %s360, 12
          %v435 = vld [vmem:[%s434] sm:$0x1]
          %v436 = vmul.f32 %v392, %v435
          %s437 = scalar_lea.vmem %s360, 13
          %v438 = vld [vmem:[%s437] sm:$0x1]
          %v439 = vmul.f32 %v395, %v438
          %v440 = vadd.f32 %v436, %v439
          %s441 = scalar_lea.vmem %s360, 14
          %v442 = vld [vmem:[%s441] sm:$0x1]
          %v443 = vmul.f32 %v392, %v442
          %s444 = scalar_lea.vmem %s360, 15
          %v445 = vld [vmem:[%s444] sm:$0x1]
          %v446 = vmul.f32 %v395, %v445
          %v447 = vadd.f32 %v443, %v446
          %v448 = vmax.f32 %v398, %v405
          %v449 = vmax.f32 %v448, %v412
          %v450 = vmax.f32 %v449, %v419
          %v451 = vmax.f32 %v450, %v426
          %v452 = vmax.f32 %v451, %v433
          %v453 = vmax.f32 %v452, %v440
          %v454 = vmax.f32 %v453, %v447
          %v455 = vsub.f32 %v398, %v454
          %v456 = vmul.f32 %v455, 1.442695
          %v457 = vpow.pop %v456
          %v458 = vsub.f32 %v405, %v454
          %v459 = vmul.f32 %v458, 1.442695
          %v460 = vpow.pop %v459
          %v461 = vsub.f32 %v412, %v454
          %v462 = vmul.f32 %v461, 1.442695
          %v463 = vpow.pop %v462
          %v464 = vsub.f32 %v419, %v454
          %v465 = vmul.f32 %v464, 1.442695
          %v466 = vpow.pop %v465
          %v467 = vsub.f32 %v426, %v454
          %v468 = vmul.f32 %v467, 1.442695
          %v469 = vpow.pop %v468
          %v470 = vsub.f32 %v433, %v454
          %v471 = vmul.f32 %v470, 1.442695
          %v472 = vpow.pop %v471
          %v473 = vsub.f32 %v440, %v454
          %v474 = vmul.f32 %v473, 1.442695
          %v475 = vpow.pop %v474
          %v476 = vsub.f32 %v447, %v454
          %v477 = vmul.f32 %v476, 1.442695
          %v478 = vpow.pop %v477
          %v479 = vadd.f32 %v457, %v460
          %v480 = vadd.f32 %v479, %v463
          %v481 = vadd.f32 %v480, %v466
          %v482 = vadd.f32 %v481, %v469
          %v483 = vadd.f32 %v482, %v472
          %v484 = vadd.f32 %v483, %v475
          %v485 = vadd.f32 %v484, %v478
          %v486 = vrcp.pop %v485
          %v487 = vstv %s373
          %v488 = vmul.f32 %v457, %v487
          %v489 = vstv %s374
          %v490 = vmul.f32 %v460, %v489
          %v491 = vadd.f32 %v488, %v490
          %v492 = vstv %s375
          %v493 = vmul.f32 %v463, %v492
          %v494 = vadd.f32 %v491, %v493
          %v495 = vstv %s376
          %v496 = vmul.f32 %v466, %v495
          %v497 = vadd.f32 %v494, %v496
          %v498 = vstv %s377
          %v499 = vmul.f32 %v469, %v498
          %v500 = vadd.f32 %v497, %v499
          %v501 = vstv %s378
          %v502 = vmul.f32 %v472, %v501
          %v503 = vadd.f32 %v500, %v502
          %v504 = vstv %s379
          %v505 = vmul.f32 %v475, %v504
          %v506 = vadd.f32 %v503, %v505
          %v507 = vstv %s380
          %v508 = vmul.f32 %v478, %v507
          %v509 = vadd.f32 %v506, %v508
          %v510 = vmul.f32 %v509, %v486
          %v511 = vstv %s389
          %v512 = vadd.f32 %v510, %v511
          %513 = vst [vmem:[#allocation2] sm:$0x1] %v512
          %v514 = vstv %s381
          %v515 = vmul.f32 %v457, %v514
          %v516 = vstv %s382
          %v517 = vmul.f32 %v460, %v516
          %v518 = vadd.f32 %v515, %v517
          %v519 = vstv %s383
          %v520 = vmul.f32 %v463, %v519
          %v521 = vadd.f32 %v518, %v520
          %v522 = vstv %s384
          %v523 = vmul.f32 %v466, %v522
          %v524 = vadd.f32 %v521, %v523
          %v525 = vstv %s385
          %v526 = vmul.f32 %v469, %v525
          %v527 = vadd.f32 %v524, %v526
          %v528 = vstv %s386
          %v529 = vmul.f32 %v472, %v528
          %v530 = vadd.f32 %v527, %v529
          %v531 = vstv %s387
          %v532 = vmul.f32 %v475, %v531
          %v533 = vadd.f32 %v530, %v532
          %v534 = vstv %s388
          %v535 = vmul.f32 %v478, %v534
          %v536 = vadd.f32 %v533, %v535
          %v537 = vmul.f32 %v536, %v486
          %v538 = vstv %s390
          %v539 = vadd.f32 %v537, %v538
          %s540 = scalar_lea.vmem [#allocation2], 1
          %541 = vst [vmem:[%s540] sm:$0x1] %v539
          %v542 = vld [vmem:[%s399] sm:$0x1]
          %v543 = vmul.f32 %v542, 0.70710677
          %v544 = vld [vmem:[%s402] sm:$0x1]
          %v545 = vmul.f32 %v544, 0.70710677
          %v546 = vld [vmem:[%s360] sm:$0x1]
          %v547 = vmul.f32 %v543, %v546
          %v548 = vld [vmem:[%s393] sm:$0x1]
          %v549 = vmul.f32 %v545, %v548
          %v550 = vadd.f32 %v547, %v549
          %v551 = vmul.f32 %v543, %v542
          %v552 = vmul.f32 %v545, %v544
          %v553 = vadd.f32 %v551, %v552
          %v554 = vld [vmem:[%s406] sm:$0x1]
          %v555 = vmul.f32 %v543, %v554
          %v556 = vld [vmem:[%s409] sm:$0x1]
          %v557 = vmul.f32 %v545, %v556
          %v558 = vadd.f32 %v555, %v557
          %v559 = vld [vmem:[%s413] sm:$0x1]
          %v560 = vmul.f32 %v543, %v559
          %v561 = vld [vmem:[%s416] sm:$0x1]
          %v562 = vmul.f32 %v545, %v561
          %v563 = vadd.f32 %v560, %v562
          %v564 = vld [vmem:[%s420] sm:$0x1]
          %v565 = vmul.f32 %v543, %v564
          %v566 = vld [vmem:[%s423] sm:$0x1]
          %v567 = vmul.f32 %v545, %v566
          %v568 = vadd.f32 %v565, %v567
          %v569 = vld [vmem:[%s427] sm:$0x1]
          %v570 = vmul.f32 %v543, %v569
          %v571 = vld [vmem:[%s430] sm:$0x1]
          %v572 = vmul.f32 %v545, %v571
          %v573 = vadd.f32 %v570, %v572
          %v574 = vld [vmem:[%s434] sm:$0x1]
          %v575 = vmul.f32 %v543, %v574
          %v576 = vld [vmem:[%s437] sm:$0x1]
          %v577 = vmul.f32 %v545, %v576
          %v578 = vadd.f32 %v575, %v577
          %v579 = vld [vmem:[%s441] sm:$0x1]
          %v580 = vmul.f32 %v543, %v579
          %v581 = vld [vmem:[%s444] sm:$0x1]
          %v582 = vmul.f32 %v545, %v581
          %v583 = vadd.f32 %v580, %v582
          %v584 = vmax.f32 %v550, %v553
          %v585 = vmax.f32 %v584, %v558
          %v586 = vmax.f32 %v585, %v563
          %v587 = vmax.f32 %v586, %v568
          %v588 = vmax.f32 %v587, %v573
          %v589 = vmax.f32 %v588, %v578
          %v590 = vmax.f32 %v589, %v583
          %v591 = vsub.f32 %v550, %v590
          %v592 = vmul.f32 %v591, 1.442695
          %v593 = vpow.pop %v592
          %v594 = vsub.f32 %v553, %v590
          %v595 = vmul.f32 %v594, 1.442695
          %v596 = vpow.pop %v595
          %v597 = vsub.f32 %v558, %v590
          %v598 = vmul.f32 %v597, 1.442695
          %v599 = vpow.pop %v598
          %v600 = vsub.f32 %v563, %v590
          %v601 = vmul.f32 %v600, 1.442695
          %v602 = vpow.pop %v601
          %v603 = vsub.f32 %v568, %v590
          %v604 = vmul.f32 %v603, 1.442695
          %v605 = vpow.pop %v604
          %v606 = vsub.f32 %v573, %v590
          %v607 = vmul.f32 %v606, 1.442695
          %v608 = vpow.pop %v607
          %v609 = vsub.f32 %v578, %v590
          %v610 = vmul.f32 %v609, 1.442695
          %v611 = vpow.pop %v610
          %v612 = vsub.f32 %v583, %v590
          %v613 = vmul.f32 %v612, 1.442695
          %v614 = vpow.pop %v613
          %v615 = vadd.f32 %v593, %v596
          %v616 = vadd.f32 %v615, %v599
          %v617 = vadd.f32 %v616, %v602
          %v618 = vadd.f32 %v617, %v605
          %v619 = vadd.f32 %v618, %v608
          %v620 = vadd.f32 %v619, %v611
          %v621 = vadd.f32 %v620, %v614
          %v622 = vrcp.pop %v621
          %v623 = vmul.f32 %v593, %v487
          %v624 = vmul.f32 %v596, %v489
          %v625 = vadd.f32 %v623, %v624
          %v626 = vmul.f32 %v599, %v492
          %v627 = vadd.f32 %v625, %v626
          %v628 = vmul.f32 %v602, %v495
          %v629 = vadd.f32 %v627, %v628
          %v630 = vmul.f32 %v605, %v498
          %v631 = vadd.f32 %v629, %v630
          %v632 = vmul.f32 %v608, %v501
          %v633 = vadd.f32 %v631, %v632
          %v634 = vmul.f32 %v611, %v504
          %v635 = vadd.f32 %v633, %v634
          %v636 = vmul.f32 %v614, %v507
          %v637 = vadd.f32 %v635, %v636
          %v638 = vmul.f32 %v637, %v622
          %v639 = vadd.f32 %v638, %v511
          %s640 = scalar_lea.vmem [#allocation2], 2
          %641 = vst [vmem:[%s640] sm:$0x1] %v639
          %v642 = vmul.f32 %v593, %v514
          %v643 = vmul.f32 %v596, %v516
          %v644 = vadd.f32 %v642, %v643
          %v645 = vmul.f32 %v599, %v519
          %v646 = vadd.f32 %v644, %v645
          %v647 = vmul.f32 %v602, %v522
          %v648 = vadd.f32 %v646, %v647
          %v649 = vmul.f32 %v605, %v525
          %v650 = vadd.f32 %v648, %v649
          %v651 = vmul.f32 %v608, %v528
          %v652 = vadd.f32 %v650, %v651
          %v653 = vmul.f32 %v611, %v531
          %v654 = vadd.f32 %v652, %v653
          %v655 = vmul.f32 %v614, %v534
          %v656 = vadd.f32 %v654, %v655
          %v657 = vmul.f32 %v656, %v622
          %v658 = vadd.f32 %v657, %v538
          %s659 = scalar_lea.vmem [#allocation2], 3
          %660 = vst [vmem:[%s659] sm:$0x1] %v658
          %v661 = vld [vmem:[%s406] sm:$0x1]
          %v662 = vmul.f32 %v661, 0.70710677
          %v663 = vld [vmem:[%s409] sm:$0x1]
          %v664 = vmul.f32 %v663, 0.70710677
          %v665 = vld [vmem:[%s360] sm:$0x1]
          %v666 = vmul.f32 %v662, %v665
          %v667 = vld [vmem:[%s393] sm:$0x1]
          %v668 = vmul.f32 %v664, %v667
          %v669 = vadd.f32 %v666, %v668
          %v670 = vld [vmem:[%s399] sm:$0x1]
          %v671 = vmul.f32 %v662, %v670
          %v672 = vld [vmem:[%s402] sm:$0x1]
          %v673 = vmul.f32 %v664, %v672
          %v674 = vadd.f32 %v671, %v673
          %v675 = vmul.f32 %v662, %v661
          %v676 = vmul.f32 %v664, %v663
          %v677 = vadd.f32 %v675, %v676
          %v678 = vld [vmem:[%s413] sm:$0x1]
          %v679 = vmul.f32 %v662, %v678
          %v680 = vld [vmem:[%s416] sm:$0x1]
          %v681 = vmul.f32 %v664, %v680
          %v682 = vadd.f32 %v679, %v681
          %v683 = vld [vmem:[%s420] sm:$0x1]
          %v684 = vmul.f32 %v662, %v683
          %v685 = vld [vmem:[%s423] sm:$0x1]
          %v686 = vmul.f32 %v664, %v685
          %v687 = vadd.f32 %v684, %v686
          %v688 = vld [vmem:[%s427] sm:$0x1]
          %v689 = vmul.f32 %v662, %v688
          %v690 = vld [vmem:[%s430] sm:$0x1]
          %v691 = vmul.f32 %v664, %v690
          %v692 = vadd.f32 %v689, %v691
          %v693 = vld [vmem:[%s434] sm:$0x1]
          %v694 = vmul.f32 %v662, %v693
          %v695 = vld [vmem:[%s437] sm:$0x1]
          %v696 = vmul.f32 %v664, %v695
          %v697 = vadd.f32 %v694, %v696
          %v698 = vld [vmem:[%s441] sm:$0x1]
          %v699 = vmul.f32 %v662, %v698
          %v700 = vld [vmem:[%s444] sm:$0x1]
          %v701 = vmul.f32 %v664, %v700
          %v702 = vadd.f32 %v699, %v701
          %v703 = vmax.f32 %v669, %v674
          %v704 = vmax.f32 %v703, %v677
          %v705 = vmax.f32 %v704, %v682
          %v706 = vmax.f32 %v705, %v687
          %v707 = vmax.f32 %v706, %v692
          %v708 = vmax.f32 %v707, %v697
          %v709 = vmax.f32 %v708, %v702
          %v710 = vsub.f32 %v669, %v709
          %v711 = vmul.f32 %v710, 1.442695
          %v712 = vpow.pop %v711
          %v713 = vsub.f32 %v674, %v709
          %v714 = vmul.f32 %v713, 1.442695
          %v715 = vpow.pop %v714
          %v716 = vsub.f32 %v677, %v709
          %v717 = vmul.f32 %v716, 1.442695
          %v718 = vpow.pop %v717
          %v719 = vsub.f32 %v682, %v709
          %v720 = vmul.f32 %v719, 1.442695
          %v721 = vpow.pop %v720
          %v722 = vsub.f32 %v687, %v709
          %v723 = vmul.f32 %v722, 1.442695
          %v724 = vpow.pop %v723
          %v725 = vsub.f32 %v692, %v709
          %v726 = vmul.f32 %v725, 1.442695
          %v727 = vpow.pop %v726
          %v728 = vsub.f32 %v697, %v709
          %v729 = vmul.f32 %v728, 1.442695
          %v730 = vpow.pop %v729
          %v731 = vsub.f32 %v702, %v709
          %v732 = vmul.f32 %v731, 1.442695
          %v733 = vpow.pop %v732
          %v734 = vadd.f32 %v712, %v715
          %v735 = vadd.f32 %v734, %v718
          %v736 = vadd.f32 %v735, %v721
          %v737 = vadd.f32 %v736, %v724
          %v738 = vadd.f32 %v737, %v727
          %v739 = vadd.f32 %v738, %v730
          %v740 = vadd.f32 %v739, %v733
          %v741 = vrcp.pop %v740
          %v742 = vmul.f32 %v712, %v487
          %v743 = vmul.f32 %v715, %v489
          %v744 = vadd.f32 %v742, %v743
          %v745 = vmul.f32 %v718, %v492
          %v746 = vadd.f32 %v744, %v745
          %v747 = vmul.f32 %v721, %v495
          %v748 = vadd.f32 %v746, %v747
          %v749 = vmul.f32 %v724, %v498
          %v750 = vadd.f32 %v748, %v749
          %v751 = vmul.f32 %v727, %v501
          %v752 = vadd.f32 %v750, %v751
          %v753 = vmul.f32 %v730, %v504
          %v754 = vadd.f32 %v752, %v753
          %v755 = vmul.f32 %v733, %v507
          %v756 = vadd.f32 %v754, %v755
          %v757 = vmul.f32 %v756, %v741
          %v758 = vadd.f32 %v757, %v511
          %s759 = scalar_lea.vmem [#allocation2], 4
          %760 = vst [vmem:[%s759] sm:$0x1] %v758
          %v761 = vmul.f32 %v712, %v514
          %v762 = vmul.f32 %v715, %v516
          %v763 = vadd.f32 %v761, %v762
          %v764 = vmul.f32 %v718, %v519
          %v765 = vadd.f32 %v763, %v764
          %v766 = vmul.f32 %v721, %v522
          %v767 = vadd.f32 %v765, %v766
          %v768 = vmul.f32 %v724, %v525
          %v769 = vadd.f32 %v767, %v768
          %v770 = vmul.f32 %v727, %v528
          %v771 = vadd.f32 %v769, %v770
          %v772 = vmul.f32 %v730, %v531
          %v773 = vadd.f32 %v771, %v772
          %v774 = vmul.f32 %v733, %v534
          %v775 = vadd.f32 %v773, %v774
          %v776 = vmul.f32 %v775, %v741
          %v777 = vadd.f32 %v776, %v538
          %s778 = scalar_lea.vmem [#allocation2], 5
          %779 = vst [vmem:[%s778] sm:$0x1] %v777
          %v780 = vld [vmem:[%s413] sm:$0x1]
          %v781 = vmul.f32 %v780, 0.70710677
          %v782 = vld [vmem:[%s416] sm:$0x1]
          %v783 = vmul.f32 %v782, 0.70710677
          %v784 = vld [vmem:[%s360] sm:$0x1]
          %v785 = vmul.f32 %v781, %v784
          %v786 = vld [vmem:[%s393] sm:$0x1]
          %v787 = vmul.f32 %v783, %v786
          %v788 = vadd.f32 %v785, %v787
          %v789 = vld [vmem:[%s399] sm:$0x1]
          %v790 = vmul.f32 %v781, %v789
          %v791 = vld [vmem:[%s402] sm:$0x1]
          %v792 = vmul.f32 %v783, %v791
          %v793 = vadd.f32 %v790, %v792
          %v794 = vld [vmem:[%s406] sm:$0x1]
          %v795 = vmul.f32 %v781, %v794
          %v796 = vld [vmem:[%s409] sm:$0x1]
          %v797 = vmul.f32 %v783, %v796
          %v798 = vadd.f32 %v795, %v797
          %v799 = vmul.f32 %v781, %v780
          %v800 = vmul.f32 %v783, %v782
          %v801 = vadd.f32 %v799, %v800
          %v802 = vld [vmem:[%s420] sm:$0x1]
          %v803 = vmul.f32 %v781, %v802
          %v804 = vld [vmem:[%s423] sm:$0x1]
          %v805 = vmul.f32 %v783, %v804
          %v806 = vadd.f32 %v803, %v805
          %v807 = vld [vmem:[%s427] sm:$0x1]
          %v808 = vmul.f32 %v781, %v807
          %v809 = vld [vmem:[%s430] sm:$0x1]
          %v810 = vmul.f32 %v783, %v809
          %v811 = vadd.f32 %v808, %v810
          %v812 = vld [vmem:[%s434] sm:$0x1]
          %v813 = vmul.f32 %v781, %v812
          %v814 = vld [vmem:[%s437] sm:$0x1]
          %v815 = vmul.f32 %v783, %v814
          %v816 = vadd.f32 %v813, %v815
          %v817 = vld [vmem:[%s441] sm:$0x1]
          %v818 = vmul.f32 %v781, %v817
          %v819 = vld [vmem:[%s444] sm:$0x1]
          %v820 = vmul.f32 %v783, %v819
          %v821 = vadd.f32 %v818, %v820
          %v822 = vmax.f32 %v788, %v793
          %v823 = vmax.f32 %v822, %v798
          %v824 = vmax.f32 %v823, %v801
          %v825 = vmax.f32 %v824, %v806
          %v826 = vmax.f32 %v825, %v811
          %v827 = vmax.f32 %v826, %v816
          %v828 = vmax.f32 %v827, %v821
          %v829 = vsub.f32 %v788, %v828
          %v830 = vmul.f32 %v829, 1.442695
          %v831 = vpow.pop %v830
          %v832 = vsub.f32 %v793, %v828
          %v833 = vmul.f32 %v832, 1.442695
          %v834 = vpow.pop %v833
          %v835 = vsub.f32 %v798, %v828
          %v836 = vmul.f32 %v835, 1.442695
          %v837 = vpow.pop %v836
          %v838 = vsub.f32 %v801, %v828
          %v839 = vmul.f32 %v838, 1.442695
          %v840 = vpow.pop %v839
          %v841 = vsub.f32 %v806, %v828
          %v842 = vmul.f32 %v841, 1.442695
          %v843 = vpow.pop %v842
          %v844 = vsub.f32 %v811, %v828
          %v845 = vmul.f32 %v844, 1.442695
          %v846 = vpow.pop %v845
          %v847 = vsub.f32 %v816, %v828
          %v848 = vmul.f32 %v847, 1.442695
          %v849 = vpow.pop %v848
          %v850 = vsub.f32 %v821, %v828
          %v851 = vmul.f32 %v850, 1.442695
          %v852 = vpow.pop %v851
          %v853 = vadd.f32 %v831, %v834
          %v854 = vadd.f32 %v853, %v837
          %v855 = vadd.f32 %v854, %v840
          %v856 = vadd.f32 %v855, %v843
          %v857 = vadd.f32 %v856, %v846
          %v858 = vadd.f32 %v857, %v849
          %v859 = vadd.f32 %v858, %v852
          %v860 = vrcp.pop %v859
          %v861 = vmul.f32 %v831, %v487
          %v862 = vmul.f32 %v834, %v489
          %v863 = vadd.f32 %v861, %v862
          %v864 = vmul.f32 %v837, %v492
          %v865 = vadd.f32 %v863, %v864
          %v866 = vmul.f32 %v840, %v495
          %v867 = vadd.f32 %v865, %v866
          %v868 = vmul.f32 %v843, %v498
          %v869 = vadd.f32 %v867, %v868
          %v870 = vmul.f32 %v846, %v501
          %v871 = vadd.f32 %v869, %v870
          %v872 = vmul.f32 %v849, %v504
          %v873 = vadd.f32 %v871, %v872
          %v874 = vmul.f32 %v852, %v507
          %v875 = vadd.f32 %v873, %v874
          %v876 = vmul.f32 %v875, %v860
          %v877 = vadd.f32 %v876, %v511
          %s878 = scalar_lea.vmem [#allocation2], 6
          %879 = vst [vmem:[%s878] sm:$0x1] %v877
          %v880 = vmul.f32 %v831, %v514
          %v881 = vmul.f32 %v834, %v516
          %v882 = vadd.f32 %v880, %v881
          %v883 = vmul.f32 %v837, %v519
          %v884 = vadd.f32 %v882, %v883
          %v885 = vmul.f32 %v840, %v522
          %v886 = vadd.f32 %v884, %v885
          %v887 = vmul.f32 %v843, %v525
          %v888 = vadd.f32 %v886, %v887
          %v889 = vmul.f32 %v846, %v528
          %v890 = vadd.f32 %v888, %v889
          %v891 = vmul.f32 %v849, %v531
          %v892 = vadd.f32 %v890, %v891
          %v893 = vmul.f32 %v852, %v534
          %v894 = vadd.f32 %v892, %v893
          %v895 = vmul.f32 %v894, %v860
          %v896 = vadd.f32 %v895, %v538
          %s897 = scalar_lea.vmem [#allocation2], 7
          %898 = vst [vmem:[%s897] sm:$0x1] %v896
          %s899 = sld [smem:[#allocation7]]
          %s900 = sld [smem:[#allocation7 + $0x1]]
          %s901 = sld [smem:[#allocation7 + $0x2]]
          %s902 = sld [smem:[#allocation7 + $0x3]]
          %s903 = sld [smem:[#allocation7 + $0x80]]
          %s904 = sld [smem:[#allocation7 + $0x81]]
          %s905 = sld [smem:[#allocation7 + $0x82]]
          %s906 = sld [smem:[#allocation7 + $0x83]]
          %s907 = sld [smem:[#allocation7 + $0x100]]
          %s908 = sld [smem:[#allocation7 + $0x101]]
          %s909 = sld [smem:[#allocation7 + $0x102]]
          %s910 = sld [smem:[#allocation7 + $0x103]]
          %s911 = sld [smem:[#allocation7 + $0x180]]
          %s912 = sld [smem:[#allocation7 + $0x181]]
          %s913 = sld [smem:[#allocation7 + $0x182]]
          %s914 = sld [smem:[#allocation7 + $0x183]]
          %s915 = sld [smem:[#allocation8]]
          %s916 = sld [smem:[#allocation8 + $0x1]]
          %s917 = sld [smem:[#allocation8 + $0x2]]
          %s918 = sld [smem:[#allocation8 + $0x3]]
          %v919 = vld [vmem:[%s360] sm:$0x1]
          %v920 = vmul.f32 %v919, 0.5
          %v921 = vld [vmem:[%s393] sm:$0x1]
          %v922 = vmul.f32 %v921, 0.5
          %v923 = vld [vmem:[%s399] sm:$0x1]
          %v924 = vmul.f32 %v923, 0.5
          %v925 = vld [vmem:[%s402] sm:$0x1]
          %v926 = vmul.f32 %v925, 0.5
          %v927 = vmul.f32 %v920, %v919
          %v928 = vmul.f32 %v922, %v921
          %v929 = vadd.f32 %v927, %v928
          %v930 = vmul.f32 %v924, %v923
          %v931 = vadd.f32 %v929, %v930
          %v932 = vmul.f32 %v926, %v925
          %v933 = vadd.f32 %v931, %v932
          %v934 = vld [vmem:[%s406] sm:$0x1]
          %v935 = vmul.f32 %v920, %v934
          %v936 = vld [vmem:[%s409] sm:$0x1]
          %v937 = vmul.f32 %v922, %v936
          %v938 = vadd.f32 %v935, %v937
          %v939 = vld [vmem:[%s413] sm:$0x1]
          %v940 = vmul.f32 %v924, %v939
          %v941 = vadd.f32 %v938, %v940
          %v942 = vld [vmem:[%s416] sm:$0x1]
          %v943 = vmul.f32 %v926, %v942
          %v944 = vadd.f32 %v941, %v943
          %v945 = vld [vmem:[%s420] sm:$0x1]
          %v946 = vmul.f32 %v920, %v945
          %v947 = vld [vmem:[%s423] sm:$0x1]
          %v948 = vmul.f32 %v922, %v947
          %v949 = vadd.f32 %v946, %v948
          %v950 = vld [vmem:[%s427] sm:$0x1]
          %v951 = vmul.f32 %v924, %v950
          %v952 = vadd.f32 %v949, %v951
          %v953 = vld [vmem:[%s430] sm:$0x1]
          %v954 = vmul.f32 %v926, %v953
          %v955 = vadd.f32 %v952, %v954
          %v956 = vld [vmem:[%s434] sm:$0x1]
          %v957 = vmul.f32 %v920, %v956
          %v958 = vld [vmem:[%s437] sm:$0x1]
          %v959 = vmul.f32 %v922, %v958
          %v960 = vadd.f32 %v957, %v959
          %v961 = vld [vmem:[%s441] sm:$0x1]
          %v962 = vmul.f32 %v924, %v961
          %v963 = vadd.f32 %v960, %v962
          %v964 = vld [vmem:[%s444] sm:$0x1]
          %v965 = vmul.f32 %v926, %v964
          %v966 = vadd.f32 %v963, %v965
          %v967 = vmax.f32 %v933, %v944
          %v968 = vmax.f32 %v967, %v955
          %v969 = vmax.f32 %v968, %v966
          %v970 = vsub.f32 %v933, %v969
          %v971 = vmul.f32 %v970, 1.442695
          %v972 = vpow.pop %v971
          %v973 = vsub.f32 %v944, %v969
          %v974 = vmul.f32 %v973, 1.442695
          %v975 = vpow.pop %v974
          %v976 = vsub.f32 %v955, %v969
          %v977 = vmul.f32 %v976, 1.442695
          %v978 = vpow.pop %v977
          %v979 = vsub.f32 %v966, %v969
          %v980 = vmul.f32 %v979, 1.442695
          %v981 = vpow.pop %v980
          %v982 = vadd.f32 %v972, %v975
          %v983 = vadd.f32 %v982, %v978
          %v984 = vadd.f32 %v983, %v981
          %v985 = vrcp.pop %v984
          %v986 = vstv %s899
          %v987 = vmul.f32 %v972, %v986
          %v988 = vstv %s900
          %v989 = vmul.f32 %v975, %v988
          %v990 = vadd.f32 %v987, %v989
          %v991 = vstv %s901
          %v992 = vmul.f32 %v978, %v991
          %v993 = vadd.f32 %v990, %v992
          %v994 = vstv %s902
          %v995 = vmul.f32 %v981, %v994
          %v996 = vadd.f32 %v993, %v995
          %v997 = vmul.f32 %v996, %v985
          %v998 = vstv %s915
          %v999 = vadd.f32 %v997, %v998
          %v1000 = vld [vmem:[#allocation2] sm:$0x1]
          %v1001 = vadd.f32 %v1000, %v999
          %1002 = vst [vmem:[#allocation2] sm:$0x1] %v1001
          %v1003 = vstv %s903
          %v1004 = vmul.f32 %v972, %v1003
          %v1005 = vstv %s904
          %v1006 = vmul.f32 %v975, %v1005
          %v1007 = vadd.f32 %v1004, %v1006
          %v1008 = vstv %s905
          %v1009 = vmul.f32 %v978, %v1008
          %v1010 = vadd.f32 %v1007, %v1009
          %v1011 = vstv %s906
          %v1012 = vmul.f32 %v981, %v1011
          %v1013 = vadd.f32 %v1010, %v1012
          %v1014 = vmul.f32 %v1013, %v985
          %v1015 = vstv %s916
          %v1016 = vadd.f32 %v1014, %v1015
          %v1017 = vld [vmem:[%s540] sm:$0x1]
          %v1018 = vadd.f32 %v1017, %v1016
          %1019 = vst [vmem:[%s540] sm:$0x1] %v1018
          %v1020 = vstv %s907
          %v1021 = vmul.f32 %v972, %v1020
          %v1022 = vstv %s908
          %v1023 = vmul.f32 %v975, %v1022
          %v1024 = vadd.f32 %v1021, %v1023
          %v1025 = vstv %s909
          %v1026 = vmul.f32 %v978, %v1025
          %v1027 = vadd.f32 %v1024, %v1026
          %v1028 = vstv %s910
          %v1029 = vmul.f32 %v981, %v1028
          %v1030 = vadd.f32 %v1027, %v1029
          %v1031 = vmul.f32 %v1030, %v985
          %v1032 = vstv %s917
          %v1033 = vadd.f32 %v1031, %v1032
          %v1034 = vld [vmem:[%s640] sm:$0x1]
          %v1035 = vadd.f32 %v1034, %v1033
          %1036 = vst [vmem:[%s640] sm:$0x1] %v1035
          %v1037 = vstv %s911
          %v1038 = vmul.f32 %v972, %v1037
          %v1039 = vstv %s912
          %v1040 = vmul.f32 %v975, %v1039
          %v1041 = vadd.f32 %v1038, %v1040
          %v1042 = vstv %s913
          %v1043 = vmul.f32 %v978, %v1042
          %v1044 = vadd.f32 %v1041, %v1043
          %v1045 = vstv %s914
          %v1046 = vmul.f32 %v981, %v1045
          %v1047 = vadd.f32 %v1044, %v1046
          %v1048 = vmul.f32 %v1047, %v985
          %v1049 = vstv %s918
          %v1050 = vadd.f32 %v1048, %v1049
          %v1051 = vld [vmem:[%s659] sm:$0x1]
          %v1052 = vadd.f32 %v1051, %v1050
          %1053 = vst [vmem:[%s659] sm:$0x1] %v1052
          %v1054 = vld [vmem:[%s406] sm:$0x1]
          %v1055 = vmul.f32 %v1054, 0.5
          %v1056 = vld [vmem:[%s409] sm:$0x1]
          %v1057 = vmul.f32 %v1056, 0.5
          %v1058 = vld [vmem:[%s413] sm:$0x1]
          %v1059 = vmul.f32 %v1058, 0.5
          %v1060 = vld [vmem:[%s416] sm:$0x1]
          %v1061 = vmul.f32 %v1060, 0.5
          %v1062 = vld [vmem:[%s360] sm:$0x1]
          %v1063 = vmul.f32 %v1055, %v1062
          %v1064 = vld [vmem:[%s393] sm:$0x1]
          %v1065 = vmul.f32 %v1057, %v1064
          %v1066 = vadd.f32 %v1063, %v1065
          %v1067 = vld [vmem:[%s399] sm:$0x1]
          %v1068 = vmul.f32 %v1059, %v1067
          %v1069 = vadd.f32 %v1066, %v1068
          %v1070 = vld [vmem:[%s402] sm:$0x1]
          %v1071 = vmul.f32 %v1061, %v1070
          %v1072 = vadd.f32 %v1069, %v1071
          %v1073 = vmul.f32 %v1055, %v1054
          %v1074 = vmul.f32 %v1057, %v1056
          %v1075 = vadd.f32 %v1073, %v1074
          %v1076 = vmul.f32 %v1059, %v1058
          %v1077 = vadd.f32 %v1075, %v1076
          %v1078 = vmul.f32 %v1061, %v1060
          %v1079 = vadd.f32 %v1077, %v1078
          %v1080 = vld [vmem:[%s420] sm:$0x1]
          %v1081 = vmul.f32 %v1055, %v1080
          %v1082 = vld [vmem:[%s423] sm:$0x1]
          %v1083 = vmul.f32 %v1057, %v1082
          %v1084 = vadd.f32 %v1081, %v1083
          %v1085 = vld [vmem:[%s427] sm:$0x1]
          %v1086 = vmul.f32 %v1059, %v1085
          %v1087 = vadd.f32 %v1084, %v1086
          %v1088 = vld [vmem:[%s430] sm:$0x1]
          %v1089 = vmul.f32 %v1061, %v1088
          %v1090 = vadd.f32 %v1087, %v1089
          %v1091 = vld [vmem:[%s434] sm:$0x1]
          %v1092 = vmul.f32 %v1055, %v1091
          %v1093 = vld [vmem:[%s437] sm:$0x1]
          %v1094 = vmul.f32 %v1057, %v1093
          %v1095 = vadd.f32 %v1092, %v1094
          %v1096 = vld [vmem:[%s441] sm:$0x1]
          %v1097 = vmul.f32 %v1059, %v1096
          %v1098 = vadd.f32 %v1095, %v1097
          %v1099 = vld [vmem:[%s444] sm:$0x1]
          %v1100 = vmul.f32 %v1061, %v1099
          %v1101 = vadd.f32 %v1098, %v1100
          %v1102 = vmax.f32 %v1072, %v1079
          %v1103 = vmax.f32 %v1102, %v1090
          %v1104 = vmax.f32 %v1103, %v1101
          %v1105 = vsub.f32 %v1072, %v1104
          %v1106 = vmul.f32 %v1105, 1.442695
          %v1107 = vpow.pop %v1106
          %v1108 = vsub.f32 %v1079, %v1104
          %v1109 = vmul.f32 %v1108, 1.442695
          %v1110 = vpow.pop %v1109
          %v1111 = vsub.f32 %v1090, %v1104
          %v1112 = vmul.f32 %v1111, 1.442695
          %v1113 = vpow.pop %v1112
          %v1114 = vsub.f32 %v1101, %v1104
          %v1115 = vmul.f32 %v1114, 1.442695
          %v1116 = vpow.pop %v1115
          %v1117 = vadd.f32 %v1107, %v1110
          %v1118 = vadd.f32 %v1117, %v1113
          %v1119 = vadd.f32 %v1118, %v1116
          %v1120 = vrcp.pop %v1119
          %v1121 = vmul.f32 %v1107, %v986
          %v1122 = vmul.f32 %v1110, %v988
          %v1123 = vadd.f32 %v1121, %v1122
          %v1124 = vmul.f32 %v1113, %v991
          %v1125 = vadd.f32 %v1123, %v1124
          %v1126 = vmul.f32 %v1116, %v994
          %v1127 = vadd.f32 %v1125, %v1126
          %v1128 = vmul.f32 %v1127, %v1120
          %v1129 = vadd.f32 %v1128, %v998
          %v1130 = vld [vmem:[%s759] sm:$0x1]
          %v1131 = vadd.f32 %v1130, %v1129
          %1132 = vst [vmem:[%s759] sm:$0x1] %v1131
          %v1133 = vmul.f32 %v1107, %v1003
          %v1134 = vmul.f32 %v1110, %v1005
          %v1135 = vadd.f32 %v1133, %v1134
          %v1136 = vmul.f32 %v1113, %v1008
          %v1137 = vadd.f32 %v1135, %v1136
          %v1138 = vmul.f32 %v1116, %v1011
          %v1139 = vadd.f32 %v1137, %v1138
          %v1140 = vmul.f32 %v1139, %v1120
          %v1141 = vadd.f32 %v1140, %v1015
          %v1142 = vld [vmem:[%s778] sm:$0x1]
          %v1143 = vadd.f32 %v1142, %v1141
          %1144 = vst [vmem:[%s778] sm:$0x1] %v1143
          %v1145 = vmul.f32 %v1107, %v1020
          %v1146 = vmul.f32 %v1110, %v1022
          %v1147 = vadd.f32 %v1145, %v1146
          %v1148 = vmul.f32 %v1113, %v1025
          %v1149 = vadd.f32 %v1147, %v1148
          %v1150 = vmul.f32 %v1116, %v1028
          %v1151 = vadd.f32 %v1149, %v1150
          %v1152 = vmul.f32 %v1151, %v1120
          %v1153 = vadd.f32 %v1152, %v1032
          %v1154 = vld [vmem:[%s878] sm:$0x1]
          %v1155 = vadd.f32 %v1154, %v1153
          %1156 = vst [vmem:[%s878] sm:$0x1] %v1155
          %v1157 = vmul.f32 %v1107, %v1037
          %v1158 = vmul.f32 %v1110, %v1039
          %v1159 = vadd.f32 %v1157, %v1158
          %v1160 = vmul.f32 %v1113, %v1042
          %v1161 = vadd.f32 %v1159, %v1160
          %v1162 = vmul.f32 %v1116, %v1045
          %v1163 = vadd.f32 %v1161, %v1162
          %v1164 = vmul.f32 %v1163, %v1120
          %v1165 = vadd.f32 %v1164, %v1049
          %v1166 = vld [vmem:[%s897] sm:$0x1]
          %v1167 = vadd.f32 %v1166, %v1165
          %1168 = vst [vmem:[%s897] sm:$0x1] %v1167
          %s1169 = sld [smem:[#allocation10]]
          %s1170 = sld [smem:[#allocation10 + $0x1]]
          %s1171 = sld [smem:[#allocation10 + $0x80]]
          %s1172 = sld [smem:[#allocation10 + $0x81]]
          %s1173 = sld [smem:[#allocation10 + $0x100]]
          %s1174 = sld [smem:[#allocation10 + $0x101]]
          %s1175 = sld [smem:[#allocation10 + $0x180]]
          %s1176 = sld [smem:[#allocation10 + $0x181]]
          %s1177 = sld [smem:[#allocation10 + $0x200]]
          %s1178 = sld [smem:[#allocation10 + $0x201]]
          %s1179 = sld [smem:[#allocation10 + $0x280]]
          %s1180 = sld [smem:[#allocation10 + $0x281]]
          %s1181 = sld [smem:[#allocation10 + $0x300]]
          %s1182 = sld [smem:[#allocation10 + $0x301]]
          %s1183 = sld [smem:[#allocation10 + $0x380]]
          %s1184 = sld [smem:[#allocation10 + $0x381]]
          %s1185 = sld [smem:[#allocation11]]
          %s1186 = sld [smem:[#allocation11 + $0x1]]
          %s1187 = sld [smem:[#allocation11 + $0x2]]
          %s1188 = sld [smem:[#allocation11 + $0x3]]
          %s1189 = sld [smem:[#allocation11 + $0x4]]
          %s1190 = sld [smem:[#allocation11 + $0x5]]
          %s1191 = sld [smem:[#allocation11 + $0x6]]
          %s1192 = sld [smem:[#allocation11 + $0x7]]
          %v1193 = vld [vmem:[%s360] sm:$0x1]
          %v1194 = vmul.f32 %v1193, 0.35355338
          %v1195 = vld [vmem:[%s393] sm:$0x1]
          %v1196 = vmul.f32 %v1195, 0.35355338
          %v1197 = vld [vmem:[%s399] sm:$0x1]
          %v1198 = vmul.f32 %v1197, 0.35355338
          %v1199 = vld [vmem:[%s402] sm:$0x1]
          %v1200 = vmul.f32 %v1199, 0.35355338
          %v1201 = vld [vmem:[%s406] sm:$0x1]
          %v1202 = vmul.f32 %v1201, 0.35355338
          %v1203 = vld [vmem:[%s409] sm:$0x1]
          %v1204 = vmul.f32 %v1203, 0.35355338
          %v1205 = vld [vmem:[%s413] sm:$0x1]
          %v1206 = vmul.f32 %v1205, 0.35355338
          %v1207 = vld [vmem:[%s416] sm:$0x1]
          %v1208 = vmul.f32 %v1207, 0.35355338
          %v1209 = vmul.f32 %v1194, %v1193
          %v1210 = vmul.f32 %v1196, %v1195
          %v1211 = vadd.f32 %v1209, %v1210
          %v1212 = vmul.f32 %v1198, %v1197
          %v1213 = vadd.f32 %v1211, %v1212
          %v1214 = vmul.f32 %v1200, %v1199
          %v1215 = vadd.f32 %v1213, %v1214
          %v1216 = vmul.f32 %v1202, %v1201
          %v1217 = vadd.f32 %v1215, %v1216
          %v1218 = vmul.f32 %v1204, %v1203
          %v1219 = vadd.f32 %v1217, %v1218
          %v1220 = vmul.f32 %v1206, %v1205
          %v1221 = vadd.f32 %v1219, %v1220
          %v1222 = vmul.f32 %v1208, %v1207
          %v1223 = vadd.f32 %v1221, %v1222
          %v1224 = vld [vmem:[%s420] sm:$0x1]
          %v1225 = vmul.f32 %v1194, %v1224
          %v1226 = vld [vmem:[%s423] sm:$0x1]
          %v1227 = vmul.f32 %v1196, %v1226
          %v1228 = vadd.f32 %v1225, %v1227
          %v1229 = vld [vmem:[%s427] sm:$0x1]
          %v1230 = vmul.f32 %v1198, %v1229
          %v1231 = vadd.f32 %v1228, %v1230
          %v1232 = vld [vmem:[%s430] sm:$0x1]
          %v1233 = vmul.f32 %v1200, %v1232
          %v1234 = vadd.f32 %v1231, %v1233
          %v1235 = vld [vmem:[%s434] sm:$0x1]
          %v1236 = vmul.f32 %v1202, %v1235
          %v1237 = vadd.f32 %v1234, %v1236
          %v1238 = vld [vmem:[%s437] sm:$0x1]
          %v1239 = vmul.f32 %v1204, %v1238
          %v1240 = vadd.f32 %v1237, %v1239
          %v1241 = vld [vmem:[%s441] sm:$0x1]
          %v1242 = vmul.f32 %v1206, %v1241
          %v1243 = vadd.f32 %v1240, %v1242
          %v1244 = vld [vmem:[%s444] sm:$0x1]
          %v1245 = vmul.f32 %v1208, %v1244
          %v1246 = vadd.f32 %v1243, %v1245
          %v1247 = vmax.f32 %v1223, %v1246
          %v1248 = vsub.f32 %v1223, %v1247
          %v1249 = vmul.f32 %v1248, 1.442695
          %v1250 = vpow.pop %v1249
          %v1251 = vsub.f32 %v1246, %v1247
          %v1252 = vmul.f32 %v1251, 1.442695
          %v1253 = vpow.pop %v1252
          %v1254 = vadd.f32 %v1250, %v1253
          %v1255 = vrcp.pop %v1254
          %v1256 = vstv %s1169
          %v1257 = vmul.f32 %v1250, %v1256
          %v1258 = vstv %s1170
          %v1259 = vmul.f32 %v1253, %v1258
          %v1260 = vadd.f32 %v1257, %v1259
          %v1261 = vmul.f32 %v1260, %v1255
          %v1262 = vstv %s1185
          %v1263 = vadd.f32 %v1261, %v1262
          %v1264 = vld [vmem:[#allocation2] sm:$0x1]
          %v1265 = vadd.f32 %v1264, %v1263
          %1266 = vst [vmem:[#allocation2] sm:$0x1] %v1265
          %v1267 = vstv %s1171
          %v1268 = vmul.f32 %v1250, %v1267
          %v1269 = vstv %s1172
          %v1270 = vmul.f32 %v1253, %v1269
          %v1271 = vadd.f32 %v1268, %v1270
          %v1272 = vmul.f32 %v1271, %v1255
          %v1273 = vstv %s1186
          %v1274 = vadd.f32 %v1272, %v1273
          %v1275 = vld [vmem:[%s540] sm:$0x1]
          %v1276 = vadd.f32 %v1275, %v1274
          %1277 = vst [vmem:[%s540] sm:$0x1] %v1276
          %v1278 = vstv %s1173
          %v1279 = vmul.f32 %v1250, %v1278
          %v1280 = vstv %s1174
          %v1281 = vmul.f32 %v1253, %v1280
          %v1282 = vadd.f32 %v1279, %v1281
          %v1283 = vmul.f32 %v1282, %v1255
          %v1284 = vstv %s1187
          %v1285 = vadd.f32 %v1283, %v1284
          %v1286 = vld [vmem:[%s640] sm:$0x1]
          %v1287 = vadd.f32 %v1286, %v1285
          %1288 = vst [vmem:[%s640] sm:$0x1] %v1287
          %v1289 = vstv %s1175
          %v1290 = vmul.f32 %v1250, %v1289
          %v1291 = vstv %s1176
          %v1292 = vmul.f32 %v1253, %v1291
          %v1293 = vadd.f32 %v1290, %v1292
          %v1294 = vmul.f32 %v1293, %v1255
          %v1295 = vstv %s1188
          %v1296 = vadd.f32 %v1294, %v1295
          %v1297 = vld [vmem:[%s659] sm:$0x1]
          %v1298 = vadd.f32 %v1297, %v1296
          %1299 = vst [vmem:[%s659] sm:$0x1] %v1298
          %v1300 = vstv %s1177
          %v1301 = vmul.f32 %v1250, %v1300
          %v1302 = vstv %s1178
          %v1303 = vmul.f32 %v1253, %v1302
          %v1304 = vadd.f32 %v1301, %v1303
          %v1305 = vmul.f32 %v1304, %v1255
          %v1306 = vstv %s1189
          %v1307 = vadd.f32 %v1305, %v1306
          %v1308 = vld [vmem:[%s759] sm:$0x1]
          %v1309 = vadd.f32 %v1308, %v1307
          %1310 = vst [vmem:[%s759] sm:$0x1] %v1309
          %v1311 = vstv %s1179
          %v1312 = vmul.f32 %v1250, %v1311
          %v1313 = vstv %s1180
          %v1314 = vmul.f32 %v1253, %v1313
          %v1315 = vadd.f32 %v1312, %v1314
          %v1316 = vmul.f32 %v1315, %v1255
          %v1317 = vstv %s1190
          %v1318 = vadd.f32 %v1316, %v1317
          %v1319 = vld [vmem:[%s778] sm:$0x1]
          %v1320 = vadd.f32 %v1319, %v1318
          %1321 = vst [vmem:[%s778] sm:$0x1] %v1320
          %v1322 = vstv %s1181
          %v1323 = vmul.f32 %v1250, %v1322
          %v1324 = vstv %s1182
          %v1325 = vmul.f32 %v1253, %v1324
          %v1326 = vadd.f32 %v1323, %v1325
          %v1327 = vmul.f32 %v1326, %v1255
          %v1328 = vstv %s1191
          %v1329 = vadd.f32 %v1327, %v1328
          %v1330 = vld [vmem:[%s878] sm:$0x1]
          %v1331 = vadd.f32 %v1330, %v1329
          %1332 = vst [vmem:[%s878] sm:$0x1] %v1331
          %v1333 = vstv %s1183
          %v1334 = vmul.f32 %v1250, %v1333
          %v1335 = vstv %s1184
          %v1336 = vmul.f32 %v1253, %v1335
          %v1337 = vadd.f32 %v1334, %v1336
          %v1338 = vmul.f32 %v1337, %v1255
          %v1339 = vstv %s1192
          %v1340 = vadd.f32 %v1338, %v1339
          %v1341 = vld [vmem:[%s897] sm:$0x1]
          %v1342 = vadd.f32 %v1341, %v1340
          %1343 = vst [vmem:[%s897] sm:$0x1] %v1342
        $region76: #{inception_attention_forward.1} parent=47 // pred_fallthru
          _
        %p1344 = scmp.eq.s32.totalorder %s26, 1
        // Predicated region
        $region77: #{inception_attention_forward.1} parent=47 // pred_check
          %p1345 = pneg %p1344
        $region78: #{inception_attention_forward.1} parent=47 // pred_check_branch
          %1347 = sbr.rel (%p1345) target = $region80
        $region79: #{inception_attention_forward.1} parent=47 // pred_region
          %s1348 = sld [smem:[#allocation3]]
          %s1349 = sld [smem:[#allocation3 + $0x1]]
          %s1350 = sld [smem:[#allocation3 + $0x2]]
          %s1351 = sld [smem:[#allocation3 + $0x3]]
          %s1352 = sld [smem:[#allocation3 + $0x4]]
          %s1353 = sld [smem:[#allocation3 + $0x5]]
          %s1354 = sld [smem:[#allocation3 + $0x6]]
          %s1355 = sld [smem:[#allocation3 + $0x7]]
          %s1356 = sld [smem:[#allocation3 + $0x80]]
          %s1357 = sld [smem:[#allocation3 + $0x81]]
          %s1358 = sld [smem:[#allocation3 + $0x82]]
          %s1359 = sld [smem:[#allocation3 + $0x83]]
          %s1360 = sld [smem:[#allocation3 + $0x84]]
          %s1361 = sld [smem:[#allocation3 + $0x85]]
          %s1362 = sld [smem:[#allocation3 + $0x86]]
          %s1363 = sld [smem:[#allocation3 + $0x87]]
          %s1364 = sld [smem:[#allocation5]]
          %s1365 = sld [smem:[#allocation5 + $0x1]]
          %s1366 = scalar_lea.vmem %s360, 8
          %v1367 = vld [vmem:[%s1366] sm:$0x1]
          %v1368 = vmul.f32 %v1367, 0.70710677
          %s1369 = scalar_lea.vmem %s360, 9
          %v1370 = vld [vmem:[%s1369] sm:$0x1]
          %v1371 = vmul.f32 %v1370, 0.70710677
          %v1372 = vld [vmem:[%s360] sm:$0x1]
          %v1373 = vmul.f32 %v1368, %v1372
          %s1374 = scalar_lea.vmem %s360, 1
          %v1375 = vld [vmem:[%s1374] sm:$0x1]
          %v1376 = vmul.f32 %v1371, %v1375
          %v1377 = vadd.f32 %v1373, %v1376
          %s1378 = scalar_lea.vmem %s360, 2
          %v1379 = vld [vmem:[%s1378] sm:$0x1]
          %v1380 = vmul.f32 %v1368, %v1379
          %s1381 = scalar_lea.vmem %s360, 3
          %v1382 = vld [vmem:[%s1381] sm:$0x1]
          %v1383 = vmul.f32 %v1371, %v1382
          %v1384 = vadd.f32 %v1380, %v1383
          %s1385 = scalar_lea.vmem %s360, 4
          %v1386 = vld [vmem:[%s1385] sm:$0x1]
          %v1387 = vmul.f32 %v1368, %v1386
          %s1388 = scalar_lea.vmem %s360, 5
          %v1389 = vld [vmem:[%s1388] sm:$0x1]
          %v1390 = vmul.f32 %v1371, %v1389
          %v1391 = vadd.f32 %v1387, %v1390
          %s1392 = scalar_lea.vmem %s360, 6
          %v1393 = vld [vmem:[%s1392] sm:$0x1]
          %v1394 = vmul.f32 %v1368, %v1393
          %s1395 = scalar_lea.vmem %s360, 7
          %v1396 = vld [vmem:[%s1395] sm:$0x1]
          %v1397 = vmul.f32 %v1371, %v1396
          %v1398 = vadd.f32 %v1394, %v1397
          %v1399 = vmul.f32 %v1368, %v1367
          %v1400 = vmul.f32 %v1371, %v1370
          %v1401 = vadd.f32 %v1399, %v1400
          %s1402 = scalar_lea.vmem %s360, 10
          %v1403 = vld [vmem:[%s1402] sm:$0x1]
          %v1404 = vmul.f32 %v1368, %v1403
          %s1405 = scalar_lea.vmem %s360, 11
          %v1406 = vld [vmem:[%s1405] sm:$0x1]
          %v1407 = vmul.f32 %v1371, %v1406
          %v1408 = vadd.f32 %v1404, %v1407
          %s1409 = scalar_lea.vmem %s360, 12
          %v1410 = vld [vmem:[%s1409] sm:$0x1]
          %v1411 = vmul.f32 %v1368, %v1410
          %s1412 = scalar_lea.vmem %s360, 13
          %v1413 = vld [vmem:[%s1412] sm:$0x1]
          %v1414 = vmul.f32 %v1371, %v1413
          %v1415 = vadd.f32 %v1411, %v1414
          %s1416 = scalar_lea.vmem %s360, 14
          %v1417 = vld [vmem:[%s1416] sm:$0x1]
          %v1418 = vmul.f32 %v1368, %v1417
          %s1419 = scalar_lea.vmem %s360, 15
          %v1420 = vld [vmem:[%s1419] sm:$0x1]
          %v1421 = vmul.f32 %v1371, %v1420
          %v1422 = vadd.f32 %v1418, %v1421
          %v1423 = vmax.f32 %v1377, %v1384
          %v1424 = vmax.f32 %v1423, %v1391
          %v1425 = vmax.f32 %v1424, %v1398
          %v1426 = vmax.f32 %v1425, %v1401
          %v1427 = vmax.f32 %v1426, %v1408
          %v1428 = vmax.f32 %v1427, %v1415
          %v1429 = vmax.f32 %v1428, %v1422
          %v1430 = vsub.f32 %v1377, %v1429
          %v1431 = vmul.f32 %v1430, 1.442695
          %v1432 = vpow.pop %v1431
          %v1433 = vsub.f32 %v1384, %v1429
          %v1434 = vmul.f32 %v1433, 1.442695
          %v1435 = vpow.pop %v1434
          %v1436 = vsub.f32 %v1391, %v1429
          %v1437 = vmul.f32 %v1436, 1.442695
          %v1438 = vpow.pop %v1437
          %v1439 = vsub.f32 %v1398, %v1429
          %v1440 = vmul.f32 %v1439, 1.442695
          %v1441 = vpow.pop %v1440
          %v1442 = vsub.f32 %v1401, %v1429
          %v1443 = vmul.f32 %v1442, 1.442695
          %v1444 = vpow.pop %v1443
          %v1445 = vsub.f32 %v1408, %v1429
          %v1446 = vmul.f32 %v1445, 1.442695
          %v1447 = vpow.pop %v1446
          %v1448 = vsub.f32 %v1415, %v1429
          %v1449 = vmul.f32 %v1448, 1.442695
          %v1450 = vpow.pop %v1449
          %v1451 = vsub.f32 %v1422, %v1429
          %v1452 = vmul.f32 %v1451, 1.442695
          %v1453 = vpow.pop %v1452
          %v1454 = vadd.f32 %v1432, %v1435
          %v1455 = vadd.f32 %v1454, %v1438
          %v1456 = vadd.f32 %v1455, %v1441
          %v1457 = vadd.f32 %v1456, %v1444
          %v1458 = vadd.f32 %v1457, %v1447
          %v1459 = vadd.f32 %v1458, %v1450
          %v1460 = vadd.f32 %v1459, %v1453
          %v1461 = vrcp.pop %v1460
          %v1462 = vstv %s1348
          %v1463 = vmul.f32 %v1432, %v1462
          %v1464 = vstv %s1349
          %v1465 = vmul.f32 %v1435, %v1464
          %v1466 = vadd.f32 %v1463, %v1465
          %v1467 = vstv %s1350
          %v1468 = vmul.f32 %v1438, %v1467
          %v1469 = vadd.f32 %v1466, %v1468
          %v1470 = vstv %s1351
          %v1471 = vmul.f32 %v1441, %v1470
          %v1472 = vadd.f32 %v1469, %v1471
          %v1473 = vstv %s1352
          %v1474 = vmul.f32 %v1444, %v1473
          %v1475 = vadd.f32 %v1472, %v1474
          %v1476 = vstv %s1353
          %v1477 = vmul.f32 %v1447, %v1476
          %v1478 = vadd.f32 %v1475, %v1477
          %v1479 = vstv %s1354
          %v1480 = vmul.f32 %v1450, %v1479
          %v1481 = vadd.f32 %v1478, %v1480
          %v1482 = vstv %s1355
          %v1483 = vmul.f32 %v1453, %v1482
          %v1484 = vadd.f32 %v1481, %v1483
          %v1485 = vmul.f32 %v1484, %v1461
          %v1486 = vstv %s1364
          %v1487 = vadd.f32 %v1485, %v1486
          %1488 = vst [vmem:[#allocation2] sm:$0x1] %v1487
          %v1489 = vstv %s1356
          %v1490 = vmul.f32 %v1432, %v1489
          %v1491 = vstv %s1357
          %v1492 = vmul.f32 %v1435, %v1491
          %v1493 = vadd.f32 %v1490, %v1492
          %v1494 = vstv %s1358
          %v1495 = vmul.f32 %v1438, %v1494
          %v1496 = vadd.f32 %v1493, %v1495
          %v1497 = vstv %s1359
          %v1498 = vmul.f32 %v1441, %v1497
          %v1499 = vadd.f32 %v1496, %v1498
          %v1500 = vstv %s1360
          %v1501 = vmul.f32 %v1444, %v1500
          %v1502 = vadd.f32 %v1499, %v1501
          %v1503 = vstv %s1361
          %v1504 = vmul.f32 %v1447, %v1503
          %v1505 = vadd.f32 %v1502, %v1504
          %v1506 = vstv %s1362
          %v1507 = vmul.f32 %v1450, %v1506
          %v1508 = vadd.f32 %v1505, %v1507
          %v1509 = vstv %s1363
          %v1510 = vmul.f32 %v1453, %v1509
          %v1511 = vadd.f32 %v1508, %v1510
          %v1512 = vmul.f32 %v1511, %v1461
          %v1513 = vstv %s1365
          %v1514 = vadd.f32 %v1512, %v1513
          %s1515 = scalar_lea.vmem [#allocation2], 1
          %1516 = vst [vmem:[%s1515] sm:$0x1] %v1514
          %v1517 = vld [vmem:[%s1402] sm:$0x1]
          %v1518 = vmul.f32 %v1517, 0.70710677
          %v1519 = vld [vmem:[%s1405] sm:$0x1]
          %v1520 = vmul.f32 %v1519, 0.70710677
          %v1521 = vld [vmem:[%s360] sm:$0x1]
          %v1522 = vmul.f32 %v1518, %v1521
          %v1523 = vld [vmem:[%s1374] sm:$0x1]
          %v1524 = vmul.f32 %v1520, %v1523
          %v1525 = vadd.f32 %v1522, %v1524
          %v1526 = vld [vmem:[%s1378] sm:$0x1]
          %v1527 = vmul.f32 %v1518, %v1526
          %v1528 = vld [vmem:[%s1381] sm:$0x1]
          %v1529 = vmul.f32 %v1520, %v1528
          %v1530 = vadd.f32 %v1527, %v1529
          %v1531 = vld [vmem:[%s1385] sm:$0x1]
          %v1532 = vmul.f32 %v1518, %v1531
          %v1533 = vld [vmem:[%s1388] sm:$0x1]
          %v1534 = vmul.f32 %v1520, %v1533
          %v1535 = vadd.f32 %v1532, %v1534
          %v1536 = vld [vmem:[%s1392] sm:$0x1]
          %v1537 = vmul.f32 %v1518, %v1536
          %v1538 = vld [vmem:[%s1395] sm:$0x1]
          %v1539 = vmul.f32 %v1520, %v1538
          %v1540 = vadd.f32 %v1537, %v1539
          %v1541 = vld [vmem:[%s1366] sm:$0x1]
          %v1542 = vmul.f32 %v1518, %v1541
          %v1543 = vld [vmem:[%s1369] sm:$0x1]
          %v1544 = vmul.f32 %v1520, %v1543
          %v1545 = vadd.f32 %v1542, %v1544
          %v1546 = vmul.f32 %v1518, %v1517
          %v1547 = vmul.f32 %v1520, %v1519
          %v1548 = vadd.f32 %v1546, %v1547
          %v1549 = vld [vmem:[%s1409] sm:$0x1]
          %v1550 = vmul.f32 %v1518, %v1549
          %v1551 = vld [vmem:[%s1412] sm:$0x1]
          %v1552 = vmul.f32 %v1520, %v1551
          %v1553 = vadd.f32 %v1550, %v1552
          %v1554 = vld [vmem:[%s1416] sm:$0x1]
          %v1555 = vmul.f32 %v1518, %v1554
          %v1556 = vld [vmem:[%s1419] sm:$0x1]
          %v1557 = vmul.f32 %v1520, %v1556
          %v1558 = vadd.f32 %v1555, %v1557
          %v1559 = vmax.f32 %v1525, %v1530
          %v1560 = vmax.f32 %v1559, %v1535
          %v1561 = vmax.f32 %v1560, %v1540
          %v1562 = vmax.f32 %v1561, %v1545
          %v1563 = vmax.f32 %v1562, %v1548
          %v1564 = vmax.f32 %v1563, %v1553
          %v1565 = vmax.f32 %v1564, %v1558
          %v1566 = vsub.f32 %v1525, %v1565
          %v1567 = vmul.f32 %v1566, 1.442695
          %v1568 = vpow.pop %v1567
          %v1569 = vsub.f32 %v1530, %v1565
          %v1570 = vmul.f32 %v1569, 1.442695
          %v1571 = vpow.pop %v1570
          %v1572 = vsub.f32 %v1535, %v1565
          %v1573 = vmul.f32 %v1572, 1.442695
          %v1574 = vpow.pop %v1573
          %v1575 = vsub.f32 %v1540, %v1565
          %v1576 = vmul.f32 %v1575, 1.442695
          %v1577 = vpow.pop %v1576
          %v1578 = vsub.f32 %v1545, %v1565
          %v1579 = vmul.f32 %v1578, 1.442695
          %v1580 = vpow.pop %v1579
          %v1581 = vsub.f32 %v1548, %v1565
          %v1582 = vmul.f32 %v1581, 1.442695
          %v1583 = vpow.pop %v1582
          %v1584 = vsub.f32 %v1553, %v1565
          %v1585 = vmul.f32 %v1584, 1.442695
          %v1586 = vpow.pop %v1585
          %v1587 = vsub.f32 %v1558, %v1565
          %v1588 = vmul.f32 %v1587, 1.442695
          %v1589 = vpow.pop %v1588
          %v1590 = vadd.f32 %v1568, %v1571
          %v1591 = vadd.f32 %v1590, %v1574
          %v1592 = vadd.f32 %v1591, %v1577
          %v1593 = vadd.f32 %v1592, %v1580
          %v1594 = vadd.f32 %v1593, %v1583
          %v1595 = vadd.f32 %v1594, %v1586
          %v1596 = vadd.f32 %v1595, %v1589
          %v1597 = vrcp.pop %v1596
          %v1598 = vmul.f32 %v1568, %v1462
          %v1599 = vmul.f32 %v1571, %v1464
          %v1600 = vadd.f32 %v1598, %v1599
          %v1601 = vmul.f32 %v1574, %v1467
          %v1602 = vadd.f32 %v1600, %v1601
          %v1603 = vmul.f32 %v1577, %v1470
          %v1604 = vadd.f32 %v1602, %v1603
          %v1605 = vmul.f32 %v1580, %v1473
          %v1606 = vadd.f32 %v1604, %v1605
          %v1607 = vmul.f32 %v1583, %v1476
          %v1608 = vadd.f32 %v1606, %v1607
          %v1609 = vmul.f32 %v1586, %v1479
          %v1610 = vadd.f32 %v1608, %v1609
          %v1611 = vmul.f32 %v1589, %v1482
          %v1612 = vadd.f32 %v1610, %v1611
          %v1613 = vmul.f32 %v1612, %v1597
          %v1614 = vadd.f32 %v1613, %v1486
          %s1615 = scalar_lea.vmem [#allocation2], 2
          %1616 = vst [vmem:[%s1615] sm:$0x1] %v1614
          %v1617 = vmul.f32 %v1568, %v1489
          %v1618 = vmul.f32 %v1571, %v1491
          %v1619 = vadd.f32 %v1617, %v1618
          %v1620 = vmul.f32 %v1574, %v1494
          %v1621 = vadd.f32 %v1619, %v1620
          %v1622 = vmul.f32 %v1577, %v1497
          %v1623 = vadd.f32 %v1621, %v1622
          %v1624 = vmul.f32 %v1580, %v1500
          %v1625 = vadd.f32 %v1623, %v1624
          %v1626 = vmul.f32 %v1583, %v1503
          %v1627 = vadd.f32 %v1625, %v1626
          %v1628 = vmul.f32 %v1586, %v1506
          %v1629 = vadd.f32 %v1627, %v1628
          %v1630 = vmul.f32 %v1589, %v1509
          %v1631 = vadd.f32 %v1629, %v1630
          %v1632 = vmul.f32 %v1631, %v1597
          %v1633 = vadd.f32 %v1632, %v1513
          %s1634 = scalar_lea.vmem [#allocation2], 3
          %1635 = vst [vmem:[%s1634] sm:$0x1] %v1633
          %v1636 = vld [vmem:[%s1409] sm:$0x1]
          %v1637 = vmul.f32 %v1636, 0.70710677
          %v1638 = vld [vmem:[%s1412] sm:$0x1]
          %v1639 = vmul.f32 %v1638, 0.70710677
          %v1640 = vld [vmem:[%s360] sm:$0x1]
          %v1641 = vmul.f32 %v1637, %v1640
          %v1642 = vld [vmem:[%s1374] sm:$0x1]
          %v1643 = vmul.f32 %v1639, %v1642
          %v1644 = vadd.f32 %v1641, %v1643
          %v1645 = vld [vmem:[%s1378] sm:$0x1]
          %v1646 = vmul.f32 %v1637, %v1645
          %v1647 = vld [vmem:[%s1381] sm:$0x1]
          %v1648 = vmul.f32 %v1639, %v1647
          %v1649 = vadd.f32 %v1646, %v1648
          %v1650 = vld [vmem:[%s1385] sm:$0x1]
          %v1651 = vmul.f32 %v1637, %v1650
          %v1652 = vld [vmem:[%s1388] sm:$0x1]
          %v1653 = vmul.f32 %v1639, %v1652
          %v1654 = vadd.f32 %v1651, %v1653
          %v1655 = vld [vmem:[%s1392] sm:$0x1]
          %v1656 = vmul.f32 %v1637, %v1655
          %v1657 = vld [vmem:[%s1395] sm:$0x1]
          %v1658 = vmul.f32 %v1639, %v1657
          %v1659 = vadd.f32 %v1656, %v1658
          %v1660 = vld [vmem:[%s1366] sm:$0x1]
          %v1661 = vmul.f32 %v1637, %v1660
          %v1662 = vld [vmem:[%s1369] sm:$0x1]
          %v1663 = vmul.f32 %v1639, %v1662
          %v1664 = vadd.f32 %v1661, %v1663
          %v1665 = vld [vmem:[%s1402] sm:$0x1]
          %v1666 = vmul.f32 %v1637, %v1665
          %v1667 = vld [vmem:[%s1405] sm:$0x1]
          %v1668 = vmul.f32 %v1639, %v1667
          %v1669 = vadd.f32 %v1666, %v1668
          %v1670 = vmul.f32 %v1637, %v1636
          %v1671 = vmul.f32 %v1639, %v1638
          %v1672 = vadd.f32 %v1670, %v1671
          %v1673 = vld [vmem:[%s1416] sm:$0x1]
          %v1674 = vmul.f32 %v1637, %v1673
          %v1675 = vld [vmem:[%s1419] sm:$0x1]
          %v1676 = vmul.f32 %v1639, %v1675
          %v1677 = vadd.f32 %v1674, %v1676
          %v1678 = vmax.f32 %v1644, %v1649
          %v1679 = vmax.f32 %v1678, %v1654
          %v1680 = vmax.f32 %v1679, %v1659
          %v1681 = vmax.f32 %v1680, %v1664
          %v1682 = vmax.f32 %v1681, %v1669
          %v1683 = vmax.f32 %v1682, %v1672
          %v1684 = vmax.f32 %v1683, %v1677
          %v1685 = vsub.f32 %v1644, %v1684
          %v1686 = vmul.f32 %v1685, 1.442695
          %v1687 = vpow.pop %v1686
          %v1688 = vsub.f32 %v1649, %v1684
          %v1689 = vmul.f32 %v1688, 1.442695
          %v1690 = vpow.pop %v1689
          %v1691 = vsub.f32 %v1654, %v1684
          %v1692 = vmul.f32 %v1691, 1.442695
          %v1693 = vpow.pop %v1692
          %v1694 = vsub.f32 %v1659, %v1684
          %v1695 = vmul.f32 %v1694, 1.442695
          %v1696 = vpow.pop %v1695
          %v1697 = vsub.f32 %v1664, %v1684
          %v1698 = vmul.f32 %v1697, 1.442695
          %v1699 = vpow.pop %v1698
          %v1700 = vsub.f32 %v1669, %v1684
          %v1701 = vmul.f32 %v1700, 1.442695
          %v1702 = vpow.pop %v1701
          %v1703 = vsub.f32 %v1672, %v1684
          %v1704 = vmul.f32 %v1703, 1.442695
          %v1705 = vpow.pop %v1704
          %v1706 = vsub.f32 %v1677, %v1684
          %v1707 = vmul.f32 %v1706, 1.442695
          %v1708 = vpow.pop %v1707
          %v1709 = vadd.f32 %v1687, %v1690
          %v1710 = vadd.f32 %v1709, %v1693
          %v1711 = vadd.f32 %v1710, %v1696
          %v1712 = vadd.f32 %v1711, %v1699
          %v1713 = vadd.f32 %v1712, %v1702
          %v1714 = vadd.f32 %v1713, %v1705
          %v1715 = vadd.f32 %v1714, %v1708
          %v1716 = vrcp.pop %v1715
          %v1717 = vmul.f32 %v1687, %v1462
          %v1718 = vmul.f32 %v1690, %v1464
          %v1719 = vadd.f32 %v1717, %v1718
          %v1720 = vmul.f32 %v1693, %v1467
          %v1721 = vadd.f32 %v1719, %v1720
          %v1722 = vmul.f32 %v1696, %v1470
          %v1723 = vadd.f32 %v1721, %v1722
          %v1724 = vmul.f32 %v1699, %v1473
          %v1725 = vadd.f32 %v1723, %v1724
          %v1726 = vmul.f32 %v1702, %v1476
          %v1727 = vadd.f32 %v1725, %v1726
          %v1728 = vmul.f32 %v1705, %v1479
          %v1729 = vadd.f32 %v1727, %v1728
          %v1730 = vmul.f32 %v1708, %v1482
          %v1731 = vadd.f32 %v1729, %v1730
          %v1732 = vmul.f32 %v1731, %v1716
          %v1733 = vadd.f32 %v1732, %v1486
          %s1734 = scalar_lea.vmem [#allocation2], 4
          %1735 = vst [vmem:[%s1734] sm:$0x1] %v1733
          %v1736 = vmul.f32 %v1687, %v1489
          %v1737 = vmul.f32 %v1690, %v1491
          %v1738 = vadd.f32 %v1736, %v1737
          %v1739 = vmul.f32 %v1693, %v1494
          %v1740 = vadd.f32 %v1738, %v1739
          %v1741 = vmul.f32 %v1696, %v1497
          %v1742 = vadd.f32 %v1740, %v1741
          %v1743 = vmul.f32 %v1699, %v1500
          %v1744 = vadd.f32 %v1742, %v1743
          %v1745 = vmul.f32 %v1702, %v1503
          %v1746 = vadd.f32 %v1744, %v1745
          %v1747 = vmul.f32 %v1705, %v1506
          %v1748 = vadd.f32 %v1746, %v1747
          %v1749 = vmul.f32 %v1708, %v1509
          %v1750 = vadd.f32 %v1748, %v1749
          %v1751 = vmul.f32 %v1750, %v1716
          %v1752 = vadd.f32 %v1751, %v1513
          %s1753 = scalar_lea.vmem [#allocation2], 5
          %1754 = vst [vmem:[%s1753] sm:$0x1] %v1752
          %v1755 = vld [vmem:[%s1416] sm:$0x1]
          %v1756 = vmul.f32 %v1755, 0.70710677
          %v1757 = vld [vmem:[%s1419] sm:$0x1]
          %v1758 = vmul.f32 %v1757, 0.70710677
          %v1759 = vld [vmem:[%s360] sm:$0x1]
          %v1760 = vmul.f32 %v1756, %v1759
          %v1761 = vld [vmem:[%s1374] sm:$0x1]
          %v1762 = vmul.f32 %v1758, %v1761
          %v1763 = vadd.f32 %v1760, %v1762
          %v1764 = vld [vmem:[%s1378] sm:$0x1]
          %v1765 = vmul.f32 %v1756, %v1764
          %v1766 = vld [vmem:[%s1381] sm:$0x1]
          %v1767 = vmul.f32 %v1758, %v1766
          %v1768 = vadd.f32 %v1765, %v1767
          %v1769 = vld [vmem:[%s1385] sm:$0x1]
          %v1770 = vmul.f32 %v1756, %v1769
          %v1771 = vld [vmem:[%s1388] sm:$0x1]
          %v1772 = vmul.f32 %v1758, %v1771
          %v1773 = vadd.f32 %v1770, %v1772
          %v1774 = vld [vmem:[%s1392] sm:$0x1]
          %v1775 = vmul.f32 %v1756, %v1774
          %v1776 = vld [vmem:[%s1395] sm:$0x1]
          %v1777 = vmul.f32 %v1758, %v1776
          %v1778 = vadd.f32 %v1775, %v1777
          %v1779 = vld [vmem:[%s1366] sm:$0x1]
          %v1780 = vmul.f32 %v1756, %v1779
          %v1781 = vld [vmem:[%s1369] sm:$0x1]
          %v1782 = vmul.f32 %v1758, %v1781
          %v1783 = vadd.f32 %v1780, %v1782
          %v1784 = vld [vmem:[%s1402] sm:$0x1]
          %v1785 = vmul.f32 %v1756, %v1784
          %v1786 = vld [vmem:[%s1405] sm:$0x1]
          %v1787 = vmul.f32 %v1758, %v1786
          %v1788 = vadd.f32 %v1785, %v1787
          %v1789 = vld [vmem:[%s1409] sm:$0x1]
          %v1790 = vmul.f32 %v1756, %v1789
          %v1791 = vld [vmem:[%s1412] sm:$0x1]
          %v1792 = vmul.f32 %v1758, %v1791
          %v1793 = vadd.f32 %v1790, %v1792
          %v1794 = vmul.f32 %v1756, %v1755
          %v1795 = vmul.f32 %v1758, %v1757
          %v1796 = vadd.f32 %v1794, %v1795
          %v1797 = vmax.f32 %v1763, %v1768
          %v1798 = vmax.f32 %v1797, %v1773
          %v1799 = vmax.f32 %v1798, %v1778
          %v1800 = vmax.f32 %v1799, %v1783
          %v1801 = vmax.f32 %v1800, %v1788
          %v1802 = vmax.f32 %v1801, %v1793
          %v1803 = vmax.f32 %v1802, %v1796
          %v1804 = vsub.f32 %v1763, %v1803
          %v1805 = vmul.f32 %v1804, 1.442695
          %v1806 = vpow.pop %v1805
          %v1807 = vsub.f32 %v1768, %v1803
          %v1808 = vmul.f32 %v1807, 1.442695
          %v1809 = vpow.pop %v1808
          %v1810 = vsub.f32 %v1773, %v1803
          %v1811 = vmul.f32 %v1810, 1.442695
          %v1812 = vpow.pop %v1811
          %v1813 = vsub.f32 %v1778, %v1803
          %v1814 = vmul.f32 %v1813, 1.442695
          %v1815 = vpow.pop %v1814
          %v1816 = vsub.f32 %v1783, %v1803
          %v1817 = vmul.f32 %v1816, 1.442695
          %v1818 = vpow.pop %v1817
          %v1819 = vsub.f32 %v1788, %v1803
          %v1820 = vmul.f32 %v1819, 1.442695
          %v1821 = vpow.pop %v1820
          %v1822 = vsub.f32 %v1793, %v1803
          %v1823 = vmul.f32 %v1822, 1.442695
          %v1824 = vpow.pop %v1823
          %v1825 = vsub.f32 %v1796, %v1803
          %v1826 = vmul.f32 %v1825, 1.442695
          %v1827 = vpow.pop %v1826
          %v1828 = vadd.f32 %v1806, %v1809
          %v1829 = vadd.f32 %v1828, %v1812
          %v1830 = vadd.f32 %v1829, %v1815
          %v1831 = vadd.f32 %v1830, %v1818
          %v1832 = vadd.f32 %v1831, %v1821
          %v1833 = vadd.f32 %v1832, %v1824
          %v1834 = vadd.f32 %v1833, %v1827
          %v1835 = vrcp.pop %v1834
          %v1836 = vmul.f32 %v1806, %v1462
          %v1837 = vmul.f32 %v1809, %v1464
          %v1838 = vadd.f32 %v1836, %v1837
          %v1839 = vmul.f32 %v1812, %v1467
          %v1840 = vadd.f32 %v1838, %v1839
          %v1841 = vmul.f32 %v1815, %v1470
          %v1842 = vadd.f32 %v1840, %v1841
          %v1843 = vmul.f32 %v1818, %v1473
          %v1844 = vadd.f32 %v1842, %v1843
          %v1845 = vmul.f32 %v1821, %v1476
          %v1846 = vadd.f32 %v1844, %v1845
          %v1847 = vmul.f32 %v1824, %v1479
          %v1848 = vadd.f32 %v1846, %v1847
          %v1849 = vmul.f32 %v1827, %v1482
          %v1850 = vadd.f32 %v1848, %v1849
          %v1851 = vmul.f32 %v1850, %v1835
          %v1852 = vadd.f32 %v1851, %v1486
          %s1853 = scalar_lea.vmem [#allocation2], 6
          %1854 = vst [vmem:[%s1853] sm:$0x1] %v1852
          %v1855 = vmul.f32 %v1806, %v1489
          %v1856 = vmul.f32 %v1809, %v1491
          %v1857 = vadd.f32 %v1855, %v1856
          %v1858 = vmul.f32 %v1812, %v1494
          %v1859 = vadd.f32 %v1857, %v1858
          %v1860 = vmul.f32 %v1815, %v1497
          %v1861 = vadd.f32 %v1859, %v1860
          %v1862 = vmul.f32 %v1818, %v1500
          %v1863 = vadd.f32 %v1861, %v1862
          %v1864 = vmul.f32 %v1821, %v1503
          %v1865 = vadd.f32 %v1863, %v1864
          %v1866 = vmul.f32 %v1824, %v1506
          %v1867 = vadd.f32 %v1865, %v1866
          %v1868 = vmul.f32 %v1827, %v1509
          %v1869 = vadd.f32 %v1867, %v1868
          %v1870 = vmul.f32 %v1869, %v1835
          %v1871 = vadd.f32 %v1870, %v1513
          %s1872 = scalar_lea.vmem [#allocation2], 7
          %1873 = vst [vmem:[%s1872] sm:$0x1] %v1871
          %s1874 = sld [smem:[#allocation7]]
          %s1875 = sld [smem:[#allocation7 + $0x1]]
          %s1876 = sld [smem:[#allocation7 + $0x2]]
          %s1877 = sld [smem:[#allocation7 + $0x3]]
          %s1878 = sld [smem:[#allocation7 + $0x80]]
          %s1879 = sld [smem:[#allocation7 + $0x81]]
          %s1880 = sld [smem:[#allocation7 + $0x82]]
          %s1881 = sld [smem:[#allocation7 + $0x83]]
          %s1882 = sld [smem:[#allocation7 + $0x100]]
          %s1883 = sld [smem:[#allocation7 + $0x101]]
          %s1884 = sld [smem:[#allocation7 + $0x102]]
          %s1885 = sld [smem:[#allocation7 + $0x103]]
          %s1886 = sld [smem:[#allocation7 + $0x180]]
          %s1887 = sld [smem:[#allocation7 + $0x181]]
          %s1888 = sld [smem:[#allocation7 + $0x182]]
          %s1889 = sld [smem:[#allocation7 + $0x183]]
          %s1890 = sld [smem:[#allocation8]]
          %s1891 = sld [smem:[#allocation8 + $0x1]]
          %s1892 = sld [smem:[#allocation8 + $0x2]]
          %s1893 = sld [smem:[#allocation8 + $0x3]]
          %v1894 = vld [vmem:[%s1366] sm:$0x1]
          %v1895 = vmul.f32 %v1894, 0.5
          %v1896 = vld [vmem:[%s1369] sm:$0x1]
          %v1897 = vmul.f32 %v1896, 0.5
          %v1898 = vld [vmem:[%s1402] sm:$0x1]
          %v1899 = vmul.f32 %v1898, 0.5
          %v1900 = vld [vmem:[%s1405] sm:$0x1]
          %v1901 = vmul.f32 %v1900, 0.5
          %v1902 = vld [vmem:[%s360] sm:$0x1]
          %v1903 = vmul.f32 %v1895, %v1902
          %v1904 = vld [vmem:[%s1374] sm:$0x1]
          %v1905 = vmul.f32 %v1897, %v1904
          %v1906 = vadd.f32 %v1903, %v1905
          %v1907 = vld [vmem:[%s1378] sm:$0x1]
          %v1908 = vmul.f32 %v1899, %v1907
          %v1909 = vadd.f32 %v1906, %v1908
          %v1910 = vld [vmem:[%s1381] sm:$0x1]
          %v1911 = vmul.f32 %v1901, %v1910
          %v1912 = vadd.f32 %v1909, %v1911
          %v1913 = vld [vmem:[%s1385] sm:$0x1]
          %v1914 = vmul.f32 %v1895, %v1913
          %v1915 = vld [vmem:[%s1388] sm:$0x1]
          %v1916 = vmul.f32 %v1897, %v1915
          %v1917 = vadd.f32 %v1914, %v1916
          %v1918 = vld [vmem:[%s1392] sm:$0x1]
          %v1919 = vmul.f32 %v1899, %v1918
          %v1920 = vadd.f32 %v1917, %v1919
          %v1921 = vld [vmem:[%s1395] sm:$0x1]
          %v1922 = vmul.f32 %v1901, %v1921
          %v1923 = vadd.f32 %v1920, %v1922
          %v1924 = vmul.f32 %v1895, %v1894
          %v1925 = vmul.f32 %v1897, %v1896
          %v1926 = vadd.f32 %v1924, %v1925
          %v1927 = vmul.f32 %v1899, %v1898
          %v1928 = vadd.f32 %v1926, %v1927
          %v1929 = vmul.f32 %v1901, %v1900
          %v1930 = vadd.f32 %v1928, %v1929
          %v1931 = vld [vmem:[%s1409] sm:$0x1]
          %v1932 = vmul.f32 %v1895, %v1931
          %v1933 = vld [vmem:[%s1412] sm:$0x1]
          %v1934 = vmul.f32 %v1897, %v1933
          %v1935 = vadd.f32 %v1932, %v1934
          %v1936 = vld [vmem:[%s1416] sm:$0x1]
          %v1937 = vmul.f32 %v1899, %v1936
          %v1938 = vadd.f32 %v1935, %v1937
          %v1939 = vld [vmem:[%s1419] sm:$0x1]
          %v1940 = vmul.f32 %v1901, %v1939
          %v1941 = vadd.f32 %v1938, %v1940
          %v1942 = vmax.f32 %v1912, %v1923
          %v1943 = vmax.f32 %v1942, %v1930
          %v1944 = vmax.f32 %v1943, %v1941
          %v1945 = vsub.f32 %v1912, %v1944
          %v1946 = vmul.f32 %v1945, 1.442695
          %v1947 = vpow.pop %v1946
          %v1948 = vsub.f32 %v1923, %v1944
          %v1949 = vmul.f32 %v1948, 1.442695
          %v1950 = vpow.pop %v1949
          %v1951 = vsub.f32 %v1930, %v1944
          %v1952 = vmul.f32 %v1951, 1.442695
          %v1953 = vpow.pop %v1952
          %v1954 = vsub.f32 %v1941, %v1944
          %v1955 = vmul.f32 %v1954, 1.442695
          %v1956 = vpow.pop %v1955
          %v1957 = vadd.f32 %v1947, %v1950
          %v1958 = vadd.f32 %v1957, %v1953
          %v1959 = vadd.f32 %v1958, %v1956
          %v1960 = vrcp.pop %v1959
          %v1961 = vstv %s1874
          %v1962 = vmul.f32 %v1947, %v1961
          %v1963 = vstv %s1875
          %v1964 = vmul.f32 %v1950, %v1963
          %v1965 = vadd.f32 %v1962, %v1964
          %v1966 = vstv %s1876
          %v1967 = vmul.f32 %v1953, %v1966
          %v1968 = vadd.f32 %v1965, %v1967
          %v1969 = vstv %s1877
          %v1970 = vmul.f32 %v1956, %v1969
          %v1971 = vadd.f32 %v1968, %v1970
          %v1972 = vmul.f32 %v1971, %v1960
          %v1973 = vstv %s1890
          %v1974 = vadd.f32 %v1972, %v1973
          %v1975 = vld [vmem:[#allocation2] sm:$0x1]
          %v1976 = vadd.f32 %v1975, %v1974
          %1977 = vst [vmem:[#allocation2] sm:$0x1] %v1976
          %v1978 = vstv %s1878
          %v1979 = vmul.f32 %v1947, %v1978
          %v1980 = vstv %s1879
          %v1981 = vmul.f32 %v1950, %v1980
          %v1982 = vadd.f32 %v1979, %v1981
          %v1983 = vstv %s1880
          %v1984 = vmul.f32 %v1953, %v1983
          %v1985 = vadd.f32 %v1982, %v1984
          %v1986 = vstv %s1881
          %v1987 = vmul.f32 %v1956, %v1986
          %v1988 = vadd.f32 %v1985, %v1987
          %v1989 = vmul.f32 %v1988, %v1960
          %v1990 = vstv %s1891
          %v1991 = vadd.f32 %v1989, %v1990
          %v1992 = vld [vmem:[%s1515] sm:$0x1]
          %v1993 = vadd.f32 %v1992, %v1991
          %1994 = vst [vmem:[%s1515] sm:$0x1] %v1993
          %v1995 = vstv %s1882
          %v1996 = vmul.f32 %v1947, %v1995
          %v1997 = vstv %s1883
          %v1998 = vmul.f32 %v1950, %v1997
          %v1999 = vadd.f32 %v1996, %v1998
          %v2000 = vstv %s1884
          %v2001 = vmul.f32 %v1953, %v2000
          %v2002 = vadd.f32 %v1999, %v2001
          %v2003 = vstv %s1885
          %v2004 = vmul.f32 %v1956, %v2003
          %v2005 = vadd.f32 %v2002, %v2004
          %v2006 = vmul.f32 %v2005, %v1960
          %v2007 = vstv %s1892
          %v2008 = vadd.f32 %v2006, %v2007
          %v2009 = vld [vmem:[%s1615] sm:$0x1]
          %v2010 = vadd.f32 %v2009, %v2008
          %2011 = vst [vmem:[%s1615] sm:$0x1] %v2010
          %v2012 = vstv %s1886
          %v2013 = vmul.f32 %v1947, %v2012
          %v2014 = vstv %s1887
          %v2015 = vmul.f32 %v1950, %v2014
          %v2016 = vadd.f32 %v2013, %v2015
          %v2017 = vstv %s1888
          %v2018 = vmul.f32 %v1953, %v2017
          %v2019 = vadd.f32 %v2016, %v2018
          %v2020 = vstv %s1889
          %v2021 = vmul.f32 %v1956, %v2020
          %v2022 = vadd.f32 %v2019, %v2021
          %v2023 = vmul.f32 %v2022, %v1960
          %v2024 = vstv %s1893
          %v2025 = vadd.f32 %v2023, %v2024
          %v2026 = vld [vmem:[%s1634] sm:$0x1]
          %v2027 = vadd.f32 %v2026, %v2025
          %2028 = vst [vmem:[%s1634] sm:$0x1] %v2027
          %v2029 = vld [vmem:[%s1409] sm:$0x1]
          %v2030 = vmul.f32 %v2029, 0.5
          %v2031 = vld [vmem:[%s1412] sm:$0x1]
          %v2032 = vmul.f32 %v2031, 0.5
          %v2033 = vld [vmem:[%s1416] sm:$0x1]
          %v2034 = vmul.f32 %v2033, 0.5
          %v2035 = vld [vmem:[%s1419] sm:$0x1]
          %v2036 = vmul.f32 %v2035, 0.5
          %v2037 = vld [vmem:[%s360] sm:$0x1]
          %v2038 = vmul.f32 %v2030, %v2037
          %v2039 = vld [vmem:[%s1374] sm:$0x1]
          %v2040 = vmul.f32 %v2032, %v2039
          %v2041 = vadd.f32 %v2038, %v2040
          %v2042 = vld [vmem:[%s1378] sm:$0x1]
          %v2043 = vmul.f32 %v2034, %v2042
          %v2044 = vadd.f32 %v2041, %v2043
          %v2045 = vld [vmem:[%s1381] sm:$0x1]
          %v2046 = vmul.f32 %v2036, %v2045
          %v2047 = vadd.f32 %v2044, %v2046
          %v2048 = vld [vmem:[%s1385] sm:$0x1]
          %v2049 = vmul.f32 %v2030, %v2048
          %v2050 = vld [vmem:[%s1388] sm:$0x1]
          %v2051 = vmul.f32 %v2032, %v2050
          %v2052 = vadd.f32 %v2049, %v2051
          %v2053 = vld [vmem:[%s1392] sm:$0x1]
          %v2054 = vmul.f32 %v2034, %v2053
          %v2055 = vadd.f32 %v2052, %v2054
          %v2056 = vld [vmem:[%s1395] sm:$0x1]
          %v2057 = vmul.f32 %v2036, %v2056
          %v2058 = vadd.f32 %v2055, %v2057
          %v2059 = vld [vmem:[%s1366] sm:$0x1]
          %v2060 = vmul.f32 %v2030, %v2059
          %v2061 = vld [vmem:[%s1369] sm:$0x1]
          %v2062 = vmul.f32 %v2032, %v2061
          %v2063 = vadd.f32 %v2060, %v2062
          %v2064 = vld [vmem:[%s1402] sm:$0x1]
          %v2065 = vmul.f32 %v2034, %v2064
          %v2066 = vadd.f32 %v2063, %v2065
          %v2067 = vld [vmem:[%s1405] sm:$0x1]
          %v2068 = vmul.f32 %v2036, %v2067
          %v2069 = vadd.f32 %v2066, %v2068
          %v2070 = vmul.f32 %v2030, %v2029
          %v2071 = vmul.f32 %v2032, %v2031
          %v2072 = vadd.f32 %v2070, %v2071
          %v2073 = vmul.f32 %v2034, %v2033
          %v2074 = vadd.f32 %v2072, %v2073
          %v2075 = vmul.f32 %v2036, %v2035
          %v2076 = vadd.f32 %v2074, %v2075
          %v2077 = vmax.f32 %v2047, %v2058
          %v2078 = vmax.f32 %v2077, %v2069
          %v2079 = vmax.f32 %v2078, %v2076
          %v2080 = vsub.f32 %v2047, %v2079
          %v2081 = vmul.f32 %v2080, 1.442695
          %v2082 = vpow.pop %v2081
          %v2083 = vsub.f32 %v2058, %v2079
          %v2084 = vmul.f32 %v2083, 1.442695
          %v2085 = vpow.pop %v2084
          %v2086 = vsub.f32 %v2069, %v2079
          %v2087 = vmul.f32 %v2086, 1.442695
          %v2088 = vpow.pop %v2087
          %v2089 = vsub.f32 %v2076, %v2079
          %v2090 = vmul.f32 %v2089, 1.442695
          %v2091 = vpow.pop %v2090
          %v2092 = vadd.f32 %v2082, %v2085
          %v2093 = vadd.f32 %v2092, %v2088
          %v2094 = vadd.f32 %v2093, %v2091
          %v2095 = vrcp.pop %v2094
          %v2096 = vmul.f32 %v2082, %v1961
          %v2097 = vmul.f32 %v2085, %v1963
          %v2098 = vadd.f32 %v2096, %v2097
          %v2099 = vmul.f32 %v2088, %v1966
          %v2100 = vadd.f32 %v2098, %v2099
          %v2101 = vmul.f32 %v2091, %v1969
          %v2102 = vadd.f32 %v2100, %v2101
          %v2103 = vmul.f32 %v2102, %v2095
          %v2104 = vadd.f32 %v2103, %v1973
          %v2105 = vld [vmem:[%s1734] sm:$0x1]
          %v2106 = vadd.f32 %v2105, %v2104
          %2107 = vst [vmem:[%s1734] sm:$0x1] %v2106
          %v2108 = vmul.f32 %v2082, %v1978
          %v2109 = vmul.f32 %v2085, %v1980
          %v2110 = vadd.f32 %v2108, %v2109
          %v2111 = vmul.f32 %v2088, %v1983
          %v2112 = vadd.f32 %v2110, %v2111
          %v2113 = vmul.f32 %v2091, %v1986
          %v2114 = vadd.f32 %v2112, %v2113
          %v2115 = vmul.f32 %v2114, %v2095
          %v2116 = vadd.f32 %v2115, %v1990
          %v2117 = vld [vmem:[%s1753] sm:$0x1]
          %v2118 = vadd.f32 %v2117, %v2116
          %2119 = vst [vmem:[%s1753] sm:$0x1] %v2118
          %v2120 = vmul.f32 %v2082, %v1995
          %v2121 = vmul.f32 %v2085, %v1997
          %v2122 = vadd.f32 %v2120, %v2121
          %v2123 = vmul.f32 %v2088, %v2000
          %v2124 = vadd.f32 %v2122, %v2123
          %v2125 = vmul.f32 %v2091, %v2003
          %v2126 = vadd.f32 %v2124, %v2125
          %v2127 = vmul.f32 %v2126, %v2095
          %v2128 = vadd.f32 %v2127, %v2007
          %v2129 = vld [vmem:[%s1853] sm:$0x1]
          %v2130 = vadd.f32 %v2129, %v2128
          %2131 = vst [vmem:[%s1853] sm:$0x1] %v2130
          %v2132 = vmul.f32 %v2082, %v2012
          %v2133 = vmul.f32 %v2085, %v2014
          %v2134 = vadd.f32 %v2132, %v2133
          %v2135 = vmul.f32 %v2088, %v2017
          %v2136 = vadd.f32 %v2134, %v2135
          %v2137 = vmul.f32 %v2091, %v2020
          %v2138 = vadd.f32 %v2136, %v2137
          %v2139 = vmul.f32 %v2138, %v2095
          %v2140 = vadd.f32 %v2139, %v2024
          %v2141 = vld [vmem:[%s1872] sm:$0x1]
          %v2142 = vadd.f32 %v2141, %v2140
          %2143 = vst [vmem:[%s1872] sm:$0x1] %v2142
          %s2144 = sld [smem:[#allocation10]]
          %s2145 = sld [smem:[#allocation10 + $0x1]]
          %s2146 = sld [smem:[#allocation10 + $0x80]]
          %s2147 = sld [smem:[#allocation10 + $0x81]]
          %s2148 = sld [smem:[#allocation10 + $0x100]]
          %s2149 = sld [smem:[#allocation10 + $0x101]]
          %s2150 = sld [smem:[#allocation10 + $0x180]]
          %s2151 = sld [smem:[#allocation10 + $0x181]]
          %s2152 = sld [smem:[#allocation10 + $0x200]]
          %s2153 = sld [smem:[#allocation10 + $0x201]]
          %s2154 = sld [smem:[#allocation10 + $0x280]]
          %s2155 = sld [smem:[#allocation10 + $0x281]]
          %s2156 = sld [smem:[#allocation10 + $0x300]]
          %s2157 = sld [smem:[#allocation10 + $0x301]]
          %s2158 = sld [smem:[#allocation10 + $0x380]]
          %s2159 = sld [smem:[#allocation10 + $0x381]]
          %s2160 = sld [smem:[#allocation11]]
          %s2161 = sld [smem:[#allocation11 + $0x1]]
          %s2162 = sld [smem:[#allocation11 + $0x2]]
          %s2163 = sld [smem:[#allocation11 + $0x3]]
          %s2164 = sld [smem:[#allocation11 + $0x4]]
          %s2165 = sld [smem:[#allocation11 + $0x5]]
          %s2166 = sld [smem:[#allocation11 + $0x6]]
          %s2167 = sld [smem:[#allocation11 + $0x7]]
          %v2168 = vld [vmem:[%s1366] sm:$0x1]
          %v2169 = vmul.f32 %v2168, 0.35355338
          %v2170 = vld [vmem:[%s1369] sm:$0x1]
          %v2171 = vmul.f32 %v2170, 0.35355338
          %v2172 = vld [vmem:[%s1402] sm:$0x1]
          %v2173 = vmul.f32 %v2172, 0.35355338
          %v2174 = vld [vmem:[%s1405] sm:$0x1]
          %v2175 = vmul.f32 %v2174, 0.35355338
          %v2176 = vld [vmem:[%s1409] sm:$0x1]
          %v2177 = vmul.f32 %v2176, 0.35355338
          %v2178 = vld [vmem:[%s1412] sm:$0x1]
          %v2179 = vmul.f32 %v2178, 0.35355338
          %v2180 = vld [vmem:[%s1416] sm:$0x1]
          %v2181 = vmul.f32 %v2180, 0.35355338
          %v2182 = vld [vmem:[%s1419] sm:$0x1]
          %v2183 = vmul.f32 %v2182, 0.35355338
          %v2184 = vld [vmem:[%s360] sm:$0x1]
          %v2185 = vmul.f32 %v2169, %v2184
          %v2186 = vld [vmem:[%s1374] sm:$0x1]
          %v2187 = vmul.f32 %v2171, %v2186
          %v2188 = vadd.f32 %v2185, %v2187
          %v2189 = vld [vmem:[%s1378] sm:$0x1]
          %v2190 = vmul.f32 %v2173, %v2189
          %v2191 = vadd.f32 %v2188, %v2190
          %v2192 = vld [vmem:[%s1381] sm:$0x1]
          %v2193 = vmul.f32 %v2175, %v2192
          %v2194 = vadd.f32 %v2191, %v2193
          %v2195 = vld [vmem:[%s1385] sm:$0x1]
          %v2196 = vmul.f32 %v2177, %v2195
          %v2197 = vadd.f32 %v2194, %v2196
          %v2198 = vld [vmem:[%s1388] sm:$0x1]
          %v2199 = vmul.f32 %v2179, %v2198
          %v2200 = vadd.f32 %v2197, %v2199
          %v2201 = vld [vmem:[%s1392] sm:$0x1]
          %v2202 = vmul.f32 %v2181, %v2201
          %v2203 = vadd.f32 %v2200, %v2202
          %v2204 = vld [vmem:[%s1395] sm:$0x1]
          %v2205 = vmul.f32 %v2183, %v2204
          %v2206 = vadd.f32 %v2203, %v2205
          %v2207 = vmul.f32 %v2169, %v2168
          %v2208 = vmul.f32 %v2171, %v2170
          %v2209 = vadd.f32 %v2207, %v2208
          %v2210 = vmul.f32 %v2173, %v2172
          %v2211 = vadd.f32 %v2209, %v2210
          %v2212 = vmul.f32 %v2175, %v2174
          %v2213 = vadd.f32 %v2211, %v2212
          %v2214 = vmul.f32 %v2177, %v2176
          %v2215 = vadd.f32 %v2213, %v2214
          %v2216 = vmul.f32 %v2179, %v2178
          %v2217 = vadd.f32 %v2215, %v2216
          %v2218 = vmul.f32 %v2181, %v2180
          %v2219 = vadd.f32 %v2217, %v2218
          %v2220 = vmul.f32 %v2183, %v2182
          %v2221 = vadd.f32 %v2219, %v2220
          %v2222 = vmax.f32 %v2206, %v2221
          %v2223 = vsub.f32 %v2206, %v2222
          %v2224 = vmul.f32 %v2223, 1.442695
          %v2225 = vpow.pop %v2224
          %v2226 = vsub.f32 %v2221, %v2222
          %v2227 = vmul.f32 %v2226, 1.442695
          %v2228 = vpow.pop %v2227
          %v2229 = vadd.f32 %v2225, %v2228
          %v2230 = vrcp.pop %v2229
          %v2231 = vstv %s2144
          %v2232 = vmul.f32 %v2225, %v2231
          %v2233 = vstv %s2145
          %v2234 = vmul.f32 %v2228, %v2233
          %v2235 = vadd.f32 %v2232, %v2234
          %v2236 = vmul.f32 %v2235, %v2230
          %v2237 = vstv %s2160
          %v2238 = vadd.f32 %v2236, %v2237
          %v2239 = vld [vmem:[#allocation2] sm:$0x1]
          %v2240 = vadd.f32 %v2239, %v2238
          %2241 = vst [vmem:[#allocation2] sm:$0x1] %v2240
          %v2242 = vstv %s2146
          %v2243 = vmul.f32 %v2225, %v2242
          %v2244 = vstv %s2147
          %v2245 = vmul.f32 %v2228, %v2244
          %v2246 = vadd.f32 %v2243, %v2245
          %v2247 = vmul.f32 %v2246, %v2230
          %v2248 = vstv %s2161
          %v2249 = vadd.f32 %v2247, %v2248
          %v2250 = vld [vmem:[%s1515] sm:$0x1]
          %v2251 = vadd.f32 %v2250, %v2249
          %2252 = vst [vmem:[%s1515] sm:$0x1] %v2251
          %v2253 = vstv %s2148
          %v2254 = vmul.f32 %v2225, %v2253
          %v2255 = vstv %s2149
          %v2256 = vmul.f32 %v2228, %v2255
          %v2257 = vadd.f32 %v2254, %v2256
          %v2258 = vmul.f32 %v2257, %v2230
          %v2259 = vstv %s2162
          %v2260 = vadd.f32 %v2258, %v2259
          %v2261 = vld [vmem:[%s1615] sm:$0x1]
          %v2262 = vadd.f32 %v2261, %v2260
          %2263 = vst [vmem:[%s1615] sm:$0x1] %v2262
          %v2264 = vstv %s2150
          %v2265 = vmul.f32 %v2225, %v2264
          %v2266 = vstv %s2151
          %v2267 = vmul.f32 %v2228, %v2266
          %v2268 = vadd.f32 %v2265, %v2267
          %v2269 = vmul.f32 %v2268, %v2230
          %v2270 = vstv %s2163
          %v2271 = vadd.f32 %v2269, %v2270
          %v2272 = vld [vmem:[%s1634] sm:$0x1]
          %v2273 = vadd.f32 %v2272, %v2271
          %2274 = vst [vmem:[%s1634] sm:$0x1] %v2273
          %v2275 = vstv %s2152
          %v2276 = vmul.f32 %v2225, %v2275
          %v2277 = vstv %s2153
          %v2278 = vmul.f32 %v2228, %v2277
          %v2279 = vadd.f32 %v2276, %v2278
          %v2280 = vmul.f32 %v2279, %v2230
          %v2281 = vstv %s2164
          %v2282 = vadd.f32 %v2280, %v2281
          %v2283 = vld [vmem:[%s1734] sm:$0x1]
          %v2284 = vadd.f32 %v2283, %v2282
          %2285 = vst [vmem:[%s1734] sm:$0x1] %v2284
          %v2286 = vstv %s2154
          %v2287 = vmul.f32 %v2225, %v2286
          %v2288 = vstv %s2155
          %v2289 = vmul.f32 %v2228, %v2288
          %v2290 = vadd.f32 %v2287, %v2289
          %v2291 = vmul.f32 %v2290, %v2230
          %v2292 = vstv %s2165
          %v2293 = vadd.f32 %v2291, %v2292
          %v2294 = vld [vmem:[%s1753] sm:$0x1]
          %v2295 = vadd.f32 %v2294, %v2293
          %2296 = vst [vmem:[%s1753] sm:$0x1] %v2295
          %v2297 = vstv %s2156
          %v2298 = vmul.f32 %v2225, %v2297
          %v2299 = vstv %s2157
          %v2300 = vmul.f32 %v2228, %v2299
          %v2301 = vadd.f32 %v2298, %v2300
          %v2302 = vmul.f32 %v2301, %v2230
          %v2303 = vstv %s2166
          %v2304 = vadd.f32 %v2302, %v2303
          %v2305 = vld [vmem:[%s1853] sm:$0x1]
          %v2306 = vadd.f32 %v2305, %v2304
          %2307 = vst [vmem:[%s1853] sm:$0x1] %v2306
          %v2308 = vstv %s2158
          %v2309 = vmul.f32 %v2225, %v2308
          %v2310 = vstv %s2159
          %v2311 = vmul.f32 %v2228, %v2310
          %v2312 = vadd.f32 %v2309, %v2311
          %v2313 = vmul.f32 %v2312, %v2230
          %v2314 = vstv %s2167
          %v2315 = vadd.f32 %v2313, %v2314
          %v2316 = vld [vmem:[%s1872] sm:$0x1]
          %v2317 = vadd.f32 %v2316, %v2315
          %2318 = vst [vmem:[%s1872] sm:$0x1] %v2317
        $region80: #{inception_attention_forward.1} parent=47 // pred_fallthru
          _
        %v2319 = vld [vmem:[#allocation2] sm:$0x1]
        %v2320 = vld [vmem:[#allocation2 + $0x1] sm:$0x1]
        %v2321 = vld [vmem:[#allocation2 + $0x2] sm:$0x1]
        %v2322 = vld [vmem:[#allocation2 + $0x3] sm:$0x1]
        %v2323 = vld [vmem:[#allocation2 + $0x4] sm:$0x1]
        %v2324 = vld [vmem:[#allocation2 + $0x5] sm:$0x1]
        %v2325 = vld [vmem:[#allocation2 + $0x6] sm:$0x1]
        %v2326 = vld [vmem:[#allocation2 + $0x7] sm:$0x1]
        %2327 = vst [vmem:[%s367] sm:$0x1] %v2319
        %2328 = vst [vmem:[%s367 + $0x1] sm:$0x1] %v2320
        %2329 = vst [vmem:[%s367 + $0x2] sm:$0x1] %v2321
        %2330 = vst [vmem:[%s367 + $0x3] sm:$0x1] %v2322
        %2331 = vst [vmem:[%s367 + $0x4] sm:$0x1] %v2323
        %2332 = vst [vmem:[%s367 + $0x5] sm:$0x1] %v2324
        %2333 = vst [vmem:[%s367 + $0x6] sm:$0x1] %v2325
        %2334 = vst [vmem:[%s367 + $0x7] sm:$0x1] %v2326
        %s2335 = smul.u32 8, %s26
        %p2336 = scmp.lt.s32.totalorder %s2335, 15
        %s2337 = scalar_select %p2336, %s2335, 15
        %p2338 = scmp.lt.s32.totalorder %s27, 0
        %s2339 = scalar_select %p2338, %s27, 0
        %s2340 = sadd.s32 %s2339, %s2337
        %s2341 = scalar_lea.vmem %s7, %s2340
        // Predicated region
        $region81: #{inception_attention_forward.1} parent=47 // pred_check
          %p2342 = pneg %p206
        $region82: #{inception_attention_forward.1} parent=47 // pred_check_branch
          %2344 = sbr.rel (%p2342) target = $region84
        $region83: #{inception_attention_forward.1} parent=47 // pred_region
          %s2345 = smul.u32 8, %s26
        $region84: #{inception_attention_forward.1} parent=47 // pred_fallthru
          _
      $region48: #{inception_attention_forward.1} parent=5 // pred_fallthru
        _
      %p2346 = scmp.le.s32.totalorder 2, %s17
      // Predicated region
      $region85: #{inception_attention_forward.1} parent=5 // pred_check
        %p2347 = pneg %p2346
      $region86: #{inception_attention_forward.1} parent=5 // pred_check_branch
        %2349 = sbr.rel (%p2347) target = $region88
      $region87: #{inception_attention_forward.1} parent=5 // pred_region
        %s2350 = ssub.s32 %s17, 2
        // Predicated region
        $region89: #{inception_attention_forward.1} parent=87 // pred_check
          %p2351 = pneg %p212
        $region90: #{inception_attention_forward.1} parent=87 // pred_check_branch
          %2353 = sbr.rel (%p2351) target = $region92
        $region91: #{inception_attention_forward.1} parent=87 // pred_region
          %s2354 = smul.u32 8, %s28
          %p2355 = scmp.lt.s32.totalorder %s2354, 15
          %s2356 = scalar_select %p2355, %s2354, 15
          %p2357 = scmp.lt.s32.totalorder %s29, 0
          %s2358 = scalar_select %p2357, %s29, 0
          %s2359 = sadd.s32 %s2358, %s2356
          %s2360 = scalar_lea.vmem %s7, %s2359
        $region92: #{inception_attention_forward.1} parent=87 // pred_fallthru
          _
      $region88: #{inception_attention_forward.1} parent=5 // pred_fallthru
        _
    $region6: #{inception_attention_forward.1} parent=1 // loop_footer
      %s21 = sadd.s32 1, %s17
    $region7: #{inception_attention_forward.1} parent=1 // loop_footer_branch
      %16 = sbr.rel target = $region3
    $region8: #{inception_attention_forward.1} parent=1 // loop_exit
      _
    %2361 = vsyncpa [#allocation4], 1
    %s2362 = scalar_lea.sflag [#allocation4], 1
    %2363 = vsyncpa %s2362, 1
    %2364 = vsyncpa [#allocation6], 1
    %2365 = vsyncpa [#allocation9], 1
    %2366 = vsyncpa [#allocation12], 1

</llo_original>
